<compile_context>
chip_gen: v7x
topology: tpu7x:2x2x1
jax: 0.10.0
libtpu: 0.0.40
codegen_flags: <defaults>
</compile_context>

<pallas_src>
import jax
import jax.numpy as jnp
from jax.experimental import pallas as pl
from jax.experimental.pallas import tpu as pltpu


LAT_H = 16                       # feature-map height
LAT_W = 16                       # feature-map width
LAT_C = 128                      # feature-map channels
S = LAT_H * LAT_W                # 256 spatial positions
HALF_S = S // 2                  # 128-row half (second parallel grid axis)
MAP_N = S * LAT_C                # 32768 = latent2map output width
UP_K = 16                        # upsample factor
OUT_C = 3
UP_COLS = UP_K * UP_K * OUT_C    # 768
UP_CHUNK = 256                   # 256-lane upsample output chunks (v6e/v7x MXU width)


# ---------------------------------------------------------------------------
# Kernel 1: folded  embed_latent . latent2map  ->  x:(N,Ld) @ W:(Ld,32768) + b
# W's columns are pre-permuted offline to (h, w, c) order so the output
# reshapes to an NHWC feature map with zero layout cost.  Output is bf16.
# ---------------------------------------------------------------------------
def _latent2map_kernel(x_ref, w_ref, b_ref, o_ref):
    xb = x_ref[...].astype(jnp.bfloat16)
    acc = jnp.dot(xb, w_ref[...], preferred_element_type=jnp.float32)
    o_ref[...] = (acc + b_ref[...]).astype(o_ref.dtype)


def latent2map(x, w_fused, b_fused, *, tn=16384):
    n, ld = x.shape
    m = w_fused.shape[1]
    assert m % tn == 0
    return pl.pallas_call(
        _latent2map_kernel,
        out_shape=jax.ShapeDtypeStruct((n, m), jnp.bfloat16),
        grid_spec=pltpu.PrefetchScalarGridSpec(
            num_scalar_prefetch=0,
            grid=(m // tn,),                       # 2 steps: low fixed overhead,
            in_specs=[                             # still megacore-splittable
                pl.BlockSpec((n, ld), lambda j: (0, 0)),
                pl.BlockSpec((ld, tn), lambda j: (0, j)),
                pl.BlockSpec((1, tn), lambda j: (0, j)),
            ],
            out_specs=pl.BlockSpec((n, tn), lambda j: (0, j)),
        ),
        compiler_params=pltpu.CompilerParams(
            dimension_semantics=("parallel",)),
    )(x, w_fused, b_fused)


# ---------------------------------------------------------------------------
# Kernel 2: MaskedAutoencoder decoder (synthetic, see TODO above).
# Grid = (N, 2): axis 0 over samples, axis 1 over two 128-row output halves
# (both "parallel" -> both v7x TensorCores busy even at N=1).
# Per grid step:
#   z:(256,128) bf16  (row = h*16+w, lane = channel)
#   im2col 3x3 conv:  9 shifted copies -> (256,1152) bf16, ONE matmul against
#                     the stacked (1152,128) taps, + bias, ReLU.
#   upsample:         the 128-row half of hmap @ (128,768), in three
#                     (128,128)@(128,256) chunks; lane-dense bf16 stores.
# ---------------------------------------------------------------------------
def _decoder_kernel(z_ref, wc_ref, bc_ref, wu_ref, bu_ref, o_ref, hmap_ref):
    s_idx = jax.lax.broadcasted_iota(jnp.int32, (S, 1), 0)
    w_idx = s_idx % LAT_W                                  # w position of row s

    # dx (+-1 within a row) shifts: roll + border mask (f32 mask math, then bf16)
    zf = z_ref[0].astype(jnp.float32)                      # (256, 128)
    right = jnp.where(w_idx < LAT_W - 1,
                      pltpu.roll(zf, shift=S - 1, axis=0), 0.0)   # lhs[s]=z[s+1]
    left = jnp.where(w_idx > 0,
                     pltpu.roll(zf, shift=1, axis=0), 0.0)        # lhs[s]=z[s-1]
    dx_variants = (left.astype(jnp.bfloat16),              # dx=0  (w-1)
                   z_ref[0],                               # dx=1  (w)
                   right.astype(jnp.bfloat16))             # dx=2  (w+1)

    # dy (+-16 rows) shifts: tile-aligned row concat with zero rows.
    zrow = jnp.zeros((LAT_W, LAT_C), jnp.bfloat16)
    cols = []
    for dy in range(3):
        for dx in range(3):
            v = dx_variants[dx]
            if dy == 0:        # h-1: lhs[s] = v[s-16], zero for h==0
                v = jnp.concatenate([zrow, v[: S - LAT_W]], axis=0)
            elif dy == 2:      # h+1: lhs[s] = v[s+16], zero for h==15
                v = jnp.concatenate([v[LAT_W:], zrow], axis=0)
            cols.append(v)
    lhs_cat = jnp.concatenate(cols, axis=1)                # (256, 1152) bf16

    # single fused conv matmul (K=1152 fills the 256-deep MXU), bias + ReLU
    h = jnp.dot(lhs_cat, wc_ref[...], preferred_element_type=jnp.float32)
    h = jnp.maximum(h + bc_ref[...], 0.0)
    hmap_ref[...] = h.astype(jnp.bfloat16)

    # upsample for this instance's 128-row half, 256-lane output chunks
    r0 = pl.multiple_of(pl.program_id(1) * HALF_S, HALF_S)
    hm = hmap_ref[pl.ds(r0, HALF_S), :]                    # (128, 128) bf16
    for c in range(UP_COLS // UP_CHUNK):
        lo = c * UP_CHUNK
        out_c = (jnp.dot(hm, wu_ref[:, lo:lo + UP_CHUNK],
                         preferred_element_type=jnp.float32)
                 + bu_ref[:, lo:lo + UP_CHUNK])
        o_ref[0, :, lo:lo + UP_CHUNK] = out_c.astype(o_ref.dtype)


def masked_autoencoder_decode(z_hwc, wc_cat, bc, wu, bu):
    n = z_hwc.shape[0]
    out = pl.pallas_call(
        _decoder_kernel,
        out_shape=jax.ShapeDtypeStruct((n, S, UP_COLS), jnp.bfloat16),
        grid_spec=pltpu.PrefetchScalarGridSpec(
            num_scalar_prefetch=0,
            grid=(n, 2),
            in_specs=[
                pl.BlockSpec((1, S, LAT_C), lambda i, j: (i, 0, 0)),
                pl.BlockSpec((9 * LAT_C, LAT_C), lambda i, j: (0, 0)),
                pl.BlockSpec((1, LAT_C), lambda i, j: (0, 0)),
                pl.BlockSpec((LAT_C, UP_COLS), lambda i, j: (0, 0)),
                pl.BlockSpec((1, UP_COLS), lambda i, j: (0, 0)),
            ],
            out_specs=pl.BlockSpec((1, HALF_S, UP_COLS), lambda i, j: (i, j, 0)),
            scratch_shapes=[pltpu.VMEM((S, LAT_C), jnp.bfloat16)],
        ),
        compiler_params=pltpu.CompilerParams(
            dimension_semantics=("parallel", "parallel")),
    )(z_hwc, wc_cat, bc, wu, bu)

    # depth-to-space epilogue in bf16; drop fully-cropped w tiles (w=0, w=15)
    # BEFORE the transpose to shrink the XLA copy.
    out = out.reshape(n, LAT_H, LAT_W, UP_K, UP_K, OUT_C)   # (n,h,w,kh,kw,c)
    out = out[:, :, 1:LAT_W - 1]                            # (n,16,14,16,16,3)
    out = jnp.transpose(out, (0, 5, 1, 3, 2, 4))            # (n,c,h,kh,w,kw)
    return out.reshape(n, OUT_C, LAT_H * UP_K, (LAT_W - 2) * UP_K)


# ---------------------------------------------------------------------------
# Full Decoder.forward equivalent
# ---------------------------------------------------------------------------
@jax.jit
def decoder_forward(x, params):
    z = latent2map(x, params["w_fused"], params["b_fused"])       # (N,32768) bf16 hwc
    z = z.reshape(-1, S, LAT_C)                                   # metadata-only
    img = masked_autoencoder_decode(z, params["w_conv_cat"], params["b_conv"],
                                    params["w_up"], params["b_up"])
    h_start = (256 - 228) // 2                                    # 14
    w_start = (256 - 198) // 2 - UP_K                             # 29, shifted by the
    img = img[:, :, h_start:h_start + 228, w_start:w_start + 198]  # dropped w=0 tile
    return img.astype(jnp.float32)


# ---------------------------------------------------------------------------
# Parameters: raw (PyTorch-like) params + offline preparation (fold / permute /
# stack / bf16 cast).  All exact transforms except the bf16 cast of MXU inputs.
# ---------------------------------------------------------------------------
def init_raw_params(key, latent_dim=32, emb_dim=64):
    ks = jax.random.split(key, 4)

    def lin(k, shape, fan_in):
        return jax.random.normal(k, shape, jnp.float32) / jnp.sqrt(
            jnp.float32(fan_in))

    return {
        "w_embed": lin(ks[0], (latent_dim, emb_dim), latent_dim),
        "b_embed": jnp.zeros((1, emb_dim), jnp.float32),
        "w_l2m": lin(ks[1], (emb_dim, MAP_N), emb_dim),
        "b_l2m": jnp.zeros((1, MAP_N), jnp.float32),
        "w_conv": lin(ks[2], (3, 3, LAT_C, LAT_C), 9 * LAT_C),   # (dy,dx,cin,cout)
        "b_conv": jnp.zeros((1, LAT_C), jnp.float32),
        "w_up": lin(ks[3], (LAT_C, UP_COLS), LAT_C),             # cols = (kh,kw,c)
        "b_up": jnp.zeros((1, UP_COLS), jnp.float32),
    }


def prepare_params(raw):
    latent_dim = raw["w_embed"].shape[0]
    # exact fold of the two affine layers (no nonlinearity in between)
    w_f = raw["w_embed"] @ raw["w_l2m"]                    # (latent, 32768), CHW cols
    b_f = raw["b_embed"] @ raw["w_l2m"] + raw["b_l2m"]     # (1, 32768),      CHW cols
    # offline column permutation CHW -> HWC:  c*256 + s  ->  s*128 + c
    w_f = jnp.transpose(w_f.reshape(latent_dim, LAT_C, S),
                        (0, 2, 1)).reshape(latent_dim, MAP_N)
    b_f = jnp.transpose(b_f.reshape(1, LAT_C, S),
                        (0, 2, 1)).reshape(1, MAP_N)
    return {
        "w_fused": w_f.astype(jnp.bfloat16),
        "b_fused": b_f,                                               # f32 bias
        # stacked im2col conv weight: row block k = dy*3+dx holds tap (dy,dx)
        "w_conv_cat": raw["w_conv"].reshape(9 * LAT_C, LAT_C).astype(jnp.bfloat16),
        "b_conv": raw["b_conv"],
        "w_up": raw["w_up"].astype(jnp.bfloat16),
        "b_up": raw["b_up"],
    }


# ---------------------------------------------------------------------------
# Pure-JAX reference (validates the kernels, incl. pltpu.roll direction and
# all layout permutations, with matching bf16 rounding points).
# ---------------------------------------------------------------------------
def _reference_forward(x, params):
    xb = x.astype(jnp.bfloat16).astype(jnp.float32)
    w_f = params["w_fused"].astype(jnp.float32)
    z = xb @ w_f + params["b_fused"]
    z = z.astype(jnp.bfloat16).astype(jnp.float32)          # kernel 1 stores bf16
    n = z.shape[0]
    z = z.reshape(n, LAT_H, LAT_W, LAT_C)
    wc = params["w_conv_cat"].astype(jnp.float32).reshape(3, 3, LAT_C, LAT_C)
    h = jax.lax.conv_general_dilated(
        z, wc, window_strides=(1, 1), padding="SAME",
        dimension_numbers=("NHWC", "HWIO", "NHWC"))
    h = jnp.maximum(h + params["b_conv"].reshape(1, 1, 1, LAT_C), 0.0)
    h = h.astype(jnp.bfloat16).astype(jnp.float32)           # kernel 2 hmap in bf16
    up = (h.reshape(n, S, LAT_C) @ params["w_up"].astype(jnp.float32)
          + params["b_up"])
    img = up.reshape(n, LAT_H, LAT_W, UP_K, UP_K, OUT_C)
    img = jnp.transpose(img, (0, 5, 1, 3, 2, 4)).reshape(n, OUT_C, 256, 256)
    return img[:, :, 14:14 + 228, 29:29 + 198]


if __name__ == "__main__":
    key = jax.random.PRNGKey(0)
    kx, kp = jax.random.split(key)
    params = prepare_params(init_raw_params(kp))
    x = jax.random.normal(kx, (2, 32), jnp.float32)          # latent input
    out = decoder_forward(x, params)
    jax.block_until_ready(out)
    assert out.shape == (2, 3, 228, 198), out.shape
    assert out.dtype == jnp.float32

    ref = _reference_forward(x, params)
    err = float(jnp.max(jnp.abs(out - ref)))
    assert err < 1e-1, f"max abs error vs reference: {err}"
    print("KERNEL_OK")
</pallas_src>

<mosaic_0001>
module attributes {stable_mosaic.version = 11 : i64} {
  func.func @_decoder_kernel(%arg0: i32, %arg1: i32, %arg2: memref<1x256x128xbf16, #tpu.memory_space<vmem>>, %arg3: memref<1152x128xbf16, #tpu.memory_space<vmem>>, %arg4: memref<1x128xf32, #tpu.memory_space<vmem>>, %arg5: memref<128x768xbf16, #tpu.memory_space<vmem>>, %arg6: memref<1x768xf32, #tpu.memory_space<vmem>>, %arg7: memref<1x128x768xbf16, #tpu.memory_space<vmem>>, %arg8: memref<256x128xbf16, #tpu.memory_space<vmem>>) attributes {dimension_semantics = [#tpu.dimension_semantics<parallel>, #tpu.dimension_semantics<parallel>], iteration_bounds = array<i64: 2, 2>, scalar_prefetch = 0 : i64, scratch_operands = 1 : i64, tpu.core_type = #tpu.core_type<tc>, window_params = [{transform_indices = @transform_0, window_bounds = array<i64: 1, 256, 128>}, {pipeline_mode = #tpu.pipeline_mode<synchronous>, transform_indices = @transform_1, window_bounds = array<i64: 1152, 128>}, {pipeline_mode = #tpu.pipeline_mode<synchronous>, transform_indices = @transform_2, window_bounds = array<i64: 1, 128>}, {pipeline_mode = #tpu.pipeline_mode<synchronous>, transform_indices = @transform_3, window_bounds = array<i64: 128, 768>}, {pipeline_mode = #tpu.pipeline_mode<synchronous>, transform_indices = @transform_4, window_bounds = array<i64: 1, 768>}, {transform_indices = @transform_5, window_bounds = array<i64: 1, 128, 768>}]} {
    %0 = tpu.iota {dimensions = array<i32: 0>} : vector<256x1xi32>
    %c16_i32 = arith.constant 16 : i32
    %c0_i32 = arith.constant 0 : i32
    %1 = arith.cmpi eq, %c16_i32, %c0_i32 : i32
    %c1_i32 = arith.constant 1 : i32
    %2 = arith.select %1, %c1_i32, %c16_i32 : i32
    %3 = vector.broadcast %2 : i32 to vector<256x1xi32>
    %4 = arith.remsi %0, %3 : vector<256x1xi32>
    %c0_i32_0 = arith.constant 0 : i32
    %5 = vector.broadcast %c0_i32_0 : i32 to vector<256x1xi32>
    %6 = arith.cmpi ne, %4, %5 : vector<256x1xi32>
    %c0_i32_1 = arith.constant 0 : i32
    %7 = vector.broadcast %c0_i32_1 : i32 to vector<256x1xi32>
    %8 = arith.cmpi slt, %4, %7 : vector<256x1xi32>
    %c0_i32_2 = arith.constant 0 : i32
    %9 = arith.cmpi slt, %2, %c0_i32_2 : i32
    %10 = vector.broadcast %9 : i1 to vector<256x1xi1>
    %11 = vector.broadcast %10 : vector<256x1xi1> to vector<256x1xi1>
    %12 = arith.xori %8, %11 : vector<256x1xi1>
    %13 = arith.andi %12, %6 : vector<256x1xi1>
    %14 = vector.broadcast %2 : i32 to vector<256x1xi32>
    %15 = arith.addi %4, %14 : vector<256x1xi32>
    %16 = arith.select %13, %15, %4 : vector<256x1xi1>, vector<256x1xi32>
    %c0 = arith.constant 0 : index
    %c0_3 = arith.constant 0 : index
    %c0_4 = arith.constant 0 : index
    %17 = vector.load %arg2[%c0, %c0_3, %c0_4] : memref<1x256x128xbf16, #tpu.memory_space<vmem>>, vector<1x256x128xbf16>
    %18 = vector.shape_cast %17 : vector<1x256x128xbf16> to vector<256x128xbf16>
    %19 = arith.extf %18 : vector<256x128xbf16> to vector<256x128xf32>
    %c15_i32 = arith.constant 15 : i32
    %20 = vector.broadcast %c15_i32 : i32 to vector<256x1xi32>
    %21 = arith.cmpi slt, %16, %20 : vector<256x1xi32>
    %c255_i32 = arith.constant 255 : i32
    %22 = tpu.dynamic_rotate %19 by %c255_i32 dim 0 : vector<256x128xf32>, i32 -> vector<256x128xf32>
    %cst = arith.constant 0.000000e+00 : f32
    %23 = vector.shape_cast %21 : vector<256x1xi1> to vector<256x1xi1>
    %24 = vector.broadcast %23 : vector<256x1xi1> to vector<256x128xi1>
    %25 = vector.broadcast %cst : f32 to vector<256x128xf32>
    %26 = arith.select %24, %22, %25 : vector<256x128xi1>, vector<256x128xf32>
    %c0_i32_5 = arith.constant 0 : i32
    %27 = vector.broadcast %c0_i32_5 : i32 to vector<256x1xi32>
    %28 = arith.cmpi sgt, %16, %27 : vector<256x1xi32>
    %c1_i32_6 = arith.constant 1 : i32
    %29 = tpu.dynamic_rotate %19 by %c1_i32_6 dim 0 : vector<256x128xf32>, i32 -> vector<256x128xf32>
    %cst_7 = arith.constant 0.000000e+00 : f32
    %30 = vector.shape_cast %28 : vector<256x1xi1> to vector<256x1xi1>
    %31 = vector.broadcast %30 : vector<256x1xi1> to vector<256x128xi1>
    %32 = vector.broadcast %cst_7 : f32 to vector<256x128xf32>
    %33 = arith.select %31, %29, %32 : vector<256x128xi1>, vector<256x128xf32>
    %34 = arith.truncf %33 : vector<256x128xf32> to vector<256x128xbf16>
    %c0_8 = arith.constant 0 : index
    %c0_9 = arith.constant 0 : index
    %c0_10 = arith.constant 0 : index
    %35 = vector.load %arg2[%c0_8, %c0_9, %c0_10] : memref<1x256x128xbf16, #tpu.memory_space<vmem>>, vector<1x256x128xbf16>
    %36 = vector.shape_cast %35 : vector<1x256x128xbf16> to vector<256x128xbf16>
    %37 = arith.truncf %26 : vector<256x128xf32> to vector<256x128xbf16>
    %cst_11 = arith.constant 0.000000e+00 : bf16
    %38 = vector.broadcast %cst_11 : bf16 to vector<16x128xbf16>
    %39 = vector.extract_strided_slice %34 {offsets = [0, 0], sizes = [240, 128], strides = [1, 1]} : vector<256x128xbf16> to vector<240x128xbf16>
    %40 = tpu.concatenate %38, %39 in 0 : vector<16x128xbf16>, vector<240x128xbf16> -> vector<256x128xbf16>
    %41 = vector.extract_strided_slice %36 {offsets = [0, 0], sizes = [240, 128], strides = [1, 1]} : vector<256x128xbf16> to vector<240x128xbf16>
    %42 = tpu.concatenate %38, %41 in 0 : vector<16x128xbf16>, vector<240x128xbf16> -> vector<256x128xbf16>
    %43 = vector.extract_strided_slice %37 {offsets = [0, 0], sizes = [240, 128], strides = [1, 1]} : vector<256x128xbf16> to vector<240x128xbf16>
    %44 = tpu.concatenate %38, %43 in 0 : vector<16x128xbf16>, vector<240x128xbf16> -> vector<256x128xbf16>
    %45 = vector.extract_strided_slice %34 {offsets = [16, 0], sizes = [240, 128], strides = [1, 1]} : vector<256x128xbf16> to vector<240x128xbf16>
    %46 = tpu.concatenate %45, %38 in 0 : vector<240x128xbf16>, vector<16x128xbf16> -> vector<256x128xbf16>
    %47 = vector.extract_strided_slice %36 {offsets = [16, 0], sizes = [240, 128], strides = [1, 1]} : vector<256x128xbf16> to vector<240x128xbf16>
    %48 = tpu.concatenate %47, %38 in 0 : vector<240x128xbf16>, vector<16x128xbf16> -> vector<256x128xbf16>
    %49 = vector.extract_strided_slice %37 {offsets = [16, 0], sizes = [240, 128], strides = [1, 1]} : vector<256x128xbf16> to vector<240x128xbf16>
    %50 = tpu.concatenate %49, %38 in 0 : vector<240x128xbf16>, vector<16x128xbf16> -> vector<256x128xbf16>
    %51 = tpu.concatenate %40, %42, %44, %34, %36, %37, %46, %48, %50 in 1 : vector<256x128xbf16>, vector<256x128xbf16>, vector<256x128xbf16>, vector<256x128xbf16>, vector<256x128xbf16>, vector<256x128xbf16>, vector<256x128xbf16>, vector<256x128xbf16>, vector<256x128xbf16> -> vector<256x1152xbf16>
    %c0_12 = arith.constant 0 : index
    %c0_13 = arith.constant 0 : index
    %52 = vector.load %arg3[%c0_12, %c0_13] : memref<1152x128xbf16, #tpu.memory_space<vmem>>, vector<1152x128xbf16>
    %cst_14 = arith.constant dense<0.000000e+00> : vector<256x128xf32>
    %53 = tpu.matmul %51, %52, %cst_14 {dimension_numbers = #tpu.dot_dimension_numbers<[1], [0], [0], [1], [0, 0, 1, 1], [], []>} : vector<256x1152xbf16>, vector<1152x128xbf16>, vector<256x128xf32> -> vector<256x128xf32>
    %c0_15 = arith.constant 0 : index
    %c0_16 = arith.constant 0 : index
    %54 = vector.load %arg4[%c0_15, %c0_16] : memref<1x128xf32, #tpu.memory_space<vmem>>, vector<1x128xf32>
    %55 = vector.broadcast %54 : vector<1x128xf32> to vector<256x128xf32>
    %56 = arith.addf %53, %55 : vector<256x128xf32>
    %cst_17 = arith.constant 0.000000e+00 : f32
    %57 = vector.broadcast %cst_17 : f32 to vector<256x128xf32>
    %58 = arith.maximumf %56, %57 : vector<256x128xf32>
    %59 = arith.truncf %58 : vector<256x128xf32> to vector<256x128xbf16>
    %c0_18 = arith.constant 0 : index
    %c0_19 = arith.constant 0 : index
    %60 = vector.load %arg8[%c0_18, %c0_19] : memref<256x128xbf16, #tpu.memory_space<vmem>>, vector<256x128xbf16>
    tpu.vector_store %arg8[%c0_18, %c0_19], %59 {strides = array<i32>} : memref<256x128xbf16, #tpu.memory_space<vmem>>, vector<256x128xbf16>,
    %c128_i32 = arith.constant 128 : i32
    %61 = arith.muli %arg1, %c128_i32 : i32
    %62 = tpu.assume_multiple %61, 128 : i32
    %63 = arith.index_cast %62 : i32 to index
    %c0_20 = arith.constant 0 : index
    %64 = vector.load %arg8[%63, %c0_20] : memref<256x128xbf16, #tpu.memory_space<vmem>>, vector<128x128xbf16>
    %c0_21 = arith.constant 0 : index
    %c0_22 = arith.constant 0 : index
    %65 = vector.load %arg5[%c0_21, %c0_22] : memref<128x768xbf16, #tpu.memory_space<vmem>>, vector<128x256xbf16>
    %cst_23 = arith.constant dense<0.000000e+00> : vector<128x256xf32>
    %66 = tpu.matmul %64, %65, %cst_23 {dimension_numbers = #tpu.dot_dimension_numbers<[1], [0], [0], [1], [0, 0, 1, 1], [], []>} : vector<128x128xbf16>, vector<128x256xbf16>, vector<128x256xf32> -> vector<128x256xf32>
    %c0_24 = arith.constant 0 : index
    %c0_25 = arith.constant 0 : index
    %67 = vector.load %arg6[%c0_24, %c0_25] : memref<1x768xf32, #tpu.memory_space<vmem>>, vector<1x256xf32>
    %68 = vector.broadcast %67 : vector<1x256xf32> to vector<128x256xf32>
    %69 = arith.addf %66, %68 : vector<128x256xf32>
    %70 = arith.truncf %69 : vector<128x256xf32> to vector<128x256xbf16>
    %c0_26 = arith.constant 0 : index
    %c0_27 = arith.constant 0 : index
    %c0_28 = arith.constant 0 : index
    %71 = vector.load %arg7[%c0_26, %c0_27, %c0_28] : memref<1x128x768xbf16, #tpu.memory_space<vmem>>, vector<1x128x256xbf16>
    %72 = vector.shape_cast %71 : vector<1x128x256xbf16> to vector<128x256xbf16>
    %73 = vector.shape_cast %70 : vector<128x256xbf16> to vector<1x128x256xbf16>
    tpu.vector_store %arg7[%c0_26, %c0_27, %c0_28], %73 {strides = array<i32>} : memref<1x128x768xbf16, #tpu.memory_space<vmem>>, vector<1x128x256xbf16>,
    %c0_29 = arith.constant 0 : index
    %c256 = arith.constant 256 : index
    %74 = vector.load %arg5[%c0_29, %c256] : memref<128x768xbf16, #tpu.memory_space<vmem>>, vector<128x256xbf16>
    %cst_30 = arith.constant dense<0.000000e+00> : vector<128x256xf32>
    %75 = tpu.matmul %64, %74, %cst_30 {dimension_numbers = #tpu.dot_dimension_numbers<[1], [0], [0], [1], [0, 0, 1, 1], [], []>} : vector<128x128xbf16>, vector<128x256xbf16>, vector<128x256xf32> -> vector<128x256xf32>
    %c0_31 = arith.constant 0 : index
    %c256_32 = arith.constant 256 : index
    %76 = vector.load %arg6[%c0_31, %c256_32] : memref<1x768xf32, #tpu.memory_space<vmem>>, vector<1x256xf32>
    %77 = vector.broadcast %76 : vector<1x256xf32> to vector<128x256xf32>
    %78 = arith.addf %75, %77 : vector<128x256xf32>
    %79 = arith.truncf %78 : vector<128x256xf32> to vector<128x256xbf16>
    %c0_33 = arith.constant 0 : index
    %c0_34 = arith.constant 0 : index
    %c256_35 = arith.constant 256 : index
    %80 = vector.load %arg7[%c0_33, %c0_34, %c256_35] : memref<1x128x768xbf16, #tpu.memory_space<vmem>>, vector<1x128x256xbf16>
    %81 = vector.shape_cast %80 : vector<1x128x256xbf16> to vector<128x256xbf16>
    %82 = vector.shape_cast %79 : vector<128x256xbf16> to vector<1x128x256xbf16>
    tpu.vector_store %arg7[%c0_33, %c0_34, %c256_35], %82 {strides = array<i32>} : memref<1x128x768xbf16, #tpu.memory_space<vmem>>, vector<1x128x256xbf16>,
    %c0_36 = arith.constant 0 : index
    %c512 = arith.constant 512 : index
    %83 = vector.load %arg5[%c0_36, %c512] : memref<128x768xbf16, #tpu.memory_space<vmem>>, vector<128x256xbf16>
    %cst_37 = arith.constant dense<0.000000e+00> : vector<128x256xf32>
    %84 = tpu.matmul %64, %83, %cst_37 {dimension_numbers = #tpu.dot_dimension_numbers<[1], [0], [0], [1], [0, 0, 1, 1], [], []>} : vector<128x128xbf16>, vector<128x256xbf16>, vector<128x256xf32> -> vector<128x256xf32>
    %c0_38 = arith.constant 0 : index
    %c512_39 = arith.constant 512 : index
    %85 = vector.load %arg6[%c0_38, %c512_39] : memref<1x768xf32, #tpu.memory_space<vmem>>, vector<1x256xf32>
    %86 = vector.broadcast %85 : vector<1x256xf32> to vector<128x256xf32>
    %87 = arith.addf %84, %86 : vector<128x256xf32>
    %88 = arith.truncf %87 : vector<128x256xf32> to vector<128x256xbf16>
    %c0_40 = arith.constant 0 : index
    %c0_41 = arith.constant 0 : index
    %c512_42 = arith.constant 512 : index
    %89 = vector.load %arg7[%c0_40, %c0_41, %c512_42] : memref<1x128x768xbf16, #tpu.memory_space<vmem>>, vector<1x128x256xbf16>
    %90 = vector.shape_cast %89 : vector<1x128x256xbf16> to vector<128x256xbf16>
    %91 = vector.shape_cast %88 : vector<128x256xbf16> to vector<1x128x256xbf16>
    tpu.vector_store %arg7[%c0_40, %c0_41, %c512_42], %91 {strides = array<i32>} : memref<1x128x768xbf16, #tpu.memory_space<vmem>>, vector<1x128x256xbf16>,
    return
  }
  func.func @transform_0(%arg0: i32, %arg1: i32) -> (i32, i32, i32) {
    %c0_i32 = arith.constant 0 : i32
    %c0_i32_0 = arith.constant 0 : i32
    %c0_i32_1 = arith.constant 0 : i32
    return %arg0, %c0_i32, %c0_i32_0 : i32, i32, i32
  }
  func.func @transform_1(%arg0: i32, %arg1: i32) -> (i32, i32) {
    %c0_i32 = arith.constant 0 : i32
    %c0_i32_0 = arith.constant 0 : i32
    %c0_i32_1 = arith.constant 0 : i32
    return %c0_i32, %c0_i32_0 : i32, i32
  }
  func.func @transform_2(%arg0: i32, %arg1: i32) -> (i32, i32) {
    %c0_i32 = arith.constant 0 : i32
    %c0_i32_0 = arith.constant 0 : i32
    %c0_i32_1 = arith.constant 0 : i32
    return %c0_i32, %c0_i32_0 : i32, i32
  }
  func.func @transform_3(%arg0: i32, %arg1: i32) -> (i32, i32) {
    %c0_i32 = arith.constant 0 : i32
    %c0_i32_0 = arith.constant 0 : i32
    %c0_i32_1 = arith.constant 0 : i32
    return %c0_i32, %c0_i32_0 : i32, i32
  }
  func.func @transform_4(%arg0: i32, %arg1: i32) -> (i32, i32) {
    %c0_i32 = arith.constant 0 : i32
    %c0_i32_0 = arith.constant 0 : i32
    %c0_i32_1 = arith.constant 0 : i32
    return %c0_i32, %c0_i32_0 : i32, i32
  }
  func.func @transform_5(%arg0: i32, %arg1: i32) -> (i32, i32, i32) {
    %c0_i32 = arith.constant 0 : i32
    %c0_i32_0 = arith.constant 0 : i32
    return %arg0, %arg1, %c0_i32 : i32, i32, i32
  }
}

module attributes {stable_mosaic.version = 11 : i64} {
  func.func @_latent2map_kernel(%arg0: i32, %arg1: memref<2x32xf32, #tpu.memory_space<vmem>>, %arg2: memref<32x16384xbf16, #tpu.memory_space<vmem>>, %arg3: memref<1x16384xf32, #tpu.memory_space<vmem>>, %arg4: memref<2x16384xbf16, #tpu.memory_space<vmem>>) attributes {dimension_semantics = [#tpu.dimension_semantics<parallel>], iteration_bounds = array<i64: 2>, scalar_prefetch = 0 : i64, scratch_operands = 0 : i64, tpu.core_type = #tpu.core_type<tc>, window_params = [{pipeline_mode = #tpu.pipeline_mode<synchronous>, transform_indices = @transform_0, window_bounds = array<i64: 2, 32>}, {transform_indices = @transform_1, window_bounds = array<i64: 32, 16384>}, {transform_indices = @transform_2, window_bounds = array<i64: 1, 16384>}, {transform_indices = @transform_3, window_bounds = array<i64: 2, 16384>}]} {
    %c0 = arith.constant 0 : index
    %c0_0 = arith.constant 0 : index
    %0 = vector.load %arg1[%c0, %c0_0] : memref<2x32xf32, #tpu.memory_space<vmem>>, vector<2x32xf32>
    %1 = arith.truncf %0 : vector<2x32xf32> to vector<2x32xbf16>
    %c0_1 = arith.constant 0 : index
    %c0_2 = arith.constant 0 : index
    %2 = vector.load %arg2[%c0_1, %c0_2] : memref<32x16384xbf16, #tpu.memory_space<vmem>>, vector<32x16384xbf16>
    %cst = arith.constant dense<0.000000e+00> : vector<2x16384xf32>
    %3 = tpu.matmul %1, %2, %cst {dimension_numbers = #tpu.dot_dimension_numbers<[1], [0], [0], [1], [0, 0, 1, 1], [], []>} : vector<2x32xbf16>, vector<32x16384xbf16>, vector<2x16384xf32> -> vector<2x16384xf32>
    %c0_3 = arith.constant 0 : index
    %c0_4 = arith.constant 0 : index
    %4 = vector.load %arg3[%c0_3, %c0_4] : memref<1x16384xf32, #tpu.memory_space<vmem>>, vector<1x16384xf32>
    %5 = vector.broadcast %4 : vector<1x16384xf32> to vector<2x16384xf32>
    %6 = arith.addf %3, %5 : vector<2x16384xf32>
    %7 = arith.truncf %6 : vector<2x16384xf32> to vector<2x16384xbf16>
    %c0_5 = arith.constant 0 : index
    %c0_6 = arith.constant 0 : index
    %8 = vector.load %arg4[%c0_5, %c0_6] : memref<2x16384xbf16, #tpu.memory_space<vmem>>, vector<2x16384xbf16>
    tpu.vector_store %arg4[%c0_5, %c0_6], %7 {strides = array<i32>} : memref<2x16384xbf16, #tpu.memory_space<vmem>>, vector<2x16384xbf16>,
    return
  }
  func.func @transform_0(%arg0: i32) -> (i32, i32) {
    %c0_i32 = arith.constant 0 : i32
    %c0_i32_0 = arith.constant 0 : i32
    %c0_i32_1 = arith.constant 0 : i32
    return %c0_i32, %c0_i32_0 : i32, i32
  }
  func.func @transform_1(%arg0: i32) -> (i32, i32) {
    %c0_i32 = arith.constant 0 : i32
    %c0_i32_0 = arith.constant 0 : i32
    return %c0_i32, %arg0 : i32, i32
  }
  func.func @transform_2(%arg0: i32) -> (i32, i32) {
    %c0_i32 = arith.constant 0 : i32
    %c0_i32_0 = arith.constant 0 : i32
    return %c0_i32, %arg0 : i32, i32
  }
  func.func @transform_3(%arg0: i32) -> (i32, i32) {
    %c0_i32 = arith.constant 0 : i32
    %c0_i32_0 = arith.constant 0 : i32
    return %c0_i32, %arg0 : i32, i32
  }
}

</mosaic_0001>

<llo_original>
// kernel: decoder_forward.3
$region0: #{decoder_forward.3}
  #allocation0 [shape = 'u32[]', space=smem, size = 0x4, offset = 0x4, fixed_abs, tag = 'smem constant byte address 0x4 - core index']
  #allocation1 [shape = 'u32[144,128]{1,0:T(1,128)}', space=vmem, size = 0x12000, scoped, tag = 'internal scratch']
  #allocation2 [shape = 'bf16[256,128]{1,0:T(16,128)(2,1)}', space=vmem, size = 0x10000, scoped, tag = 'scratch operand']
  %s0 = inlined_call_operand.vmem [shape: bf16[2,256,128], index: 0, kind: input, shape index: {}]
  %s1 = inlined_call_operand.hbm [shape: bf16[1152,128], index: 1, kind: input, shape index: {}]
  %s2 = inlined_call_operand.hbm [shape: f32[1,128], index: 2, kind: input, shape index: {}]
  %s3 = inlined_call_operand.hbm [shape: bf16[128,768], index: 3, kind: input, shape index: {}]
  %s4 = inlined_call_operand.hbm [shape: f32[1,768], index: 4, kind: input, shape index: {}]
  %s5 = inlined_call_operand.vmem [shape: bf16[2,256,768], index: 5, kind: output, shape index: {}]
  %s6 = sld [smem:[#allocation0]]
  $region69: #{decoder_forward.3} parent=0
    _
  %s8 = ssub.s32 1, %s6
  %s9 = scalar_select 0, %s8, %s6
  $region1: #{decoder_forward.3} parent=0
    #allocation3 [shape = 'u8[294912]{0}', space=vmem, size = 0x48000, scoped, tag = 'input window, operand 1, single buffered']
    #allocation4 [shape = 's32[2]{0}', space=sflag, size = 0x8, scoped, tag = 'scoped memory for decoder_forward.3']
    #allocation5 [shape = 'u8[512]{0}', space=vmem, size = 0x400, scoped, tag = 'input window, operand 2, single buffered']
    #allocation6 [shape = 's32[1]{0}', space=sflag, size = 0x4, scoped, tag = 'scoped memory for decoder_forward.3']
    #allocation7 [shape = 'u8[196608]{0}', space=vmem, size = 0x30000, scoped, tag = 'input window, operand 3, single buffered']
    #allocation8 [shape = 'u8[3072]{0}', space=vmem, size = 0xc00, scoped, tag = 'input window, operand 4, single buffered']
    #allocation9 [shape = 's32[1]{0}', space=sflag, size = 0x4, scoped, tag = 'scoped memory for decoder_forward.3']
    %10 = vsyncpa [#allocation4], 0
    %11 = vsyncpa [#allocation6], 0
    %12 = vsyncpa [#allocation9], 0
    loop: start=0, step=1, limit=6
    $region2: #{decoder_forward.3} parent=1 // loop_pre_header
      _
    $region3: #{decoder_forward.3} parent=1 // loop_header
      %s14 = sphi 0, %s18
      %p15 = scmp.ge.s32.totalorder %s14, 6
      %s21 = sphi 0, %s33
      %s22 = sphi 0, %s29
      %s23 = sphi 0, %s21
      %s24 = sphi 0, %s22
      %s25 = sphi 0, %s23
      %s26 = sphi 0, %s24
      %s36 = sphi 0, %s38
      %s39 = sphi 0, %s36
      %s40 = sphi 0, %s39
      %s56 = sphi 0, %s40
      %s60 = sphi 0, %s60
      %s62 = sphi 0, %s60
      %s63 = sphi 0, %s62
      %s77 = sphi 0, %s63
      %s81 = sphi 0, %s81
      %s83 = sphi 0, %s81
      %s84 = sphi 0, %s83
      %s98 = sphi 0, %s84
      %s102 = sphi 0, %s102
      %s104 = sphi 0, %s102
      %s105 = sphi 0, %s104
      %s119 = sphi 0, %s105
      %s123 = sphi 0, %s123
      %s125 = sphi 0, %s123
      %s126 = sphi 0, %s125
      %s140 = sphi 0, %s126
      %s148 = sphi 0, %s150
      %s151 = sphi 0, %s148
      %s152 = sphi 0, %s151
      %s168 = sphi 0, %s152
    $region4: #{decoder_forward.3} parent=1 // loop_header_branch
      %17 = sbr.rel (%p15) target = $region8
    $region5: #{decoder_forward.3} parent=1 // loop_body
      %s19 = ssub.s32 %s14, 1
      %s20 = ssub.s32 %s14, 2
      %s27 = sadd.s32 1, %s22
      %p28 = scmp.ge.s32.totalorder %s27, 2
      %s29 = scalar_select %p28, 0, %s27
      %s30 = sadd.s32 1, %s21
      %s31 = scalar_select %p28, %s30, %s21
      %p32 = scmp.ge.s32.totalorder %s31, 2
      %s33 = scalar_select %p32, 0, %s31
      %s34 = ssub.s32 %s21, %s33
      %p35 = scmp.eq.s32.totalorder %s34, 0
      %s37 = sadd.s32 %s36, 1
      %s38 = scalar_select %p35, %s36, %s37
      %p41 = pneg %p35
      %p42 = scmp.eq.s32.totalorder %s14, 3
      %p43 = por %p41, %p42
      %p44 = scmp.ne.s32.totalorder %s36, %s39
      %p45 = scmp.eq.s32.totalorder %s14, 0
      %p46 = por %p44, %p45
      %p47 = scmp.ne.s32.totalorder %s36, %s39
      %p48 = scmp.eq.s32.totalorder %s19, 3
      %p49 = por %p47, %p48
      %p50 = scmp.ne.s32.totalorder %s39, %s40
      %p51 = scmp.eq.s32.totalorder %s19, 0
      %p52 = por %p50, %p51
      %p53 = scmp.ne.s32.totalorder %s39, %s40
      %p54 = scmp.eq.s32.totalorder %s20, 3
      %p55 = por %p53, %p54
      %p57 = scmp.ne.s32.totalorder %s40, %s56
      %p58 = scmp.eq.s32.totalorder %s20, 0
      %p59 = por %p57, %p58
      %s61 = sadd.s32 %s60, 1
      %p64 = scmp.eq.s32.totalorder %s14, 3
      %p65 = scmp.ne.s32.totalorder %s60, %s62
      %p66 = scmp.eq.s32.totalorder %s14, 0
      %p67 = por %p65, %p66
      %p68 = scmp.ne.s32.totalorder %s60, %s62
      %p69 = scmp.eq.s32.totalorder %s19, 3
      %p70 = por %p68, %p69
      %p71 = scmp.ne.s32.totalorder %s62, %s63
      %p72 = scmp.eq.s32.totalorder %s19, 0
      %p73 = por %p71, %p72
      %p74 = scmp.ne.s32.totalorder %s62, %s63
      %p75 = scmp.eq.s32.totalorder %s20, 3
      %p76 = por %p74, %p75
      %p78 = scmp.ne.s32.totalorder %s63, %s77
      %p79 = scmp.eq.s32.totalorder %s20, 0
      %p80 = por %p78, %p79
      %s82 = sadd.s32 %s81, 1
      %p85 = scmp.eq.s32.totalorder %s14, 3
      %p86 = scmp.ne.s32.totalorder %s81, %s83
      %p87 = scmp.eq.s32.totalorder %s14, 0
      %p88 = por %p86, %p87
      %p89 = scmp.ne.s32.totalorder %s81, %s83
      %p90 = scmp.eq.s32.totalorder %s19, 3
      %p91 = por %p89, %p90
      %p92 = scmp.ne.s32.totalorder %s83, %s84
      %p93 = scmp.eq.s32.totalorder %s19, 0
      %p94 = por %p92, %p93
      %p95 = scmp.ne.s32.totalorder %s83, %s84
      %p96 = scmp.eq.s32.totalorder %s20, 3
      %p97 = por %p95, %p96
      %p99 = scmp.ne.s32.totalorder %s84, %s98
      %p100 = scmp.eq.s32.totalorder %s20, 0
      %p101 = por %p99, %p100
      %s103 = sadd.s32 %s102, 1
      %p106 = scmp.eq.s32.totalorder %s14, 3
      %p107 = scmp.ne.s32.totalorder %s102, %s104
      %p108 = scmp.eq.s32.totalorder %s14, 0
      %p109 = por %p107, %p108
      %p110 = scmp.ne.s32.totalorder %s102, %s104
      %p111 = scmp.eq.s32.totalorder %s19, 3
      %p112 = por %p110, %p111
      %p113 = scmp.ne.s32.totalorder %s104, %s105
      %p114 = scmp.eq.s32.totalorder %s19, 0
      %p115 = por %p113, %p114
      %p116 = scmp.ne.s32.totalorder %s104, %s105
      %p117 = scmp.eq.s32.totalorder %s20, 3
      %p118 = por %p116, %p117
      %p120 = scmp.ne.s32.totalorder %s105, %s119
      %p121 = scmp.eq.s32.totalorder %s20, 0
      %p122 = por %p120, %p121
      %s124 = sadd.s32 %s123, 1
      %p127 = scmp.eq.s32.totalorder %s14, 3
      %p128 = scmp.ne.s32.totalorder %s123, %s125
      %p129 = scmp.eq.s32.totalorder %s14, 0
      %p130 = por %p128, %p129
      %p131 = scmp.ne.s32.totalorder %s123, %s125
      %p132 = scmp.eq.s32.totalorder %s19, 3
      %p133 = por %p131, %p132
      %p134 = scmp.ne.s32.totalorder %s125, %s126
      %p135 = scmp.eq.s32.totalorder %s19, 0
      %p136 = por %p134, %p135
      %p137 = scmp.ne.s32.totalorder %s125, %s126
      %p138 = scmp.eq.s32.totalorder %s20, 3
      %p139 = por %p137, %p138
      %p141 = scmp.ne.s32.totalorder %s126, %s140
      %p142 = scmp.eq.s32.totalorder %s20, 0
      %p143 = por %p141, %p142
      %s144 = ssub.s32 %s21, %s33
      %s145 = ssub.s32 %s22, %s29
      %s146 = sor.u32 %s144, %s145
      %p147 = scmp.eq.s32.totalorder %s146, 0
      %s149 = sadd.s32 %s148, 1
      %s150 = scalar_select %p147, %s148, %s149
      %p153 = pneg %p147
      %p154 = scmp.eq.s32.totalorder %s14, 3
      %p155 = por %p153, %p154
      %p156 = scmp.ne.s32.totalorder %s148, %s151
      %p157 = scmp.eq.s32.totalorder %s14, 0
      %p158 = por %p156, %p157
      %p159 = scmp.ne.s32.totalorder %s148, %s151
      %p160 = scmp.eq.s32.totalorder %s19, 3
      %p161 = por %p159, %p160
      %p162 = scmp.ne.s32.totalorder %s151, %s152
      %p163 = scmp.eq.s32.totalorder %s19, 0
      %p164 = por %p162, %p163
      %p165 = scmp.ne.s32.totalorder %s151, %s152
      %p166 = scmp.eq.s32.totalorder %s20, 3
      %p167 = por %p165, %p166
      %p169 = scmp.ne.s32.totalorder %s152, %s168
      %p170 = scmp.eq.s32.totalorder %s20, 0
      %p171 = por %p169, %p170
      %p172 = scmp.le.s32.totalorder 1, %s14
      %p173 = scmp.lt.s32.totalorder %s14, 5
      %p174 = pnand %p172, %p173
      %p175 = pneg %p174
      // Predicated region
      $region9: #{decoder_forward.3} parent=5 // pred_check
        _
      $region10: #{decoder_forward.3} parent=5 // pred_check_branch
        %177 = sbr.rel (%p174) target = $region12
      $region11: #{decoder_forward.3} parent=5 // pred_region
        %s178 = ssub.s32 %s14, 1
        // Predicated region
        $region13: #{decoder_forward.3} parent=11 // pred_check
          %p179 = pneg %p73
        $region14: #{decoder_forward.3} parent=11 // pred_check_branch
          %181 = sbr.rel (%p179) target = $region16
        $region15: #{decoder_forward.3} parent=11 // pred_region
          %s183 = ssub.s32 9216, 9216
          %184 = vsyncadd [#allocation4], %s183
          %s185 = sshll.u32 [#allocation3], 4
          %s186 = int_to_ptr.vmem [resolvable:$true] %s185
          %191 = dma.hbm_to_vmem [thread:$0]  %s1, 9216, %s186, [#allocation4], 64, 64, 4
        $region16: #{decoder_forward.3} parent=11 // pred_fallthru
          _
        // Predicated region
        $region17: #{decoder_forward.3} parent=11 // pred_check
          %p192 = pneg %p94
        $region18: #{decoder_forward.3} parent=11 // pred_check_branch
          %194 = sbr.rel (%p192) target = $region20
        $region19: #{decoder_forward.3} parent=11 // pred_region
          %s196 = ssub.s32 16, 16
          %197 = vsyncadd [#allocation6], %s196
          %s199 = sshll.u32 [#allocation5], 4
          %s200 = int_to_ptr.vmem [resolvable:$true] %s199
          %202 = dma.hbm_to_vmem [thread:$0]  %s2, 16, %s200, [#allocation6]
        $region20: #{decoder_forward.3} parent=11 // pred_fallthru
          _
        // Predicated region
        $region21: #{decoder_forward.3} parent=11 // pred_check
          %p203 = pneg %p115
        $region22: #{decoder_forward.3} parent=11 // pred_check_branch
          %205 = sbr.rel (%p203) target = $region24
        $region23: #{decoder_forward.3} parent=11 // pred_region
          %s207 = ssub.s32 6144, 6144
          %208 = vsyncadd [#allocation6], %s207
          %s209 = sshll.u32 [#allocation7], 4
          %s210 = int_to_ptr.vmem [resolvable:$true] %s209
          %215 = dma.hbm_to_vmem [thread:$0]  %s3, 6144, %s210, [#allocation6], 384, 384, 24
        $region24: #{decoder_forward.3} parent=11 // pred_fallthru
          _
        // Predicated region
        $region25: #{decoder_forward.3} parent=11 // pred_check
          %p216 = pneg %p136
        $region26: #{decoder_forward.3} parent=11 // pred_check_branch
          %218 = sbr.rel (%p216) target = $region28
        $region27: #{decoder_forward.3} parent=11 // pred_region
          %s220 = ssub.s32 96, 96
          %221 = vsyncadd [#allocation9], %s220
          %s223 = sshll.u32 [#allocation8], 4
          %s224 = int_to_ptr.vmem [resolvable:$true] %s223
          %226 = dma.hbm_to_vmem [thread:$0]  %s4, 96, %s224, [#allocation9]
        $region28: #{decoder_forward.3} parent=11 // pred_fallthru
          _
      $region12: #{decoder_forward.3} parent=5 // pred_fallthru
        _
      %p227 = scmp.lt.s32.totalorder %s14, 4
      // Predicated region
      $region29: #{decoder_forward.3} parent=5 // pred_check
        %p228 = pneg %p227
      $region30: #{decoder_forward.3} parent=5 // pred_check_branch
        %230 = sbr.rel (%p228) target = $region32
      $region31: #{decoder_forward.3} parent=5 // pred_region
        // Predicated region
        $region33: #{decoder_forward.3} parent=31 // pred_check
          %p231 = pneg %p46
        $region34: #{decoder_forward.3} parent=31 // pred_check_branch
          %233 = sbr.rel (%p231) target = $region36
        $region35: #{decoder_forward.3} parent=31 // pred_region
          %p234 = scmp.lt.s32.totalorder %s21, 1
          %s235 = scalar_select %p234, %s21, 1
          %s236 = smul.addr %s235, 32
          %s237 = smul.addr %s236, 4
          %s238 = scalar_lea.vmem %s0, %s237
        $region36: #{decoder_forward.3} parent=31 // pred_fallthru
          _
      $region32: #{decoder_forward.3} parent=5 // pred_fallthru
        _
      %p239 = scmp.le.s32.totalorder 1, %s14
      %p240 = scmp.lt.s32.totalorder %s14, 5
      %p241 = pnand %p239, %p240
      %p242 = pneg %p241
      // Predicated region
      $region37: #{decoder_forward.3} parent=5 // pred_check
        _
      $region38: #{decoder_forward.3} parent=5 // pred_check_branch
        %244 = sbr.rel (%p241) target = $region40
      $region39: #{decoder_forward.3} parent=5 // pred_region
        %s245 = ssub.s32 %s14, 1
        // Predicated region
        $region41: #{decoder_forward.3} parent=39 // pred_check
          %p246 = pneg %p73
        $region42: #{decoder_forward.3} parent=39 // pred_check_branch
          %248 = sbr.rel (%p246) target = $region44
        $region43: #{decoder_forward.3} parent=39 // pred_region
          %249 = dma.done [#allocation4], 9216
        $region44: #{decoder_forward.3} parent=39 // pred_fallthru
          _
        // Predicated region
        $region45: #{decoder_forward.3} parent=39 // pred_check
          %p250 = pneg %p94
        $region46: #{decoder_forward.3} parent=39 // pred_check_branch
          %252 = sbr.rel (%p250) target = $region48
        $region47: #{decoder_forward.3} parent=39 // pred_region
          %253 = dma.done [#allocation6], 16
        $region48: #{decoder_forward.3} parent=39 // pred_fallthru
          _
        // Predicated region
        $region49: #{decoder_forward.3} parent=39 // pred_check
          %p254 = pneg %p115
        $region50: #{decoder_forward.3} parent=39 // pred_check_branch
          %256 = sbr.rel (%p254) target = $region52
        $region51: #{decoder_forward.3} parent=39 // pred_region
          %257 = dma.done [#allocation6], 6144
        $region52: #{decoder_forward.3} parent=39 // pred_fallthru
          _
        // Predicated region
        $region53: #{decoder_forward.3} parent=39 // pred_check
          %p258 = pneg %p136
        $region54: #{decoder_forward.3} parent=39 // pred_check_branch
          %260 = sbr.rel (%p258) target = $region56
        $region55: #{decoder_forward.3} parent=39 // pred_region
          %261 = dma.done [#allocation9], 96
        $region56: #{decoder_forward.3} parent=39 // pred_fallthru
          _
        %p262 = scmp.lt.s32.totalorder %s23, 1
        %s263 = scalar_select %p262, %s23, 1
        %s264 = smul.addr %s263, 32
        %s265 = smul.addr %s264, 4
        %s266 = scalar_lea.vmem %s0, %s265
        %p267 = pneg %p52
        %p268 = pneg %p49
        %p269 = pneg %p73
        %p270 = pneg %p70
        %p271 = pneg %p94
        %p272 = pneg %p91
        %p273 = pneg %p115
        %p274 = pneg %p112
        %p275 = pneg %p136
        %p276 = pneg %p133
        %p277 = pneg %p164
        %p278 = pneg %p161
        %s279 = smul.u32 16, %s24
        %p280 = scmp.lt.s32.totalorder %s23, 1
        %s281 = scalar_select %p280, %s23, 1
        %p282 = scmp.lt.s32.totalorder %s279, 31
        %s283 = scalar_select %p282, %s279, 31
        %s284 = smul.addr %s283, 6
        %s285 = smul.addr %s281, 192
        %s286 = sadd.s32 %s284, %s285
        %s287 = smul.addr %s286, 4
        %s288 = scalar_lea.vmem %s5, %s287
        %p289 = scmp.lt.s32.totalorder %s23, 1
        %s290 = scalar_select %p289, %s23, 1
        %s291 = smul.addr %s290, 32
        %s292 = smul.addr %s291, 4
        %s293 = scalar_lea.vmem %s0, %s292
        %s294 = smul.u32 16, %s24
        %p295 = scmp.lt.s32.totalorder %s23, 1
        %s296 = scalar_select %p295, %s23, 1
        %p297 = scmp.lt.s32.totalorder %s294, 31
        %s298 = scalar_select %p297, %s294, 31
        %s299 = smul.addr %s298, 6
        %s300 = smul.addr %s296, 192
        %s301 = sadd.s32 %s299, %s300
        %s302 = smul.addr %s301, 4
        %s303 = scalar_lea.vmem %s5, %s302
        %s304 = smul.u32 16, %s24
        %v306 = vlaneseq
        %v307 = vshrl.u32 %v306, 7
        %v308 = vadd.s32 %v307, 8
        %v309 = vadd.s32 %v307, 16
        %v310 = vadd.s32 %v307, 24
        %v311 = vadd.s32 %v307, 32
        %v312 = vadd.s32 %v307, 40
        %v313 = vadd.s32 %v307, 48
        %v314 = vadd.s32 %v307, 56
        %v315 = vadd.s32 %v307, 64
        %v316 = vadd.s32 %v307, 72
        %v317 = vadd.s32 %v307, 80
        %v318 = vadd.s32 %v307, 88
        %v319 = vadd.s32 %v307, 96
        %v320 = vadd.s32 %v307, 104
        %v321 = vadd.s32 %v307, 112
        %v322 = vadd.s32 %v307, 120
        %v323 = vadd.s32 %v307, 128
        %v324 = vadd.s32 %v307, 136
        %v325 = vadd.s32 %v307, 144
        %v326 = vadd.s32 %v307, 152
        %v327 = vadd.s32 %v307, 160
        %v328 = vadd.s32 %v307, 168
        %v329 = vadd.s32 %v307, 176
        %v330 = vadd.s32 %v307, 184
        %v331 = vadd.s32 %v307, 192
        %v332 = vadd.s32 %v307, 200
        %v333 = vadd.s32 %v307, 208
        %v334 = vadd.s32 %v307, 216
        %v335 = vadd.s32 %v307, 224
        %v336 = vadd.s32 %v307, 232
        %v337 = vadd.s32 %v307, 240
        %v338 = vadd.s32 %v307, 248
        %vm339 = vcmp.lt.s32.totalorder %v307, 0
        %v340 = vsub.s32 0, %v307
        %v341 = vsel %vm339, %v340, %v307
        %v342 = vshrl.u32 %v341, 4
        %v343 = vand.u32 %v341, 15
        %v344 = vsub.s32 0, %v343
        %v345 = vsel %vm339, %v344, %v343
        %vm346 = vcmp.lt.s32.totalorder %v308, 0
        %v347 = vsub.s32 0, %v308
        %v348 = vsel %vm346, %v347, %v308
        %v349 = vshrl.u32 %v348, 4
        %v350 = vand.u32 %v348, 15
        %v351 = vsub.s32 0, %v350
        %v352 = vsel %vm346, %v351, %v350
        %vm353 = vcmp.lt.s32.totalorder %v309, 0
        %v354 = vsub.s32 0, %v309
        %v355 = vsel %vm353, %v354, %v309
        %v356 = vshrl.u32 %v355, 4
        %v357 = vand.u32 %v355, 15
        %v358 = vsub.s32 0, %v357
        %v359 = vsel %vm353, %v358, %v357
        %vm360 = vcmp.lt.s32.totalorder %v310, 0
        %v361 = vsub.s32 0, %v310
        %v362 = vsel %vm360, %v361, %v310
        %v363 = vshrl.u32 %v362, 4
        %v364 = vand.u32 %v362, 15
        %v365 = vsub.s32 0, %v364
        %v366 = vsel %vm360, %v365, %v364
        %vm367 = vcmp.lt.s32.totalorder %v311, 0
        %v368 = vsub.s32 0, %v311
        %v369 = vsel %vm367, %v368, %v311
        %v370 = vshrl.u32 %v369, 4
        %v371 = vand.u32 %v369, 15
        %v372 = vsub.s32 0, %v371
        %v373 = vsel %vm367, %v372, %v371
        %vm374 = vcmp.lt.s32.totalorder %v312, 0
        %v375 = vsub.s32 0, %v312
        %v376 = vsel %vm374, %v375, %v312
        %v377 = vshrl.u32 %v376, 4
        %v378 = vand.u32 %v376, 15
        %v379 = vsub.s32 0, %v378
        %v380 = vsel %vm374, %v379, %v378
        %vm381 = vcmp.lt.s32.totalorder %v313, 0
        %v382 = vsub.s32 0, %v313
        %v383 = vsel %vm381, %v382, %v313
        %v384 = vshrl.u32 %v383, 4
        %v385 = vand.u32 %v383, 15
        %v386 = vsub.s32 0, %v385
        %v387 = vsel %vm381, %v386, %v385
        %vm388 = vcmp.lt.s32.totalorder %v314, 0
        %v389 = vsub.s32 0, %v314
        %v390 = vsel %vm388, %v389, %v314
        %v391 = vshrl.u32 %v390, 4
        %v392 = vand.u32 %v390, 15
        %v393 = vsub.s32 0, %v392
        %v394 = vsel %vm388, %v393, %v392
        %vm395 = vcmp.lt.s32.totalorder %v315, 0
        %v396 = vsub.s32 0, %v315
        %v397 = vsel %vm395, %v396, %v315
        %v398 = vshrl.u32 %v397, 4
        %v399 = vand.u32 %v397, 15
        %v400 = vsub.s32 0, %v399
        %v401 = vsel %vm395, %v400, %v399
        %vm402 = vcmp.lt.s32.totalorder %v316, 0
        %v403 = vsub.s32 0, %v316
        %v404 = vsel %vm402, %v403, %v316
        %v405 = vshrl.u32 %v404, 4
        %v406 = vand.u32 %v404, 15
        %v407 = vsub.s32 0, %v406
        %v408 = vsel %vm402, %v407, %v406
        %vm409 = vcmp.lt.s32.totalorder %v317, 0
        %v410 = vsub.s32 0, %v317
        %v411 = vsel %vm409, %v410, %v317
        %v412 = vshrl.u32 %v411, 4
        %v413 = vand.u32 %v411, 15
        %v414 = vsub.s32 0, %v413
        %v415 = vsel %vm409, %v414, %v413
        %vm416 = vcmp.lt.s32.totalorder %v318, 0
        %v417 = vsub.s32 0, %v318
        %v418 = vsel %vm416, %v417, %v318
        %v419 = vshrl.u32 %v418, 4
        %v420 = vand.u32 %v418, 15
        %v421 = vsub.s32 0, %v420
        %v422 = vsel %vm416, %v421, %v420
        %vm423 = vcmp.lt.s32.totalorder %v319, 0
        %v424 = vsub.s32 0, %v319
        %v425 = vsel %vm423, %v424, %v319
        %v426 = vshrl.u32 %v425, 4
        %v427 = vand.u32 %v425, 15
        %v428 = vsub.s32 0, %v427
        %v429 = vsel %vm423, %v428, %v427
        %vm430 = vcmp.lt.s32.totalorder %v320, 0
        %v431 = vsub.s32 0, %v320
        %v432 = vsel %vm430, %v431, %v320
        %v433 = vshrl.u32 %v432, 4
        %v434 = vand.u32 %v432, 15
        %v435 = vsub.s32 0, %v434
        %v436 = vsel %vm430, %v435, %v434
        %vm437 = vcmp.lt.s32.totalorder %v321, 0
        %v438 = vsub.s32 0, %v321
        %v439 = vsel %vm437, %v438, %v321
        %v440 = vshrl.u32 %v439, 4
        %v441 = vand.u32 %v439, 15
        %v442 = vsub.s32 0, %v441
        %v443 = vsel %vm437, %v442, %v441
        %vm444 = vcmp.lt.s32.totalorder %v322, 0
        %v445 = vsub.s32 0, %v322
        %v446 = vsel %vm444, %v445, %v322
        %v447 = vshrl.u32 %v446, 4
        %v448 = vand.u32 %v446, 15
        %v449 = vsub.s32 0, %v448
        %v450 = vsel %vm444, %v449, %v448
        %vm451 = vcmp.lt.s32.totalorder %v323, 0
        %v452 = vsub.s32 0, %v323
        %v453 = vsel %vm451, %v452, %v323
        %v454 = vshrl.u32 %v453, 4
        %v455 = vand.u32 %v453, 15
        %v456 = vsub.s32 0, %v455
        %v457 = vsel %vm451, %v456, %v455
        %vm458 = vcmp.lt.s32.totalorder %v324, 0
        %v459 = vsub.s32 0, %v324
        %v460 = vsel %vm458, %v459, %v324
        %v461 = vshrl.u32 %v460, 4
        %v462 = vand.u32 %v460, 15
        %v463 = vsub.s32 0, %v462
        %v464 = vsel %vm458, %v463, %v462
        %vm465 = vcmp.lt.s32.totalorder %v325, 0
        %v466 = vsub.s32 0, %v325
        %v467 = vsel %vm465, %v466, %v325
        %v468 = vshrl.u32 %v467, 4
        %v469 = vand.u32 %v467, 15
        %v470 = vsub.s32 0, %v469
        %v471 = vsel %vm465, %v470, %v469
        %vm472 = vcmp.lt.s32.totalorder %v326, 0
        %v473 = vsub.s32 0, %v326
        %v474 = vsel %vm472, %v473, %v326
        %v475 = vshrl.u32 %v474, 4
        %v476 = vand.u32 %v474, 15
        %v477 = vsub.s32 0, %v476
        %v478 = vsel %vm472, %v477, %v476
        %vm479 = vcmp.lt.s32.totalorder %v327, 0
        %v480 = vsub.s32 0, %v327
        %v481 = vsel %vm479, %v480, %v327
        %v482 = vshrl.u32 %v481, 4
        %v483 = vand.u32 %v481, 15
        %v484 = vsub.s32 0, %v483
        %v485 = vsel %vm479, %v484, %v483
        %vm486 = vcmp.lt.s32.totalorder %v328, 0
        %v487 = vsub.s32 0, %v328
        %v488 = vsel %vm486, %v487, %v328
        %v489 = vshrl.u32 %v488, 4
        %v490 = vand.u32 %v488, 15
        %v491 = vsub.s32 0, %v490
        %v492 = vsel %vm486, %v491, %v490
        %vm493 = vcmp.lt.s32.totalorder %v329, 0
        %v494 = vsub.s32 0, %v329
        %v495 = vsel %vm493, %v494, %v329
        %v496 = vshrl.u32 %v495, 4
        %v497 = vand.u32 %v495, 15
        %v498 = vsub.s32 0, %v497
        %v499 = vsel %vm493, %v498, %v497
        %vm500 = vcmp.lt.s32.totalorder %v330, 0
        %v501 = vsub.s32 0, %v330
        %v502 = vsel %vm500, %v501, %v330
        %v503 = vshrl.u32 %v502, 4
        %v504 = vand.u32 %v502, 15
        %v505 = vsub.s32 0, %v504
        %v506 = vsel %vm500, %v505, %v504
        %vm507 = vcmp.lt.s32.totalorder %v331, 0
        %v508 = vsub.s32 0, %v331
        %v509 = vsel %vm507, %v508, %v331
        %v510 = vshrl.u32 %v509, 4
        %v511 = vand.u32 %v509, 15
        %v512 = vsub.s32 0, %v511
        %v513 = vsel %vm507, %v512, %v511
        %vm514 = vcmp.lt.s32.totalorder %v332, 0
        %v515 = vsub.s32 0, %v332
        %v516 = vsel %vm514, %v515, %v332
        %v517 = vshrl.u32 %v516, 4
        %v518 = vand.u32 %v516, 15
        %v519 = vsub.s32 0, %v518
        %v520 = vsel %vm514, %v519, %v518
        %vm521 = vcmp.lt.s32.totalorder %v333, 0
        %v522 = vsub.s32 0, %v333
        %v523 = vsel %vm521, %v522, %v333
        %v524 = vshrl.u32 %v523, 4
        %v525 = vand.u32 %v523, 15
        %v526 = vsub.s32 0, %v525
        %v527 = vsel %vm521, %v526, %v525
        %vm528 = vcmp.lt.s32.totalorder %v334, 0
        %v529 = vsub.s32 0, %v334
        %v530 = vsel %vm528, %v529, %v334
        %v531 = vshrl.u32 %v530, 4
        %v532 = vand.u32 %v530, 15
        %v533 = vsub.s32 0, %v532
        %v534 = vsel %vm528, %v533, %v532
        %vm535 = vcmp.lt.s32.totalorder %v335, 0
        %v536 = vsub.s32 0, %v335
        %v537 = vsel %vm535, %v536, %v335
        %v538 = vshrl.u32 %v537, 4
        %v539 = vand.u32 %v537, 15
        %v540 = vsub.s32 0, %v539
        %v541 = vsel %vm535, %v540, %v539
        %vm542 = vcmp.lt.s32.totalorder %v336, 0
        %v543 = vsub.s32 0, %v336
        %v544 = vsel %vm542, %v543, %v336
        %v545 = vshrl.u32 %v544, 4
        %v546 = vand.u32 %v544, 15
        %v547 = vsub.s32 0, %v546
        %v548 = vsel %vm542, %v547, %v546
        %vm549 = vcmp.lt.s32.totalorder %v337, 0
        %v550 = vsub.s32 0, %v337
        %v551 = vsel %vm549, %v550, %v337
        %v552 = vshrl.u32 %v551, 4
        %v553 = vand.u32 %v551, 15
        %v554 = vsub.s32 0, %v553
        %v555 = vsel %vm549, %v554, %v553
        %vm556 = vcmp.lt.s32.totalorder %v338, 0
        %v557 = vsub.s32 0, %v338
        %v558 = vsel %vm556, %v557, %v338
        %v559 = vshrl.u32 %v558, 4
        %v560 = vand.u32 %v558, 15
        %v561 = vsub.s32 0, %v560
        %v562 = vsel %vm556, %v561, %v560
        %vm563 = vcmp.ne.s32.totalorder %v345, 0
        %vm564 = vcmp.ne.s32.totalorder %v352, 0
        %vm565 = vcmp.ne.s32.totalorder %v359, 0
        %vm566 = vcmp.ne.s32.totalorder %v366, 0
        %vm567 = vcmp.ne.s32.totalorder %v373, 0
        %vm568 = vcmp.ne.s32.totalorder %v380, 0
        %vm569 = vcmp.ne.s32.totalorder %v387, 0
        %vm570 = vcmp.ne.s32.totalorder %v394, 0
        %vm571 = vcmp.ne.s32.totalorder %v401, 0
        %vm572 = vcmp.ne.s32.totalorder %v408, 0
        %vm573 = vcmp.ne.s32.totalorder %v415, 0
        %vm574 = vcmp.ne.s32.totalorder %v422, 0
        %vm575 = vcmp.ne.s32.totalorder %v429, 0
        %vm576 = vcmp.ne.s32.totalorder %v436, 0
        %vm577 = vcmp.ne.s32.totalorder %v443, 0
        %vm578 = vcmp.ne.s32.totalorder %v450, 0
        %vm579 = vcmp.ne.s32.totalorder %v457, 0
        %vm580 = vcmp.ne.s32.totalorder %v464, 0
        %vm581 = vcmp.ne.s32.totalorder %v471, 0
        %vm582 = vcmp.ne.s32.totalorder %v478, 0
        %vm583 = vcmp.ne.s32.totalorder %v485, 0
        %vm584 = vcmp.ne.s32.totalorder %v492, 0
        %vm585 = vcmp.ne.s32.totalorder %v499, 0
        %vm586 = vcmp.ne.s32.totalorder %v506, 0
        %vm587 = vcmp.ne.s32.totalorder %v513, 0
        %vm588 = vcmp.ne.s32.totalorder %v520, 0
        %vm589 = vcmp.ne.s32.totalorder %v527, 0
        %vm590 = vcmp.ne.s32.totalorder %v534, 0
        %vm591 = vcmp.ne.s32.totalorder %v541, 0
        %vm592 = vcmp.ne.s32.totalorder %v548, 0
        %vm593 = vcmp.ne.s32.totalorder %v555, 0
        %vm594 = vcmp.ne.s32.totalorder %v562, 0
        %vm595 = vcmp.lt.s32.totalorder %v345, 0
        %vm596 = vcmp.lt.s32.totalorder %v352, 0
        %vm597 = vcmp.lt.s32.totalorder %v359, 0
        %vm598 = vcmp.lt.s32.totalorder %v366, 0
        %vm599 = vcmp.lt.s32.totalorder %v373, 0
        %vm600 = vcmp.lt.s32.totalorder %v380, 0
        %vm601 = vcmp.lt.s32.totalorder %v387, 0
        %vm602 = vcmp.lt.s32.totalorder %v394, 0
        %vm603 = vcmp.lt.s32.totalorder %v401, 0
        %vm604 = vcmp.lt.s32.totalorder %v408, 0
        %vm605 = vcmp.lt.s32.totalorder %v415, 0
        %vm606 = vcmp.lt.s32.totalorder %v422, 0
        %vm607 = vcmp.lt.s32.totalorder %v429, 0
        %vm608 = vcmp.lt.s32.totalorder %v436, 0
        %vm609 = vcmp.lt.s32.totalorder %v443, 0
        %vm610 = vcmp.lt.s32.totalorder %v450, 0
        %vm611 = vcmp.lt.s32.totalorder %v457, 0
        %vm612 = vcmp.lt.s32.totalorder %v464, 0
        %vm613 = vcmp.lt.s32.totalorder %v471, 0
        %vm614 = vcmp.lt.s32.totalorder %v478, 0
        %vm615 = vcmp.lt.s32.totalorder %v485, 0
        %vm616 = vcmp.lt.s32.totalorder %v492, 0
        %vm617 = vcmp.lt.s32.totalorder %v499, 0
        %vm618 = vcmp.lt.s32.totalorder %v506, 0
        %vm619 = vcmp.lt.s32.totalorder %v513, 0
        %vm620 = vcmp.lt.s32.totalorder %v520, 0
        %vm621 = vcmp.lt.s32.totalorder %v527, 0
        %vm622 = vcmp.lt.s32.totalorder %v534, 0
        %vm623 = vcmp.lt.s32.totalorder %v541, 0
        %vm624 = vcmp.lt.s32.totalorder %v548, 0
        %vm625 = vcmp.lt.s32.totalorder %v555, 0
        %vm626 = vcmp.lt.s32.totalorder %v562, 0
        %vm627 = vmand %vm595, %vm563
        %vm628 = vmand %vm596, %vm564
        %vm629 = vmand %vm597, %vm565
        %vm630 = vmand %vm598, %vm566
        %vm631 = vmand %vm599, %vm567
        %vm632 = vmand %vm600, %vm568
        %vm633 = vmand %vm601, %vm569
        %vm634 = vmand %vm602, %vm570
        %vm635 = vmand %vm603, %vm571
        %vm636 = vmand %vm604, %vm572
        %vm637 = vmand %vm605, %vm573
        %vm638 = vmand %vm606, %vm574
        %vm639 = vmand %vm607, %vm575
        %vm640 = vmand %vm608, %vm576
        %vm641 = vmand %vm609, %vm577
        %vm642 = vmand %vm610, %vm578
        %vm643 = vmand %vm611, %vm579
        %vm644 = vmand %vm612, %vm580
        %vm645 = vmand %vm613, %vm581
        %vm646 = vmand %vm614, %vm582
        %vm647 = vmand %vm615, %vm583
        %vm648 = vmand %vm616, %vm584
        %vm649 = vmand %vm617, %vm585
        %vm650 = vmand %vm618, %vm586
        %vm651 = vmand %vm619, %vm587
        %vm652 = vmand %vm620, %vm588
        %vm653 = vmand %vm621, %vm589
        %vm654 = vmand %vm622, %vm590
        %vm655 = vmand %vm623, %vm591
        %vm656 = vmand %vm624, %vm592
        %vm657 = vmand %vm625, %vm593
        %vm658 = vmand %vm626, %vm594
        %v659 = vadd.s32 %v345, 16
        %v660 = vadd.s32 %v352, 16
        %v661 = vadd.s32 %v359, 16
        %v662 = vadd.s32 %v366, 16
        %v663 = vadd.s32 %v373, 16
        %v664 = vadd.s32 %v380, 16
        %v665 = vadd.s32 %v387, 16
        %v666 = vadd.s32 %v394, 16
        %v667 = vadd.s32 %v401, 16
        %v668 = vadd.s32 %v408, 16
        %v669 = vadd.s32 %v415, 16
        %v670 = vadd.s32 %v422, 16
        %v671 = vadd.s32 %v429, 16
        %v672 = vadd.s32 %v436, 16
        %v673 = vadd.s32 %v443, 16
        %v674 = vadd.s32 %v450, 16
        %v675 = vadd.s32 %v457, 16
        %v676 = vadd.s32 %v464, 16
        %v677 = vadd.s32 %v471, 16
        %v678 = vadd.s32 %v478, 16
        %v679 = vadd.s32 %v485, 16
        %v680 = vadd.s32 %v492, 16
        %v681 = vadd.s32 %v499, 16
        %v682 = vadd.s32 %v506, 16
        %v683 = vadd.s32 %v513, 16
        %v684 = vadd.s32 %v520, 16
        %v685 = vadd.s32 %v527, 16
        %v686 = vadd.s32 %v534, 16
        %v687 = vadd.s32 %v541, 16
        %v688 = vadd.s32 %v548, 16
        %v689 = vadd.s32 %v555, 16
        %v690 = vadd.s32 %v562, 16
        %v691 = vsel %vm627, %v659, %v345
        %v692 = vsel %vm628, %v660, %v352
        %v693 = vsel %vm629, %v661, %v359
        %v694 = vsel %vm630, %v662, %v366
        %v695 = vsel %vm631, %v663, %v373
        %v696 = vsel %vm632, %v664, %v380
        %v697 = vsel %vm633, %v665, %v387
        %v698 = vsel %vm634, %v666, %v394
        %v699 = vsel %vm635, %v667, %v401
        %v700 = vsel %vm636, %v668, %v408
        %v701 = vsel %vm637, %v669, %v415
        %v702 = vsel %vm638, %v670, %v422
        %v703 = vsel %vm639, %v671, %v429
        %v704 = vsel %vm640, %v672, %v436
        %v705 = vsel %vm641, %v673, %v443
        %v706 = vsel %vm642, %v674, %v450
        %v707 = vsel %vm643, %v675, %v457
        %v708 = vsel %vm644, %v676, %v464
        %v709 = vsel %vm645, %v677, %v471
        %v710 = vsel %vm646, %v678, %v478
        %v711 = vsel %vm647, %v679, %v485
        %v712 = vsel %vm648, %v680, %v492
        %v713 = vsel %vm649, %v681, %v499
        %v714 = vsel %vm650, %v682, %v506
        %v715 = vsel %vm651, %v683, %v513
        %v716 = vsel %vm652, %v684, %v520
        %v717 = vsel %vm653, %v685, %v527
        %v718 = vsel %vm654, %v686, %v534
        %v719 = vsel %vm655, %v687, %v541
        %v720 = vsel %vm656, %v688, %v548
        %v721 = vsel %vm657, %v689, %v555
        %v722 = vsel %vm658, %v690, %v562
        %v723 = vld [vmem:[%s293] sm:$0xf]
        %v724 = vld [vmem:[%s293 + $0x4] sm:$0xf]
        %v725 = vld [vmem:[%s293 + $0x8] sm:$0xf]
        %v726 = vld [vmem:[%s293 + $0xc] sm:$0xf]
        %v727 = vld [vmem:[%s293 + $0x10] sm:$0xf]
        %v728 = vld [vmem:[%s293 + $0x14] sm:$0xf]
        %v729 = vld [vmem:[%s293 + $0x18] sm:$0xf]
        %v730 = vld [vmem:[%s293 + $0x1c] sm:$0xf]
        %v731 = vld [vmem:[%s293 + $0x20] sm:$0xf]
        %v732 = vld [vmem:[%s293 + $0x24] sm:$0xf]
        %v733 = vld [vmem:[%s293 + $0x28] sm:$0xf]
        %v734 = vld [vmem:[%s293 + $0x2c] sm:$0xf]
        %v735 = vld [vmem:[%s293 + $0x30] sm:$0xf]
        %v736 = vld [vmem:[%s293 + $0x34] sm:$0xf]
        %v737 = vld [vmem:[%s293 + $0x38] sm:$0xf]
        %v738 = vld [vmem:[%s293 + $0x3c] sm:$0xf]
        %v739 = vld [vmem:[%s293 + $0x40] sm:$0xf]
        %v740 = vld [vmem:[%s293 + $0x44] sm:$0xf]
        %v741 = vld [vmem:[%s293 + $0x48] sm:$0xf]
        %v742 = vld [vmem:[%s293 + $0x4c] sm:$0xf]
        %v743 = vld [vmem:[%s293 + $0x50] sm:$0xf]
        %v744 = vld [vmem:[%s293 + $0x54] sm:$0xf]
        %v745 = vld [vmem:[%s293 + $0x58] sm:$0xf]
        %v746 = vld [vmem:[%s293 + $0x5c] sm:$0xf]
        %v747 = vld [vmem:[%s293 + $0x60] sm:$0xf]
        %v748 = vld [vmem:[%s293 + $0x64] sm:$0xf]
        %v749 = vld [vmem:[%s293 + $0x68] sm:$0xf]
        %v750 = vld [vmem:[%s293 + $0x6c] sm:$0xf]
        %v751 = vld [vmem:[%s293 + $0x70] sm:$0xf]
        %v752 = vld [vmem:[%s293 + $0x74] sm:$0xf]
        %v753 = vld [vmem:[%s293 + $0x78] sm:$0xf]
        %v754 = vld [vmem:[%s293 + $0x7c] sm:$0xf]
        %v755 = vunpack.c.l.bf16 %v723
        %v756 = vunpack.c.l.bf16 %v724
        %v757 = vunpack.c.l.bf16 %v725
        %v758 = vunpack.c.l.bf16 %v726
        %v759 = vunpack.c.l.bf16 %v727
        %v760 = vunpack.c.l.bf16 %v728
        %v761 = vunpack.c.l.bf16 %v729
        %v762 = vunpack.c.l.bf16 %v730
        %v763 = vunpack.c.l.bf16 %v731
        %v764 = vunpack.c.l.bf16 %v732
        %v765 = vunpack.c.l.bf16 %v733
        %v766 = vunpack.c.l.bf16 %v734
        %v767 = vunpack.c.l.bf16 %v735
        %v768 = vunpack.c.l.bf16 %v736
        %v769 = vunpack.c.l.bf16 %v737
        %v770 = vunpack.c.l.bf16 %v738
        %v771 = vunpack.c.l.bf16 %v739
        %v772 = vunpack.c.l.bf16 %v740
        %v773 = vunpack.c.l.bf16 %v741
        %v774 = vunpack.c.l.bf16 %v742
        %v775 = vunpack.c.l.bf16 %v743
        %v776 = vunpack.c.l.bf16 %v744
        %v777 = vunpack.c.l.bf16 %v745
        %v778 = vunpack.c.l.bf16 %v746
        %v779 = vunpack.c.l.bf16 %v747
        %v780 = vunpack.c.l.bf16 %v748
        %v781 = vunpack.c.l.bf16 %v749
        %v782 = vunpack.c.l.bf16 %v750
        %v783 = vunpack.c.l.bf16 %v751
        %v784 = vunpack.c.l.bf16 %v752
        %v785 = vunpack.c.l.bf16 %v753
        %v786 = vunpack.c.l.bf16 %v754
        %vm787 = vcmp.lt.s32.totalorder %v691, 15
        %vm788 = vcmp.lt.s32.totalorder %v692, 15
        %vm789 = vcmp.lt.s32.totalorder %v693, 15
        %vm790 = vcmp.lt.s32.totalorder %v694, 15
        %vm791 = vcmp.lt.s32.totalorder %v695, 15
        %vm792 = vcmp.lt.s32.totalorder %v696, 15
        %vm793 = vcmp.lt.s32.totalorder %v697, 15
        %vm794 = vcmp.lt.s32.totalorder %v698, 15
        %vm795 = vcmp.lt.s32.totalorder %v699, 15
        %vm796 = vcmp.lt.s32.totalorder %v700, 15
        %vm797 = vcmp.lt.s32.totalorder %v701, 15
        %vm798 = vcmp.lt.s32.totalorder %v702, 15
        %vm799 = vcmp.lt.s32.totalorder %v703, 15
        %vm800 = vcmp.lt.s32.totalorder %v704, 15
        %vm801 = vcmp.lt.s32.totalorder %v705, 15
        %vm802 = vcmp.lt.s32.totalorder %v706, 15
        %vm803 = vcmp.lt.s32.totalorder %v707, 15
        %vm804 = vcmp.lt.s32.totalorder %v708, 15
        %vm805 = vcmp.lt.s32.totalorder %v709, 15
        %vm806 = vcmp.lt.s32.totalorder %v710, 15
        %vm807 = vcmp.lt.s32.totalorder %v711, 15
        %vm808 = vcmp.lt.s32.totalorder %v712, 15
        %vm809 = vcmp.lt.s32.totalorder %v713, 15
        %vm810 = vcmp.lt.s32.totalorder %v714, 15
        %vm811 = vcmp.lt.s32.totalorder %v715, 15
        %vm812 = vcmp.lt.s32.totalorder %v716, 15
        %vm813 = vcmp.lt.s32.totalorder %v717, 15
        %vm814 = vcmp.lt.s32.totalorder %v718, 15
        %vm815 = vcmp.lt.s32.totalorder %v719, 15
        %vm816 = vcmp.lt.s32.totalorder %v720, 15
        %vm817 = vcmp.lt.s32.totalorder %v721, 15
        %vm818 = vcmp.lt.s32.totalorder %v722, 15
        %v819 = vrot.slane %v755, 1
        %v820 = vrot.slane %v756, 1
        %v821 = vrot.slane %v757, 1
        %v822 = vrot.slane %v758, 1
        %v823 = vrot.slane %v759, 1
        %v824 = vrot.slane %v760, 1
        %v825 = vrot.slane %v761, 1
        %v826 = vrot.slane %v762, 1
        %v827 = vrot.slane %v763, 1
        %v828 = vrot.slane %v764, 1
        %v829 = vrot.slane %v765, 1
        %v830 = vrot.slane %v766, 1
        %v831 = vrot.slane %v767, 1
        %v832 = vrot.slane %v768, 1
        %v833 = vrot.slane %v769, 1
        %v834 = vrot.slane %v770, 1
        %v835 = vrot.slane %v771, 1
        %v836 = vrot.slane %v772, 1
        %v837 = vrot.slane %v773, 1
        %v838 = vrot.slane %v774, 1
        %v839 = vrot.slane %v775, 1
        %v840 = vrot.slane %v776, 1
        %v841 = vrot.slane %v777, 1
        %v842 = vrot.slane %v778, 1
        %v843 = vrot.slane %v779, 1
        %v844 = vrot.slane %v780, 1
        %v845 = vrot.slane %v781, 1
        %v846 = vrot.slane %v782, 1
        %v847 = vrot.slane %v783, 1
        %v848 = vrot.slane %v784, 1
        %v849 = vrot.slane %v785, 1
        %v850 = vrot.slane %v786, 1
        %vm851 = vcmp.lt.s32.totalorder %v307, 7
        %v852 = vsel %vm851, %v849, %v850
        %v853 = vsel %vm851, %v848, %v849
        %v854 = vsel %vm851, %v847, %v848
        %v855 = vsel %vm851, %v846, %v847
        %v856 = vsel %vm851, %v845, %v846
        %v857 = vsel %vm851, %v844, %v845
        %v858 = vsel %vm851, %v843, %v844
        %v859 = vsel %vm851, %v842, %v843
        %v860 = vsel %vm851, %v841, %v842
        %v861 = vsel %vm851, %v840, %v841
        %v862 = vsel %vm851, %v839, %v840
        %v863 = vsel %vm851, %v838, %v839
        %v864 = vsel %vm851, %v837, %v838
        %v865 = vsel %vm851, %v836, %v837
        %v866 = vsel %vm851, %v835, %v836
        %v867 = vsel %vm851, %v834, %v835
        %v868 = vsel %vm851, %v833, %v834
        %v869 = vsel %vm851, %v832, %v833
        %v870 = vsel %vm851, %v831, %v832
        %v871 = vsel %vm851, %v830, %v831
        %v872 = vsel %vm851, %v829, %v830
        %v873 = vsel %vm851, %v828, %v829
        %v874 = vsel %vm851, %v827, %v828
        %v875 = vsel %vm851, %v826, %v827
        %v876 = vsel %vm851, %v825, %v826
        %v877 = vsel %vm851, %v824, %v825
        %v878 = vsel %vm851, %v823, %v824
        %v879 = vsel %vm851, %v822, %v823
        %v880 = vsel %vm851, %v821, %v822
        %v881 = vsel %vm851, %v820, %v821
        %v882 = vsel %vm851, %v819, %v820
        %v883 = vsel %vm851, %v850, %v819
        %v884 = vsel %vm787, 1, 0
        %v885 = vsel %vm788, 1, 0
        %v886 = vsel %vm789, 1, 0
        %v887 = vsel %vm790, 1, 0
        %v888 = vsel %vm791, 1, 0
        %v889 = vsel %vm792, 1, 0
        %v890 = vsel %vm793, 1, 0
        %v891 = vsel %vm794, 1, 0
        %v892 = vsel %vm795, 1, 0
        %v893 = vsel %vm796, 1, 0
        %v894 = vsel %vm797, 1, 0
        %v895 = vsel %vm798, 1, 0
        %v896 = vsel %vm799, 1, 0
        %v897 = vsel %vm800, 1, 0
        %v898 = vsel %vm801, 1, 0
        %v899 = vsel %vm802, 1, 0
        %v900 = vsel %vm803, 1, 0
        %v901 = vsel %vm804, 1, 0
        %v902 = vsel %vm805, 1, 0
        %v903 = vsel %vm806, 1, 0
        %v904 = vsel %vm807, 1, 0
        %v905 = vsel %vm808, 1, 0
        %v906 = vsel %vm809, 1, 0
        %v907 = vsel %vm810, 1, 0
        %v908 = vsel %vm811, 1, 0
        %v909 = vsel %vm812, 1, 0
        %v910 = vsel %vm813, 1, 0
        %v911 = vsel %vm814, 1, 0
        %v912 = vsel %vm815, 1, 0
        %v913 = vsel %vm816, 1, 0
        %v914 = vsel %vm817, 1, 0
        %v915 = vsel %vm818, 1, 0
        %vm916 = vcmp.eq.s32.totalorder %v884, 1
        %vm917 = vcmp.eq.s32.totalorder %v885, 1
        %vm918 = vcmp.eq.s32.totalorder %v886, 1
        %vm919 = vcmp.eq.s32.totalorder %v887, 1
        %vm920 = vcmp.eq.s32.totalorder %v888, 1
        %vm921 = vcmp.eq.s32.totalorder %v889, 1
        %vm922 = vcmp.eq.s32.totalorder %v890, 1
        %vm923 = vcmp.eq.s32.totalorder %v891, 1
        %vm924 = vcmp.eq.s32.totalorder %v892, 1
        %vm925 = vcmp.eq.s32.totalorder %v893, 1
        %vm926 = vcmp.eq.s32.totalorder %v894, 1
        %vm927 = vcmp.eq.s32.totalorder %v895, 1
        %vm928 = vcmp.eq.s32.totalorder %v896, 1
        %vm929 = vcmp.eq.s32.totalorder %v897, 1
        %vm930 = vcmp.eq.s32.totalorder %v898, 1
        %vm931 = vcmp.eq.s32.totalorder %v899, 1
        %vm932 = vcmp.eq.s32.totalorder %v900, 1
        %vm933 = vcmp.eq.s32.totalorder %v901, 1
        %vm934 = vcmp.eq.s32.totalorder %v902, 1
        %vm935 = vcmp.eq.s32.totalorder %v903, 1
        %vm936 = vcmp.eq.s32.totalorder %v904, 1
        %vm937 = vcmp.eq.s32.totalorder %v905, 1
        %vm938 = vcmp.eq.s32.totalorder %v906, 1
        %vm939 = vcmp.eq.s32.totalorder %v907, 1
        %vm940 = vcmp.eq.s32.totalorder %v908, 1
        %vm941 = vcmp.eq.s32.totalorder %v909, 1
        %vm942 = vcmp.eq.s32.totalorder %v910, 1
        %vm943 = vcmp.eq.s32.totalorder %v911, 1
        %vm944 = vcmp.eq.s32.totalorder %v912, 1
        %vm945 = vcmp.eq.s32.totalorder %v913, 1
        %vm946 = vcmp.eq.s32.totalorder %v914, 1
        %vm947 = vcmp.eq.s32.totalorder %v915, 1
        %v948 = vsel %vm916, %v882, 0.0
        %v949 = vsel %vm917, %v881, 0.0
        %v950 = vsel %vm918, %v880, 0.0
        %v951 = vsel %vm919, %v879, 0.0
        %v952 = vsel %vm920, %v878, 0.0
        %v953 = vsel %vm921, %v877, 0.0
        %v954 = vsel %vm922, %v876, 0.0
        %v955 = vsel %vm923, %v875, 0.0
        %v956 = vsel %vm924, %v874, 0.0
        %v957 = vsel %vm925, %v873, 0.0
        %v958 = vsel %vm926, %v872, 0.0
        %v959 = vsel %vm927, %v871, 0.0
        %v960 = vsel %vm928, %v870, 0.0
        %v961 = vsel %vm929, %v869, 0.0
        %v962 = vsel %vm930, %v868, 0.0
        %v963 = vsel %vm931, %v867, 0.0
        %v964 = vsel %vm932, %v866, 0.0
        %v965 = vsel %vm933, %v865, 0.0
        %v966 = vsel %vm934, %v864, 0.0
        %v967 = vsel %vm935, %v863, 0.0
        %v968 = vsel %vm936, %v862, 0.0
        %v969 = vsel %vm937, %v861, 0.0
        %v970 = vsel %vm938, %v860, 0.0
        %v971 = vsel %vm939, %v859, 0.0
        %v972 = vsel %vm940, %v858, 0.0
        %v973 = vsel %vm941, %v857, 0.0
        %v974 = vsel %vm942, %v856, 0.0
        %v975 = vsel %vm943, %v855, 0.0
        %v976 = vsel %vm944, %v854, 0.0
        %v977 = vsel %vm945, %v853, 0.0
        %v978 = vsel %vm946, %v852, 0.0
        %v979 = vsel %vm947, %v883, 0.0
        %vm980 = vcmp.gt.s32.totalorder %v691, 0
        %vm981 = vcmp.gt.s32.totalorder %v692, 0
        %vm982 = vcmp.gt.s32.totalorder %v693, 0
        %vm983 = vcmp.gt.s32.totalorder %v694, 0
        %vm984 = vcmp.gt.s32.totalorder %v695, 0
        %vm985 = vcmp.gt.s32.totalorder %v696, 0
        %vm986 = vcmp.gt.s32.totalorder %v697, 0
        %vm987 = vcmp.gt.s32.totalorder %v698, 0
        %vm988 = vcmp.gt.s32.totalorder %v699, 0
        %vm989 = vcmp.gt.s32.totalorder %v700, 0
        %vm990 = vcmp.gt.s32.totalorder %v701, 0
        %vm991 = vcmp.gt.s32.totalorder %v702, 0
        %vm992 = vcmp.gt.s32.totalorder %v703, 0
        %vm993 = vcmp.gt.s32.totalorder %v704, 0
        %vm994 = vcmp.gt.s32.totalorder %v705, 0
        %vm995 = vcmp.gt.s32.totalorder %v706, 0
        %vm996 = vcmp.gt.s32.totalorder %v707, 0
        %vm997 = vcmp.gt.s32.totalorder %v708, 0
        %vm998 = vcmp.gt.s32.totalorder %v709, 0
        %vm999 = vcmp.gt.s32.totalorder %v710, 0
        %vm1000 = vcmp.gt.s32.totalorder %v711, 0
        %vm1001 = vcmp.gt.s32.totalorder %v712, 0
        %vm1002 = vcmp.gt.s32.totalorder %v713, 0
        %vm1003 = vcmp.gt.s32.totalorder %v714, 0
        %vm1004 = vcmp.gt.s32.totalorder %v715, 0
        %vm1005 = vcmp.gt.s32.totalorder %v716, 0
        %vm1006 = vcmp.gt.s32.totalorder %v717, 0
        %vm1007 = vcmp.gt.s32.totalorder %v718, 0
        %vm1008 = vcmp.gt.s32.totalorder %v719, 0
        %vm1009 = vcmp.gt.s32.totalorder %v720, 0
        %vm1010 = vcmp.gt.s32.totalorder %v721, 0
        %vm1011 = vcmp.gt.s32.totalorder %v722, 0
        %v1012 = vrot.slane %v755, 7
        %v1013 = vrot.slane %v756, 7
        %v1014 = vrot.slane %v757, 7
        %v1015 = vrot.slane %v758, 7
        %v1016 = vrot.slane %v759, 7
        %v1017 = vrot.slane %v760, 7
        %v1018 = vrot.slane %v761, 7
        %v1019 = vrot.slane %v762, 7
        %v1020 = vrot.slane %v763, 7
        %v1021 = vrot.slane %v764, 7
        %v1022 = vrot.slane %v765, 7
        %v1023 = vrot.slane %v766, 7
        %v1024 = vrot.slane %v767, 7
        %v1025 = vrot.slane %v768, 7
        %v1026 = vrot.slane %v769, 7
        %v1027 = vrot.slane %v770, 7
        %v1028 = vrot.slane %v771, 7
        %v1029 = vrot.slane %v772, 7
        %v1030 = vrot.slane %v773, 7
        %v1031 = vrot.slane %v774, 7
        %v1032 = vrot.slane %v775, 7
        %v1033 = vrot.slane %v776, 7
        %v1034 = vrot.slane %v777, 7
        %v1035 = vrot.slane %v778, 7
        %v1036 = vrot.slane %v779, 7
        %v1037 = vrot.slane %v780, 7
        %v1038 = vrot.slane %v781, 7
        %v1039 = vrot.slane %v782, 7
        %v1040 = vrot.slane %v783, 7
        %v1041 = vrot.slane %v784, 7
        %v1042 = vrot.slane %v785, 7
        %v1043 = vrot.slane %v786, 7
        %vm1044 = vcmp.lt.s32.totalorder %v307, 1
        %v1045 = vsel %vm1044, %v1042, %v1043
        %v1046 = vsel %vm1044, %v1041, %v1042
        %v1047 = vsel %vm1044, %v1040, %v1041
        %v1048 = vsel %vm1044, %v1039, %v1040
        %v1049 = vsel %vm1044, %v1038, %v1039
        %v1050 = vsel %vm1044, %v1037, %v1038
        %v1051 = vsel %vm1044, %v1036, %v1037
        %v1052 = vsel %vm1044, %v1035, %v1036
        %v1053 = vsel %vm1044, %v1034, %v1035
        %v1054 = vsel %vm1044, %v1033, %v1034
        %v1055 = vsel %vm1044, %v1032, %v1033
        %v1056 = vsel %vm1044, %v1031, %v1032
        %v1057 = vsel %vm1044, %v1030, %v1031
        %v1058 = vsel %vm1044, %v1029, %v1030
        %v1059 = vsel %vm1044, %v1028, %v1029
        %v1060 = vsel %vm1044, %v1027, %v1028
        %v1061 = vsel %vm1044, %v1026, %v1027
        %v1062 = vsel %vm1044, %v1025, %v1026
        %v1063 = vsel %vm1044, %v1024, %v1025
        %v1064 = vsel %vm1044, %v1023, %v1024
        %v1065 = vsel %vm1044, %v1022, %v1023
        %v1066 = vsel %vm1044, %v1021, %v1022
        %v1067 = vsel %vm1044, %v1020, %v1021
        %v1068 = vsel %vm1044, %v1019, %v1020
        %v1069 = vsel %vm1044, %v1018, %v1019
        %v1070 = vsel %vm1044, %v1017, %v1018
        %v1071 = vsel %vm1044, %v1016, %v1017
        %v1072 = vsel %vm1044, %v1015, %v1016
        %v1073 = vsel %vm1044, %v1014, %v1015
        %v1074 = vsel %vm1044, %v1013, %v1014
        %v1075 = vsel %vm1044, %v1012, %v1013
        %v1076 = vsel %vm1044, %v1043, %v1012
        %v1077 = vsel %vm980, 1, 0
        %v1078 = vsel %vm981, 1, 0
        %v1079 = vsel %vm982, 1, 0
        %v1080 = vsel %vm983, 1, 0
        %v1081 = vsel %vm984, 1, 0
        %v1082 = vsel %vm985, 1, 0
        %v1083 = vsel %vm986, 1, 0
        %v1084 = vsel %vm987, 1, 0
        %v1085 = vsel %vm988, 1, 0
        %v1086 = vsel %vm989, 1, 0
        %v1087 = vsel %vm990, 1, 0
        %v1088 = vsel %vm991, 1, 0
        %v1089 = vsel %vm992, 1, 0
        %v1090 = vsel %vm993, 1, 0
        %v1091 = vsel %vm994, 1, 0
        %v1092 = vsel %vm995, 1, 0
        %v1093 = vsel %vm996, 1, 0
        %v1094 = vsel %vm997, 1, 0
        %v1095 = vsel %vm998, 1, 0
        %v1096 = vsel %vm999, 1, 0
        %v1097 = vsel %vm1000, 1, 0
        %v1098 = vsel %vm1001, 1, 0
        %v1099 = vsel %vm1002, 1, 0
        %v1100 = vsel %vm1003, 1, 0
        %v1101 = vsel %vm1004, 1, 0
        %v1102 = vsel %vm1005, 1, 0
        %v1103 = vsel %vm1006, 1, 0
        %v1104 = vsel %vm1007, 1, 0
        %v1105 = vsel %vm1008, 1, 0
        %v1106 = vsel %vm1009, 1, 0
        %v1107 = vsel %vm1010, 1, 0
        %v1108 = vsel %vm1011, 1, 0
        %vm1109 = vcmp.eq.s32.totalorder %v1077, 1
        %vm1110 = vcmp.eq.s32.totalorder %v1078, 1
        %vm1111 = vcmp.eq.s32.totalorder %v1079, 1
        %vm1112 = vcmp.eq.s32.totalorder %v1080, 1
        %vm1113 = vcmp.eq.s32.totalorder %v1081, 1
        %vm1114 = vcmp.eq.s32.totalorder %v1082, 1
        %vm1115 = vcmp.eq.s32.totalorder %v1083, 1
        %vm1116 = vcmp.eq.s32.totalorder %v1084, 1
        %vm1117 = vcmp.eq.s32.totalorder %v1085, 1
        %vm1118 = vcmp.eq.s32.totalorder %v1086, 1
        %vm1119 = vcmp.eq.s32.totalorder %v1087, 1
        %vm1120 = vcmp.eq.s32.totalorder %v1088, 1
        %vm1121 = vcmp.eq.s32.totalorder %v1089, 1
        %vm1122 = vcmp.eq.s32.totalorder %v1090, 1
        %vm1123 = vcmp.eq.s32.totalorder %v1091, 1
        %vm1124 = vcmp.eq.s32.totalorder %v1092, 1
        %vm1125 = vcmp.eq.s32.totalorder %v1093, 1
        %vm1126 = vcmp.eq.s32.totalorder %v1094, 1
        %vm1127 = vcmp.eq.s32.totalorder %v1095, 1
        %vm1128 = vcmp.eq.s32.totalorder %v1096, 1
        %vm1129 = vcmp.eq.s32.totalorder %v1097, 1
        %vm1130 = vcmp.eq.s32.totalorder %v1098, 1
        %vm1131 = vcmp.eq.s32.totalorder %v1099, 1
        %vm1132 = vcmp.eq.s32.totalorder %v1100, 1
        %vm1133 = vcmp.eq.s32.totalorder %v1101, 1
        %vm1134 = vcmp.eq.s32.totalorder %v1102, 1
        %vm1135 = vcmp.eq.s32.totalorder %v1103, 1
        %vm1136 = vcmp.eq.s32.totalorder %v1104, 1
        %vm1137 = vcmp.eq.s32.totalorder %v1105, 1
        %vm1138 = vcmp.eq.s32.totalorder %v1106, 1
        %vm1139 = vcmp.eq.s32.totalorder %v1107, 1
        %vm1140 = vcmp.eq.s32.totalorder %v1108, 1
        %v1141 = vsel %vm1109, %v1076, 0.0
        %v1142 = vsel %vm1110, %v1075, 0.0
        %v1143 = vsel %vm1111, %v1074, 0.0
        %v1144 = vsel %vm1112, %v1073, 0.0
        %v1145 = vsel %vm1113, %v1072, 0.0
        %v1146 = vsel %vm1114, %v1071, 0.0
        %v1147 = vsel %vm1115, %v1070, 0.0
        %v1148 = vsel %vm1116, %v1069, 0.0
        %v1149 = vsel %vm1117, %v1068, 0.0
        %v1150 = vsel %vm1118, %v1067, 0.0
        %v1151 = vsel %vm1119, %v1066, 0.0
        %v1152 = vsel %vm1120, %v1065, 0.0
        %v1153 = vsel %vm1121, %v1064, 0.0
        %v1154 = vsel %vm1122, %v1063, 0.0
        %v1155 = vsel %vm1123, %v1062, 0.0
        %v1156 = vsel %vm1124, %v1061, 0.0
        %v1157 = vsel %vm1125, %v1060, 0.0
        %v1158 = vsel %vm1126, %v1059, 0.0
        %v1159 = vsel %vm1127, %v1058, 0.0
        %v1160 = vsel %vm1128, %v1057, 0.0
        %v1161 = vsel %vm1129, %v1056, 0.0
        %v1162 = vsel %vm1130, %v1055, 0.0
        %v1163 = vsel %vm1131, %v1054, 0.0
        %v1164 = vsel %vm1132, %v1053, 0.0
        %v1165 = vsel %vm1133, %v1052, 0.0
        %v1166 = vsel %vm1134, %v1051, 0.0
        %v1167 = vsel %vm1135, %v1050, 0.0
        %v1168 = vsel %vm1136, %v1049, 0.0
        %v1169 = vsel %vm1137, %v1048, 0.0
        %v1170 = vsel %vm1138, %v1047, 0.0
        %v1171 = vsel %vm1139, %v1046, 0.0
        %v1172 = vsel %vm1140, %v1045, 0.0
        %v1173 = vpack.c.bf16 %v1142, %v1141
        %v1174 = vpack.c.bf16 %v1144, %v1143
        %v1175 = vpack.c.bf16 %v1146, %v1145
        %v1176 = vpack.c.bf16 %v1148, %v1147
        %v1177 = vpack.c.bf16 %v1150, %v1149
        %v1178 = vpack.c.bf16 %v1152, %v1151
        %v1179 = vpack.c.bf16 %v1154, %v1153
        %v1180 = vpack.c.bf16 %v1156, %v1155
        %v1181 = vpack.c.bf16 %v1158, %v1157
        %v1182 = vpack.c.bf16 %v1160, %v1159
        %v1183 = vpack.c.bf16 %v1162, %v1161
        %v1184 = vpack.c.bf16 %v1164, %v1163
        %v1185 = vpack.c.bf16 %v1166, %v1165
        %v1186 = vpack.c.bf16 %v1168, %v1167
        %v1187 = vpack.c.bf16 %v1170, %v1169
        %v1188 = vpack.c.bf16 %v1172, %v1171
        %v1189 = vpack.c.bf16 %v949, %v948
        %v1190 = vpack.c.bf16 %v951, %v950
        %v1191 = vpack.c.bf16 %v953, %v952
        %v1192 = vpack.c.bf16 %v955, %v954
        %v1193 = vpack.c.bf16 %v957, %v956
        %v1194 = vpack.c.bf16 %v959, %v958
        %v1195 = vpack.c.bf16 %v961, %v960
        %v1196 = vpack.c.bf16 %v963, %v962
        %v1197 = vpack.c.bf16 %v965, %v964
        %v1198 = vpack.c.bf16 %v967, %v966
        %v1199 = vpack.c.bf16 %v969, %v968
        %v1200 = vpack.c.bf16 %v971, %v970
        %v1201 = vpack.c.bf16 %v973, %v972
        %v1202 = vpack.c.bf16 %v975, %v974
        %v1203 = vpack.c.bf16 %v977, %v976
        %v1204 = vpack.c.bf16 %v979, %v978
        %v1235 = vunpack.c.l.b16 %v723
        %v1236 = vunpack.c.l.b16 %v724
        %v1237 = vunpack.c.l.b16 %v725
        %v1238 = vunpack.c.l.b16 %v726
        %v1239 = vunpack.c.l.b16 %v727
        %v1240 = vunpack.c.l.b16 %v728
        %v1241 = vunpack.c.l.b16 %v729
        %v1242 = vunpack.c.l.b16 %v730
        %v1243 = vunpack.c.l.b16 %v731
        %v1244 = vunpack.c.l.b16 %v732
        %v1245 = vunpack.c.l.b16 %v733
        %v1246 = vunpack.c.l.b16 %v734
        %v1247 = vunpack.c.l.b16 %v735
        %v1248 = vunpack.c.l.b16 %v736
        %v1249 = vunpack.c.l.b16 %v737
        %v1250 = vunpack.c.l.b16 %v738
        %v1251 = vunpack.c.l.b16 %v739
        %v1252 = vunpack.c.l.b16 %v740
        %v1253 = vunpack.c.l.b16 %v741
        %v1254 = vunpack.c.l.b16 %v742
        %v1255 = vunpack.c.l.b16 %v743
        %v1256 = vunpack.c.l.b16 %v744
        %v1257 = vunpack.c.l.b16 %v745
        %v1258 = vunpack.c.l.b16 %v746
        %v1259 = vunpack.c.l.b16 %v747
        %v1260 = vunpack.c.l.b16 %v748
        %v1261 = vunpack.c.l.b16 %v749
        %v1262 = vunpack.c.l.b16 %v750
        %v1263 = vunpack.c.l.b16 %v751
        %v1264 = vunpack.c.l.b16 %v752
        %v1265 = vpack.c.b16 %v1236, %v1235
        %v1266 = vpack.c.b16 %v1238, %v1237
        %v1267 = vpack.c.b16 %v1240, %v1239
        %v1268 = vpack.c.b16 %v1242, %v1241
        %v1269 = vpack.c.b16 %v1244, %v1243
        %v1270 = vpack.c.b16 %v1246, %v1245
        %v1271 = vpack.c.b16 %v1248, %v1247
        %v1272 = vpack.c.b16 %v1250, %v1249
        %v1273 = vpack.c.b16 %v1252, %v1251
        %v1274 = vpack.c.b16 %v1254, %v1253
        %v1275 = vpack.c.b16 %v1256, %v1255
        %v1276 = vpack.c.b16 %v1258, %v1257
        %v1277 = vpack.c.b16 %v1260, %v1259
        %v1278 = vpack.c.b16 %v1262, %v1261
        %v1279 = vpack.c.b16 %v1264, %v1263
        %v1297 = vunpack.c.l.b16 %v753
        %v1298 = vunpack.c.l.b16 %v754
        %v1299 = vpack.c.b16 %v1298, %v1297
        %v1301 = vld [vmem:[#allocation3] sm:$0xf]
        %v1302 = vld [vmem:[#allocation3 + $0x4] sm:$0xf]
        %v1303 = vld [vmem:[#allocation3 + $0x8] sm:$0xf]
        %v1304 = vld [vmem:[#allocation3 + $0xc] sm:$0xf]
        %v1305 = vld [vmem:[#allocation3 + $0x10] sm:$0xf]
        %v1306 = vld [vmem:[#allocation3 + $0x14] sm:$0xf]
        %v1307 = vld [vmem:[#allocation3 + $0x18] sm:$0xf]
        %v1308 = vld [vmem:[#allocation3 + $0x1c] sm:$0xf]
        %v1309 = vld [vmem:[#allocation3 + $0x20] sm:$0xf]
        %v1310 = vld [vmem:[#allocation3 + $0x24] sm:$0xf]
        %v1311 = vld [vmem:[#allocation3 + $0x28] sm:$0xf]
        %v1312 = vld [vmem:[#allocation3 + $0x2c] sm:$0xf]
        %v1313 = vld [vmem:[#allocation3 + $0x30] sm:$0xf]
        %v1314 = vld [vmem:[#allocation3 + $0x34] sm:$0xf]
        %v1315 = vld [vmem:[#allocation3 + $0x38] sm:$0xf]
        %v1316 = vld [vmem:[#allocation3 + $0x3c] sm:$0xf]
        %v1317 = vld [vmem:[#allocation3 + $0x40] sm:$0xf]
        %v1318 = vld [vmem:[#allocation3 + $0x44] sm:$0xf]
        %v1319 = vld [vmem:[#allocation3 + $0x48] sm:$0xf]
        %v1320 = vld [vmem:[#allocation3 + $0x4c] sm:$0xf]
        %v1321 = vld [vmem:[#allocation3 + $0x50] sm:$0xf]
        %v1322 = vld [vmem:[#allocation3 + $0x54] sm:$0xf]
        %v1323 = vld [vmem:[#allocation3 + $0x58] sm:$0xf]
        %v1324 = vld [vmem:[#allocation3 + $0x5c] sm:$0xf]
        %v1325 = vld [vmem:[#allocation3 + $0x60] sm:$0xf]
        %v1326 = vld [vmem:[#allocation3 + $0x64] sm:$0xf]
        %v1327 = vld [vmem:[#allocation3 + $0x68] sm:$0xf]
        %v1328 = vld [vmem:[#allocation3 + $0x6c] sm:$0xf]
        %v1329 = vld [vmem:[#allocation3 + $0x70] sm:$0xf]
        %v1330 = vld [vmem:[#allocation3 + $0x74] sm:$0xf]
        %v1331 = vld [vmem:[#allocation3 + $0x78] sm:$0xf]
        %v1332 = vld [vmem:[#allocation3 + $0x7c] sm:$0xf]
        %v1333 = vld [vmem:[#allocation3 + $0x80] sm:$0xf]
        %v1334 = vld [vmem:[#allocation3 + $0x84] sm:$0xf]
        %v1335 = vld [vmem:[#allocation3 + $0x88] sm:$0xf]
        %v1336 = vld [vmem:[#allocation3 + $0x8c] sm:$0xf]
        %v1337 = vld [vmem:[#allocation3 + $0x90] sm:$0xf]
        %v1338 = vld [vmem:[#allocation3 + $0x94] sm:$0xf]
        %v1339 = vld [vmem:[#allocation3 + $0x98] sm:$0xf]
        %v1340 = vld [vmem:[#allocation3 + $0x9c] sm:$0xf]
        %v1341 = vld [vmem:[#allocation3 + $0xa0] sm:$0xf]
        %v1342 = vld [vmem:[#allocation3 + $0xa4] sm:$0xf]
        %v1343 = vld [vmem:[#allocation3 + $0xa8] sm:$0xf]
        %v1344 = vld [vmem:[#allocation3 + $0xac] sm:$0xf]
        %v1345 = vld [vmem:[#allocation3 + $0xb0] sm:$0xf]
        %v1346 = vld [vmem:[#allocation3 + $0xb4] sm:$0xf]
        %v1347 = vld [vmem:[#allocation3 + $0xb8] sm:$0xf]
        %v1348 = vld [vmem:[#allocation3 + $0xbc] sm:$0xf]
        %v1349 = vld [vmem:[#allocation3 + $0xc0] sm:$0xf]
        %v1350 = vld [vmem:[#allocation3 + $0xc4] sm:$0xf]
        %v1351 = vld [vmem:[#allocation3 + $0xc8] sm:$0xf]
        %v1352 = vld [vmem:[#allocation3 + $0xcc] sm:$0xf]
        %v1353 = vld [vmem:[#allocation3 + $0xd0] sm:$0xf]
        %v1354 = vld [vmem:[#allocation3 + $0xd4] sm:$0xf]
        %v1355 = vld [vmem:[#allocation3 + $0xd8] sm:$0xf]
        %v1356 = vld [vmem:[#allocation3 + $0xdc] sm:$0xf]
        %v1357 = vld [vmem:[#allocation3 + $0xe0] sm:$0xf]
        %v1358 = vld [vmem:[#allocation3 + $0xe4] sm:$0xf]
        %v1359 = vld [vmem:[#allocation3 + $0xe8] sm:$0xf]
        %v1360 = vld [vmem:[#allocation3 + $0xec] sm:$0xf]
        %v1361 = vld [vmem:[#allocation3 + $0xf0] sm:$0xf]
        %v1362 = vld [vmem:[#allocation3 + $0xf4] sm:$0xf]
        %v1363 = vld [vmem:[#allocation3 + $0xf8] sm:$0xf]
        %v1364 = vld [vmem:[#allocation3 + $0xfc] sm:$0xf]
        %v1365 = vld [vmem:[#allocation3 + $0x100] sm:$0xf]
        %v1366 = vld [vmem:[#allocation3 + $0x104] sm:$0xf]
        %v1367 = vld [vmem:[#allocation3 + $0x108] sm:$0xf]
        %v1368 = vld [vmem:[#allocation3 + $0x10c] sm:$0xf]
        %v1369 = vld [vmem:[#allocation3 + $0x110] sm:$0xf]
        %v1370 = vld [vmem:[#allocation3 + $0x114] sm:$0xf]
        %v1371 = vld [vmem:[#allocation3 + $0x118] sm:$0xf]
        %v1372 = vld [vmem:[#allocation3 + $0x11c] sm:$0xf]
        %v1373 = vld [vmem:[#allocation3 + $0x120] sm:$0xf]
        %v1374 = vld [vmem:[#allocation3 + $0x124] sm:$0xf]
        %v1375 = vld [vmem:[#allocation3 + $0x128] sm:$0xf]
        %v1376 = vld [vmem:[#allocation3 + $0x12c] sm:$0xf]
        %v1377 = vld [vmem:[#allocation3 + $0x130] sm:$0xf]
        %v1378 = vld [vmem:[#allocation3 + $0x134] sm:$0xf]
        %v1379 = vld [vmem:[#allocation3 + $0x138] sm:$0xf]
        %v1380 = vld [vmem:[#allocation3 + $0x13c] sm:$0xf]
        %v1381 = vld [vmem:[#allocation3 + $0x140] sm:$0xf]
        %v1382 = vld [vmem:[#allocation3 + $0x144] sm:$0xf]
        %v1383 = vld [vmem:[#allocation3 + $0x148] sm:$0xf]
        %v1384 = vld [vmem:[#allocation3 + $0x14c] sm:$0xf]
        %v1385 = vld [vmem:[#allocation3 + $0x150] sm:$0xf]
        %v1386 = vld [vmem:[#allocation3 + $0x154] sm:$0xf]
        %v1387 = vld [vmem:[#allocation3 + $0x158] sm:$0xf]
        %v1388 = vld [vmem:[#allocation3 + $0x15c] sm:$0xf]
        %v1389 = vld [vmem:[#allocation3 + $0x160] sm:$0xf]
        %v1390 = vld [vmem:[#allocation3 + $0x164] sm:$0xf]
        %v1391 = vld [vmem:[#allocation3 + $0x168] sm:$0xf]
        %v1392 = vld [vmem:[#allocation3 + $0x16c] sm:$0xf]
        %v1393 = vld [vmem:[#allocation3 + $0x170] sm:$0xf]
        %v1394 = vld [vmem:[#allocation3 + $0x174] sm:$0xf]
        %v1395 = vld [vmem:[#allocation3 + $0x178] sm:$0xf]
        %v1396 = vld [vmem:[#allocation3 + $0x17c] sm:$0xf]
        %v1397 = vld [vmem:[#allocation3 + $0x180] sm:$0xf]
        %v1398 = vld [vmem:[#allocation3 + $0x184] sm:$0xf]
        %v1399 = vld [vmem:[#allocation3 + $0x188] sm:$0xf]
        %v1400 = vld [vmem:[#allocation3 + $0x18c] sm:$0xf]
        %v1401 = vld [vmem:[#allocation3 + $0x190] sm:$0xf]
        %v1402 = vld [vmem:[#allocation3 + $0x194] sm:$0xf]
        %v1403 = vld [vmem:[#allocation3 + $0x198] sm:$0xf]
        %v1404 = vld [vmem:[#allocation3 + $0x19c] sm:$0xf]
        %v1405 = vld [vmem:[#allocation3 + $0x1a0] sm:$0xf]
        %v1406 = vld [vmem:[#allocation3 + $0x1a4] sm:$0xf]
        %v1407 = vld [vmem:[#allocation3 + $0x1a8] sm:$0xf]
        %v1408 = vld [vmem:[#allocation3 + $0x1ac] sm:$0xf]
        %v1409 = vld [vmem:[#allocation3 + $0x1b0] sm:$0xf]
        %v1410 = vld [vmem:[#allocation3 + $0x1b4] sm:$0xf]
        %v1411 = vld [vmem:[#allocation3 + $0x1b8] sm:$0xf]
        %v1412 = vld [vmem:[#allocation3 + $0x1bc] sm:$0xf]
        %v1413 = vld [vmem:[#allocation3 + $0x1c0] sm:$0xf]
        %v1414 = vld [vmem:[#allocation3 + $0x1c4] sm:$0xf]
        %v1415 = vld [vmem:[#allocation3 + $0x1c8] sm:$0xf]
        %v1416 = vld [vmem:[#allocation3 + $0x1cc] sm:$0xf]
        %v1417 = vld [vmem:[#allocation3 + $0x1d0] sm:$0xf]
        %v1418 = vld [vmem:[#allocation3 + $0x1d4] sm:$0xf]
        %v1419 = vld [vmem:[#allocation3 + $0x1d8] sm:$0xf]
        %v1420 = vld [vmem:[#allocation3 + $0x1dc] sm:$0xf]
        %v1421 = vld [vmem:[#allocation3 + $0x1e0] sm:$0xf]
        %v1422 = vld [vmem:[#allocation3 + $0x1e4] sm:$0xf]
        %v1423 = vld [vmem:[#allocation3 + $0x1e8] sm:$0xf]
        %v1424 = vld [vmem:[#allocation3 + $0x1ec] sm:$0xf]
        %v1425 = vld [vmem:[#allocation3 + $0x1f0] sm:$0xf]
        %v1426 = vld [vmem:[#allocation3 + $0x1f4] sm:$0xf]
        %v1427 = vld [vmem:[#allocation3 + $0x1f8] sm:$0xf]
        %v1428 = vld [vmem:[#allocation3 + $0x1fc] sm:$0xf]
        %v1429 = vld [vmem:[#allocation3 + $0x200] sm:$0xf]
        %v1430 = vld [vmem:[#allocation3 + $0x204] sm:$0xf]
        %v1431 = vld [vmem:[#allocation3 + $0x208] sm:$0xf]
        %v1432 = vld [vmem:[#allocation3 + $0x20c] sm:$0xf]
        %v1433 = vld [vmem:[#allocation3 + $0x210] sm:$0xf]
        %v1434 = vld [vmem:[#allocation3 + $0x214] sm:$0xf]
        %v1435 = vld [vmem:[#allocation3 + $0x218] sm:$0xf]
        %v1436 = vld [vmem:[#allocation3 + $0x21c] sm:$0xf]
        %v1437 = vld [vmem:[#allocation3 + $0x220] sm:$0xf]
        %v1438 = vld [vmem:[#allocation3 + $0x224] sm:$0xf]
        %v1439 = vld [vmem:[#allocation3 + $0x228] sm:$0xf]
        %v1440 = vld [vmem:[#allocation3 + $0x22c] sm:$0xf]
        %v1441 = vld [vmem:[#allocation3 + $0x230] sm:$0xf]
        %v1442 = vld [vmem:[#allocation3 + $0x234] sm:$0xf]
        %v1443 = vld [vmem:[#allocation3 + $0x238] sm:$0xf]
        %v1444 = vld [vmem:[#allocation3 + $0x23c] sm:$0xf]
        %v1445 = vld [vmem:[#allocation5] sm:$0x1]
        %v1447 = vlaneseq
        %v1448 = vshrl.u32 %v1447, 7
        %v1449 = vsub.s32 0, %v1448
        %v1450 = vrot.slane %v1445, %v1449
        %v1596 = vunpack.c.l.b16 %v1301
        %v1597 = vunpack.c.l.b16 %v1302
        %v1598 = vunpack.c.l.b16 %v1303
        %v1599 = vunpack.c.l.b16 %v1304
        %v1600 = vunpack.c.l.b16 %v1305
        %v1601 = vunpack.c.l.b16 %v1306
        %v1602 = vunpack.c.l.b16 %v1307
        %v1603 = vunpack.c.l.b16 %v1308
        %v1604 = vunpack.c.l.b16 %v1309
        %v1605 = vunpack.c.l.b16 %v1310
        %v1606 = vunpack.c.l.b16 %v1311
        %v1607 = vunpack.c.l.b16 %v1312
        %v1608 = vunpack.c.l.b16 %v1313
        %v1609 = vunpack.c.l.b16 %v1314
        %v1610 = vunpack.c.l.b16 %v1315
        %v1611 = vunpack.c.l.b16 %v1316
        %v1612 = vunpack.c.l.b16 %v1317
        %v1613 = vunpack.c.l.b16 %v1318
        %v1614 = vunpack.c.l.b16 %v1319
        %v1615 = vunpack.c.l.b16 %v1320
        %v1616 = vunpack.c.l.b16 %v1321
        %v1617 = vunpack.c.l.b16 %v1322
        %v1618 = vunpack.c.l.b16 %v1323
        %v1619 = vunpack.c.l.b16 %v1324
        %v1620 = vunpack.c.l.b16 %v1325
        %v1621 = vunpack.c.l.b16 %v1326
        %v1622 = vunpack.c.l.b16 %v1327
        %v1623 = vunpack.c.l.b16 %v1328
        %v1624 = vunpack.c.l.b16 %v1329
        %v1625 = vunpack.c.l.b16 %v1330
        %v1626 = vunpack.c.l.b16 %v1331
        %v1627 = vunpack.c.l.b16 %v1332
        %v1628 = vunpack.c.l.b16 %v1333
        %v1629 = vunpack.c.l.b16 %v1334
        %v1630 = vunpack.c.l.b16 %v1335
        %v1631 = vunpack.c.l.b16 %v1336
        %v1632 = vunpack.c.l.b16 %v1337
        %v1633 = vunpack.c.l.b16 %v1338
        %v1634 = vunpack.c.l.b16 %v1339
        %v1635 = vunpack.c.l.b16 %v1340
        %v1636 = vunpack.c.l.b16 %v1341
        %v1637 = vunpack.c.l.b16 %v1342
        %v1638 = vunpack.c.l.b16 %v1343
        %v1639 = vunpack.c.l.b16 %v1344
        %v1640 = vunpack.c.l.b16 %v1345
        %v1641 = vunpack.c.l.b16 %v1346
        %v1642 = vunpack.c.l.b16 %v1347
        %v1643 = vunpack.c.l.b16 %v1348
        %v1644 = vunpack.c.l.b16 %v1349
        %v1645 = vunpack.c.l.b16 %v1350
        %v1646 = vunpack.c.l.b16 %v1351
        %v1647 = vunpack.c.l.b16 %v1352
        %v1648 = vunpack.c.l.b16 %v1353
        %v1649 = vunpack.c.l.b16 %v1354
        %v1650 = vunpack.c.l.b16 %v1355
        %v1651 = vunpack.c.l.b16 %v1356
        %v1652 = vunpack.c.l.b16 %v1357
        %v1653 = vunpack.c.l.b16 %v1358
        %v1654 = vunpack.c.l.b16 %v1359
        %v1655 = vunpack.c.l.b16 %v1360
        %v1656 = vunpack.c.l.b16 %v1361
        %v1657 = vunpack.c.l.b16 %v1362
        %v1658 = vunpack.c.l.b16 %v1363
        %v1659 = vunpack.c.l.b16 %v1364
        %v1660 = vunpack.c.l.b16 %v1365
        %v1661 = vunpack.c.l.b16 %v1366
        %v1662 = vunpack.c.l.b16 %v1367
        %v1663 = vunpack.c.l.b16 %v1368
        %v1664 = vunpack.c.l.b16 %v1369
        %v1665 = vunpack.c.l.b16 %v1370
        %v1666 = vunpack.c.l.b16 %v1371
        %v1667 = vunpack.c.l.b16 %v1372
        %v1668 = vunpack.c.l.b16 %v1373
        %v1669 = vunpack.c.l.b16 %v1374
        %v1670 = vunpack.c.l.b16 %v1375
        %v1671 = vunpack.c.l.b16 %v1376
        %v1672 = vunpack.c.l.b16 %v1377
        %v1673 = vunpack.c.l.b16 %v1378
        %v1674 = vunpack.c.l.b16 %v1379
        %v1675 = vunpack.c.l.b16 %v1380
        %v1676 = vunpack.c.l.b16 %v1381
        %v1677 = vunpack.c.l.b16 %v1382
        %v1678 = vunpack.c.l.b16 %v1383
        %v1679 = vunpack.c.l.b16 %v1384
        %v1680 = vunpack.c.l.b16 %v1385
        %v1681 = vunpack.c.l.b16 %v1386
        %v1682 = vunpack.c.l.b16 %v1387
        %v1683 = vunpack.c.l.b16 %v1388
        %v1684 = vunpack.c.l.b16 %v1389
        %v1685 = vunpack.c.l.b16 %v1390
        %v1686 = vunpack.c.l.b16 %v1391
        %v1687 = vunpack.c.l.b16 %v1392
        %v1688 = vunpack.c.l.b16 %v1393
        %v1689 = vunpack.c.l.b16 %v1394
        %v1690 = vunpack.c.l.b16 %v1395
        %v1691 = vunpack.c.l.b16 %v1396
        %v1692 = vunpack.c.l.b16 %v1397
        %v1693 = vunpack.c.l.b16 %v1398
        %v1694 = vunpack.c.l.b16 %v1399
        %v1695 = vunpack.c.l.b16 %v1400
        %v1696 = vunpack.c.l.b16 %v1401
        %v1697 = vunpack.c.l.b16 %v1402
        %v1698 = vunpack.c.l.b16 %v1403
        %v1699 = vunpack.c.l.b16 %v1404
        %v1700 = vunpack.c.l.b16 %v1405
        %v1701 = vunpack.c.l.b16 %v1406
        %v1702 = vunpack.c.l.b16 %v1407
        %v1703 = vunpack.c.l.b16 %v1408
        %v1704 = vunpack.c.l.b16 %v1409
        %v1705 = vunpack.c.l.b16 %v1410
        %v1706 = vunpack.c.l.b16 %v1411
        %v1707 = vunpack.c.l.b16 %v1412
        %v1708 = vunpack.c.l.b16 %v1413
        %v1709 = vunpack.c.l.b16 %v1414
        %v1710 = vunpack.c.l.b16 %v1415
        %v1711 = vunpack.c.l.b16 %v1416
        %v1712 = vunpack.c.l.b16 %v1417
        %v1713 = vunpack.c.l.b16 %v1418
        %v1714 = vunpack.c.l.b16 %v1419
        %v1715 = vunpack.c.l.b16 %v1420
        %v1716 = vunpack.c.l.b16 %v1421
        %v1717 = vunpack.c.l.b16 %v1422
        %v1718 = vunpack.c.l.b16 %v1423
        %v1719 = vunpack.c.l.b16 %v1424
        %v1720 = vunpack.c.l.b16 %v1425
        %v1721 = vunpack.c.l.b16 %v1426
        %v1722 = vunpack.c.l.b16 %v1427
        %v1723 = vunpack.c.l.b16 %v1428
        %v1724 = vunpack.c.l.b16 %v1429
        %v1725 = vunpack.c.l.b16 %v1430
        %v1726 = vunpack.c.l.b16 %v1431
        %v1727 = vunpack.c.l.b16 %v1432
        %v1728 = vunpack.c.l.b16 %v1433
        %v1729 = vunpack.c.l.b16 %v1434
        %v1730 = vunpack.c.l.b16 %v1435
        %v1731 = vunpack.c.l.b16 %v1436
        %v1732 = vunpack.c.l.b16 %v1437
        %v1733 = vunpack.c.l.b16 %v1438
        %v1734 = vunpack.c.l.b16 %v1439
        %v1735 = vunpack.c.l.b16 %v1440
        %v1736 = vunpack.c.l.b16 %v1441
        %v1737 = vunpack.c.l.b16 %v1442
        %v1738 = vunpack.c.l.b16 %v1443
        %v1739 = vunpack.c.l.b16 %v1444
        %v1740 = vpack.c.b16 %v1597, %v1596
        %v1741 = vpack.c.b16 %v1599, %v1598
        %v1742 = vpack.c.b16 %v1601, %v1600
        %v1743 = vpack.c.b16 %v1603, %v1602
        %v1744 = vpack.c.b16 %v1605, %v1604
        %v1745 = vpack.c.b16 %v1607, %v1606
        %v1746 = vpack.c.b16 %v1609, %v1608
        %v1747 = vpack.c.b16 %v1611, %v1610
        %v1748 = vpack.c.b16 %v1613, %v1612
        %v1749 = vpack.c.b16 %v1615, %v1614
        %v1750 = vpack.c.b16 %v1617, %v1616
        %v1751 = vpack.c.b16 %v1619, %v1618
        %v1752 = vpack.c.b16 %v1621, %v1620
        %v1753 = vpack.c.b16 %v1623, %v1622
        %v1754 = vpack.c.b16 %v1625, %v1624
        %v1755 = vpack.c.b16 %v1627, %v1626
        %v1756 = vpack.c.b16 %v1629, %v1628
        %v1757 = vpack.c.b16 %v1631, %v1630
        %v1758 = vpack.c.b16 %v1633, %v1632
        %v1759 = vpack.c.b16 %v1635, %v1634
        %v1760 = vpack.c.b16 %v1637, %v1636
        %v1761 = vpack.c.b16 %v1639, %v1638
        %v1762 = vpack.c.b16 %v1641, %v1640
        %v1763 = vpack.c.b16 %v1643, %v1642
        %v1764 = vpack.c.b16 %v1645, %v1644
        %v1765 = vpack.c.b16 %v1647, %v1646
        %v1766 = vpack.c.b16 %v1649, %v1648
        %v1767 = vpack.c.b16 %v1651, %v1650
        %v1768 = vpack.c.b16 %v1653, %v1652
        %v1769 = vpack.c.b16 %v1655, %v1654
        %v1770 = vpack.c.b16 %v1657, %v1656
        %v1771 = vpack.c.b16 %v1659, %v1658
        %v1772 = vpack.c.b16 %v1661, %v1660
        %v1773 = vpack.c.b16 %v1663, %v1662
        %v1774 = vpack.c.b16 %v1665, %v1664
        %v1775 = vpack.c.b16 %v1667, %v1666
        %v1776 = vpack.c.b16 %v1669, %v1668
        %v1777 = vpack.c.b16 %v1671, %v1670
        %v1778 = vpack.c.b16 %v1673, %v1672
        %v1779 = vpack.c.b16 %v1675, %v1674
        %v1780 = vpack.c.b16 %v1677, %v1676
        %v1781 = vpack.c.b16 %v1679, %v1678
        %v1782 = vpack.c.b16 %v1681, %v1680
        %v1783 = vpack.c.b16 %v1683, %v1682
        %v1784 = vpack.c.b16 %v1685, %v1684
        %v1785 = vpack.c.b16 %v1687, %v1686
        %v1786 = vpack.c.b16 %v1689, %v1688
        %v1787 = vpack.c.b16 %v1691, %v1690
        %v1788 = vpack.c.b16 %v1693, %v1692
        %v1789 = vpack.c.b16 %v1695, %v1694
        %v1790 = vpack.c.b16 %v1697, %v1696
        %v1791 = vpack.c.b16 %v1699, %v1698
        %v1792 = vpack.c.b16 %v1701, %v1700
        %v1793 = vpack.c.b16 %v1703, %v1702
        %v1794 = vpack.c.b16 %v1705, %v1704
        %v1795 = vpack.c.b16 %v1707, %v1706
        %v1796 = vpack.c.b16 %v1709, %v1708
        %v1797 = vpack.c.b16 %v1711, %v1710
        %v1798 = vpack.c.b16 %v1713, %v1712
        %v1799 = vpack.c.b16 %v1715, %v1714
        %v1800 = vpack.c.b16 %v1717, %v1716
        %v1801 = vpack.c.b16 %v1719, %v1718
        %v1802 = vpack.c.b16 %v1721, %v1720
        %v1803 = vpack.c.b16 %v1723, %v1722
        %v1804 = vpack.c.b16 %v1725, %v1724
        %v1805 = vpack.c.b16 %v1727, %v1726
        %v1806 = vpack.c.b16 %v1729, %v1728
        %v1807 = vpack.c.b16 %v1731, %v1730
        %v1808 = vpack.c.b16 %v1733, %v1732
        %v1809 = vpack.c.b16 %v1735, %v1734
        %v1810 = vpack.c.b16 %v1737, %v1736
        %v1811 = vpack.c.b16 %v1739, %v1738
        %1884 = vmatprep.subr.bf16.mxu0 0
        %1885 = vmatpush1.bf16.msra.mxu0 %v1740
        %1886 = vmatprep.subr.bf16.mxu0 0
        %1887 = vmatpush1.bf16.msra.mxu0 %v1741
        %1888 = vmatprep.subr.bf16.mxu0 0
        %1889 = vmatpush1.bf16.msra.mxu0 %v1742
        %1890 = vmatprep.subr.bf16.mxu0 0
        %1891 = vmatpush1.bf16.msra.mxu0 %v1743
        %1892 = vmatprep.subr.bf16.mxu0 0
        %1893 = vmatpush1.bf16.msra.mxu0 %v1744
        %1894 = vmatprep.subr.bf16.mxu0 0
        %1895 = vmatpush1.bf16.msra.mxu0 %v1745
        %1896 = vmatprep.subr.bf16.mxu0 0
        %1897 = vmatpush1.bf16.msra.mxu0 %v1746
        %1898 = vmatprep.subr.bf16.mxu0 0
        %1899 = vmatpush1.bf16.msra.mxu0 %v1747
        %1900 = vmatprep.subr.bf16.mxu0 0
        %1901 = vmatpush1.bf16.msra.mxu0 %v1748
        %1902 = vmatprep.subr.bf16.mxu0 0
        %1903 = vmatpush1.bf16.msra.mxu0 %v1749
        %1904 = vmatprep.subr.bf16.mxu0 0
        %1905 = vmatpush1.bf16.msra.mxu0 %v1750
        %1906 = vmatprep.subr.bf16.mxu0 0
        %1907 = vmatpush1.bf16.msra.mxu0 %v1751
        %1908 = vmatprep.subr.bf16.mxu0 0
        %1909 = vmatpush1.bf16.msra.mxu0 %v1752
        %1910 = vmatprep.subr.bf16.mxu0 0
        %1911 = vmatpush1.bf16.msra.mxu0 %v1753
        %1912 = vmatprep.subr.bf16.mxu0 0
        %1913 = vmatpush1.bf16.msra.mxu0 %v1754
        %1914 = vmatprep.subr.bf16.mxu0 0
        %1915 = vmatpush1.bf16.msra.mxu0 %v1755
        %1916 = vmatprep.mubr.bf16.mxu0 0
        %1917 = vmatmul.mubr.bf16.gmra.mrb[0].mxu0 0
        %v1918 = vpop.f32.mrb[0].mxu0
        %v1919 = vadd.f32 %v1450, %v1918
        %v1920 = vpop.f32.mrb[0].mxu0
        %v1921 = vpop.f32.mrb[0].mxu0
        %v1922 = vadd.f32 %v1450, %v1921
        %v1923 = vpop.f32.mrb[0].mxu0
        %1924 = vmatprep.mubr.bf16.mxu0 %v1265
        %1925 = vmatmul.mubr.bf16.gmra.mrb[0].mxu0 %v1173
        %v1926 = vpop.f32.mrb[0].mxu0
        %v1927 = vadd.f32 %v1450, %v1926
        %v1928 = vpop.f32.mrb[0].mxu0
        %v1929 = vpop.f32.mrb[0].mxu0
        %v1930 = vadd.f32 %v1450, %v1929
        %v1931 = vpop.f32.mrb[0].mxu0
        %1932 = vmatprep.mubr.bf16.mxu0 %v1266
        %1933 = vmatmul.mubr.bf16.gmra.mrb[0].mxu0 %v1174
        %v1934 = vpop.f32.mrb[0].mxu0
        %v1935 = vadd.f32 %v1450, %v1934
        %v1936 = vpop.f32.mrb[0].mxu0
        %v1937 = vpop.f32.mrb[0].mxu0
        %v1938 = vadd.f32 %v1450, %v1937
        %v1939 = vpop.f32.mrb[0].mxu0
        %1940 = vmatprep.mubr.bf16.mxu0 %v1267
        %1941 = vmatmul.mubr.bf16.gmra.mrb[0].mxu0 %v1175
        %v1942 = vpop.f32.mrb[0].mxu0
        %v1943 = vadd.f32 %v1450, %v1942
        %v1944 = vpop.f32.mrb[0].mxu0
        %v1945 = vpop.f32.mrb[0].mxu0
        %v1946 = vadd.f32 %v1450, %v1945
        %v1947 = vpop.f32.mrb[0].mxu0
        %1948 = vmatprep.mubr.bf16.mxu0 %v1268
        %1949 = vmatmul.mubr.bf16.gmra.mrb[0].mxu0 %v1176
        %v1950 = vpop.f32.mrb[0].mxu0
        %v1951 = vadd.f32 %v1450, %v1950
        %v1952 = vpop.f32.mrb[0].mxu0
        %v1953 = vpop.f32.mrb[0].mxu0
        %v1954 = vadd.f32 %v1450, %v1953
        %v1955 = vpop.f32.mrb[0].mxu0
        %1956 = vmatprep.mubr.bf16.mxu0 %v1269
        %1957 = vmatmul.mubr.bf16.gmra.mrb[0].mxu0 %v1177
        %v1958 = vpop.f32.mrb[0].mxu0
        %v1959 = vadd.f32 %v1450, %v1958
        %v1960 = vpop.f32.mrb[0].mxu0
        %v1961 = vpop.f32.mrb[0].mxu0
        %v1962 = vadd.f32 %v1450, %v1961
        %v1963 = vpop.f32.mrb[0].mxu0
        %1964 = vmatprep.mubr.bf16.mxu0 %v1270
        %1965 = vmatmul.mubr.bf16.gmra.mrb[0].mxu0 %v1178
        %v1966 = vpop.f32.mrb[0].mxu0
        %v1967 = vadd.f32 %v1450, %v1966
        %v1968 = vpop.f32.mrb[0].mxu0
        %v1969 = vpop.f32.mrb[0].mxu0
        %v1970 = vadd.f32 %v1450, %v1969
        %v1971 = vpop.f32.mrb[0].mxu0
        %1972 = vmatprep.mubr.bf16.mxu0 %v1271
        %1973 = vmatmul.mubr.bf16.gmra.mrb[0].mxu0 %v1179
        %v1974 = vpop.f32.mrb[0].mxu0
        %v1975 = vadd.f32 %v1450, %v1974
        %v1976 = vpop.f32.mrb[0].mxu0
        %v1977 = vpop.f32.mrb[0].mxu0
        %v1978 = vadd.f32 %v1450, %v1977
        %v1979 = vpop.f32.mrb[0].mxu0
        %1980 = vmatprep.mubr.bf16.mxu0 %v1272
        %1981 = vmatmul.mubr.bf16.gmra.mrb[0].mxu0 %v1180
        %v1982 = vpop.f32.mrb[0].mxu0
        %v1983 = vadd.f32 %v1450, %v1982
        %v1984 = vpop.f32.mrb[0].mxu0
        %v1985 = vpop.f32.mrb[0].mxu0
        %v1986 = vadd.f32 %v1450, %v1985
        %v1987 = vpop.f32.mrb[0].mxu0
        %1988 = vmatprep.mubr.bf16.mxu0 %v1273
        %1989 = vmatmul.mubr.bf16.gmra.mrb[0].mxu0 %v1181
        %v1990 = vpop.f32.mrb[0].mxu0
        %v1991 = vadd.f32 %v1450, %v1990
        %v1992 = vpop.f32.mrb[0].mxu0
        %v1993 = vpop.f32.mrb[0].mxu0
        %v1994 = vadd.f32 %v1450, %v1993
        %v1995 = vpop.f32.mrb[0].mxu0
        %1996 = vmatprep.mubr.bf16.mxu0 %v1274
        %1997 = vmatmul.mubr.bf16.gmra.mrb[0].mxu0 %v1182
        %v1998 = vpop.f32.mrb[0].mxu0
        %v1999 = vadd.f32 %v1450, %v1998
        %v2000 = vpop.f32.mrb[0].mxu0
        %v2001 = vpop.f32.mrb[0].mxu0
        %v2002 = vadd.f32 %v1450, %v2001
        %v2003 = vpop.f32.mrb[0].mxu0
        %2004 = vmatprep.mubr.bf16.mxu0 %v1275
        %2005 = vmatmul.mubr.bf16.gmra.mrb[0].mxu0 %v1183
        %v2006 = vpop.f32.mrb[0].mxu0
        %v2007 = vadd.f32 %v1450, %v2006
        %v2008 = vpop.f32.mrb[0].mxu0
        %v2009 = vpop.f32.mrb[0].mxu0
        %v2010 = vadd.f32 %v1450, %v2009
        %v2011 = vpop.f32.mrb[0].mxu0
        %2012 = vmatprep.mubr.bf16.mxu0 %v1276
        %2013 = vmatmul.mubr.bf16.gmra.mrb[0].mxu0 %v1184
        %v2014 = vpop.f32.mrb[0].mxu0
        %v2015 = vadd.f32 %v1450, %v2014
        %v2016 = vpop.f32.mrb[0].mxu0
        %v2017 = vpop.f32.mrb[0].mxu0
        %v2018 = vadd.f32 %v1450, %v2017
        %v2019 = vpop.f32.mrb[0].mxu0
        %2020 = vmatprep.mubr.bf16.mxu0 %v1277
        %2021 = vmatmul.mubr.bf16.gmra.mrb[0].mxu0 %v1185
        %v2022 = vpop.f32.mrb[0].mxu0
        %v2023 = vadd.f32 %v1450, %v2022
        %v2024 = vpop.f32.mrb[0].mxu0
        %v2025 = vpop.f32.mrb[0].mxu0
        %v2026 = vadd.f32 %v1450, %v2025
        %v2027 = vpop.f32.mrb[0].mxu0
        %2028 = vmatprep.mubr.bf16.mxu0 %v1278
        %2029 = vmatmul.mubr.bf16.gmra.mrb[0].mxu0 %v1186
        %v2030 = vpop.f32.mrb[0].mxu0
        %v2031 = vadd.f32 %v1450, %v2030
        %v2032 = vpop.f32.mrb[0].mxu0
        %v2033 = vpop.f32.mrb[0].mxu0
        %v2034 = vadd.f32 %v1450, %v2033
        %v2035 = vpop.f32.mrb[0].mxu0
        %2036 = vmatprep.mubr.bf16.mxu0 %v1279
        %2037 = vmatmul.mubr.bf16.gmra.mrb[0].mxu0 %v1187
        %v2038 = vpop.f32.mrb[0].mxu0
        %v2039 = vadd.f32 %v1450, %v2038
        %v2040 = vpop.f32.mrb[0].mxu0
        %v2041 = vpop.f32.mrb[0].mxu0
        %v2042 = vadd.f32 %v1450, %v2041
        %v2043 = vpop.f32.mrb[0].mxu0
        %2044 = vdwg.mxu0
        %2045 = vmatprep.subr.bf16.mxu0 0
        %2046 = vmatpush1.bf16.msra.mxu0 %v1756
        %2047 = vmatprep.subr.bf16.mxu0 0
        %2048 = vmatpush1.bf16.msra.mxu0 %v1757
        %2049 = vmatprep.subr.bf16.mxu0 0
        %2050 = vmatpush1.bf16.msra.mxu0 %v1758
        %2051 = vmatprep.subr.bf16.mxu0 0
        %2052 = vmatpush1.bf16.msra.mxu0 %v1759
        %2053 = vmatprep.subr.bf16.mxu0 0
        %2054 = vmatpush1.bf16.msra.mxu0 %v1760
        %2055 = vmatprep.subr.bf16.mxu0 0
        %2056 = vmatpush1.bf16.msra.mxu0 %v1761
        %2057 = vmatprep.subr.bf16.mxu0 0
        %2058 = vmatpush1.bf16.msra.mxu0 %v1762
        %2059 = vmatprep.subr.bf16.mxu0 0
        %2060 = vmatpush1.bf16.msra.mxu0 %v1763
        %2061 = vmatprep.subr.bf16.mxu0 0
        %2062 = vmatpush1.bf16.msra.mxu0 %v1764
        %2063 = vmatprep.subr.bf16.mxu0 0
        %2064 = vmatpush1.bf16.msra.mxu0 %v1765
        %2065 = vmatprep.subr.bf16.mxu0 0
        %2066 = vmatpush1.bf16.msra.mxu0 %v1766
        %2067 = vmatprep.subr.bf16.mxu0 0
        %2068 = vmatpush1.bf16.msra.mxu0 %v1767
        %2069 = vmatprep.subr.bf16.mxu0 0
        %2070 = vmatpush1.bf16.msra.mxu0 %v1768
        %2071 = vmatprep.subr.bf16.mxu0 0
        %2072 = vmatpush1.bf16.msra.mxu0 %v1769
        %2073 = vmatprep.subr.bf16.mxu0 0
        %2074 = vmatpush1.bf16.msra.mxu0 %v1770
        %2075 = vmatprep.subr.bf16.mxu0 0
        %2076 = vmatpush1.bf16.msra.mxu0 %v1771
        %2077 = vmatprep.mubr.bf16.mxu0 %v1173
        %2078 = vmatmul.mubr.bf16.gmra.mrb[0].mxu0 0
        %v2079 = vpop.f32.mrb[0].mxu0
        %v2080 = vadd.f32 %v1919, %v2079
        %v2081 = vpop.f32.mrb[0].mxu0
        %v2082 = vpop.f32.mrb[0].mxu0
        %v2083 = vadd.f32 %v1922, %v2082
        %v2084 = vpop.f32.mrb[0].mxu0
        %2085 = vmatprep.mubr.bf16.mxu0 %v1174
        %2086 = vmatmul.mubr.bf16.gmra.mrb[0].mxu0 %v1189
        %v2087 = vpop.f32.mrb[0].mxu0
        %v2088 = vadd.f32 %v1927, %v2087
        %v2089 = vpop.f32.mrb[0].mxu0
        %v2090 = vpop.f32.mrb[0].mxu0
        %v2091 = vadd.f32 %v1930, %v2090
        %v2092 = vpop.f32.mrb[0].mxu0
        %2093 = vmatprep.mubr.bf16.mxu0 %v1175
        %2094 = vmatmul.mubr.bf16.gmra.mrb[0].mxu0 %v1190
        %v2095 = vpop.f32.mrb[0].mxu0
        %v2096 = vadd.f32 %v1935, %v2095
        %v2097 = vpop.f32.mrb[0].mxu0
        %v2098 = vpop.f32.mrb[0].mxu0
        %v2099 = vadd.f32 %v1938, %v2098
        %v2100 = vpop.f32.mrb[0].mxu0
        %2101 = vmatprep.mubr.bf16.mxu0 %v1176
        %2102 = vmatmul.mubr.bf16.gmra.mrb[0].mxu0 %v1191
        %v2103 = vpop.f32.mrb[0].mxu0
        %v2104 = vadd.f32 %v1943, %v2103
        %v2105 = vpop.f32.mrb[0].mxu0
        %v2106 = vpop.f32.mrb[0].mxu0
        %v2107 = vadd.f32 %v1946, %v2106
        %v2108 = vpop.f32.mrb[0].mxu0
        %2109 = vmatprep.mubr.bf16.mxu0 %v1177
        %2110 = vmatmul.mubr.bf16.gmra.mrb[0].mxu0 %v1192
        %v2111 = vpop.f32.mrb[0].mxu0
        %v2112 = vadd.f32 %v1951, %v2111
        %v2113 = vpop.f32.mrb[0].mxu0
        %v2114 = vpop.f32.mrb[0].mxu0
        %v2115 = vadd.f32 %v1954, %v2114
        %v2116 = vpop.f32.mrb[0].mxu0
        %2117 = vmatprep.mubr.bf16.mxu0 %v1178
        %2118 = vmatmul.mubr.bf16.gmra.mrb[0].mxu0 %v1193
        %v2119 = vpop.f32.mrb[0].mxu0
        %v2120 = vadd.f32 %v1959, %v2119
        %v2121 = vpop.f32.mrb[0].mxu0
        %v2122 = vpop.f32.mrb[0].mxu0
        %v2123 = vadd.f32 %v1962, %v2122
        %v2124 = vpop.f32.mrb[0].mxu0
        %2125 = vmatprep.mubr.bf16.mxu0 %v1179
        %2126 = vmatmul.mubr.bf16.gmra.mrb[0].mxu0 %v1194
        %v2127 = vpop.f32.mrb[0].mxu0
        %v2128 = vadd.f32 %v1967, %v2127
        %v2129 = vpop.f32.mrb[0].mxu0
        %v2130 = vpop.f32.mrb[0].mxu0
        %v2131 = vadd.f32 %v1970, %v2130
        %v2132 = vpop.f32.mrb[0].mxu0
        %2133 = vmatprep.mubr.bf16.mxu0 %v1180
        %2134 = vmatmul.mubr.bf16.gmra.mrb[0].mxu0 %v1195
        %v2135 = vpop.f32.mrb[0].mxu0
        %v2136 = vadd.f32 %v1975, %v2135
        %v2137 = vpop.f32.mrb[0].mxu0
        %v2138 = vpop.f32.mrb[0].mxu0
        %v2139 = vadd.f32 %v1978, %v2138
        %v2140 = vpop.f32.mrb[0].mxu0
        %2141 = vmatprep.mubr.bf16.mxu0 %v1181
        %2142 = vmatmul.mubr.bf16.gmra.mrb[0].mxu0 %v1196
        %v2143 = vpop.f32.mrb[0].mxu0
        %v2144 = vadd.f32 %v1983, %v2143
        %v2145 = vpop.f32.mrb[0].mxu0
        %v2146 = vpop.f32.mrb[0].mxu0
        %v2147 = vadd.f32 %v1986, %v2146
        %v2148 = vpop.f32.mrb[0].mxu0
        %2149 = vmatprep.mubr.bf16.mxu0 %v1182
        %2150 = vmatmul.mubr.bf16.gmra.mrb[0].mxu0 %v1197
        %v2151 = vpop.f32.mrb[0].mxu0
        %v2152 = vadd.f32 %v1991, %v2151
        %v2153 = vpop.f32.mrb[0].mxu0
        %v2154 = vpop.f32.mrb[0].mxu0
        %v2155 = vadd.f32 %v1994, %v2154
        %v2156 = vpop.f32.mrb[0].mxu0
        %2157 = vmatprep.mubr.bf16.mxu0 %v1183
        %2158 = vmatmul.mubr.bf16.gmra.mrb[0].mxu0 %v1198
        %v2159 = vpop.f32.mrb[0].mxu0
        %v2160 = vadd.f32 %v1999, %v2159
        %v2161 = vpop.f32.mrb[0].mxu0
        %v2162 = vpop.f32.mrb[0].mxu0
        %v2163 = vadd.f32 %v2002, %v2162
        %v2164 = vpop.f32.mrb[0].mxu0
        %2165 = vmatprep.mubr.bf16.mxu0 %v1184
        %2166 = vmatmul.mubr.bf16.gmra.mrb[0].mxu0 %v1199
        %v2167 = vpop.f32.mrb[0].mxu0
        %v2168 = vadd.f32 %v2007, %v2167
        %v2169 = vpop.f32.mrb[0].mxu0
        %v2170 = vpop.f32.mrb[0].mxu0
        %v2171 = vadd.f32 %v2010, %v2170
        %v2172 = vpop.f32.mrb[0].mxu0
        %2173 = vmatprep.mubr.bf16.mxu0 %v1185
        %2174 = vmatmul.mubr.bf16.gmra.mrb[0].mxu0 %v1200
        %v2175 = vpop.f32.mrb[0].mxu0
        %v2176 = vadd.f32 %v2015, %v2175
        %v2177 = vpop.f32.mrb[0].mxu0
        %v2178 = vpop.f32.mrb[0].mxu0
        %v2179 = vadd.f32 %v2018, %v2178
        %v2180 = vpop.f32.mrb[0].mxu0
        %2181 = vmatprep.mubr.bf16.mxu0 %v1186
        %2182 = vmatmul.mubr.bf16.gmra.mrb[0].mxu0 %v1201
        %v2183 = vpop.f32.mrb[0].mxu0
        %v2184 = vadd.f32 %v2023, %v2183
        %v2185 = vpop.f32.mrb[0].mxu0
        %v2186 = vpop.f32.mrb[0].mxu0
        %v2187 = vadd.f32 %v2026, %v2186
        %v2188 = vpop.f32.mrb[0].mxu0
        %2189 = vmatprep.mubr.bf16.mxu0 %v1187
        %2190 = vmatmul.mubr.bf16.gmra.mrb[0].mxu0 %v1202
        %v2191 = vpop.f32.mrb[0].mxu0
        %v2192 = vadd.f32 %v2031, %v2191
        %v2193 = vpop.f32.mrb[0].mxu0
        %v2194 = vpop.f32.mrb[0].mxu0
        %v2195 = vadd.f32 %v2034, %v2194
        %v2196 = vpop.f32.mrb[0].mxu0
        %2197 = vmatprep.mubr.bf16.mxu0 %v1188
        %2198 = vmatmul.mubr.bf16.gmra.mrb[0].mxu0 %v1203
        %v2199 = vpop.f32.mrb[0].mxu0
        %v2200 = vadd.f32 %v2039, %v2199
        %v2201 = vpop.f32.mrb[0].mxu0
        %v2202 = vpop.f32.mrb[0].mxu0
        %v2203 = vadd.f32 %v2042, %v2202
        %v2204 = vpop.f32.mrb[0].mxu0
        %2205 = vdwg.mxu0
        %2206 = vmatprep.subr.bf16.mxu0 0
        %2207 = vmatpush1.bf16.msra.mxu0 %v1772
        %2208 = vmatprep.subr.bf16.mxu0 0
        %2209 = vmatpush1.bf16.msra.mxu0 %v1773
        %2210 = vmatprep.subr.bf16.mxu0 0
        %2211 = vmatpush1.bf16.msra.mxu0 %v1774
        %2212 = vmatprep.subr.bf16.mxu0 0
        %2213 = vmatpush1.bf16.msra.mxu0 %v1775
        %2214 = vmatprep.subr.bf16.mxu0 0
        %2215 = vmatpush1.bf16.msra.mxu0 %v1776
        %2216 = vmatprep.subr.bf16.mxu0 0
        %2217 = vmatpush1.bf16.msra.mxu0 %v1777
        %2218 = vmatprep.subr.bf16.mxu0 0
        %2219 = vmatpush1.bf16.msra.mxu0 %v1778
        %2220 = vmatprep.subr.bf16.mxu0 0
        %2221 = vmatpush1.bf16.msra.mxu0 %v1779
        %2222 = vmatprep.subr.bf16.mxu0 0
        %2223 = vmatpush1.bf16.msra.mxu0 %v1780
        %2224 = vmatprep.subr.bf16.mxu0 0
        %2225 = vmatpush1.bf16.msra.mxu0 %v1781
        %2226 = vmatprep.subr.bf16.mxu0 0
        %2227 = vmatpush1.bf16.msra.mxu0 %v1782
        %2228 = vmatprep.subr.bf16.mxu0 0
        %2229 = vmatpush1.bf16.msra.mxu0 %v1783
        %2230 = vmatprep.subr.bf16.mxu0 0
        %2231 = vmatpush1.bf16.msra.mxu0 %v1784
        %2232 = vmatprep.subr.bf16.mxu0 0
        %2233 = vmatpush1.bf16.msra.mxu0 %v1785
        %2234 = vmatprep.subr.bf16.mxu0 0
        %2235 = vmatpush1.bf16.msra.mxu0 %v1786
        %2236 = vmatprep.subr.bf16.mxu0 0
        %2237 = vmatpush1.bf16.msra.mxu0 %v1787
        %2238 = vmatprep.mubr.bf16.mxu0 %v1189
        %2239 = vmatmul.mubr.bf16.gmra.mrb[0].mxu0 %v1265
        %v2240 = vpop.f32.mrb[0].mxu0
        %v2241 = vadd.f32 %v2080, %v2240
        %v2242 = vpop.f32.mrb[0].mxu0
        %v2243 = vpop.f32.mrb[0].mxu0
        %v2244 = vadd.f32 %v2083, %v2243
        %v2245 = vpop.f32.mrb[0].mxu0
        %2246 = vmatprep.mubr.bf16.mxu0 %v1190
        %2247 = vmatmul.mubr.bf16.gmra.mrb[0].mxu0 %v1266
        %v2248 = vpop.f32.mrb[0].mxu0
        %v2249 = vadd.f32 %v2088, %v2248
        %v2250 = vpop.f32.mrb[0].mxu0
        %v2251 = vpop.f32.mrb[0].mxu0
        %v2252 = vadd.f32 %v2091, %v2251
        %v2253 = vpop.f32.mrb[0].mxu0
        %2254 = vmatprep.mubr.bf16.mxu0 %v1191
        %2255 = vmatmul.mubr.bf16.gmra.mrb[0].mxu0 %v1267
        %v2256 = vpop.f32.mrb[0].mxu0
        %v2257 = vadd.f32 %v2096, %v2256
        %v2258 = vpop.f32.mrb[0].mxu0
        %v2259 = vpop.f32.mrb[0].mxu0
        %v2260 = vadd.f32 %v2099, %v2259
        %v2261 = vpop.f32.mrb[0].mxu0
        %2262 = vmatprep.mubr.bf16.mxu0 %v1192
        %2263 = vmatmul.mubr.bf16.gmra.mrb[0].mxu0 %v1268
        %v2264 = vpop.f32.mrb[0].mxu0
        %v2265 = vadd.f32 %v2104, %v2264
        %v2266 = vpop.f32.mrb[0].mxu0
        %v2267 = vpop.f32.mrb[0].mxu0
        %v2268 = vadd.f32 %v2107, %v2267
        %v2269 = vpop.f32.mrb[0].mxu0
        %2270 = vmatprep.mubr.bf16.mxu0 %v1193
        %2271 = vmatmul.mubr.bf16.gmra.mrb[0].mxu0 %v1269
        %v2272 = vpop.f32.mrb[0].mxu0
        %v2273 = vadd.f32 %v2112, %v2272
        %v2274 = vpop.f32.mrb[0].mxu0
        %v2275 = vpop.f32.mrb[0].mxu0
        %v2276 = vadd.f32 %v2115, %v2275
        %v2277 = vpop.f32.mrb[0].mxu0
        %2278 = vmatprep.mubr.bf16.mxu0 %v1194
        %2279 = vmatmul.mubr.bf16.gmra.mrb[0].mxu0 %v1270
        %v2280 = vpop.f32.mrb[0].mxu0
        %v2281 = vadd.f32 %v2120, %v2280
        %v2282 = vpop.f32.mrb[0].mxu0
        %v2283 = vpop.f32.mrb[0].mxu0
        %v2284 = vadd.f32 %v2123, %v2283
        %v2285 = vpop.f32.mrb[0].mxu0
        %2286 = vmatprep.mubr.bf16.mxu0 %v1195
        %2287 = vmatmul.mubr.bf16.gmra.mrb[0].mxu0 %v1271
        %v2288 = vpop.f32.mrb[0].mxu0
        %v2289 = vadd.f32 %v2128, %v2288
        %v2290 = vpop.f32.mrb[0].mxu0
        %v2291 = vpop.f32.mrb[0].mxu0
        %v2292 = vadd.f32 %v2131, %v2291
        %v2293 = vpop.f32.mrb[0].mxu0
        %2294 = vmatprep.mubr.bf16.mxu0 %v1196
        %2295 = vmatmul.mubr.bf16.gmra.mrb[0].mxu0 %v1272
        %v2296 = vpop.f32.mrb[0].mxu0
        %v2297 = vadd.f32 %v2136, %v2296
        %v2298 = vpop.f32.mrb[0].mxu0
        %v2299 = vpop.f32.mrb[0].mxu0
        %v2300 = vadd.f32 %v2139, %v2299
        %v2301 = vpop.f32.mrb[0].mxu0
        %2302 = vmatprep.mubr.bf16.mxu0 %v1197
        %2303 = vmatmul.mubr.bf16.gmra.mrb[0].mxu0 %v1273
        %v2304 = vpop.f32.mrb[0].mxu0
        %v2305 = vadd.f32 %v2144, %v2304
        %v2306 = vpop.f32.mrb[0].mxu0
        %v2307 = vpop.f32.mrb[0].mxu0
        %v2308 = vadd.f32 %v2147, %v2307
        %v2309 = vpop.f32.mrb[0].mxu0
        %2310 = vmatprep.mubr.bf16.mxu0 %v1198
        %2311 = vmatmul.mubr.bf16.gmra.mrb[0].mxu0 %v1274
        %v2312 = vpop.f32.mrb[0].mxu0
        %v2313 = vadd.f32 %v2152, %v2312
        %v2314 = vpop.f32.mrb[0].mxu0
        %v2315 = vpop.f32.mrb[0].mxu0
        %v2316 = vadd.f32 %v2155, %v2315
        %v2317 = vpop.f32.mrb[0].mxu0
        %2318 = vmatprep.mubr.bf16.mxu0 %v1199
        %2319 = vmatmul.mubr.bf16.gmra.mrb[0].mxu0 %v1275
        %v2320 = vpop.f32.mrb[0].mxu0
        %v2321 = vadd.f32 %v2160, %v2320
        %v2322 = vpop.f32.mrb[0].mxu0
        %v2323 = vpop.f32.mrb[0].mxu0
        %v2324 = vadd.f32 %v2163, %v2323
        %v2325 = vpop.f32.mrb[0].mxu0
        %2326 = vmatprep.mubr.bf16.mxu0 %v1200
        %2327 = vmatmul.mubr.bf16.gmra.mrb[0].mxu0 %v1276
        %v2328 = vpop.f32.mrb[0].mxu0
        %v2329 = vadd.f32 %v2168, %v2328
        %v2330 = vpop.f32.mrb[0].mxu0
        %v2331 = vpop.f32.mrb[0].mxu0
        %v2332 = vadd.f32 %v2171, %v2331
        %v2333 = vpop.f32.mrb[0].mxu0
        %2334 = vmatprep.mubr.bf16.mxu0 %v1201
        %2335 = vmatmul.mubr.bf16.gmra.mrb[0].mxu0 %v1277
        %v2336 = vpop.f32.mrb[0].mxu0
        %v2337 = vadd.f32 %v2176, %v2336
        %v2338 = vpop.f32.mrb[0].mxu0
        %v2339 = vpop.f32.mrb[0].mxu0
        %v2340 = vadd.f32 %v2179, %v2339
        %v2341 = vpop.f32.mrb[0].mxu0
        %2342 = vmatprep.mubr.bf16.mxu0 %v1202
        %2343 = vmatmul.mubr.bf16.gmra.mrb[0].mxu0 %v1278
        %v2344 = vpop.f32.mrb[0].mxu0
        %v2345 = vadd.f32 %v2184, %v2344
        %v2346 = vpop.f32.mrb[0].mxu0
        %v2347 = vpop.f32.mrb[0].mxu0
        %v2348 = vadd.f32 %v2187, %v2347
        %v2349 = vpop.f32.mrb[0].mxu0
        %2350 = vmatprep.mubr.bf16.mxu0 %v1203
        %2351 = vmatmul.mubr.bf16.gmra.mrb[0].mxu0 %v1279
        %v2352 = vpop.f32.mrb[0].mxu0
        %v2353 = vadd.f32 %v2192, %v2352
        %v2354 = vpop.f32.mrb[0].mxu0
        %v2355 = vpop.f32.mrb[0].mxu0
        %v2356 = vadd.f32 %v2195, %v2355
        %v2357 = vpop.f32.mrb[0].mxu0
        %2358 = vmatprep.mubr.bf16.mxu0 %v1204
        %2359 = vmatmul.mubr.bf16.gmra.mrb[0].mxu0 %v1299
        %v2360 = vpop.f32.mrb[0].mxu0
        %v2361 = vadd.f32 %v2200, %v2360
        %v2362 = vpop.f32.mrb[0].mxu0
        %v2363 = vpop.f32.mrb[0].mxu0
        %v2364 = vadd.f32 %v2203, %v2363
        %v2365 = vpop.f32.mrb[0].mxu0
        %2366 = vdwg.mxu0
        %2367 = vmatprep.subr.bf16.mxu0 0
        %2368 = vmatpush1.bf16.msra.mxu0 %v1788
        %2369 = vmatprep.subr.bf16.mxu0 0
        %2370 = vmatpush1.bf16.msra.mxu0 %v1789
        %2371 = vmatprep.subr.bf16.mxu0 0
        %2372 = vmatpush1.bf16.msra.mxu0 %v1790
        %2373 = vmatprep.subr.bf16.mxu0 0
        %2374 = vmatpush1.bf16.msra.mxu0 %v1791
        %2375 = vmatprep.subr.bf16.mxu0 0
        %2376 = vmatpush1.bf16.msra.mxu0 %v1792
        %2377 = vmatprep.subr.bf16.mxu0 0
        %2378 = vmatpush1.bf16.msra.mxu0 %v1793
        %2379 = vmatprep.subr.bf16.mxu0 0
        %2380 = vmatpush1.bf16.msra.mxu0 %v1794
        %2381 = vmatprep.subr.bf16.mxu0 0
        %2382 = vmatpush1.bf16.msra.mxu0 %v1795
        %2383 = vmatprep.subr.bf16.mxu0 0
        %2384 = vmatpush1.bf16.msra.mxu0 %v1796
        %2385 = vmatprep.subr.bf16.mxu0 0
        %2386 = vmatpush1.bf16.msra.mxu0 %v1797
        %2387 = vmatprep.subr.bf16.mxu0 0
        %2388 = vmatpush1.bf16.msra.mxu0 %v1798
        %2389 = vmatprep.subr.bf16.mxu0 0
        %2390 = vmatpush1.bf16.msra.mxu0 %v1799
        %2391 = vmatprep.subr.bf16.mxu0 0
        %2392 = vmatpush1.bf16.msra.mxu0 %v1800
        %2393 = vmatprep.subr.bf16.mxu0 0
        %2394 = vmatpush1.bf16.msra.mxu0 %v1801
        %2395 = vmatprep.subr.bf16.mxu0 0
        %2396 = vmatpush1.bf16.msra.mxu0 %v1802
        %2397 = vmatprep.subr.bf16.mxu0 0
        %2398 = vmatpush1.bf16.msra.mxu0 %v1803
        %2399 = vmatprep.mubr.bf16.mxu0 %v1266
        %2400 = vmatmul.mubr.bf16.gmra.mrb[0].mxu0 %v1174
        %v2401 = vpop.f32.mrb[0].mxu0
        %v2402 = vadd.f32 %v2241, %v2401
        %v2403 = vpop.f32.mrb[0].mxu0
        %v2404 = vpop.f32.mrb[0].mxu0
        %v2405 = vadd.f32 %v2244, %v2404
        %v2406 = vpop.f32.mrb[0].mxu0
        %2407 = vmatprep.mubr.bf16.mxu0 %v1267
        %2408 = vmatmul.mubr.bf16.gmra.mrb[0].mxu0 %v1175
        %v2409 = vpop.f32.mrb[0].mxu0
        %v2410 = vadd.f32 %v2249, %v2409
        %v2411 = vpop.f32.mrb[0].mxu0
        %v2412 = vpop.f32.mrb[0].mxu0
        %v2413 = vadd.f32 %v2252, %v2412
        %v2414 = vpop.f32.mrb[0].mxu0
        %2415 = vmatprep.mubr.bf16.mxu0 %v1268
        %2416 = vmatmul.mubr.bf16.gmra.mrb[0].mxu0 %v1176
        %v2417 = vpop.f32.mrb[0].mxu0
        %v2418 = vadd.f32 %v2257, %v2417
        %v2419 = vpop.f32.mrb[0].mxu0
        %v2420 = vpop.f32.mrb[0].mxu0
        %v2421 = vadd.f32 %v2260, %v2420
        %v2422 = vpop.f32.mrb[0].mxu0
        %2423 = vmatprep.mubr.bf16.mxu0 %v1269
        %2424 = vmatmul.mubr.bf16.gmra.mrb[0].mxu0 %v1177
        %v2425 = vpop.f32.mrb[0].mxu0
        %v2426 = vadd.f32 %v2265, %v2425
        %v2427 = vpop.f32.mrb[0].mxu0
        %v2428 = vpop.f32.mrb[0].mxu0
        %v2429 = vadd.f32 %v2268, %v2428
        %v2430 = vpop.f32.mrb[0].mxu0
        %2431 = vmatprep.mubr.bf16.mxu0 %v1270
        %2432 = vmatmul.mubr.bf16.gmra.mrb[0].mxu0 %v1178
        %v2433 = vpop.f32.mrb[0].mxu0
        %v2434 = vadd.f32 %v2273, %v2433
        %v2435 = vpop.f32.mrb[0].mxu0
        %v2436 = vpop.f32.mrb[0].mxu0
        %v2437 = vadd.f32 %v2276, %v2436
        %v2438 = vpop.f32.mrb[0].mxu0
        %2439 = vmatprep.mubr.bf16.mxu0 %v1271
        %2440 = vmatmul.mubr.bf16.gmra.mrb[0].mxu0 %v1179
        %v2441 = vpop.f32.mrb[0].mxu0
        %v2442 = vadd.f32 %v2281, %v2441
        %v2443 = vpop.f32.mrb[0].mxu0
        %v2444 = vpop.f32.mrb[0].mxu0
        %v2445 = vadd.f32 %v2284, %v2444
        %v2446 = vpop.f32.mrb[0].mxu0
        %2447 = vmatprep.mubr.bf16.mxu0 %v1272
        %2448 = vmatmul.mubr.bf16.gmra.mrb[0].mxu0 %v1180
        %v2449 = vpop.f32.mrb[0].mxu0
        %v2450 = vadd.f32 %v2289, %v2449
        %v2451 = vpop.f32.mrb[0].mxu0
        %v2452 = vpop.f32.mrb[0].mxu0
        %v2453 = vadd.f32 %v2292, %v2452
        %v2454 = vpop.f32.mrb[0].mxu0
        %2455 = vmatprep.mubr.bf16.mxu0 %v1273
        %2456 = vmatmul.mubr.bf16.gmra.mrb[0].mxu0 %v1181
        %v2457 = vpop.f32.mrb[0].mxu0
        %v2458 = vadd.f32 %v2297, %v2457
        %v2459 = vpop.f32.mrb[0].mxu0
        %v2460 = vpop.f32.mrb[0].mxu0
        %v2461 = vadd.f32 %v2300, %v2460
        %v2462 = vpop.f32.mrb[0].mxu0
        %2463 = vmatprep.mubr.bf16.mxu0 %v1274
        %2464 = vmatmul.mubr.bf16.gmra.mrb[0].mxu0 %v1182
        %v2465 = vpop.f32.mrb[0].mxu0
        %v2466 = vadd.f32 %v2305, %v2465
        %v2467 = vpop.f32.mrb[0].mxu0
        %v2468 = vpop.f32.mrb[0].mxu0
        %v2469 = vadd.f32 %v2308, %v2468
        %v2470 = vpop.f32.mrb[0].mxu0
        %2471 = vmatprep.mubr.bf16.mxu0 %v1275
        %2472 = vmatmul.mubr.bf16.gmra.mrb[0].mxu0 %v1183
        %v2473 = vpop.f32.mrb[0].mxu0
        %v2474 = vadd.f32 %v2313, %v2473
        %v2475 = vpop.f32.mrb[0].mxu0
        %v2476 = vpop.f32.mrb[0].mxu0
        %v2477 = vadd.f32 %v2316, %v2476
        %v2478 = vpop.f32.mrb[0].mxu0
        %2479 = vmatprep.mubr.bf16.mxu0 %v1276
        %2480 = vmatmul.mubr.bf16.gmra.mrb[0].mxu0 %v1184
        %v2481 = vpop.f32.mrb[0].mxu0
        %v2482 = vadd.f32 %v2321, %v2481
        %v2483 = vpop.f32.mrb[0].mxu0
        %v2484 = vpop.f32.mrb[0].mxu0
        %v2485 = vadd.f32 %v2324, %v2484
        %v2486 = vpop.f32.mrb[0].mxu0
        %2487 = vmatprep.mubr.bf16.mxu0 %v1277
        %2488 = vmatmul.mubr.bf16.gmra.mrb[0].mxu0 %v1185
        %v2489 = vpop.f32.mrb[0].mxu0
        %v2490 = vadd.f32 %v2329, %v2489
        %v2491 = vpop.f32.mrb[0].mxu0
        %v2492 = vpop.f32.mrb[0].mxu0
        %v2493 = vadd.f32 %v2332, %v2492
        %v2494 = vpop.f32.mrb[0].mxu0
        %2495 = vmatprep.mubr.bf16.mxu0 %v1278
        %2496 = vmatmul.mubr.bf16.gmra.mrb[0].mxu0 %v1186
        %v2497 = vpop.f32.mrb[0].mxu0
        %v2498 = vadd.f32 %v2337, %v2497
        %v2499 = vpop.f32.mrb[0].mxu0
        %v2500 = vpop.f32.mrb[0].mxu0
        %v2501 = vadd.f32 %v2340, %v2500
        %v2502 = vpop.f32.mrb[0].mxu0
        %2503 = vmatprep.mubr.bf16.mxu0 %v1279
        %2504 = vmatmul.mubr.bf16.gmra.mrb[0].mxu0 %v1187
        %v2505 = vpop.f32.mrb[0].mxu0
        %v2506 = vadd.f32 %v2345, %v2505
        %v2507 = vpop.f32.mrb[0].mxu0
        %v2508 = vpop.f32.mrb[0].mxu0
        %v2509 = vadd.f32 %v2348, %v2508
        %v2510 = vpop.f32.mrb[0].mxu0
        %2511 = vmatprep.mubr.bf16.mxu0 %v1299
        %2512 = vmatmul.mubr.bf16.gmra.mrb[0].mxu0 %v1188
        %v2513 = vpop.f32.mrb[0].mxu0
        %v2514 = vadd.f32 %v2353, %v2513
        %v2515 = vpop.f32.mrb[0].mxu0
        %v2516 = vpop.f32.mrb[0].mxu0
        %v2517 = vadd.f32 %v2356, %v2516
        %v2518 = vpop.f32.mrb[0].mxu0
        %2519 = vmatprep.mubr.bf16.mxu0 0
        %2520 = vmatmul.mubr.bf16.gmra.mrb[0].mxu0 0
        %v2521 = vpop.f32.mrb[0].mxu0
        %v2522 = vadd.f32 %v2361, %v2521
        %v2523 = vpop.f32.mrb[0].mxu0
        %v2524 = vpop.f32.mrb[0].mxu0
        %v2525 = vadd.f32 %v2364, %v2524
        %v2526 = vpop.f32.mrb[0].mxu0
        %2527 = vdwg.mxu0
        %2528 = vmatprep.subr.bf16.mxu0 0
        %2529 = vmatpush1.bf16.msra.mxu0 %v1804
        %2530 = vmatprep.subr.bf16.mxu0 0
        %2531 = vmatpush1.bf16.msra.mxu0 %v1805
        %2532 = vmatprep.subr.bf16.mxu0 0
        %2533 = vmatpush1.bf16.msra.mxu0 %v1806
        %2534 = vmatprep.subr.bf16.mxu0 0
        %2535 = vmatpush1.bf16.msra.mxu0 %v1807
        %2536 = vmatprep.subr.bf16.mxu0 0
        %2537 = vmatpush1.bf16.msra.mxu0 %v1808
        %2538 = vmatprep.subr.bf16.mxu0 0
        %2539 = vmatpush1.bf16.msra.mxu0 %v1809
        %2540 = vmatprep.subr.bf16.mxu0 0
        %2541 = vmatpush1.bf16.msra.mxu0 %v1810
        %2542 = vmatprep.subr.bf16.mxu0 0
        %2543 = vmatpush1.bf16.msra.mxu0 %v1811
        %2544 = vmatprep.subr.bf16.mxu0 0
        %2545 = vmatpush1.bf16.msra.mxu0 0
        %2546 = vmatprep.subr.bf16.mxu0 0
        %2547 = vmatpush1.bf16.msra.mxu0 0
        %2548 = vmatprep.subr.bf16.mxu0 0
        %2549 = vmatpush1.bf16.msra.mxu0 0
        %2550 = vmatprep.subr.bf16.mxu0 0
        %2551 = vmatpush1.bf16.msra.mxu0 0
        %2552 = vmatprep.subr.bf16.mxu0 0
        %2553 = vmatpush1.bf16.msra.mxu0 0
        %2554 = vmatprep.subr.bf16.mxu0 0
        %2555 = vmatpush1.bf16.msra.mxu0 0
        %2556 = vmatprep.subr.bf16.mxu0 0
        %2557 = vmatpush1.bf16.msra.mxu0 0
        %2558 = vmatprep.subr.bf16.mxu0 0
        %2559 = vmatpush1.bf16.msra.mxu0 0
        %2560 = vmatprep.mubr.bf16.mxu0 0
        %2561 = vmatmul.mubr.bf16.gmra.mrb[0].mxu0 %v1190
        %v2562 = vpop.f32.mrb[0].mxu0
        %v2563 = vadd.f32 %v2402, %v2562
        %v2564 = vpop.f32.mrb[0].mxu0
        %v2565 = vpop.f32.mrb[0].mxu0
        %v2566 = vadd.f32 %v2405, %v2565
        %v2567 = vpop.f32.mrb[0].mxu0
        %2568 = vmatprep.mubr.bf16.mxu0 0
        %2569 = vmatmul.mubr.bf16.gmra.mrb[0].mxu0 %v1191
        %v2570 = vpop.f32.mrb[0].mxu0
        %v2571 = vadd.f32 %v2410, %v2570
        %v2572 = vpop.f32.mrb[0].mxu0
        %v2573 = vpop.f32.mrb[0].mxu0
        %v2574 = vadd.f32 %v2413, %v2573
        %v2575 = vpop.f32.mrb[0].mxu0
        %2576 = vmatprep.mubr.bf16.mxu0 0
        %2577 = vmatmul.mubr.bf16.gmra.mrb[0].mxu0 %v1192
        %v2578 = vpop.f32.mrb[0].mxu0
        %v2579 = vadd.f32 %v2418, %v2578
        %v2580 = vpop.f32.mrb[0].mxu0
        %v2581 = vpop.f32.mrb[0].mxu0
        %v2582 = vadd.f32 %v2421, %v2581
        %v2583 = vpop.f32.mrb[0].mxu0
        %2584 = vmatprep.mubr.bf16.mxu0 0
        %2585 = vmatmul.mubr.bf16.gmra.mrb[0].mxu0 %v1193
        %v2586 = vpop.f32.mrb[0].mxu0
        %v2587 = vadd.f32 %v2426, %v2586
        %v2588 = vpop.f32.mrb[0].mxu0
        %v2589 = vpop.f32.mrb[0].mxu0
        %v2590 = vadd.f32 %v2429, %v2589
        %v2591 = vpop.f32.mrb[0].mxu0
        %2592 = vmatprep.mubr.bf16.mxu0 0
        %2593 = vmatmul.mubr.bf16.gmra.mrb[0].mxu0 %v1194
        %v2594 = vpop.f32.mrb[0].mxu0
        %v2595 = vadd.f32 %v2434, %v2594
        %v2596 = vpop.f32.mrb[0].mxu0
        %v2597 = vpop.f32.mrb[0].mxu0
        %v2598 = vadd.f32 %v2437, %v2597
        %v2599 = vpop.f32.mrb[0].mxu0
        %2600 = vmatprep.mubr.bf16.mxu0 0
        %2601 = vmatmul.mubr.bf16.gmra.mrb[0].mxu0 %v1195
        %v2602 = vpop.f32.mrb[0].mxu0
        %v2603 = vadd.f32 %v2442, %v2602
        %v2604 = vpop.f32.mrb[0].mxu0
        %v2605 = vpop.f32.mrb[0].mxu0
        %v2606 = vadd.f32 %v2445, %v2605
        %v2607 = vpop.f32.mrb[0].mxu0
        %2608 = vmatprep.mubr.bf16.mxu0 0
        %2609 = vmatmul.mubr.bf16.gmra.mrb[0].mxu0 %v1196
        %v2610 = vpop.f32.mrb[0].mxu0
        %v2611 = vadd.f32 %v2450, %v2610
        %v2612 = vpop.f32.mrb[0].mxu0
        %v2613 = vpop.f32.mrb[0].mxu0
        %v2614 = vadd.f32 %v2453, %v2613
        %v2615 = vpop.f32.mrb[0].mxu0
        %2616 = vmatprep.mubr.bf16.mxu0 0
        %2617 = vmatmul.mubr.bf16.gmra.mrb[0].mxu0 %v1197
        %v2618 = vpop.f32.mrb[0].mxu0
        %v2619 = vadd.f32 %v2458, %v2618
        %v2620 = vpop.f32.mrb[0].mxu0
        %v2621 = vpop.f32.mrb[0].mxu0
        %v2622 = vadd.f32 %v2461, %v2621
        %v2623 = vpop.f32.mrb[0].mxu0
        %2624 = vmatprep.mubr.bf16.mxu0 0
        %2625 = vmatmul.mubr.bf16.gmra.mrb[0].mxu0 %v1198
        %v2626 = vpop.f32.mrb[0].mxu0
        %v2627 = vadd.f32 %v2466, %v2626
        %v2628 = vpop.f32.mrb[0].mxu0
        %v2629 = vpop.f32.mrb[0].mxu0
        %v2630 = vadd.f32 %v2469, %v2629
        %v2631 = vpop.f32.mrb[0].mxu0
        %2632 = vmatprep.mubr.bf16.mxu0 0
        %2633 = vmatmul.mubr.bf16.gmra.mrb[0].mxu0 %v1199
        %v2634 = vpop.f32.mrb[0].mxu0
        %v2635 = vadd.f32 %v2474, %v2634
        %v2636 = vpop.f32.mrb[0].mxu0
        %v2637 = vpop.f32.mrb[0].mxu0
        %v2638 = vadd.f32 %v2477, %v2637
        %v2639 = vpop.f32.mrb[0].mxu0
        %2640 = vmatprep.mubr.bf16.mxu0 0
        %2641 = vmatmul.mubr.bf16.gmra.mrb[0].mxu0 %v1200
        %v2642 = vpop.f32.mrb[0].mxu0
        %v2643 = vadd.f32 %v2482, %v2642
        %v2644 = vpop.f32.mrb[0].mxu0
        %v2645 = vpop.f32.mrb[0].mxu0
        %v2646 = vadd.f32 %v2485, %v2645
        %v2647 = vpop.f32.mrb[0].mxu0
        %2648 = vmatprep.mubr.bf16.mxu0 0
        %2649 = vmatmul.mubr.bf16.gmra.mrb[0].mxu0 %v1201
        %v2650 = vpop.f32.mrb[0].mxu0
        %v2651 = vadd.f32 %v2490, %v2650
        %v2652 = vpop.f32.mrb[0].mxu0
        %v2653 = vpop.f32.mrb[0].mxu0
        %v2654 = vadd.f32 %v2493, %v2653
        %v2655 = vpop.f32.mrb[0].mxu0
        %2656 = vmatprep.mubr.bf16.mxu0 0
        %2657 = vmatmul.mubr.bf16.gmra.mrb[0].mxu0 %v1202
        %v2658 = vpop.f32.mrb[0].mxu0
        %v2659 = vadd.f32 %v2498, %v2658
        %v2660 = vpop.f32.mrb[0].mxu0
        %v2661 = vpop.f32.mrb[0].mxu0
        %v2662 = vadd.f32 %v2501, %v2661
        %v2663 = vpop.f32.mrb[0].mxu0
        %2664 = vmatprep.mubr.bf16.mxu0 0
        %2665 = vmatmul.mubr.bf16.gmra.mrb[0].mxu0 %v1203
        %v2666 = vpop.f32.mrb[0].mxu0
        %v2667 = vadd.f32 %v2506, %v2666
        %v2668 = vpop.f32.mrb[0].mxu0
        %v2669 = vpop.f32.mrb[0].mxu0
        %v2670 = vadd.f32 %v2509, %v2669
        %v2671 = vpop.f32.mrb[0].mxu0
        %2672 = vmatprep.mubr.bf16.mxu0 0
        %2673 = vmatmul.mubr.bf16.gmra.mrb[0].mxu0 %v1204
        %v2674 = vpop.f32.mrb[0].mxu0
        %v2675 = vadd.f32 %v2514, %v2674
        %v2676 = vpop.f32.mrb[0].mxu0
        %v2677 = vpop.f32.mrb[0].mxu0
        %v2678 = vadd.f32 %v2517, %v2677
        %v2679 = vpop.f32.mrb[0].mxu0
        %2680 = vmatprep.mubr.bf16.mxu0 0
        %2681 = vmatmul.mubr.bf16.gmra.mrb[0].mxu0 0
        %v2682 = vpop.f32.mrb[0].mxu0
        %v2683 = vadd.f32 %v2522, %v2682
        %v2684 = vpop.f32.mrb[0].mxu0
        %v2685 = vpop.f32.mrb[0].mxu0
        %v2686 = vadd.f32 %v2525, %v2685
        %v2687 = vpop.f32.mrb[0].mxu0
        %2688 = vdwg.mxu0
        %v2689 = vmax.f32 %v2563, 0.0
        %v2690 = vmax.f32 %v2566, 0.0
        %v2691 = vmax.f32 %v2571, 0.0
        %v2692 = vmax.f32 %v2574, 0.0
        %v2693 = vmax.f32 %v2579, 0.0
        %v2694 = vmax.f32 %v2582, 0.0
        %v2695 = vmax.f32 %v2587, 0.0
        %v2696 = vmax.f32 %v2590, 0.0
        %v2697 = vmax.f32 %v2595, 0.0
        %v2698 = vmax.f32 %v2598, 0.0
        %v2699 = vmax.f32 %v2603, 0.0
        %v2700 = vmax.f32 %v2606, 0.0
        %v2701 = vmax.f32 %v2611, 0.0
        %v2702 = vmax.f32 %v2614, 0.0
        %v2703 = vmax.f32 %v2619, 0.0
        %v2704 = vmax.f32 %v2622, 0.0
        %v2705 = vmax.f32 %v2627, 0.0
        %v2706 = vmax.f32 %v2630, 0.0
        %v2707 = vmax.f32 %v2635, 0.0
        %v2708 = vmax.f32 %v2638, 0.0
        %v2709 = vmax.f32 %v2643, 0.0
        %v2710 = vmax.f32 %v2646, 0.0
        %v2711 = vmax.f32 %v2651, 0.0
        %v2712 = vmax.f32 %v2654, 0.0
        %v2713 = vmax.f32 %v2659, 0.0
        %v2714 = vmax.f32 %v2662, 0.0
        %v2715 = vmax.f32 %v2667, 0.0
        %v2716 = vmax.f32 %v2670, 0.0
        %v2717 = vmax.f32 %v2675, 0.0
        %v2718 = vmax.f32 %v2678, 0.0
        %v2719 = vmax.f32 %v2683, 0.0
        %v2720 = vmax.f32 %v2686, 0.0
        %v2721 = vpack.c.bf16 %v2690, %v2689
        %v2722 = vpack.c.bf16 %v2692, %v2691
        %v2723 = vpack.c.bf16 %v2694, %v2693
        %v2724 = vpack.c.bf16 %v2696, %v2695
        %v2725 = vpack.c.bf16 %v2698, %v2697
        %v2726 = vpack.c.bf16 %v2700, %v2699
        %v2727 = vpack.c.bf16 %v2702, %v2701
        %v2728 = vpack.c.bf16 %v2704, %v2703
        %v2729 = vpack.c.bf16 %v2706, %v2705
        %v2730 = vpack.c.bf16 %v2708, %v2707
        %v2731 = vpack.c.bf16 %v2710, %v2709
        %v2732 = vpack.c.bf16 %v2712, %v2711
        %v2733 = vpack.c.bf16 %v2714, %v2713
        %v2734 = vpack.c.bf16 %v2716, %v2715
        %v2735 = vpack.c.bf16 %v2718, %v2717
        %v2736 = vpack.c.bf16 %v2720, %v2719
        %2737 = vst [vmem:[#allocation2] sm:$0xff] %v2721
        %2738 = vst [vmem:[#allocation2 + $0x8] sm:$0xff] %v2722
        %2739 = vst [vmem:[#allocation2 + $0x10] sm:$0xff] %v2723
        %2740 = vst [vmem:[#allocation2 + $0x18] sm:$0xff] %v2724
        %2741 = vst [vmem:[#allocation2 + $0x20] sm:$0xff] %v2725
        %2742 = vst [vmem:[#allocation2 + $0x28] sm:$0xff] %v2726
        %2743 = vst [vmem:[#allocation2 + $0x30] sm:$0xff] %v2727
        %2744 = vst [vmem:[#allocation2 + $0x38] sm:$0xff] %v2728
        %2745 = vst [vmem:[#allocation2 + $0x40] sm:$0xff] %v2729
        %2746 = vst [vmem:[#allocation2 + $0x48] sm:$0xff] %v2730
        %2747 = vst [vmem:[#allocation2 + $0x50] sm:$0xff] %v2731
        %2748 = vst [vmem:[#allocation2 + $0x58] sm:$0xff] %v2732
        %2749 = vst [vmem:[#allocation2 + $0x60] sm:$0xff] %v2733
        %2750 = vst [vmem:[#allocation2 + $0x68] sm:$0xff] %v2734
        %2751 = vst [vmem:[#allocation2 + $0x70] sm:$0xff] %v2735
        %2752 = vst [vmem:[#allocation2 + $0x78] sm:$0xff] %v2736
        %s2753 = smul.u32 %s24, 128
        %s2754 = sshra.s32 %s2753, 4
        %s2755 = sand.u32 %s2753, 15
        %s2756 = smul.addr %s2754, 8
        %s2757 = scalar_lea.vmem [#allocation2], %s2756
        %v2758 = vld [vmem:[%s2757] sm:$0xff]
        %v2759 = vld [vmem:[%s2757 + $0x8] sm:$0xff]
        %v2760 = vld [vmem:[%s2757 + $0x10] sm:$0xff]
        %v2761 = vld [vmem:[%s2757 + $0x18] sm:$0xff]
        %v2762 = vld [vmem:[%s2757 + $0x20] sm:$0xff]
        %v2763 = vld [vmem:[%s2757 + $0x28] sm:$0xff]
        %v2764 = vld [vmem:[%s2757 + $0x30] sm:$0xff]
        %v2765 = vld [vmem:[%s2757 + $0x38] sm:$0xff]
        %v2766 = vld [vmem:[#allocation7] sm:$0xff]
        %v2767 = vld [vmem:[#allocation7 + $0x18] sm:$0xff]
        %v2768 = vld [vmem:[#allocation7 + $0x30] sm:$0xff]
        %v2769 = vld [vmem:[#allocation7 + $0x48] sm:$0xff]
        %v2770 = vld [vmem:[#allocation7 + $0x60] sm:$0xff]
        %v2771 = vld [vmem:[#allocation7 + $0x78] sm:$0xff]
        %v2772 = vld [vmem:[#allocation7 + $0x90] sm:$0xff]
        %v2773 = vld [vmem:[#allocation7 + $0xa8] sm:$0xff]
        %v2774 = vld [vmem:[#allocation7 + $0xc0] sm:$0xff]
        %v2775 = vld [vmem:[#allocation7 + $0xd8] sm:$0xff]
        %v2776 = vld [vmem:[#allocation7 + $0xf0] sm:$0xff]
        %v2777 = vld [vmem:[#allocation7 + $0x108] sm:$0xff]
        %v2778 = vld [vmem:[#allocation7 + $0x120] sm:$0xff]
        %v2779 = vld [vmem:[#allocation7 + $0x138] sm:$0xff]
        %v2780 = vld [vmem:[#allocation7 + $0x150] sm:$0xff]
        %v2781 = vld [vmem:[#allocation7 + $0x168] sm:$0xff]
        %v2782 = vld [vmem:[#allocation8] sm:$0x3]
        %v2784 = vlaneseq
        %v2785 = vshrl.u32 %v2784, 7
        %v2786 = vsub.s32 0, %v2785
        %v2787 = vrot.slane %v2782, %v2786
        %v2788 = vlaneseq
        %v2789 = vshrl.u32 %v2788, 7
        %v2790 = vsub.s32 1, %v2789
        %v2791 = vrot.slane %v2782, %v2790
        %v2810 = vunpack.c.l.b16 %v2766
        %v2811 = vunpack.c.h.b16 %v2766
        %v2812 = vunpack.c.l.b16 %v2767
        %v2813 = vunpack.c.h.b16 %v2767
        %v2814 = vunpack.c.l.b16 %v2768
        %v2815 = vunpack.c.h.b16 %v2768
        %v2816 = vunpack.c.l.b16 %v2769
        %v2817 = vunpack.c.h.b16 %v2769
        %v2818 = vunpack.c.l.b16 %v2770
        %v2819 = vunpack.c.h.b16 %v2770
        %v2820 = vunpack.c.l.b16 %v2771
        %v2821 = vunpack.c.h.b16 %v2771
        %v2822 = vunpack.c.l.b16 %v2772
        %v2823 = vunpack.c.h.b16 %v2772
        %v2824 = vunpack.c.l.b16 %v2773
        %v2825 = vunpack.c.h.b16 %v2773
        %v2826 = vunpack.c.l.b16 %v2774
        %v2827 = vunpack.c.h.b16 %v2774
        %v2828 = vunpack.c.l.b16 %v2775
        %v2829 = vunpack.c.h.b16 %v2775
        %v2830 = vunpack.c.l.b16 %v2776
        %v2831 = vunpack.c.h.b16 %v2776
        %v2832 = vunpack.c.l.b16 %v2777
        %v2833 = vunpack.c.h.b16 %v2777
        %v2834 = vunpack.c.l.b16 %v2778
        %v2835 = vunpack.c.h.b16 %v2778
        %v2836 = vunpack.c.l.b16 %v2779
        %v2837 = vunpack.c.h.b16 %v2779
        %v2838 = vunpack.c.l.b16 %v2780
        %v2839 = vunpack.c.h.b16 %v2780
        %v2840 = vunpack.c.l.b16 %v2781
        %v2841 = vunpack.c.h.b16 %v2781
        %v2842 = vpack.c.b16 %v2812, %v2810
        %v2843 = vpack.c.b16 %v2813, %v2811
        %v2844 = vpack.c.b16 %v2816, %v2814
        %v2845 = vpack.c.b16 %v2817, %v2815
        %v2846 = vpack.c.b16 %v2820, %v2818
        %v2847 = vpack.c.b16 %v2821, %v2819
        %v2848 = vpack.c.b16 %v2824, %v2822
        %v2849 = vpack.c.b16 %v2825, %v2823
        %v2850 = vpack.c.b16 %v2828, %v2826
        %v2851 = vpack.c.b16 %v2829, %v2827
        %v2852 = vpack.c.b16 %v2832, %v2830
        %v2853 = vpack.c.b16 %v2833, %v2831
        %v2854 = vpack.c.b16 %v2836, %v2834
        %v2855 = vpack.c.b16 %v2837, %v2835
        %v2856 = vpack.c.b16 %v2840, %v2838
        %v2857 = vpack.c.b16 %v2841, %v2839
        %2874 = vmatprep.subr.bf16.mxu0 %v2843
        %2875 = vmatpush1.bf16.msra.mxu0 %v2842
        %2876 = vmatprep.subr.bf16.mxu0 %v2845
        %2877 = vmatpush1.bf16.msra.mxu0 %v2844
        %2878 = vmatprep.subr.bf16.mxu0 %v2847
        %2879 = vmatpush1.bf16.msra.mxu0 %v2846
        %2880 = vmatprep.subr.bf16.mxu0 %v2849
        %2881 = vmatpush1.bf16.msra.mxu0 %v2848
        %2882 = vmatprep.subr.bf16.mxu0 %v2851
        %2883 = vmatpush1.bf16.msra.mxu0 %v2850
        %2884 = vmatprep.subr.bf16.mxu0 %v2853
        %2885 = vmatpush1.bf16.msra.mxu0 %v2852
        %2886 = vmatprep.subr.bf16.mxu0 %v2855
        %2887 = vmatpush1.bf16.msra.mxu0 %v2854
        %2888 = vmatprep.subr.bf16.mxu0 %v2857
        %2889 = vmatpush1.bf16.msra.mxu0 %v2856
        %2890 = vmatprep.subr.bf16.mxu0 0
        %2891 = vmatpush1.bf16.msra.mxu0 0
        %2892 = vmatprep.subr.bf16.mxu0 0
        %2893 = vmatpush1.bf16.msra.mxu0 0
        %2894 = vmatprep.subr.bf16.mxu0 0
        %2895 = vmatpush1.bf16.msra.mxu0 0
        %2896 = vmatprep.subr.bf16.mxu0 0
        %2897 = vmatpush1.bf16.msra.mxu0 0
        %2898 = vmatprep.subr.bf16.mxu0 0
        %2899 = vmatpush1.bf16.msra.mxu0 0
        %2900 = vmatprep.subr.bf16.mxu0 0
        %2901 = vmatpush1.bf16.msra.mxu0 0
        %2902 = vmatprep.subr.bf16.mxu0 0
        %2903 = vmatpush1.bf16.msra.mxu0 0
        %2904 = vmatprep.subr.bf16.mxu0 0
        %2905 = vmatpush1.bf16.msra.mxu0 0
        %2906 = vmatprep.mubr.bf16.mxu0 0
        %2907 = vmatmul.mubr.bf16.gmra.mrb[0].mxu0 %v2758
        %v2908 = vpop.f32.mrb[0].mxu0
        %v2909 = vadd.f32 %v2787, %v2908
        %v2910 = vpop.f32.mrb[0].mxu0
        %v2911 = vadd.f32 %v2791, %v2910
        %v2912 = vpop.f32.mrb[0].mxu0
        %v2913 = vadd.f32 %v2787, %v2912
        %v2914 = vpop.f32.mrb[0].mxu0
        %v2915 = vadd.f32 %v2791, %v2914
        %2916 = vmatprep.mubr.bf16.mxu0 0
        %2917 = vmatmul.mubr.bf16.gmra.mrb[0].mxu0 %v2759
        %v2918 = vpop.f32.mrb[0].mxu0
        %v2919 = vadd.f32 %v2787, %v2918
        %v2920 = vpop.f32.mrb[0].mxu0
        %v2921 = vadd.f32 %v2791, %v2920
        %v2922 = vpop.f32.mrb[0].mxu0
        %v2923 = vadd.f32 %v2787, %v2922
        %v2924 = vpop.f32.mrb[0].mxu0
        %v2925 = vadd.f32 %v2791, %v2924
        %2926 = vmatprep.mubr.bf16.mxu0 0
        %2927 = vmatmul.mubr.bf16.gmra.mrb[0].mxu0 %v2760
        %v2928 = vpop.f32.mrb[0].mxu0
        %v2929 = vadd.f32 %v2787, %v2928
        %v2930 = vpop.f32.mrb[0].mxu0
        %v2931 = vadd.f32 %v2791, %v2930
        %v2932 = vpop.f32.mrb[0].mxu0
        %v2933 = vadd.f32 %v2787, %v2932
        %v2934 = vpop.f32.mrb[0].mxu0
        %v2935 = vadd.f32 %v2791, %v2934
        %2936 = vmatprep.mubr.bf16.mxu0 0
        %2937 = vmatmul.mubr.bf16.gmra.mrb[0].mxu0 %v2761
        %v2938 = vpop.f32.mrb[0].mxu0
        %v2939 = vadd.f32 %v2787, %v2938
        %v2940 = vpop.f32.mrb[0].mxu0
        %v2941 = vadd.f32 %v2791, %v2940
        %v2942 = vpop.f32.mrb[0].mxu0
        %v2943 = vadd.f32 %v2787, %v2942
        %v2944 = vpop.f32.mrb[0].mxu0
        %v2945 = vadd.f32 %v2791, %v2944
        %2946 = vmatprep.mubr.bf16.mxu0 0
        %2947 = vmatmul.mubr.bf16.gmra.mrb[0].mxu0 %v2762
        %v2948 = vpop.f32.mrb[0].mxu0
        %v2949 = vadd.f32 %v2787, %v2948
        %v2950 = vpop.f32.mrb[0].mxu0
        %v2951 = vadd.f32 %v2791, %v2950
        %v2952 = vpop.f32.mrb[0].mxu0
        %v2953 = vadd.f32 %v2787, %v2952
        %v2954 = vpop.f32.mrb[0].mxu0
        %v2955 = vadd.f32 %v2791, %v2954
        %2956 = vmatprep.mubr.bf16.mxu0 0
        %2957 = vmatmul.mubr.bf16.gmra.mrb[0].mxu0 %v2763
        %v2958 = vpop.f32.mrb[0].mxu0
        %v2959 = vadd.f32 %v2787, %v2958
        %v2960 = vpop.f32.mrb[0].mxu0
        %v2961 = vadd.f32 %v2791, %v2960
        %v2962 = vpop.f32.mrb[0].mxu0
        %v2963 = vadd.f32 %v2787, %v2962
        %v2964 = vpop.f32.mrb[0].mxu0
        %v2965 = vadd.f32 %v2791, %v2964
        %2966 = vmatprep.mubr.bf16.mxu0 0
        %2967 = vmatmul.mubr.bf16.gmra.mrb[0].mxu0 %v2764
        %v2968 = vpop.f32.mrb[0].mxu0
        %v2969 = vadd.f32 %v2787, %v2968
        %v2970 = vpop.f32.mrb[0].mxu0
        %v2971 = vadd.f32 %v2791, %v2970
        %v2972 = vpop.f32.mrb[0].mxu0
        %v2973 = vadd.f32 %v2787, %v2972
        %v2974 = vpop.f32.mrb[0].mxu0
        %v2975 = vadd.f32 %v2791, %v2974
        %2976 = vmatprep.mubr.bf16.mxu0 0
        %2977 = vmatmul.mubr.bf16.gmra.mrb[0].mxu0 %v2765
        %v2978 = vpop.f32.mrb[0].mxu0
        %v2979 = vadd.f32 %v2787, %v2978
        %v2980 = vpop.f32.mrb[0].mxu0
        %v2981 = vadd.f32 %v2791, %v2980
        %v2982 = vpop.f32.mrb[0].mxu0
        %v2983 = vadd.f32 %v2787, %v2982
        %v2984 = vpop.f32.mrb[0].mxu0
        %v2985 = vadd.f32 %v2791, %v2984
        %2986 = vdwg.mxu0
        %v2987 = vpack.c.bf16 %v2913, %v2909
        %v2988 = vpack.c.bf16 %v2915, %v2911
        %v2989 = vpack.c.bf16 %v2923, %v2919
        %v2990 = vpack.c.bf16 %v2925, %v2921
        %v2991 = vpack.c.bf16 %v2933, %v2929
        %v2992 = vpack.c.bf16 %v2935, %v2931
        %v2993 = vpack.c.bf16 %v2943, %v2939
        %v2994 = vpack.c.bf16 %v2945, %v2941
        %v2995 = vpack.c.bf16 %v2953, %v2949
        %v2996 = vpack.c.bf16 %v2955, %v2951
        %v2997 = vpack.c.bf16 %v2963, %v2959
        %v2998 = vpack.c.bf16 %v2965, %v2961
        %v2999 = vpack.c.bf16 %v2973, %v2969
        %v3000 = vpack.c.bf16 %v2975, %v2971
        %v3001 = vpack.c.bf16 %v2983, %v2979
        %v3002 = vpack.c.bf16 %v2985, %v2981
        %v3019 = vunpack.c.l.b16 %v2987
        %v3020 = vunpack.c.l.b16 %v2988
        %v3021 = vunpack.c.h.b16 %v2987
        %v3022 = vunpack.c.h.b16 %v2988
        %v3023 = vunpack.c.l.b16 %v2989
        %v3024 = vunpack.c.l.b16 %v2990
        %v3025 = vunpack.c.h.b16 %v2989
        %v3026 = vunpack.c.h.b16 %v2990
        %v3027 = vunpack.c.l.b16 %v2991
        %v3028 = vunpack.c.l.b16 %v2992
        %v3029 = vunpack.c.h.b16 %v2991
        %v3030 = vunpack.c.h.b16 %v2992
        %v3031 = vunpack.c.l.b16 %v2993
        %v3032 = vunpack.c.l.b16 %v2994
        %v3033 = vunpack.c.h.b16 %v2993
        %v3034 = vunpack.c.h.b16 %v2994
        %v3035 = vunpack.c.l.b16 %v2995
        %v3036 = vunpack.c.l.b16 %v2996
        %v3037 = vunpack.c.h.b16 %v2995
        %v3038 = vunpack.c.h.b16 %v2996
        %v3039 = vunpack.c.l.b16 %v2997
        %v3040 = vunpack.c.l.b16 %v2998
        %v3041 = vunpack.c.h.b16 %v2997
        %v3042 = vunpack.c.h.b16 %v2998
        %v3043 = vunpack.c.l.b16 %v2999
        %v3044 = vunpack.c.l.b16 %v3000
        %v3045 = vunpack.c.h.b16 %v2999
        %v3046 = vunpack.c.h.b16 %v3000
        %v3047 = vunpack.c.l.b16 %v3001
        %v3048 = vunpack.c.l.b16 %v3002
        %v3049 = vunpack.c.h.b16 %v3001
        %v3050 = vunpack.c.h.b16 %v3002
        %v3051 = vpack.c.b16 %v3020, %v3019
        %v3052 = vpack.c.b16 %v3022, %v3021
        %v3053 = vpack.c.b16 %v3024, %v3023
        %v3054 = vpack.c.b16 %v3026, %v3025
        %v3055 = vpack.c.b16 %v3028, %v3027
        %v3056 = vpack.c.b16 %v3030, %v3029
        %v3057 = vpack.c.b16 %v3032, %v3031
        %v3058 = vpack.c.b16 %v3034, %v3033
        %v3059 = vpack.c.b16 %v3036, %v3035
        %v3060 = vpack.c.b16 %v3038, %v3037
        %v3061 = vpack.c.b16 %v3040, %v3039
        %v3062 = vpack.c.b16 %v3042, %v3041
        %v3063 = vpack.c.b16 %v3044, %v3043
        %v3064 = vpack.c.b16 %v3046, %v3045
        %v3065 = vpack.c.b16 %v3048, %v3047
        %v3066 = vpack.c.b16 %v3050, %v3049
        %3083 = vst [vmem:[%s303] sm:$0xff] %v3051
        %3084 = vst [vmem:[%s303 + $0x18] sm:$0xff] %v3052
        %3085 = vst [vmem:[%s303 + $0x30] sm:$0xff] %v3053
        %3086 = vst [vmem:[%s303 + $0x48] sm:$0xff] %v3054
        %3087 = vst [vmem:[%s303 + $0x60] sm:$0xff] %v3055
        %3088 = vst [vmem:[%s303 + $0x78] sm:$0xff] %v3056
        %3089 = vst [vmem:[%s303 + $0x90] sm:$0xff] %v3057
        %3090 = vst [vmem:[%s303 + $0xa8] sm:$0xff] %v3058
        %3091 = vst [vmem:[%s303 + $0xc0] sm:$0xff] %v3059
        %3092 = vst [vmem:[%s303 + $0xd8] sm:$0xff] %v3060
        %3093 = vst [vmem:[%s303 + $0xf0] sm:$0xff] %v3061
        %3094 = vst [vmem:[%s303 + $0x108] sm:$0xff] %v3062
        %3095 = vst [vmem:[%s303 + $0x120] sm:$0xff] %v3063
        %3096 = vst [vmem:[%s303 + $0x138] sm:$0xff] %v3064
        %3097 = vst [vmem:[%s303 + $0x150] sm:$0xff] %v3065
        %3098 = vst [vmem:[%s303 + $0x168] sm:$0xff] %v3066
        %v3099 = vld [vmem:[#allocation7 + $0x8] sm:$0xff]
        %v3100 = vld [vmem:[#allocation7 + $0x20] sm:$0xff]
        %v3101 = vld [vmem:[#allocation7 + $0x38] sm:$0xff]
        %v3102 = vld [vmem:[#allocation7 + $0x50] sm:$0xff]
        %v3103 = vld [vmem:[#allocation7 + $0x68] sm:$0xff]
        %v3104 = vld [vmem:[#allocation7 + $0x80] sm:$0xff]
        %v3105 = vld [vmem:[#allocation7 + $0x98] sm:$0xff]
        %v3106 = vld [vmem:[#allocation7 + $0xb0] sm:$0xff]
        %v3107 = vld [vmem:[#allocation7 + $0xc8] sm:$0xff]
        %v3108 = vld [vmem:[#allocation7 + $0xe0] sm:$0xff]
        %v3109 = vld [vmem:[#allocation7 + $0xf8] sm:$0xff]
        %v3110 = vld [vmem:[#allocation7 + $0x110] sm:$0xff]
        %v3111 = vld [vmem:[#allocation7 + $0x128] sm:$0xff]
        %v3112 = vld [vmem:[#allocation7 + $0x140] sm:$0xff]
        %v3113 = vld [vmem:[#allocation7 + $0x158] sm:$0xff]
        %v3114 = vld [vmem:[#allocation7 + $0x170] sm:$0xff]
        %v3115 = vld [vmem:[#allocation8 + $0x2] sm:$0x3]
        %v3117 = vlaneseq
        %v3118 = vshrl.u32 %v3117, 7
        %v3119 = vsub.s32 0, %v3118
        %v3120 = vrot.slane %v3115, %v3119
        %v3121 = vlaneseq
        %v3122 = vshrl.u32 %v3121, 7
        %v3123 = vsub.s32 1, %v3122
        %v3124 = vrot.slane %v3115, %v3123
        %v3143 = vunpack.c.l.b16 %v3099
        %v3144 = vunpack.c.h.b16 %v3099
        %v3145 = vunpack.c.l.b16 %v3100
        %v3146 = vunpack.c.h.b16 %v3100
        %v3147 = vunpack.c.l.b16 %v3101
        %v3148 = vunpack.c.h.b16 %v3101
        %v3149 = vunpack.c.l.b16 %v3102
        %v3150 = vunpack.c.h.b16 %v3102
        %v3151 = vunpack.c.l.b16 %v3103
        %v3152 = vunpack.c.h.b16 %v3103
        %v3153 = vunpack.c.l.b16 %v3104
        %v3154 = vunpack.c.h.b16 %v3104
        %v3155 = vunpack.c.l.b16 %v3105
        %v3156 = vunpack.c.h.b16 %v3105
        %v3157 = vunpack.c.l.b16 %v3106
        %v3158 = vunpack.c.h.b16 %v3106
        %v3159 = vunpack.c.l.b16 %v3107
        %v3160 = vunpack.c.h.b16 %v3107
        %v3161 = vunpack.c.l.b16 %v3108
        %v3162 = vunpack.c.h.b16 %v3108
        %v3163 = vunpack.c.l.b16 %v3109
        %v3164 = vunpack.c.h.b16 %v3109
        %v3165 = vunpack.c.l.b16 %v3110
        %v3166 = vunpack.c.h.b16 %v3110
        %v3167 = vunpack.c.l.b16 %v3111
        %v3168 = vunpack.c.h.b16 %v3111
        %v3169 = vunpack.c.l.b16 %v3112
        %v3170 = vunpack.c.h.b16 %v3112
        %v3171 = vunpack.c.l.b16 %v3113
        %v3172 = vunpack.c.h.b16 %v3113
        %v3173 = vunpack.c.l.b16 %v3114
        %v3174 = vunpack.c.h.b16 %v3114
        %v3175 = vpack.c.b16 %v3145, %v3143
        %v3176 = vpack.c.b16 %v3146, %v3144
        %v3177 = vpack.c.b16 %v3149, %v3147
        %v3178 = vpack.c.b16 %v3150, %v3148
        %v3179 = vpack.c.b16 %v3153, %v3151
        %v3180 = vpack.c.b16 %v3154, %v3152
        %v3181 = vpack.c.b16 %v3157, %v3155
        %v3182 = vpack.c.b16 %v3158, %v3156
        %v3183 = vpack.c.b16 %v3161, %v3159
        %v3184 = vpack.c.b16 %v3162, %v3160
        %v3185 = vpack.c.b16 %v3165, %v3163
        %v3186 = vpack.c.b16 %v3166, %v3164
        %v3187 = vpack.c.b16 %v3169, %v3167
        %v3188 = vpack.c.b16 %v3170, %v3168
        %v3189 = vpack.c.b16 %v3173, %v3171
        %v3190 = vpack.c.b16 %v3174, %v3172
        %3207 = vmatprep.subr.bf16.mxu0 %v3176
        %3208 = vmatpush1.bf16.msra.mxu0 %v3175
        %3209 = vmatprep.subr.bf16.mxu0 %v3178
        %3210 = vmatpush1.bf16.msra.mxu0 %v3177
        %3211 = vmatprep.subr.bf16.mxu0 %v3180
        %3212 = vmatpush1.bf16.msra.mxu0 %v3179
        %3213 = vmatprep.subr.bf16.mxu0 %v3182
        %3214 = vmatpush1.bf16.msra.mxu0 %v3181
        %3215 = vmatprep.subr.bf16.mxu0 %v3184
        %3216 = vmatpush1.bf16.msra.mxu0 %v3183
        %3217 = vmatprep.subr.bf16.mxu0 %v3186
        %3218 = vmatpush1.bf16.msra.mxu0 %v3185
        %3219 = vmatprep.subr.bf16.mxu0 %v3188
        %3220 = vmatpush1.bf16.msra.mxu0 %v3187
        %3221 = vmatprep.subr.bf16.mxu0 %v3190
        %3222 = vmatpush1.bf16.msra.mxu0 %v3189
        %3223 = vmatprep.subr.bf16.mxu0 0
        %3224 = vmatpush1.bf16.msra.mxu0 0
        %3225 = vmatprep.subr.bf16.mxu0 0
        %3226 = vmatpush1.bf16.msra.mxu0 0
        %3227 = vmatprep.subr.bf16.mxu0 0
        %3228 = vmatpush1.bf16.msra.mxu0 0
        %3229 = vmatprep.subr.bf16.mxu0 0
        %3230 = vmatpush1.bf16.msra.mxu0 0
        %3231 = vmatprep.subr.bf16.mxu0 0
        %3232 = vmatpush1.bf16.msra.mxu0 0
        %3233 = vmatprep.subr.bf16.mxu0 0
        %3234 = vmatpush1.bf16.msra.mxu0 0
        %3235 = vmatprep.subr.bf16.mxu0 0
        %3236 = vmatpush1.bf16.msra.mxu0 0
        %3237 = vmatprep.subr.bf16.mxu0 0
        %3238 = vmatpush1.bf16.msra.mxu0 0
        %3239 = vmatprep.mubr.bf16.mxu0 0
        %3240 = vmatmul.mubr.bf16.gmra.mrb[0].mxu0 %v2758
        %v3241 = vpop.f32.mrb[0].mxu0
        %v3242 = vadd.f32 %v3120, %v3241
        %v3243 = vpop.f32.mrb[0].mxu0
        %v3244 = vadd.f32 %v3124, %v3243
        %v3245 = vpop.f32.mrb[0].mxu0
        %v3246 = vadd.f32 %v3120, %v3245
        %v3247 = vpop.f32.mrb[0].mxu0
        %v3248 = vadd.f32 %v3124, %v3247
        %3249 = vmatprep.mubr.bf16.mxu0 0
        %3250 = vmatmul.mubr.bf16.gmra.mrb[0].mxu0 %v2759
        %v3251 = vpop.f32.mrb[0].mxu0
        %v3252 = vadd.f32 %v3120, %v3251
        %v3253 = vpop.f32.mrb[0].mxu0
        %v3254 = vadd.f32 %v3124, %v3253
        %v3255 = vpop.f32.mrb[0].mxu0
        %v3256 = vadd.f32 %v3120, %v3255
        %v3257 = vpop.f32.mrb[0].mxu0
        %v3258 = vadd.f32 %v3124, %v3257
        %3259 = vmatprep.mubr.bf16.mxu0 0
        %3260 = vmatmul.mubr.bf16.gmra.mrb[0].mxu0 %v2760
        %v3261 = vpop.f32.mrb[0].mxu0
        %v3262 = vadd.f32 %v3120, %v3261
        %v3263 = vpop.f32.mrb[0].mxu0
        %v3264 = vadd.f32 %v3124, %v3263
        %v3265 = vpop.f32.mrb[0].mxu0
        %v3266 = vadd.f32 %v3120, %v3265
        %v3267 = vpop.f32.mrb[0].mxu0
        %v3268 = vadd.f32 %v3124, %v3267
        %3269 = vmatprep.mubr.bf16.mxu0 0
        %3270 = vmatmul.mubr.bf16.gmra.mrb[0].mxu0 %v2761
        %v3271 = vpop.f32.mrb[0].mxu0
        %v3272 = vadd.f32 %v3120, %v3271
        %v3273 = vpop.f32.mrb[0].mxu0
        %v3274 = vadd.f32 %v3124, %v3273
        %v3275 = vpop.f32.mrb[0].mxu0
        %v3276 = vadd.f32 %v3120, %v3275
        %v3277 = vpop.f32.mrb[0].mxu0
        %v3278 = vadd.f32 %v3124, %v3277
        %3279 = vmatprep.mubr.bf16.mxu0 0
        %3280 = vmatmul.mubr.bf16.gmra.mrb[0].mxu0 %v2762
        %v3281 = vpop.f32.mrb[0].mxu0
        %v3282 = vadd.f32 %v3120, %v3281
        %v3283 = vpop.f32.mrb[0].mxu0
        %v3284 = vadd.f32 %v3124, %v3283
        %v3285 = vpop.f32.mrb[0].mxu0
        %v3286 = vadd.f32 %v3120, %v3285
        %v3287 = vpop.f32.mrb[0].mxu0
        %v3288 = vadd.f32 %v3124, %v3287
        %3289 = vmatprep.mubr.bf16.mxu0 0
        %3290 = vmatmul.mubr.bf16.gmra.mrb[0].mxu0 %v2763
        %v3291 = vpop.f32.mrb[0].mxu0
        %v3292 = vadd.f32 %v3120, %v3291
        %v3293 = vpop.f32.mrb[0].mxu0
        %v3294 = vadd.f32 %v3124, %v3293
        %v3295 = vpop.f32.mrb[0].mxu0
        %v3296 = vadd.f32 %v3120, %v3295
        %v3297 = vpop.f32.mrb[0].mxu0
        %v3298 = vadd.f32 %v3124, %v3297
        %3299 = vmatprep.mubr.bf16.mxu0 0
        %3300 = vmatmul.mubr.bf16.gmra.mrb[0].mxu0 %v2764
        %v3301 = vpop.f32.mrb[0].mxu0
        %v3302 = vadd.f32 %v3120, %v3301
        %v3303 = vpop.f32.mrb[0].mxu0
        %v3304 = vadd.f32 %v3124, %v3303
        %v3305 = vpop.f32.mrb[0].mxu0
        %v3306 = vadd.f32 %v3120, %v3305
        %v3307 = vpop.f32.mrb[0].mxu0
        %v3308 = vadd.f32 %v3124, %v3307
        %3309 = vmatprep.mubr.bf16.mxu0 0
        %3310 = vmatmul.mubr.bf16.gmra.mrb[0].mxu0 %v2765
        %v3311 = vpop.f32.mrb[0].mxu0
        %v3312 = vadd.f32 %v3120, %v3311
        %v3313 = vpop.f32.mrb[0].mxu0
        %v3314 = vadd.f32 %v3124, %v3313
        %v3315 = vpop.f32.mrb[0].mxu0
        %v3316 = vadd.f32 %v3120, %v3315
        %v3317 = vpop.f32.mrb[0].mxu0
        %v3318 = vadd.f32 %v3124, %v3317
        %3319 = vdwg.mxu0
        %v3320 = vpack.c.bf16 %v3246, %v3242
        %v3321 = vpack.c.bf16 %v3248, %v3244
        %v3322 = vpack.c.bf16 %v3256, %v3252
        %v3323 = vpack.c.bf16 %v3258, %v3254
        %v3324 = vpack.c.bf16 %v3266, %v3262
        %v3325 = vpack.c.bf16 %v3268, %v3264
        %v3326 = vpack.c.bf16 %v3276, %v3272
        %v3327 = vpack.c.bf16 %v3278, %v3274
        %v3328 = vpack.c.bf16 %v3286, %v3282
        %v3329 = vpack.c.bf16 %v3288, %v3284
        %v3330 = vpack.c.bf16 %v3296, %v3292
        %v3331 = vpack.c.bf16 %v3298, %v3294
        %v3332 = vpack.c.bf16 %v3306, %v3302
        %v3333 = vpack.c.bf16 %v3308, %v3304
        %v3334 = vpack.c.bf16 %v3316, %v3312
        %v3335 = vpack.c.bf16 %v3318, %v3314
        %v3352 = vunpack.c.l.b16 %v3320
        %v3353 = vunpack.c.l.b16 %v3321
        %v3354 = vunpack.c.h.b16 %v3320
        %v3355 = vunpack.c.h.b16 %v3321
        %v3356 = vunpack.c.l.b16 %v3322
        %v3357 = vunpack.c.l.b16 %v3323
        %v3358 = vunpack.c.h.b16 %v3322
        %v3359 = vunpack.c.h.b16 %v3323
        %v3360 = vunpack.c.l.b16 %v3324
        %v3361 = vunpack.c.l.b16 %v3325
        %v3362 = vunpack.c.h.b16 %v3324
        %v3363 = vunpack.c.h.b16 %v3325
        %v3364 = vunpack.c.l.b16 %v3326
        %v3365 = vunpack.c.l.b16 %v3327
        %v3366 = vunpack.c.h.b16 %v3326
        %v3367 = vunpack.c.h.b16 %v3327
        %v3368 = vunpack.c.l.b16 %v3328
        %v3369 = vunpack.c.l.b16 %v3329
        %v3370 = vunpack.c.h.b16 %v3328
        %v3371 = vunpack.c.h.b16 %v3329
        %v3372 = vunpack.c.l.b16 %v3330
        %v3373 = vunpack.c.l.b16 %v3331
        %v3374 = vunpack.c.h.b16 %v3330
        %v3375 = vunpack.c.h.b16 %v3331
        %v3376 = vunpack.c.l.b16 %v3332
        %v3377 = vunpack.c.l.b16 %v3333
        %v3378 = vunpack.c.h.b16 %v3332
        %v3379 = vunpack.c.h.b16 %v3333
        %v3380 = vunpack.c.l.b16 %v3334
        %v3381 = vunpack.c.l.b16 %v3335
        %v3382 = vunpack.c.h.b16 %v3334
        %v3383 = vunpack.c.h.b16 %v3335
        %v3384 = vpack.c.b16 %v3353, %v3352
        %v3385 = vpack.c.b16 %v3355, %v3354
        %v3386 = vpack.c.b16 %v3357, %v3356
        %v3387 = vpack.c.b16 %v3359, %v3358
        %v3388 = vpack.c.b16 %v3361, %v3360
        %v3389 = vpack.c.b16 %v3363, %v3362
        %v3390 = vpack.c.b16 %v3365, %v3364
        %v3391 = vpack.c.b16 %v3367, %v3366
        %v3392 = vpack.c.b16 %v3369, %v3368
        %v3393 = vpack.c.b16 %v3371, %v3370
        %v3394 = vpack.c.b16 %v3373, %v3372
        %v3395 = vpack.c.b16 %v3375, %v3374
        %v3396 = vpack.c.b16 %v3377, %v3376
        %v3397 = vpack.c.b16 %v3379, %v3378
        %v3398 = vpack.c.b16 %v3381, %v3380
        %v3399 = vpack.c.b16 %v3383, %v3382
        %3416 = vst [vmem:[%s303 + $0x8] sm:$0xff] %v3384
        %3417 = vst [vmem:[%s303 + $0x20] sm:$0xff] %v3385
        %3418 = vst [vmem:[%s303 + $0x38] sm:$0xff] %v3386
        %3419 = vst [vmem:[%s303 + $0x50] sm:$0xff] %v3387
        %3420 = vst [vmem:[%s303 + $0x68] sm:$0xff] %v3388
        %3421 = vst [vmem:[%s303 + $0x80] sm:$0xff] %v3389
        %3422 = vst [vmem:[%s303 + $0x98] sm:$0xff] %v3390
        %3423 = vst [vmem:[%s303 + $0xb0] sm:$0xff] %v3391
        %3424 = vst [vmem:[%s303 + $0xc8] sm:$0xff] %v3392
        %3425 = vst [vmem:[%s303 + $0xe0] sm:$0xff] %v3393
        %3426 = vst [vmem:[%s303 + $0xf8] sm:$0xff] %v3394
        %3427 = vst [vmem:[%s303 + $0x110] sm:$0xff] %v3395
        %3428 = vst [vmem:[%s303 + $0x128] sm:$0xff] %v3396
        %3429 = vst [vmem:[%s303 + $0x140] sm:$0xff] %v3397
        %3430 = vst [vmem:[%s303 + $0x158] sm:$0xff] %v3398
        %3431 = vst [vmem:[%s303 + $0x170] sm:$0xff] %v3399
        %v3432 = vld [vmem:[#allocation7 + $0x10] sm:$0xff]
        %v3433 = vld [vmem:[#allocation7 + $0x28] sm:$0xff]
        %v3434 = vld [vmem:[#allocation7 + $0x40] sm:$0xff]
        %v3435 = vld [vmem:[#allocation7 + $0x58] sm:$0xff]
        %v3436 = vld [vmem:[#allocation7 + $0x70] sm:$0xff]
        %v3437 = vld [vmem:[#allocation7 + $0x88] sm:$0xff]
        %v3438 = vld [vmem:[#allocation7 + $0xa0] sm:$0xff]
        %v3439 = vld [vmem:[#allocation7 + $0xb8] sm:$0xff]
        %v3440 = vld [vmem:[#allocation7 + $0xd0] sm:$0xff]
        %v3441 = vld [vmem:[#allocation7 + $0xe8] sm:$0xff]
        %v3442 = vld [vmem:[#allocation7 + $0x100] sm:$0xff]
        %v3443 = vld [vmem:[#allocation7 + $0x118] sm:$0xff]
        %v3444 = vld [vmem:[#allocation7 + $0x130] sm:$0xff]
        %v3445 = vld [vmem:[#allocation7 + $0x148] sm:$0xff]
        %v3446 = vld [vmem:[#allocation7 + $0x160] sm:$0xff]
        %v3447 = vld [vmem:[#allocation7 + $0x178] sm:$0xff]
        %v3448 = vld [vmem:[#allocation8 + $0x4] sm:$0x3]
        %v3450 = vlaneseq
        %v3451 = vshrl.u32 %v3450, 7
        %v3452 = vsub.s32 0, %v3451
        %v3453 = vrot.slane %v3448, %v3452
        %v3454 = vlaneseq
        %v3455 = vshrl.u32 %v3454, 7
        %v3456 = vsub.s32 1, %v3455
        %v3457 = vrot.slane %v3448, %v3456
        %v3476 = vunpack.c.l.b16 %v3432
        %v3477 = vunpack.c.h.b16 %v3432
        %v3478 = vunpack.c.l.b16 %v3433
        %v3479 = vunpack.c.h.b16 %v3433
        %v3480 = vunpack.c.l.b16 %v3434
        %v3481 = vunpack.c.h.b16 %v3434
        %v3482 = vunpack.c.l.b16 %v3435
        %v3483 = vunpack.c.h.b16 %v3435
        %v3484 = vunpack.c.l.b16 %v3436
        %v3485 = vunpack.c.h.b16 %v3436
        %v3486 = vunpack.c.l.b16 %v3437
        %v3487 = vunpack.c.h.b16 %v3437
        %v3488 = vunpack.c.l.b16 %v3438
        %v3489 = vunpack.c.h.b16 %v3438
        %v3490 = vunpack.c.l.b16 %v3439
        %v3491 = vunpack.c.h.b16 %v3439
        %v3492 = vunpack.c.l.b16 %v3440
        %v3493 = vunpack.c.h.b16 %v3440
        %v3494 = vunpack.c.l.b16 %v3441
        %v3495 = vunpack.c.h.b16 %v3441
        %v3496 = vunpack.c.l.b16 %v3442
        %v3497 = vunpack.c.h.b16 %v3442
        %v3498 = vunpack.c.l.b16 %v3443
        %v3499 = vunpack.c.h.b16 %v3443
        %v3500 = vunpack.c.l.b16 %v3444
        %v3501 = vunpack.c.h.b16 %v3444
        %v3502 = vunpack.c.l.b16 %v3445
        %v3503 = vunpack.c.h.b16 %v3445
        %v3504 = vunpack.c.l.b16 %v3446
        %v3505 = vunpack.c.h.b16 %v3446
        %v3506 = vunpack.c.l.b16 %v3447
        %v3507 = vunpack.c.h.b16 %v3447
        %v3508 = vpack.c.b16 %v3478, %v3476
        %v3509 = vpack.c.b16 %v3479, %v3477
        %v3510 = vpack.c.b16 %v3482, %v3480
        %v3511 = vpack.c.b16 %v3483, %v3481
        %v3512 = vpack.c.b16 %v3486, %v3484
        %v3513 = vpack.c.b16 %v3487, %v3485
        %v3514 = vpack.c.b16 %v3490, %v3488
        %v3515 = vpack.c.b16 %v3491, %v3489
        %v3516 = vpack.c.b16 %v3494, %v3492
        %v3517 = vpack.c.b16 %v3495, %v3493
        %v3518 = vpack.c.b16 %v3498, %v3496
        %v3519 = vpack.c.b16 %v3499, %v3497
        %v3520 = vpack.c.b16 %v3502, %v3500
        %v3521 = vpack.c.b16 %v3503, %v3501
        %v3522 = vpack.c.b16 %v3506, %v3504
        %v3523 = vpack.c.b16 %v3507, %v3505
        %3540 = vmatprep.subr.bf16.mxu0 %v3509
        %3541 = vmatpush1.bf16.msra.mxu0 %v3508
        %3542 = vmatprep.subr.bf16.mxu0 %v3511
        %3543 = vmatpush1.bf16.msra.mxu0 %v3510
        %3544 = vmatprep.subr.bf16.mxu0 %v3513
        %3545 = vmatpush1.bf16.msra.mxu0 %v3512
        %3546 = vmatprep.subr.bf16.mxu0 %v3515
        %3547 = vmatpush1.bf16.msra.mxu0 %v3514
        %3548 = vmatprep.subr.bf16.mxu0 %v3517
        %3549 = vmatpush1.bf16.msra.mxu0 %v3516
        %3550 = vmatprep.subr.bf16.mxu0 %v3519
        %3551 = vmatpush1.bf16.msra.mxu0 %v3518
        %3552 = vmatprep.subr.bf16.mxu0 %v3521
        %3553 = vmatpush1.bf16.msra.mxu0 %v3520
        %3554 = vmatprep.subr.bf16.mxu0 %v3523
        %3555 = vmatpush1.bf16.msra.mxu0 %v3522
        %3556 = vmatprep.subr.bf16.mxu0 0
        %3557 = vmatpush1.bf16.msra.mxu0 0
        %3558 = vmatprep.subr.bf16.mxu0 0
        %3559 = vmatpush1.bf16.msra.mxu0 0
        %3560 = vmatprep.subr.bf16.mxu0 0
        %3561 = vmatpush1.bf16.msra.mxu0 0
        %3562 = vmatprep.subr.bf16.mxu0 0
        %3563 = vmatpush1.bf16.msra.mxu0 0
        %3564 = vmatprep.subr.bf16.mxu0 0
        %3565 = vmatpush1.bf16.msra.mxu0 0
        %3566 = vmatprep.subr.bf16.mxu0 0
        %3567 = vmatpush1.bf16.msra.mxu0 0
        %3568 = vmatprep.subr.bf16.mxu0 0
        %3569 = vmatpush1.bf16.msra.mxu0 0
        %3570 = vmatprep.subr.bf16.mxu0 0
        %3571 = vmatpush1.bf16.msra.mxu0 0
        %3572 = vmatprep.mubr.bf16.mxu0 0
        %3573 = vmatmul.mubr.bf16.gmra.mrb[0].mxu0 %v2758
        %v3574 = vpop.f32.mrb[0].mxu0
        %v3575 = vadd.f32 %v3453, %v3574
        %v3576 = vpop.f32.mrb[0].mxu0
        %v3577 = vadd.f32 %v3457, %v3576
        %v3578 = vpop.f32.mrb[0].mxu0
        %v3579 = vadd.f32 %v3453, %v3578
        %v3580 = vpop.f32.mrb[0].mxu0
        %v3581 = vadd.f32 %v3457, %v3580
        %3582 = vmatprep.mubr.bf16.mxu0 0
        %3583 = vmatmul.mubr.bf16.gmra.mrb[0].mxu0 %v2759
        %v3584 = vpop.f32.mrb[0].mxu0
        %v3585 = vadd.f32 %v3453, %v3584
        %v3586 = vpop.f32.mrb[0].mxu0
        %v3587 = vadd.f32 %v3457, %v3586
        %v3588 = vpop.f32.mrb[0].mxu0
        %v3589 = vadd.f32 %v3453, %v3588
        %v3590 = vpop.f32.mrb[0].mxu0
        %v3591 = vadd.f32 %v3457, %v3590
        %3592 = vmatprep.mubr.bf16.mxu0 0
        %3593 = vmatmul.mubr.bf16.gmra.mrb[0].mxu0 %v2760
        %v3594 = vpop.f32.mrb[0].mxu0
        %v3595 = vadd.f32 %v3453, %v3594
        %v3596 = vpop.f32.mrb[0].mxu0
        %v3597 = vadd.f32 %v3457, %v3596
        %v3598 = vpop.f32.mrb[0].mxu0
        %v3599 = vadd.f32 %v3453, %v3598
        %v3600 = vpop.f32.mrb[0].mxu0
        %v3601 = vadd.f32 %v3457, %v3600
        %3602 = vmatprep.mubr.bf16.mxu0 0
        %3603 = vmatmul.mubr.bf16.gmra.mrb[0].mxu0 %v2761
        %v3604 = vpop.f32.mrb[0].mxu0
        %v3605 = vadd.f32 %v3453, %v3604
        %v3606 = vpop.f32.mrb[0].mxu0
        %v3607 = vadd.f32 %v3457, %v3606
        %v3608 = vpop.f32.mrb[0].mxu0
        %v3609 = vadd.f32 %v3453, %v3608
        %v3610 = vpop.f32.mrb[0].mxu0
        %v3611 = vadd.f32 %v3457, %v3610
        %3612 = vmatprep.mubr.bf16.mxu0 0
        %3613 = vmatmul.mubr.bf16.gmra.mrb[0].mxu0 %v2762
        %v3614 = vpop.f32.mrb[0].mxu0
        %v3615 = vadd.f32 %v3453, %v3614
        %v3616 = vpop.f32.mrb[0].mxu0
        %v3617 = vadd.f32 %v3457, %v3616
        %v3618 = vpop.f32.mrb[0].mxu0
        %v3619 = vadd.f32 %v3453, %v3618
        %v3620 = vpop.f32.mrb[0].mxu0
        %v3621 = vadd.f32 %v3457, %v3620
        %3622 = vmatprep.mubr.bf16.mxu0 0
        %3623 = vmatmul.mubr.bf16.gmra.mrb[0].mxu0 %v2763
        %v3624 = vpop.f32.mrb[0].mxu0
        %v3625 = vadd.f32 %v3453, %v3624
        %v3626 = vpop.f32.mrb[0].mxu0
        %v3627 = vadd.f32 %v3457, %v3626
        %v3628 = vpop.f32.mrb[0].mxu0
        %v3629 = vadd.f32 %v3453, %v3628
        %v3630 = vpop.f32.mrb[0].mxu0
        %v3631 = vadd.f32 %v3457, %v3630
        %3632 = vmatprep.mubr.bf16.mxu0 0
        %3633 = vmatmul.mubr.bf16.gmra.mrb[0].mxu0 %v2764
        %v3634 = vpop.f32.mrb[0].mxu0
        %v3635 = vadd.f32 %v3453, %v3634
        %v3636 = vpop.f32.mrb[0].mxu0
        %v3637 = vadd.f32 %v3457, %v3636
        %v3638 = vpop.f32.mrb[0].mxu0
        %v3639 = vadd.f32 %v3453, %v3638
        %v3640 = vpop.f32.mrb[0].mxu0
        %v3641 = vadd.f32 %v3457, %v3640
        %3642 = vmatprep.mubr.bf16.mxu0 0
        %3643 = vmatmul.mubr.bf16.gmra.mrb[0].mxu0 %v2765
        %v3644 = vpop.f32.mrb[0].mxu0
        %v3645 = vadd.f32 %v3453, %v3644
        %v3646 = vpop.f32.mrb[0].mxu0
        %v3647 = vadd.f32 %v3457, %v3646
        %v3648 = vpop.f32.mrb[0].mxu0
        %v3649 = vadd.f32 %v3453, %v3648
        %v3650 = vpop.f32.mrb[0].mxu0
        %v3651 = vadd.f32 %v3457, %v3650
        %3652 = vdwg.mxu0
        %v3653 = vpack.c.bf16 %v3579, %v3575
        %v3654 = vpack.c.bf16 %v3581, %v3577
        %v3655 = vpack.c.bf16 %v3589, %v3585
        %v3656 = vpack.c.bf16 %v3591, %v3587
        %v3657 = vpack.c.bf16 %v3599, %v3595
        %v3658 = vpack.c.bf16 %v3601, %v3597
        %v3659 = vpack.c.bf16 %v3609, %v3605
        %v3660 = vpack.c.bf16 %v3611, %v3607
        %v3661 = vpack.c.bf16 %v3619, %v3615
        %v3662 = vpack.c.bf16 %v3621, %v3617
        %v3663 = vpack.c.bf16 %v3629, %v3625
        %v3664 = vpack.c.bf16 %v3631, %v3627
        %v3665 = vpack.c.bf16 %v3639, %v3635
        %v3666 = vpack.c.bf16 %v3641, %v3637
        %v3667 = vpack.c.bf16 %v3649, %v3645
        %v3668 = vpack.c.bf16 %v3651, %v3647
        %v3685 = vunpack.c.l.b16 %v3653
        %v3686 = vunpack.c.l.b16 %v3654
        %v3687 = vunpack.c.h.b16 %v3653
        %v3688 = vunpack.c.h.b16 %v3654
        %v3689 = vunpack.c.l.b16 %v3655
        %v3690 = vunpack.c.l.b16 %v3656
        %v3691 = vunpack.c.h.b16 %v3655
        %v3692 = vunpack.c.h.b16 %v3656
        %v3693 = vunpack.c.l.b16 %v3657
        %v3694 = vunpack.c.l.b16 %v3658
        %v3695 = vunpack.c.h.b16 %v3657
        %v3696 = vunpack.c.h.b16 %v3658
        %v3697 = vunpack.c.l.b16 %v3659
        %v3698 = vunpack.c.l.b16 %v3660
        %v3699 = vunpack.c.h.b16 %v3659
        %v3700 = vunpack.c.h.b16 %v3660
        %v3701 = vunpack.c.l.b16 %v3661
        %v3702 = vunpack.c.l.b16 %v3662
        %v3703 = vunpack.c.h.b16 %v3661
        %v3704 = vunpack.c.h.b16 %v3662
        %v3705 = vunpack.c.l.b16 %v3663
        %v3706 = vunpack.c.l.b16 %v3664
        %v3707 = vunpack.c.h.b16 %v3663
        %v3708 = vunpack.c.h.b16 %v3664
        %v3709 = vunpack.c.l.b16 %v3665
        %v3710 = vunpack.c.l.b16 %v3666
        %v3711 = vunpack.c.h.b16 %v3665
        %v3712 = vunpack.c.h.b16 %v3666
        %v3713 = vunpack.c.l.b16 %v3667
        %v3714 = vunpack.c.l.b16 %v3668
        %v3715 = vunpack.c.h.b16 %v3667
        %v3716 = vunpack.c.h.b16 %v3668
        %v3717 = vpack.c.b16 %v3686, %v3685
        %v3718 = vpack.c.b16 %v3688, %v3687
        %v3719 = vpack.c.b16 %v3690, %v3689
        %v3720 = vpack.c.b16 %v3692, %v3691
        %v3721 = vpack.c.b16 %v3694, %v3693
        %v3722 = vpack.c.b16 %v3696, %v3695
        %v3723 = vpack.c.b16 %v3698, %v3697
        %v3724 = vpack.c.b16 %v3700, %v3699
        %v3725 = vpack.c.b16 %v3702, %v3701
        %v3726 = vpack.c.b16 %v3704, %v3703
        %v3727 = vpack.c.b16 %v3706, %v3705
        %v3728 = vpack.c.b16 %v3708, %v3707
        %v3729 = vpack.c.b16 %v3710, %v3709
        %v3730 = vpack.c.b16 %v3712, %v3711
        %v3731 = vpack.c.b16 %v3714, %v3713
        %v3732 = vpack.c.b16 %v3716, %v3715
        %3749 = vst [vmem:[%s303 + $0x10] sm:$0xff] %v3717
        %3750 = vst [vmem:[%s303 + $0x28] sm:$0xff] %v3718
        %3751 = vst [vmem:[%s303 + $0x40] sm:$0xff] %v3719
        %3752 = vst [vmem:[%s303 + $0x58] sm:$0xff] %v3720
        %3753 = vst [vmem:[%s303 + $0x70] sm:$0xff] %v3721
        %3754 = vst [vmem:[%s303 + $0x88] sm:$0xff] %v3722
        %3755 = vst [vmem:[%s303 + $0xa0] sm:$0xff] %v3723
        %3756 = vst [vmem:[%s303 + $0xb8] sm:$0xff] %v3724
        %3757 = vst [vmem:[%s303 + $0xd0] sm:$0xff] %v3725
        %3758 = vst [vmem:[%s303 + $0xe8] sm:$0xff] %v3726
        %3759 = vst [vmem:[%s303 + $0x100] sm:$0xff] %v3727
        %3760 = vst [vmem:[%s303 + $0x118] sm:$0xff] %v3728
        %3761 = vst [vmem:[%s303 + $0x130] sm:$0xff] %v3729
        %3762 = vst [vmem:[%s303 + $0x148] sm:$0xff] %v3730
        %3763 = vst [vmem:[%s303 + $0x160] sm:$0xff] %v3731
        %3764 = vst [vmem:[%s303 + $0x178] sm:$0xff] %v3732
        %s3765 = smul.u32 16, %s24
        %p3766 = scmp.lt.s32.totalorder %s23, 1
        %s3767 = scalar_select %p3766, %s23, 1
        %p3768 = scmp.lt.s32.totalorder %s3765, 31
        %s3769 = scalar_select %p3768, %s3765, 31
        %s3770 = smul.addr %s3769, 6
        %s3771 = smul.addr %s3767, 192
        %s3772 = sadd.s32 %s3770, %s3771
        %s3773 = smul.addr %s3772, 4
        %s3774 = scalar_lea.vmem %s5, %s3773
        // Predicated region
        $region57: #{decoder_forward.3} parent=39 // pred_check
          %p3775 = pneg %p161
        $region58: #{decoder_forward.3} parent=39 // pred_check_branch
          %3777 = sbr.rel (%p3775) target = $region60
        $region59: #{decoder_forward.3} parent=39 // pred_region
          %s3778 = smul.u32 16, %s24
        $region60: #{decoder_forward.3} parent=39 // pred_fallthru
          _
      $region40: #{decoder_forward.3} parent=5 // pred_fallthru
        _
      %p3779 = scmp.le.s32.totalorder 2, %s14
      // Predicated region
      $region61: #{decoder_forward.3} parent=5 // pred_check
        %p3780 = pneg %p3779
      $region62: #{decoder_forward.3} parent=5 // pred_check_branch
        %3782 = sbr.rel (%p3780) target = $region64
      $region63: #{decoder_forward.3} parent=5 // pred_region
        %s3783 = ssub.s32 %s14, 2
        // Predicated region
        $region65: #{decoder_forward.3} parent=63 // pred_check
          %p3784 = pneg %p167
        $region66: #{decoder_forward.3} parent=63 // pred_check_branch
          %3786 = sbr.rel (%p3784) target = $region68
        $region67: #{decoder_forward.3} parent=63 // pred_region
          %s3787 = smul.u32 16, %s26
          %p3788 = scmp.lt.s32.totalorder %s25, 1
          %s3789 = scalar_select %p3788, %s25, 1
          %p3790 = scmp.lt.s32.totalorder %s3787, 31
          %s3791 = scalar_select %p3790, %s3787, 31
          %s3792 = smul.addr %s3791, 6
          %s3793 = smul.addr %s3789, 192
          %s3794 = sadd.s32 %s3792, %s3793
          %s3795 = smul.addr %s3794, 4
          %s3796 = scalar_lea.vmem %s5, %s3795
        $region68: #{decoder_forward.3} parent=63 // pred_fallthru
          _
      $region64: #{decoder_forward.3} parent=5 // pred_fallthru
        _
    $region6: #{decoder_forward.3} parent=1 // loop_footer
      %s18 = sadd.s32 1, %s14
    $region7: #{decoder_forward.3} parent=1 // loop_footer_branch
      %13 = sbr.rel target = $region3
    $region8: #{decoder_forward.3} parent=1 // loop_exit
      _
    %3797 = vsyncpa [#allocation4], 1
    %s3798 = scalar_lea.sflag [#allocation4], 1
    %3799 = vsyncpa %s3798, 1
    %3800 = vsyncpa [#allocation6], 1
    %3801 = vsyncpa [#allocation9], 1

// kernel: decoder_forward.2
$region0: #{decoder_forward.2}
  #allocation0 [shape = 'u32[]', space=smem, size = 0x4, offset = 0x4, fixed_abs, tag = 'smem constant byte address 0x4 - core index']
  #allocation1 [shape = 'u32[144,128]{1,0:T(1,128)}', space=vmem, size = 0x12000, scoped, tag = 'internal scratch']
  %s0 = inlined_call_operand.hbm [shape: f32[2,32], index: 0, kind: input, shape index: {}]
  %s1 = inlined_call_operand.hbm [shape: bf16[32,32768], index: 1, kind: input, shape index: {}]
  %s2 = inlined_call_operand.hbm [shape: f32[1,32768], index: 2, kind: input, shape index: {}]
  %s3 = inlined_call_operand.vmem [shape: bf16[2,32768], index: 3, kind: output, shape index: {}]
  %s4 = sld [smem:[#allocation0]]
  $region57: #{decoder_forward.2} parent=0
    _
  %s6 = ssub.s32 1, %s4
  %s7 = scalar_select 0, %s6, %s4
  $region1: #{decoder_forward.2} parent=0
    #allocation2 [shape = 'u8[1024]{0}', space=vmem, size = 0x400, scoped, tag = 'input window, operand 0, single buffered']
    #allocation3 [shape = 's32[2]{0}', space=sflag, size = 0x8, scoped, tag = 'scoped memory for decoder_forward.2']
    #allocation4 [shape = 'u8[2097152]{0}', space=vmem, size = 0x200000, scoped, tag = 'input window, operand 1']
    #allocation5 [shape = 's32[2]{0}', space=sflag, size = 0x8, scoped, tag = 'scoped memory for decoder_forward.2']
    #allocation6 [shape = 'u8[131072]{0}', space=vmem, size = 0x20000, scoped, tag = 'input window, operand 2']
    %8 = vsyncpa [#allocation3], 0
    %9 = vsyncpa [#allocation5], 0
    %s10 = scalar_lea.sflag [#allocation5], 1
    %11 = vsyncpa %s10, 0
    loop: start=0, step=1, limit=4
    $region2: #{decoder_forward.2} parent=1 // loop_pre_header
      _
    $region3: #{decoder_forward.2} parent=1 // loop_header
      %s13 = sphi 0, %s17
      %p14 = scmp.ge.s32.totalorder %s13, 4
      %s21 = sphi 0, %s21
      %s23 = sphi 0, %s21
      %s24 = sphi 0, %s23
      %s38 = sphi 0, %s24
      %s44 = sphi 0, %s46
      %s47 = sphi 0, %s44
      %s48 = sphi 0, %s47
      %s64 = sphi 0, %s48
      %s70 = sphi 0, %s72
      %s73 = sphi 0, %s70
      %s74 = sphi 0, %s73
      %s90 = sphi 0, %s74
      %s96 = sphi 0, %s98
      %s99 = sphi 0, %s96
      %s100 = sphi 0, %s99
      %s116 = sphi 0, %s100
    $region4: #{decoder_forward.2} parent=1 // loop_header_branch
      %16 = sbr.rel (%p14) target = $region8
    $region5: #{decoder_forward.2} parent=1 // loop_body
      %s18 = ssub.s32 %s13, 1
      %s19 = ssub.s32 %s13, 2
      %s20 = sadd.s32 %s13, 1
      %s22 = sadd.s32 %s21, 1
      %p25 = scmp.eq.s32.totalorder %s13, 1
      %p26 = scmp.ne.s32.totalorder %s21, %s23
      %p27 = scmp.eq.s32.totalorder %s13, 0
      %p28 = por %p26, %p27
      %p29 = scmp.ne.s32.totalorder %s21, %s23
      %p30 = scmp.eq.s32.totalorder %s18, 1
      %p31 = por %p29, %p30
      %p32 = scmp.ne.s32.totalorder %s23, %s24
      %p33 = scmp.eq.s32.totalorder %s18, 0
      %p34 = por %p32, %p33
      %p35 = scmp.ne.s32.totalorder %s23, %s24
      %p36 = scmp.eq.s32.totalorder %s19, 1
      %p37 = por %p35, %p36
      %p39 = scmp.ne.s32.totalorder %s24, %s38
      %p40 = scmp.eq.s32.totalorder %s19, 0
      %p41 = por %p39, %p40
      %s42 = ssub.s32 %s13, %s20
      %p43 = scmp.eq.s32.totalorder %s42, 0
      %s45 = sadd.s32 %s44, 1
      %s46 = scalar_select %p43, %s44, %s45
      %p49 = pneg %p43
      %p50 = scmp.eq.s32.totalorder %s13, 1
      %p51 = por %p49, %p50
      %p52 = scmp.ne.s32.totalorder %s44, %s47
      %p53 = scmp.eq.s32.totalorder %s13, 0
      %p54 = por %p52, %p53
      %p55 = scmp.ne.s32.totalorder %s44, %s47
      %p56 = scmp.eq.s32.totalorder %s18, 1
      %p57 = por %p55, %p56
      %p58 = scmp.ne.s32.totalorder %s47, %s48
      %p59 = scmp.eq.s32.totalorder %s18, 0
      %p60 = por %p58, %p59
      %p61 = scmp.ne.s32.totalorder %s47, %s48
      %p62 = scmp.eq.s32.totalorder %s19, 1
      %p63 = por %p61, %p62
      %p65 = scmp.ne.s32.totalorder %s48, %s64
      %p66 = scmp.eq.s32.totalorder %s19, 0
      %p67 = por %p65, %p66
      %s68 = ssub.s32 %s13, %s20
      %p69 = scmp.eq.s32.totalorder %s68, 0
      %s71 = sadd.s32 %s70, 1
      %s72 = scalar_select %p69, %s70, %s71
      %p75 = pneg %p69
      %p76 = scmp.eq.s32.totalorder %s13, 1
      %p77 = por %p75, %p76
      %p78 = scmp.ne.s32.totalorder %s70, %s73
      %p79 = scmp.eq.s32.totalorder %s13, 0
      %p80 = por %p78, %p79
      %p81 = scmp.ne.s32.totalorder %s70, %s73
      %p82 = scmp.eq.s32.totalorder %s18, 1
      %p83 = por %p81, %p82
      %p84 = scmp.ne.s32.totalorder %s73, %s74
      %p85 = scmp.eq.s32.totalorder %s18, 0
      %p86 = por %p84, %p85
      %p87 = scmp.ne.s32.totalorder %s73, %s74
      %p88 = scmp.eq.s32.totalorder %s19, 1
      %p89 = por %p87, %p88
      %p91 = scmp.ne.s32.totalorder %s74, %s90
      %p92 = scmp.eq.s32.totalorder %s19, 0
      %p93 = por %p91, %p92
      %s94 = ssub.s32 %s13, %s20
      %p95 = scmp.eq.s32.totalorder %s94, 0
      %s97 = sadd.s32 %s96, 1
      %s98 = scalar_select %p95, %s96, %s97
      %p101 = pneg %p95
      %p102 = scmp.eq.s32.totalorder %s13, 1
      %p103 = por %p101, %p102
      %p104 = scmp.ne.s32.totalorder %s96, %s99
      %p105 = scmp.eq.s32.totalorder %s13, 0
      %p106 = por %p104, %p105
      %p107 = scmp.ne.s32.totalorder %s96, %s99
      %p108 = scmp.eq.s32.totalorder %s18, 1
      %p109 = por %p107, %p108
      %p110 = scmp.ne.s32.totalorder %s99, %s100
      %p111 = scmp.eq.s32.totalorder %s18, 0
      %p112 = por %p110, %p111
      %p113 = scmp.ne.s32.totalorder %s99, %s100
      %p114 = scmp.eq.s32.totalorder %s19, 1
      %p115 = por %p113, %p114
      %p117 = scmp.ne.s32.totalorder %s100, %s116
      %p118 = scmp.eq.s32.totalorder %s19, 0
      %p119 = por %p117, %p118
      %p120 = scmp.le.s32.totalorder 1, %s13
      %p121 = scmp.lt.s32.totalorder %s13, 3
      %p122 = pnand %p120, %p121
      %p123 = pneg %p122
      // Predicated region
      $region9: #{decoder_forward.2} parent=5 // pred_check
        _
      $region10: #{decoder_forward.2} parent=5 // pred_check_branch
        %125 = sbr.rel (%p122) target = $region12
      $region11: #{decoder_forward.2} parent=5 // pred_region
        %s126 = ssub.s32 %s13, 1
        // Predicated region
        $region13: #{decoder_forward.2} parent=11 // pred_check
          %p127 = pneg %p34
        $region14: #{decoder_forward.2} parent=11 // pred_check_branch
          %129 = sbr.rel (%p127) target = $region16
        $region15: #{decoder_forward.2} parent=11 // pred_region
          %s131 = ssub.s32 32, 32
          %132 = vsyncadd [#allocation3], %s131
          %s134 = sshll.u32 [#allocation2], 4
          %s135 = int_to_ptr.vmem [resolvable:$true] %s134
          %137 = dma.hbm_to_vmem [thread:$0]  %s0, 32, %s135, [#allocation3]
        $region16: #{decoder_forward.2} parent=11 // pred_fallthru
          _
      $region12: #{decoder_forward.2} parent=5 // pred_fallthru
        _
      %p138 = scmp.lt.s32.totalorder %s13, 2
      // Predicated region
      $region17: #{decoder_forward.2} parent=5 // pred_check
        %p139 = pneg %p138
      $region18: #{decoder_forward.2} parent=5 // pred_check_branch
        %141 = sbr.rel (%p139) target = $region20
      $region19: #{decoder_forward.2} parent=5 // pred_region
        // Predicated region
        $region21: #{decoder_forward.2} parent=19 // pred_check
          %p142 = pneg %p54
        $region22: #{decoder_forward.2} parent=19 // pred_check_branch
          %144 = sbr.rel (%p142) target = $region24
        $region23: #{decoder_forward.2} parent=19 // pred_region
          %s145 = sand.u32 %s13, 1
          %s146 = scalar_lea.sflag [#allocation5], %s145
          %s147 = sand.u32 %s44, 1
          %s148 = smul.addr %s147, 2048
          %s149 = scalar_lea.vmem [#allocation4], %s148
          %s150 = smul.u32 128, %s13
          %s152 = ssub.s32 32768, 32768
          %153 = vsyncadd %s146, %s152
          %s154 = smul.addr %s150, 64
          %s155 = scalar_lea.hbm %s1, %s154
          %s156 = sshll.u32 %s149, 4
          %s157 = int_to_ptr.vmem [resolvable:$true] %s156
          %162 = dma.hbm_to_vmem [thread:$0]  %s155, 32768, %s157, %s146, 16384, 8192, 512
        $region24: #{decoder_forward.2} parent=19 // pred_fallthru
          _
        // Predicated region
        $region25: #{decoder_forward.2} parent=19 // pred_check
          %p163 = pneg %p80
        $region26: #{decoder_forward.2} parent=19 // pred_check_branch
          %165 = sbr.rel (%p163) target = $region28
        $region27: #{decoder_forward.2} parent=19 // pred_region
          %s166 = sand.u32 %s13, 1
          %s167 = scalar_lea.sflag [#allocation5], %s166
          %s168 = sand.u32 %s70, 1
          %s169 = smul.addr %s168, 128
          %s170 = scalar_lea.vmem [#allocation6], %s169
          %s171 = smul.u32 128, %s13
          %s173 = ssub.s32 2048, 2048
          %174 = vsyncadd %s167, %s173
          %s175 = smul.addr %s171, 16
          %s176 = scalar_lea.hbm %s2, %s175
          %s178 = sshll.u32 %s170, 4
          %s179 = int_to_ptr.vmem [resolvable:$true] %s178
          %181 = dma.hbm_to_vmem [thread:$0]  %s176, 2048, %s179, %s167
        $region28: #{decoder_forward.2} parent=19 // pred_fallthru
          _
      $region20: #{decoder_forward.2} parent=5 // pred_fallthru
        _
      %p182 = scmp.le.s32.totalorder 1, %s13
      %p183 = scmp.lt.s32.totalorder %s13, 3
      %p184 = pnand %p182, %p183
      %p185 = pneg %p184
      // Predicated region
      $region29: #{decoder_forward.2} parent=5 // pred_check
        _
      $region30: #{decoder_forward.2} parent=5 // pred_check_branch
        %187 = sbr.rel (%p184) target = $region32
      $region31: #{decoder_forward.2} parent=5 // pred_region
        %s188 = ssub.s32 %s13, 1
        // Predicated region
        $region33: #{decoder_forward.2} parent=31 // pred_check
          %p189 = pneg %p34
        $region34: #{decoder_forward.2} parent=31 // pred_check_branch
          %191 = sbr.rel (%p189) target = $region36
        $region35: #{decoder_forward.2} parent=31 // pred_region
          %192 = dma.done [#allocation3], 32
        $region36: #{decoder_forward.2} parent=31 // pred_fallthru
          _
        %s193 = sand.u32 %s18, 1
        %s194 = scalar_lea.sflag [#allocation5], %s193
        %s195 = sand.u32 %s47, 1
        %s196 = smul.addr %s195, 2048
        %s197 = scalar_lea.vmem [#allocation4], %s196
        // Predicated region
        $region37: #{decoder_forward.2} parent=31 // pred_check
          %p198 = pneg %p60
        $region38: #{decoder_forward.2} parent=31 // pred_check_branch
          %200 = sbr.rel (%p198) target = $region40
        $region39: #{decoder_forward.2} parent=31 // pred_region
          %201 = dma.done %s194, 32768
        $region40: #{decoder_forward.2} parent=31 // pred_fallthru
          _
        %s202 = sand.u32 %s18, 1
        %s203 = scalar_lea.sflag [#allocation5], %s202
        %s204 = sand.u32 %s73, 1
        %s205 = smul.addr %s204, 128
        %s206 = scalar_lea.vmem [#allocation6], %s205
        // Predicated region
        $region41: #{decoder_forward.2} parent=31 // pred_check
          %p207 = pneg %p86
        $region42: #{decoder_forward.2} parent=31 // pred_check_branch
          %209 = sbr.rel (%p207) target = $region44
        $region43: #{decoder_forward.2} parent=31 // pred_region
          %210 = dma.done %s203, 2048
        $region44: #{decoder_forward.2} parent=31 // pred_fallthru
          _
        %p211 = pneg %p34
        %p212 = pneg %p31
        %s213 = sand.u32 %s18, 1
        %s214 = scalar_lea.sflag [#allocation5], %s213
        %s215 = sand.u32 %s47, 1
        %s216 = smul.addr %s215, 2048
        %s217 = scalar_lea.vmem [#allocation4], %s216
        %p218 = pneg %p60
        %p219 = pneg %p57
        %s220 = sand.u32 %s18, 1
        %s221 = scalar_lea.sflag [#allocation5], %s220
        %s222 = sand.u32 %s73, 1
        %s223 = smul.addr %s222, 128
        %s224 = scalar_lea.vmem [#allocation6], %s223
        %p225 = pneg %p86
        %p226 = pneg %p83
        %p227 = pneg %p112
        %p228 = pneg %p109
        %s229 = smul.u32 128, %s18
        %p230 = scmp.lt.s32.totalorder %s229, 255
        %s231 = scalar_select %p230, %s229, 255
        %s232 = scalar_lea.vmem %s3, %s231
        %s233 = smul.u32 128, %s18
        %s234 = smul.u32 128, %s18
        %s235 = smul.u32 128, %s18
        %p236 = scmp.lt.s32.totalorder %s235, 255
        %s237 = scalar_select %p236, %s235, 255
        %s238 = scalar_lea.vmem %s3, %s237
        %s239 = smul.u32 128, %s18
        %v241 = vld [vmem:[#allocation2] sm:$0x3]
        %v242 = vpack.c.bf16 %v241, %v241
        %v243 = vld [vmem:[%s197] sm:$0xff]
        %v244 = vld [vmem:[%s197 + $0x8] sm:$0xff]
        %v245 = vld [vmem:[%s197 + $0x10] sm:$0xff]
        %v246 = vld [vmem:[%s197 + $0x18] sm:$0xff]
        %v247 = vld [vmem:[%s197 + $0x20] sm:$0xff]
        %v248 = vld [vmem:[%s197 + $0x28] sm:$0xff]
        %v249 = vld [vmem:[%s197 + $0x30] sm:$0xff]
        %v250 = vld [vmem:[%s197 + $0x38] sm:$0xff]
        %v251 = vld [vmem:[%s197 + $0x40] sm:$0xff]
        %v252 = vld [vmem:[%s197 + $0x48] sm:$0xff]
        %v253 = vld [vmem:[%s197 + $0x50] sm:$0xff]
        %v254 = vld [vmem:[%s197 + $0x58] sm:$0xff]
        %v255 = vld [vmem:[%s197 + $0x60] sm:$0xff]
        %v256 = vld [vmem:[%s197 + $0x68] sm:$0xff]
        %v257 = vld [vmem:[%s197 + $0x70] sm:$0xff]
        %v258 = vld [vmem:[%s197 + $0x78] sm:$0xff]
        %v259 = vld [vmem:[%s197 + $0x80] sm:$0xff]
        %v260 = vld [vmem:[%s197 + $0x88] sm:$0xff]
        %v261 = vld [vmem:[%s197 + $0x90] sm:$0xff]
        %v262 = vld [vmem:[%s197 + $0x98] sm:$0xff]
        %v263 = vld [vmem:[%s197 + $0xa0] sm:$0xff]
        %v264 = vld [vmem:[%s197 + $0xa8] sm:$0xff]
        %v265 = vld [vmem:[%s197 + $0xb0] sm:$0xff]
        %v266 = vld [vmem:[%s197 + $0xb8] sm:$0xff]
        %v267 = vld [vmem:[%s197 + $0xc0] sm:$0xff]
        %v268 = vld [vmem:[%s197 + $0xc8] sm:$0xff]
        %v269 = vld [vmem:[%s197 + $0xd0] sm:$0xff]
        %v270 = vld [vmem:[%s197 + $0xd8] sm:$0xff]
        %v271 = vld [vmem:[%s197 + $0xe0] sm:$0xff]
        %v272 = vld [vmem:[%s197 + $0xe8] sm:$0xff]
        %v273 = vld [vmem:[%s197 + $0xf0] sm:$0xff]
        %v274 = vld [vmem:[%s197 + $0xf8] sm:$0xff]
        %v275 = vld [vmem:[%s197 + $0x100] sm:$0xff]
        %v276 = vld [vmem:[%s197 + $0x108] sm:$0xff]
        %v277 = vld [vmem:[%s197 + $0x110] sm:$0xff]
        %v278 = vld [vmem:[%s197 + $0x118] sm:$0xff]
        %v279 = vld [vmem:[%s197 + $0x120] sm:$0xff]
        %v280 = vld [vmem:[%s197 + $0x128] sm:$0xff]
        %v281 = vld [vmem:[%s197 + $0x130] sm:$0xff]
        %v282 = vld [vmem:[%s197 + $0x138] sm:$0xff]
        %v283 = vld [vmem:[%s197 + $0x140] sm:$0xff]
        %v284 = vld [vmem:[%s197 + $0x148] sm:$0xff]
        %v285 = vld [vmem:[%s197 + $0x150] sm:$0xff]
        %v286 = vld [vmem:[%s197 + $0x158] sm:$0xff]
        %v287 = vld [vmem:[%s197 + $0x160] sm:$0xff]
        %v288 = vld [vmem:[%s197 + $0x168] sm:$0xff]
        %v289 = vld [vmem:[%s197 + $0x170] sm:$0xff]
        %v290 = vld [vmem:[%s197 + $0x178] sm:$0xff]
        %v291 = vld [vmem:[%s197 + $0x180] sm:$0xff]
        %v292 = vld [vmem:[%s197 + $0x188] sm:$0xff]
        %v293 = vld [vmem:[%s197 + $0x190] sm:$0xff]
        %v294 = vld [vmem:[%s197 + $0x198] sm:$0xff]
        %v295 = vld [vmem:[%s197 + $0x1a0] sm:$0xff]
        %v296 = vld [vmem:[%s197 + $0x1a8] sm:$0xff]
        %v297 = vld [vmem:[%s197 + $0x1b0] sm:$0xff]
        %v298 = vld [vmem:[%s197 + $0x1b8] sm:$0xff]
        %v299 = vld [vmem:[%s197 + $0x1c0] sm:$0xff]
        %v300 = vld [vmem:[%s197 + $0x1c8] sm:$0xff]
        %v301 = vld [vmem:[%s197 + $0x1d0] sm:$0xff]
        %v302 = vld [vmem:[%s197 + $0x1d8] sm:$0xff]
        %v303 = vld [vmem:[%s197 + $0x1e0] sm:$0xff]
        %v304 = vld [vmem:[%s197 + $0x1e8] sm:$0xff]
        %v305 = vld [vmem:[%s197 + $0x1f0] sm:$0xff]
        %v306 = vld [vmem:[%s197 + $0x1f8] sm:$0xff]
        %v307 = vld [vmem:[%s197 + $0x200] sm:$0xff]
        %v308 = vld [vmem:[%s197 + $0x208] sm:$0xff]
        %v309 = vld [vmem:[%s197 + $0x210] sm:$0xff]
        %v310 = vld [vmem:[%s197 + $0x218] sm:$0xff]
        %v311 = vld [vmem:[%s197 + $0x220] sm:$0xff]
        %v312 = vld [vmem:[%s197 + $0x228] sm:$0xff]
        %v313 = vld [vmem:[%s197 + $0x230] sm:$0xff]
        %v314 = vld [vmem:[%s197 + $0x238] sm:$0xff]
        %v315 = vld [vmem:[%s197 + $0x240] sm:$0xff]
        %v316 = vld [vmem:[%s197 + $0x248] sm:$0xff]
        %v317 = vld [vmem:[%s197 + $0x250] sm:$0xff]
        %v318 = vld [vmem:[%s197 + $0x258] sm:$0xff]
        %v319 = vld [vmem:[%s197 + $0x260] sm:$0xff]
        %v320 = vld [vmem:[%s197 + $0x268] sm:$0xff]
        %v321 = vld [vmem:[%s197 + $0x270] sm:$0xff]
        %v322 = vld [vmem:[%s197 + $0x278] sm:$0xff]
        %v323 = vld [vmem:[%s197 + $0x280] sm:$0xff]
        %v324 = vld [vmem:[%s197 + $0x288] sm:$0xff]
        %v325 = vld [vmem:[%s197 + $0x290] sm:$0xff]
        %v326 = vld [vmem:[%s197 + $0x298] sm:$0xff]
        %v327 = vld [vmem:[%s197 + $0x2a0] sm:$0xff]
        %v328 = vld [vmem:[%s197 + $0x2a8] sm:$0xff]
        %v329 = vld [vmem:[%s197 + $0x2b0] sm:$0xff]
        %v330 = vld [vmem:[%s197 + $0x2b8] sm:$0xff]
        %v331 = vld [vmem:[%s197 + $0x2c0] sm:$0xff]
        %v332 = vld [vmem:[%s197 + $0x2c8] sm:$0xff]
        %v333 = vld [vmem:[%s197 + $0x2d0] sm:$0xff]
        %v334 = vld [vmem:[%s197 + $0x2d8] sm:$0xff]
        %v335 = vld [vmem:[%s197 + $0x2e0] sm:$0xff]
        %v336 = vld [vmem:[%s197 + $0x2e8] sm:$0xff]
        %v337 = vld [vmem:[%s197 + $0x2f0] sm:$0xff]
        %v338 = vld [vmem:[%s197 + $0x2f8] sm:$0xff]
        %v339 = vld [vmem:[%s197 + $0x300] sm:$0xff]
        %v340 = vld [vmem:[%s197 + $0x308] sm:$0xff]
        %v341 = vld [vmem:[%s197 + $0x310] sm:$0xff]
        %v342 = vld [vmem:[%s197 + $0x318] sm:$0xff]
        %v343 = vld [vmem:[%s197 + $0x320] sm:$0xff]
        %v344 = vld [vmem:[%s197 + $0x328] sm:$0xff]
        %v345 = vld [vmem:[%s197 + $0x330] sm:$0xff]
        %v346 = vld [vmem:[%s197 + $0x338] sm:$0xff]
        %v347 = vld [vmem:[%s197 + $0x340] sm:$0xff]
        %v348 = vld [vmem:[%s197 + $0x348] sm:$0xff]
        %v349 = vld [vmem:[%s197 + $0x350] sm:$0xff]
        %v350 = vld [vmem:[%s197 + $0x358] sm:$0xff]
        %v351 = vld [vmem:[%s197 + $0x360] sm:$0xff]
        %v352 = vld [vmem:[%s197 + $0x368] sm:$0xff]
        %v353 = vld [vmem:[%s197 + $0x370] sm:$0xff]
        %v354 = vld [vmem:[%s197 + $0x378] sm:$0xff]
        %v355 = vld [vmem:[%s197 + $0x380] sm:$0xff]
        %v356 = vld [vmem:[%s197 + $0x388] sm:$0xff]
        %v357 = vld [vmem:[%s197 + $0x390] sm:$0xff]
        %v358 = vld [vmem:[%s197 + $0x398] sm:$0xff]
        %v359 = vld [vmem:[%s197 + $0x3a0] sm:$0xff]
        %v360 = vld [vmem:[%s197 + $0x3a8] sm:$0xff]
        %v361 = vld [vmem:[%s197 + $0x3b0] sm:$0xff]
        %v362 = vld [vmem:[%s197 + $0x3b8] sm:$0xff]
        %v363 = vld [vmem:[%s197 + $0x3c0] sm:$0xff]
        %v364 = vld [vmem:[%s197 + $0x3c8] sm:$0xff]
        %v365 = vld [vmem:[%s197 + $0x3d0] sm:$0xff]
        %v366 = vld [vmem:[%s197 + $0x3d8] sm:$0xff]
        %v367 = vld [vmem:[%s197 + $0x3e0] sm:$0xff]
        %v368 = vld [vmem:[%s197 + $0x3e8] sm:$0xff]
        %v369 = vld [vmem:[%s197 + $0x3f0] sm:$0xff]
        %v370 = vld [vmem:[%s197 + $0x3f8] sm:$0xff]
        %v371 = vld [vmem:[%s197 + $0x400] sm:$0xff]
        %v372 = vld [vmem:[%s197 + $0x408] sm:$0xff]
        %v373 = vld [vmem:[%s197 + $0x410] sm:$0xff]
        %v374 = vld [vmem:[%s197 + $0x418] sm:$0xff]
        %v375 = vld [vmem:[%s197 + $0x420] sm:$0xff]
        %v376 = vld [vmem:[%s197 + $0x428] sm:$0xff]
        %v377 = vld [vmem:[%s197 + $0x430] sm:$0xff]
        %v378 = vld [vmem:[%s197 + $0x438] sm:$0xff]
        %v379 = vld [vmem:[%s197 + $0x440] sm:$0xff]
        %v380 = vld [vmem:[%s197 + $0x448] sm:$0xff]
        %v381 = vld [vmem:[%s197 + $0x450] sm:$0xff]
        %v382 = vld [vmem:[%s197 + $0x458] sm:$0xff]
        %v383 = vld [vmem:[%s197 + $0x460] sm:$0xff]
        %v384 = vld [vmem:[%s197 + $0x468] sm:$0xff]
        %v385 = vld [vmem:[%s197 + $0x470] sm:$0xff]
        %v386 = vld [vmem:[%s197 + $0x478] sm:$0xff]
        %v387 = vld [vmem:[%s197 + $0x480] sm:$0xff]
        %v388 = vld [vmem:[%s197 + $0x488] sm:$0xff]
        %v389 = vld [vmem:[%s197 + $0x490] sm:$0xff]
        %v390 = vld [vmem:[%s197 + $0x498] sm:$0xff]
        %v391 = vld [vmem:[%s197 + $0x4a0] sm:$0xff]
        %v392 = vld [vmem:[%s197 + $0x4a8] sm:$0xff]
        %v393 = vld [vmem:[%s197 + $0x4b0] sm:$0xff]
        %v394 = vld [vmem:[%s197 + $0x4b8] sm:$0xff]
        %v395 = vld [vmem:[%s197 + $0x4c0] sm:$0xff]
        %v396 = vld [vmem:[%s197 + $0x4c8] sm:$0xff]
        %v397 = vld [vmem:[%s197 + $0x4d0] sm:$0xff]
        %v398 = vld [vmem:[%s197 + $0x4d8] sm:$0xff]
        %v399 = vld [vmem:[%s197 + $0x4e0] sm:$0xff]
        %v400 = vld [vmem:[%s197 + $0x4e8] sm:$0xff]
        %v401 = vld [vmem:[%s197 + $0x4f0] sm:$0xff]
        %v402 = vld [vmem:[%s197 + $0x4f8] sm:$0xff]
        %v403 = vld [vmem:[%s197 + $0x500] sm:$0xff]
        %v404 = vld [vmem:[%s197 + $0x508] sm:$0xff]
        %v405 = vld [vmem:[%s197 + $0x510] sm:$0xff]
        %v406 = vld [vmem:[%s197 + $0x518] sm:$0xff]
        %v407 = vld [vmem:[%s197 + $0x520] sm:$0xff]
        %v408 = vld [vmem:[%s197 + $0x528] sm:$0xff]
        %v409 = vld [vmem:[%s197 + $0x530] sm:$0xff]
        %v410 = vld [vmem:[%s197 + $0x538] sm:$0xff]
        %v411 = vld [vmem:[%s197 + $0x540] sm:$0xff]
        %v412 = vld [vmem:[%s197 + $0x548] sm:$0xff]
        %v413 = vld [vmem:[%s197 + $0x550] sm:$0xff]
        %v414 = vld [vmem:[%s197 + $0x558] sm:$0xff]
        %v415 = vld [vmem:[%s197 + $0x560] sm:$0xff]
        %v416 = vld [vmem:[%s197 + $0x568] sm:$0xff]
        %v417 = vld [vmem:[%s197 + $0x570] sm:$0xff]
        %v418 = vld [vmem:[%s197 + $0x578] sm:$0xff]
        %v419 = vld [vmem:[%s197 + $0x580] sm:$0xff]
        %v420 = vld [vmem:[%s197 + $0x588] sm:$0xff]
        %v421 = vld [vmem:[%s197 + $0x590] sm:$0xff]
        %v422 = vld [vmem:[%s197 + $0x598] sm:$0xff]
        %v423 = vld [vmem:[%s197 + $0x5a0] sm:$0xff]
        %v424 = vld [vmem:[%s197 + $0x5a8] sm:$0xff]
        %v425 = vld [vmem:[%s197 + $0x5b0] sm:$0xff]
        %v426 = vld [vmem:[%s197 + $0x5b8] sm:$0xff]
        %v427 = vld [vmem:[%s197 + $0x5c0] sm:$0xff]
        %v428 = vld [vmem:[%s197 + $0x5c8] sm:$0xff]
        %v429 = vld [vmem:[%s197 + $0x5d0] sm:$0xff]
        %v430 = vld [vmem:[%s197 + $0x5d8] sm:$0xff]
        %v431 = vld [vmem:[%s197 + $0x5e0] sm:$0xff]
        %v432 = vld [vmem:[%s197 + $0x5e8] sm:$0xff]
        %v433 = vld [vmem:[%s197 + $0x5f0] sm:$0xff]
        %v434 = vld [vmem:[%s197 + $0x5f8] sm:$0xff]
        %v435 = vld [vmem:[%s197 + $0x600] sm:$0xff]
        %v436 = vld [vmem:[%s197 + $0x608] sm:$0xff]
        %v437 = vld [vmem:[%s197 + $0x610] sm:$0xff]
        %v438 = vld [vmem:[%s197 + $0x618] sm:$0xff]
        %v439 = vld [vmem:[%s197 + $0x620] sm:$0xff]
        %v440 = vld [vmem:[%s197 + $0x628] sm:$0xff]
        %v441 = vld [vmem:[%s197 + $0x630] sm:$0xff]
        %v442 = vld [vmem:[%s197 + $0x638] sm:$0xff]
        %v443 = vld [vmem:[%s197 + $0x640] sm:$0xff]
        %v444 = vld [vmem:[%s197 + $0x648] sm:$0xff]
        %v445 = vld [vmem:[%s197 + $0x650] sm:$0xff]
        %v446 = vld [vmem:[%s197 + $0x658] sm:$0xff]
        %v447 = vld [vmem:[%s197 + $0x660] sm:$0xff]
        %v448 = vld [vmem:[%s197 + $0x668] sm:$0xff]
        %v449 = vld [vmem:[%s197 + $0x670] sm:$0xff]
        %v450 = vld [vmem:[%s197 + $0x678] sm:$0xff]
        %v451 = vld [vmem:[%s197 + $0x680] sm:$0xff]
        %v452 = vld [vmem:[%s197 + $0x688] sm:$0xff]
        %v453 = vld [vmem:[%s197 + $0x690] sm:$0xff]
        %v454 = vld [vmem:[%s197 + $0x698] sm:$0xff]
        %v455 = vld [vmem:[%s197 + $0x6a0] sm:$0xff]
        %v456 = vld [vmem:[%s197 + $0x6a8] sm:$0xff]
        %v457 = vld [vmem:[%s197 + $0x6b0] sm:$0xff]
        %v458 = vld [vmem:[%s197 + $0x6b8] sm:$0xff]
        %v459 = vld [vmem:[%s197 + $0x6c0] sm:$0xff]
        %v460 = vld [vmem:[%s197 + $0x6c8] sm:$0xff]
        %v461 = vld [vmem:[%s197 + $0x6d0] sm:$0xff]
        %v462 = vld [vmem:[%s197 + $0x6d8] sm:$0xff]
        %v463 = vld [vmem:[%s197 + $0x6e0] sm:$0xff]
        %v464 = vld [vmem:[%s197 + $0x6e8] sm:$0xff]
        %v465 = vld [vmem:[%s197 + $0x6f0] sm:$0xff]
        %v466 = vld [vmem:[%s197 + $0x6f8] sm:$0xff]
        %v467 = vld [vmem:[%s197 + $0x700] sm:$0xff]
        %v468 = vld [vmem:[%s197 + $0x708] sm:$0xff]
        %v469 = vld [vmem:[%s197 + $0x710] sm:$0xff]
        %v470 = vld [vmem:[%s197 + $0x718] sm:$0xff]
        %v471 = vld [vmem:[%s197 + $0x720] sm:$0xff]
        %v472 = vld [vmem:[%s197 + $0x728] sm:$0xff]
        %v473 = vld [vmem:[%s197 + $0x730] sm:$0xff]
        %v474 = vld [vmem:[%s197 + $0x738] sm:$0xff]
        %v475 = vld [vmem:[%s197 + $0x740] sm:$0xff]
        %v476 = vld [vmem:[%s197 + $0x748] sm:$0xff]
        %v477 = vld [vmem:[%s197 + $0x750] sm:$0xff]
        %v478 = vld [vmem:[%s197 + $0x758] sm:$0xff]
        %v479 = vld [vmem:[%s197 + $0x760] sm:$0xff]
        %v480 = vld [vmem:[%s197 + $0x768] sm:$0xff]
        %v481 = vld [vmem:[%s197 + $0x770] sm:$0xff]
        %v482 = vld [vmem:[%s197 + $0x778] sm:$0xff]
        %v483 = vld [vmem:[%s197 + $0x780] sm:$0xff]
        %v484 = vld [vmem:[%s197 + $0x788] sm:$0xff]
        %v485 = vld [vmem:[%s197 + $0x790] sm:$0xff]
        %v486 = vld [vmem:[%s197 + $0x798] sm:$0xff]
        %v487 = vld [vmem:[%s197 + $0x7a0] sm:$0xff]
        %v488 = vld [vmem:[%s197 + $0x7a8] sm:$0xff]
        %v489 = vld [vmem:[%s197 + $0x7b0] sm:$0xff]
        %v490 = vld [vmem:[%s197 + $0x7b8] sm:$0xff]
        %v491 = vld [vmem:[%s197 + $0x7c0] sm:$0xff]
        %v492 = vld [vmem:[%s197 + $0x7c8] sm:$0xff]
        %v493 = vld [vmem:[%s197 + $0x7d0] sm:$0xff]
        %v494 = vld [vmem:[%s197 + $0x7d8] sm:$0xff]
        %v495 = vld [vmem:[%s197 + $0x7e0] sm:$0xff]
        %v496 = vld [vmem:[%s197 + $0x7e8] sm:$0xff]
        %v497 = vld [vmem:[%s197 + $0x7f0] sm:$0xff]
        %v498 = vld [vmem:[%s197 + $0x7f8] sm:$0xff]
        %v499 = vld [vmem:[%s206] sm:$0xff]
        %v500 = vld [vmem:[%s206 + $0x8] sm:$0xff]
        %v501 = vld [vmem:[%s206 + $0x10] sm:$0xff]
        %v502 = vld [vmem:[%s206 + $0x18] sm:$0xff]
        %v503 = vld [vmem:[%s206 + $0x20] sm:$0xff]
        %v504 = vld [vmem:[%s206 + $0x28] sm:$0xff]
        %v505 = vld [vmem:[%s206 + $0x30] sm:$0xff]
        %v506 = vld [vmem:[%s206 + $0x38] sm:$0xff]
        %v507 = vld [vmem:[%s206 + $0x40] sm:$0xff]
        %v508 = vld [vmem:[%s206 + $0x48] sm:$0xff]
        %v509 = vld [vmem:[%s206 + $0x50] sm:$0xff]
        %v510 = vld [vmem:[%s206 + $0x58] sm:$0xff]
        %v511 = vld [vmem:[%s206 + $0x60] sm:$0xff]
        %v512 = vld [vmem:[%s206 + $0x68] sm:$0xff]
        %v513 = vld [vmem:[%s206 + $0x70] sm:$0xff]
        %v514 = vld [vmem:[%s206 + $0x78] sm:$0xff]
        %v531 = vlaneseq
        %v532 = vshrl.u32 %v531, 7
        %v533 = vsub.s32 0, %v532
        %v534 = vrot.slane %v499, %v533
        %v535 = vlaneseq
        %v536 = vshrl.u32 %v535, 7
        %v537 = vsub.s32 1, %v536
        %v538 = vrot.slane %v499, %v537
        %v539 = vlaneseq
        %v540 = vshrl.u32 %v539, 7
        %v541 = vsub.s32 2, %v540
        %v542 = vrot.slane %v499, %v541
        %v543 = vlaneseq
        %v544 = vshrl.u32 %v543, 7
        %v545 = vsub.s32 3, %v544
        %v546 = vrot.slane %v499, %v545
        %v547 = vlaneseq
        %v548 = vshrl.u32 %v547, 7
        %v549 = vsub.s32 4, %v548
        %v550 = vrot.slane %v499, %v549
        %v551 = vlaneseq
        %v552 = vshrl.u32 %v551, 7
        %v553 = vsub.s32 5, %v552
        %v554 = vrot.slane %v499, %v553
        %v555 = vlaneseq
        %v556 = vshrl.u32 %v555, 7
        %v557 = vsub.s32 6, %v556
        %v558 = vrot.slane %v499, %v557
        %v559 = vlaneseq
        %v560 = vshrl.u32 %v559, 7
        %v561 = vsub.s32 7, %v560
        %v562 = vrot.slane %v499, %v561
        %v563 = vlaneseq
        %v564 = vshrl.u32 %v563, 7
        %v565 = vsub.s32 0, %v564
        %v566 = vrot.slane %v500, %v565
        %v567 = vlaneseq
        %v568 = vshrl.u32 %v567, 7
        %v569 = vsub.s32 1, %v568
        %v570 = vrot.slane %v500, %v569
        %v571 = vlaneseq
        %v572 = vshrl.u32 %v571, 7
        %v573 = vsub.s32 2, %v572
        %v574 = vrot.slane %v500, %v573
        %v575 = vlaneseq
        %v576 = vshrl.u32 %v575, 7
        %v577 = vsub.s32 3, %v576
        %v578 = vrot.slane %v500, %v577
        %v579 = vlaneseq
        %v580 = vshrl.u32 %v579, 7
        %v581 = vsub.s32 4, %v580
        %v582 = vrot.slane %v500, %v581
        %v583 = vlaneseq
        %v584 = vshrl.u32 %v583, 7
        %v585 = vsub.s32 5, %v584
        %v586 = vrot.slane %v500, %v585
        %v587 = vlaneseq
        %v588 = vshrl.u32 %v587, 7
        %v589 = vsub.s32 6, %v588
        %v590 = vrot.slane %v500, %v589
        %v591 = vlaneseq
        %v592 = vshrl.u32 %v591, 7
        %v593 = vsub.s32 7, %v592
        %v594 = vrot.slane %v500, %v593
        %v595 = vlaneseq
        %v596 = vshrl.u32 %v595, 7
        %v597 = vsub.s32 0, %v596
        %v598 = vrot.slane %v501, %v597
        %v599 = vlaneseq
        %v600 = vshrl.u32 %v599, 7
        %v601 = vsub.s32 1, %v600
        %v602 = vrot.slane %v501, %v601
        %v603 = vlaneseq
        %v604 = vshrl.u32 %v603, 7
        %v605 = vsub.s32 2, %v604
        %v606 = vrot.slane %v501, %v605
        %v607 = vlaneseq
        %v608 = vshrl.u32 %v607, 7
        %v609 = vsub.s32 3, %v608
        %v610 = vrot.slane %v501, %v609
        %v611 = vlaneseq
        %v612 = vshrl.u32 %v611, 7
        %v613 = vsub.s32 4, %v612
        %v614 = vrot.slane %v501, %v613
        %v615 = vlaneseq
        %v616 = vshrl.u32 %v615, 7
        %v617 = vsub.s32 5, %v616
        %v618 = vrot.slane %v501, %v617
        %v619 = vlaneseq
        %v620 = vshrl.u32 %v619, 7
        %v621 = vsub.s32 6, %v620
        %v622 = vrot.slane %v501, %v621
        %v623 = vlaneseq
        %v624 = vshrl.u32 %v623, 7
        %v625 = vsub.s32 7, %v624
        %v626 = vrot.slane %v501, %v625
        %v627 = vlaneseq
        %v628 = vshrl.u32 %v627, 7
        %v629 = vsub.s32 0, %v628
        %v630 = vrot.slane %v502, %v629
        %v631 = vlaneseq
        %v632 = vshrl.u32 %v631, 7
        %v633 = vsub.s32 1, %v632
        %v634 = vrot.slane %v502, %v633
        %v635 = vlaneseq
        %v636 = vshrl.u32 %v635, 7
        %v637 = vsub.s32 2, %v636
        %v638 = vrot.slane %v502, %v637
        %v639 = vlaneseq
        %v640 = vshrl.u32 %v639, 7
        %v641 = vsub.s32 3, %v640
        %v642 = vrot.slane %v502, %v641
        %v643 = vlaneseq
        %v644 = vshrl.u32 %v643, 7
        %v645 = vsub.s32 4, %v644
        %v646 = vrot.slane %v502, %v645
        %v647 = vlaneseq
        %v648 = vshrl.u32 %v647, 7
        %v649 = vsub.s32 5, %v648
        %v650 = vrot.slane %v502, %v649
        %v651 = vlaneseq
        %v652 = vshrl.u32 %v651, 7
        %v653 = vsub.s32 6, %v652
        %v654 = vrot.slane %v502, %v653
        %v655 = vlaneseq
        %v656 = vshrl.u32 %v655, 7
        %v657 = vsub.s32 7, %v656
        %v658 = vrot.slane %v502, %v657
        %v659 = vlaneseq
        %v660 = vshrl.u32 %v659, 7
        %v661 = vsub.s32 0, %v660
        %v662 = vrot.slane %v503, %v661
        %v663 = vlaneseq
        %v664 = vshrl.u32 %v663, 7
        %v665 = vsub.s32 1, %v664
        %v666 = vrot.slane %v503, %v665
        %v667 = vlaneseq
        %v668 = vshrl.u32 %v667, 7
        %v669 = vsub.s32 2, %v668
        %v670 = vrot.slane %v503, %v669
        %v671 = vlaneseq
        %v672 = vshrl.u32 %v671, 7
        %v673 = vsub.s32 3, %v672
        %v674 = vrot.slane %v503, %v673
        %v675 = vlaneseq
        %v676 = vshrl.u32 %v675, 7
        %v677 = vsub.s32 4, %v676
        %v678 = vrot.slane %v503, %v677
        %v679 = vlaneseq
        %v680 = vshrl.u32 %v679, 7
        %v681 = vsub.s32 5, %v680
        %v682 = vrot.slane %v503, %v681
        %v683 = vlaneseq
        %v684 = vshrl.u32 %v683, 7
        %v685 = vsub.s32 6, %v684
        %v686 = vrot.slane %v503, %v685
        %v687 = vlaneseq
        %v688 = vshrl.u32 %v687, 7
        %v689 = vsub.s32 7, %v688
        %v690 = vrot.slane %v503, %v689
        %v691 = vlaneseq
        %v692 = vshrl.u32 %v691, 7
        %v693 = vsub.s32 0, %v692
        %v694 = vrot.slane %v504, %v693
        %v695 = vlaneseq
        %v696 = vshrl.u32 %v695, 7
        %v697 = vsub.s32 1, %v696
        %v698 = vrot.slane %v504, %v697
        %v699 = vlaneseq
        %v700 = vshrl.u32 %v699, 7
        %v701 = vsub.s32 2, %v700
        %v702 = vrot.slane %v504, %v701
        %v703 = vlaneseq
        %v704 = vshrl.u32 %v703, 7
        %v705 = vsub.s32 3, %v704
        %v706 = vrot.slane %v504, %v705
        %v707 = vlaneseq
        %v708 = vshrl.u32 %v707, 7
        %v709 = vsub.s32 4, %v708
        %v710 = vrot.slane %v504, %v709
        %v711 = vlaneseq
        %v712 = vshrl.u32 %v711, 7
        %v713 = vsub.s32 5, %v712
        %v714 = vrot.slane %v504, %v713
        %v715 = vlaneseq
        %v716 = vshrl.u32 %v715, 7
        %v717 = vsub.s32 6, %v716
        %v718 = vrot.slane %v504, %v717
        %v719 = vlaneseq
        %v720 = vshrl.u32 %v719, 7
        %v721 = vsub.s32 7, %v720
        %v722 = vrot.slane %v504, %v721
        %v723 = vlaneseq
        %v724 = vshrl.u32 %v723, 7
        %v725 = vsub.s32 0, %v724
        %v726 = vrot.slane %v505, %v725
        %v727 = vlaneseq
        %v728 = vshrl.u32 %v727, 7
        %v729 = vsub.s32 1, %v728
        %v730 = vrot.slane %v505, %v729
        %v731 = vlaneseq
        %v732 = vshrl.u32 %v731, 7
        %v733 = vsub.s32 2, %v732
        %v734 = vrot.slane %v505, %v733
        %v735 = vlaneseq
        %v736 = vshrl.u32 %v735, 7
        %v737 = vsub.s32 3, %v736
        %v738 = vrot.slane %v505, %v737
        %v739 = vlaneseq
        %v740 = vshrl.u32 %v739, 7
        %v741 = vsub.s32 4, %v740
        %v742 = vrot.slane %v505, %v741
        %v743 = vlaneseq
        %v744 = vshrl.u32 %v743, 7
        %v745 = vsub.s32 5, %v744
        %v746 = vrot.slane %v505, %v745
        %v747 = vlaneseq
        %v748 = vshrl.u32 %v747, 7
        %v749 = vsub.s32 6, %v748
        %v750 = vrot.slane %v505, %v749
        %v751 = vlaneseq
        %v752 = vshrl.u32 %v751, 7
        %v753 = vsub.s32 7, %v752
        %v754 = vrot.slane %v505, %v753
        %v755 = vlaneseq
        %v756 = vshrl.u32 %v755, 7
        %v757 = vsub.s32 0, %v756
        %v758 = vrot.slane %v506, %v757
        %v759 = vlaneseq
        %v760 = vshrl.u32 %v759, 7
        %v761 = vsub.s32 1, %v760
        %v762 = vrot.slane %v506, %v761
        %v763 = vlaneseq
        %v764 = vshrl.u32 %v763, 7
        %v765 = vsub.s32 2, %v764
        %v766 = vrot.slane %v506, %v765
        %v767 = vlaneseq
        %v768 = vshrl.u32 %v767, 7
        %v769 = vsub.s32 3, %v768
        %v770 = vrot.slane %v506, %v769
        %v771 = vlaneseq
        %v772 = vshrl.u32 %v771, 7
        %v773 = vsub.s32 4, %v772
        %v774 = vrot.slane %v506, %v773
        %v775 = vlaneseq
        %v776 = vshrl.u32 %v775, 7
        %v777 = vsub.s32 5, %v776
        %v778 = vrot.slane %v506, %v777
        %v779 = vlaneseq
        %v780 = vshrl.u32 %v779, 7
        %v781 = vsub.s32 6, %v780
        %v782 = vrot.slane %v506, %v781
        %v783 = vlaneseq
        %v784 = vshrl.u32 %v783, 7
        %v785 = vsub.s32 7, %v784
        %v786 = vrot.slane %v506, %v785
        %v787 = vlaneseq
        %v788 = vshrl.u32 %v787, 7
        %v789 = vsub.s32 0, %v788
        %v790 = vrot.slane %v507, %v789
        %v791 = vlaneseq
        %v792 = vshrl.u32 %v791, 7
        %v793 = vsub.s32 1, %v792
        %v794 = vrot.slane %v507, %v793
        %v795 = vlaneseq
        %v796 = vshrl.u32 %v795, 7
        %v797 = vsub.s32 2, %v796
        %v798 = vrot.slane %v507, %v797
        %v799 = vlaneseq
        %v800 = vshrl.u32 %v799, 7
        %v801 = vsub.s32 3, %v800
        %v802 = vrot.slane %v507, %v801
        %v803 = vlaneseq
        %v804 = vshrl.u32 %v803, 7
        %v805 = vsub.s32 4, %v804
        %v806 = vrot.slane %v507, %v805
        %v807 = vlaneseq
        %v808 = vshrl.u32 %v807, 7
        %v809 = vsub.s32 5, %v808
        %v810 = vrot.slane %v507, %v809
        %v811 = vlaneseq
        %v812 = vshrl.u32 %v811, 7
        %v813 = vsub.s32 6, %v812
        %v814 = vrot.slane %v507, %v813
        %v815 = vlaneseq
        %v816 = vshrl.u32 %v815, 7
        %v817 = vsub.s32 7, %v816
        %v818 = vrot.slane %v507, %v817
        %v819 = vlaneseq
        %v820 = vshrl.u32 %v819, 7
        %v821 = vsub.s32 0, %v820
        %v822 = vrot.slane %v508, %v821
        %v823 = vlaneseq
        %v824 = vshrl.u32 %v823, 7
        %v825 = vsub.s32 1, %v824
        %v826 = vrot.slane %v508, %v825
        %v827 = vlaneseq
        %v828 = vshrl.u32 %v827, 7
        %v829 = vsub.s32 2, %v828
        %v830 = vrot.slane %v508, %v829
        %v831 = vlaneseq
        %v832 = vshrl.u32 %v831, 7
        %v833 = vsub.s32 3, %v832
        %v834 = vrot.slane %v508, %v833
        %v835 = vlaneseq
        %v836 = vshrl.u32 %v835, 7
        %v837 = vsub.s32 4, %v836
        %v838 = vrot.slane %v508, %v837
        %v839 = vlaneseq
        %v840 = vshrl.u32 %v839, 7
        %v841 = vsub.s32 5, %v840
        %v842 = vrot.slane %v508, %v841
        %v843 = vlaneseq
        %v844 = vshrl.u32 %v843, 7
        %v845 = vsub.s32 6, %v844
        %v846 = vrot.slane %v508, %v845
        %v847 = vlaneseq
        %v848 = vshrl.u32 %v847, 7
        %v849 = vsub.s32 7, %v848
        %v850 = vrot.slane %v508, %v849
        %v851 = vlaneseq
        %v852 = vshrl.u32 %v851, 7
        %v853 = vsub.s32 0, %v852
        %v854 = vrot.slane %v509, %v853
        %v855 = vlaneseq
        %v856 = vshrl.u32 %v855, 7
        %v857 = vsub.s32 1, %v856
        %v858 = vrot.slane %v509, %v857
        %v859 = vlaneseq
        %v860 = vshrl.u32 %v859, 7
        %v861 = vsub.s32 2, %v860
        %v862 = vrot.slane %v509, %v861
        %v863 = vlaneseq
        %v864 = vshrl.u32 %v863, 7
        %v865 = vsub.s32 3, %v864
        %v866 = vrot.slane %v509, %v865
        %v867 = vlaneseq
        %v868 = vshrl.u32 %v867, 7
        %v869 = vsub.s32 4, %v868
        %v870 = vrot.slane %v509, %v869
        %v871 = vlaneseq
        %v872 = vshrl.u32 %v871, 7
        %v873 = vsub.s32 5, %v872
        %v874 = vrot.slane %v509, %v873
        %v875 = vlaneseq
        %v876 = vshrl.u32 %v875, 7
        %v877 = vsub.s32 6, %v876
        %v878 = vrot.slane %v509, %v877
        %v879 = vlaneseq
        %v880 = vshrl.u32 %v879, 7
        %v881 = vsub.s32 7, %v880
        %v882 = vrot.slane %v509, %v881
        %v883 = vlaneseq
        %v884 = vshrl.u32 %v883, 7
        %v885 = vsub.s32 0, %v884
        %v886 = vrot.slane %v510, %v885
        %v887 = vlaneseq
        %v888 = vshrl.u32 %v887, 7
        %v889 = vsub.s32 1, %v888
        %v890 = vrot.slane %v510, %v889
        %v891 = vlaneseq
        %v892 = vshrl.u32 %v891, 7
        %v893 = vsub.s32 2, %v892
        %v894 = vrot.slane %v510, %v893
        %v895 = vlaneseq
        %v896 = vshrl.u32 %v895, 7
        %v897 = vsub.s32 3, %v896
        %v898 = vrot.slane %v510, %v897
        %v899 = vlaneseq
        %v900 = vshrl.u32 %v899, 7
        %v901 = vsub.s32 4, %v900
        %v902 = vrot.slane %v510, %v901
        %v903 = vlaneseq
        %v904 = vshrl.u32 %v903, 7
        %v905 = vsub.s32 5, %v904
        %v906 = vrot.slane %v510, %v905
        %v907 = vlaneseq
        %v908 = vshrl.u32 %v907, 7
        %v909 = vsub.s32 6, %v908
        %v910 = vrot.slane %v510, %v909
        %v911 = vlaneseq
        %v912 = vshrl.u32 %v911, 7
        %v913 = vsub.s32 7, %v912
        %v914 = vrot.slane %v510, %v913
        %v915 = vlaneseq
        %v916 = vshrl.u32 %v915, 7
        %v917 = vsub.s32 0, %v916
        %v918 = vrot.slane %v511, %v917
        %v919 = vlaneseq
        %v920 = vshrl.u32 %v919, 7
        %v921 = vsub.s32 1, %v920
        %v922 = vrot.slane %v511, %v921
        %v923 = vlaneseq
        %v924 = vshrl.u32 %v923, 7
        %v925 = vsub.s32 2, %v924
        %v926 = vrot.slane %v511, %v925
        %v927 = vlaneseq
        %v928 = vshrl.u32 %v927, 7
        %v929 = vsub.s32 3, %v928
        %v930 = vrot.slane %v511, %v929
        %v931 = vlaneseq
        %v932 = vshrl.u32 %v931, 7
        %v933 = vsub.s32 4, %v932
        %v934 = vrot.slane %v511, %v933
        %v935 = vlaneseq
        %v936 = vshrl.u32 %v935, 7
        %v937 = vsub.s32 5, %v936
        %v938 = vrot.slane %v511, %v937
        %v939 = vlaneseq
        %v940 = vshrl.u32 %v939, 7
        %v941 = vsub.s32 6, %v940
        %v942 = vrot.slane %v511, %v941
        %v943 = vlaneseq
        %v944 = vshrl.u32 %v943, 7
        %v945 = vsub.s32 7, %v944
        %v946 = vrot.slane %v511, %v945
        %v947 = vlaneseq
        %v948 = vshrl.u32 %v947, 7
        %v949 = vsub.s32 0, %v948
        %v950 = vrot.slane %v512, %v949
        %v951 = vlaneseq
        %v952 = vshrl.u32 %v951, 7
        %v953 = vsub.s32 1, %v952
        %v954 = vrot.slane %v512, %v953
        %v955 = vlaneseq
        %v956 = vshrl.u32 %v955, 7
        %v957 = vsub.s32 2, %v956
        %v958 = vrot.slane %v512, %v957
        %v959 = vlaneseq
        %v960 = vshrl.u32 %v959, 7
        %v961 = vsub.s32 3, %v960
        %v962 = vrot.slane %v512, %v961
        %v963 = vlaneseq
        %v964 = vshrl.u32 %v963, 7
        %v965 = vsub.s32 4, %v964
        %v966 = vrot.slane %v512, %v965
        %v967 = vlaneseq
        %v968 = vshrl.u32 %v967, 7
        %v969 = vsub.s32 5, %v968
        %v970 = vrot.slane %v512, %v969
        %v971 = vlaneseq
        %v972 = vshrl.u32 %v971, 7
        %v973 = vsub.s32 6, %v972
        %v974 = vrot.slane %v512, %v973
        %v975 = vlaneseq
        %v976 = vshrl.u32 %v975, 7
        %v977 = vsub.s32 7, %v976
        %v978 = vrot.slane %v512, %v977
        %v979 = vlaneseq
        %v980 = vshrl.u32 %v979, 7
        %v981 = vsub.s32 0, %v980
        %v982 = vrot.slane %v513, %v981
        %v983 = vlaneseq
        %v984 = vshrl.u32 %v983, 7
        %v985 = vsub.s32 1, %v984
        %v986 = vrot.slane %v513, %v985
        %v987 = vlaneseq
        %v988 = vshrl.u32 %v987, 7
        %v989 = vsub.s32 2, %v988
        %v990 = vrot.slane %v513, %v989
        %v991 = vlaneseq
        %v992 = vshrl.u32 %v991, 7
        %v993 = vsub.s32 3, %v992
        %v994 = vrot.slane %v513, %v993
        %v995 = vlaneseq
        %v996 = vshrl.u32 %v995, 7
        %v997 = vsub.s32 4, %v996
        %v998 = vrot.slane %v513, %v997
        %v999 = vlaneseq
        %v1000 = vshrl.u32 %v999, 7
        %v1001 = vsub.s32 5, %v1000
        %v1002 = vrot.slane %v513, %v1001
        %v1003 = vlaneseq
        %v1004 = vshrl.u32 %v1003, 7
        %v1005 = vsub.s32 6, %v1004
        %v1006 = vrot.slane %v513, %v1005
        %v1007 = vlaneseq
        %v1008 = vshrl.u32 %v1007, 7
        %v1009 = vsub.s32 7, %v1008
        %v1010 = vrot.slane %v513, %v1009
        %v1011 = vlaneseq
        %v1012 = vshrl.u32 %v1011, 7
        %v1013 = vsub.s32 0, %v1012
        %v1014 = vrot.slane %v514, %v1013
        %v1015 = vlaneseq
        %v1016 = vshrl.u32 %v1015, 7
        %v1017 = vsub.s32 1, %v1016
        %v1018 = vrot.slane %v514, %v1017
        %v1019 = vlaneseq
        %v1020 = vshrl.u32 %v1019, 7
        %v1021 = vsub.s32 2, %v1020
        %v1022 = vrot.slane %v514, %v1021
        %v1023 = vlaneseq
        %v1024 = vshrl.u32 %v1023, 7
        %v1025 = vsub.s32 3, %v1024
        %v1026 = vrot.slane %v514, %v1025
        %v1027 = vlaneseq
        %v1028 = vshrl.u32 %v1027, 7
        %v1029 = vsub.s32 4, %v1028
        %v1030 = vrot.slane %v514, %v1029
        %v1031 = vlaneseq
        %v1032 = vshrl.u32 %v1031, 7
        %v1033 = vsub.s32 5, %v1032
        %v1034 = vrot.slane %v514, %v1033
        %v1035 = vlaneseq
        %v1036 = vshrl.u32 %v1035, 7
        %v1037 = vsub.s32 6, %v1036
        %v1038 = vrot.slane %v514, %v1037
        %v1039 = vlaneseq
        %v1040 = vshrl.u32 %v1039, 7
        %v1041 = vsub.s32 7, %v1040
        %v1042 = vrot.slane %v514, %v1041
        %v1427 = vunpack.c.l.b16 %v243
        %v1428 = vunpack.c.h.b16 %v243
        %v1429 = vunpack.c.l.b16 %v244
        %v1430 = vunpack.c.h.b16 %v244
        %v1431 = vunpack.c.l.b16 %v245
        %v1432 = vunpack.c.h.b16 %v245
        %v1433 = vunpack.c.l.b16 %v246
        %v1434 = vunpack.c.h.b16 %v246
        %v1435 = vunpack.c.l.b16 %v247
        %v1436 = vunpack.c.h.b16 %v247
        %v1437 = vunpack.c.l.b16 %v248
        %v1438 = vunpack.c.h.b16 %v248
        %v1439 = vunpack.c.l.b16 %v249
        %v1440 = vunpack.c.h.b16 %v249
        %v1441 = vunpack.c.l.b16 %v250
        %v1442 = vunpack.c.h.b16 %v250
        %v1443 = vunpack.c.l.b16 %v251
        %v1444 = vunpack.c.h.b16 %v251
        %v1445 = vunpack.c.l.b16 %v252
        %v1446 = vunpack.c.h.b16 %v252
        %v1447 = vunpack.c.l.b16 %v253
        %v1448 = vunpack.c.h.b16 %v253
        %v1449 = vunpack.c.l.b16 %v254
        %v1450 = vunpack.c.h.b16 %v254
        %v1451 = vunpack.c.l.b16 %v255
        %v1452 = vunpack.c.h.b16 %v255
        %v1453 = vunpack.c.l.b16 %v256
        %v1454 = vunpack.c.h.b16 %v256
        %v1455 = vunpack.c.l.b16 %v257
        %v1456 = vunpack.c.h.b16 %v257
        %v1457 = vunpack.c.l.b16 %v258
        %v1458 = vunpack.c.h.b16 %v258
        %v1459 = vunpack.c.l.b16 %v259
        %v1460 = vunpack.c.h.b16 %v259
        %v1461 = vunpack.c.l.b16 %v260
        %v1462 = vunpack.c.h.b16 %v260
        %v1463 = vunpack.c.l.b16 %v261
        %v1464 = vunpack.c.h.b16 %v261
        %v1465 = vunpack.c.l.b16 %v262
        %v1466 = vunpack.c.h.b16 %v262
        %v1467 = vunpack.c.l.b16 %v263
        %v1468 = vunpack.c.h.b16 %v263
        %v1469 = vunpack.c.l.b16 %v264
        %v1470 = vunpack.c.h.b16 %v264
        %v1471 = vunpack.c.l.b16 %v265
        %v1472 = vunpack.c.h.b16 %v265
        %v1473 = vunpack.c.l.b16 %v266
        %v1474 = vunpack.c.h.b16 %v266
        %v1475 = vunpack.c.l.b16 %v267
        %v1476 = vunpack.c.h.b16 %v267
        %v1477 = vunpack.c.l.b16 %v268
        %v1478 = vunpack.c.h.b16 %v268
        %v1479 = vunpack.c.l.b16 %v269
        %v1480 = vunpack.c.h.b16 %v269
        %v1481 = vunpack.c.l.b16 %v270
        %v1482 = vunpack.c.h.b16 %v270
        %v1483 = vunpack.c.l.b16 %v271
        %v1484 = vunpack.c.h.b16 %v271
        %v1485 = vunpack.c.l.b16 %v272
        %v1486 = vunpack.c.h.b16 %v272
        %v1487 = vunpack.c.l.b16 %v273
        %v1488 = vunpack.c.h.b16 %v273
        %v1489 = vunpack.c.l.b16 %v274
        %v1490 = vunpack.c.h.b16 %v274
        %v1491 = vunpack.c.l.b16 %v275
        %v1492 = vunpack.c.h.b16 %v275
        %v1493 = vunpack.c.l.b16 %v276
        %v1494 = vunpack.c.h.b16 %v276
        %v1495 = vunpack.c.l.b16 %v277
        %v1496 = vunpack.c.h.b16 %v277
        %v1497 = vunpack.c.l.b16 %v278
        %v1498 = vunpack.c.h.b16 %v278
        %v1499 = vunpack.c.l.b16 %v279
        %v1500 = vunpack.c.h.b16 %v279
        %v1501 = vunpack.c.l.b16 %v280
        %v1502 = vunpack.c.h.b16 %v280
        %v1503 = vunpack.c.l.b16 %v281
        %v1504 = vunpack.c.h.b16 %v281
        %v1505 = vunpack.c.l.b16 %v282
        %v1506 = vunpack.c.h.b16 %v282
        %v1507 = vunpack.c.l.b16 %v283
        %v1508 = vunpack.c.h.b16 %v283
        %v1509 = vunpack.c.l.b16 %v284
        %v1510 = vunpack.c.h.b16 %v284
        %v1511 = vunpack.c.l.b16 %v285
        %v1512 = vunpack.c.h.b16 %v285
        %v1513 = vunpack.c.l.b16 %v286
        %v1514 = vunpack.c.h.b16 %v286
        %v1515 = vunpack.c.l.b16 %v287
        %v1516 = vunpack.c.h.b16 %v287
        %v1517 = vunpack.c.l.b16 %v288
        %v1518 = vunpack.c.h.b16 %v288
        %v1519 = vunpack.c.l.b16 %v289
        %v1520 = vunpack.c.h.b16 %v289
        %v1521 = vunpack.c.l.b16 %v290
        %v1522 = vunpack.c.h.b16 %v290
        %v1523 = vunpack.c.l.b16 %v291
        %v1524 = vunpack.c.h.b16 %v291
        %v1525 = vunpack.c.l.b16 %v292
        %v1526 = vunpack.c.h.b16 %v292
        %v1527 = vunpack.c.l.b16 %v293
        %v1528 = vunpack.c.h.b16 %v293
        %v1529 = vunpack.c.l.b16 %v294
        %v1530 = vunpack.c.h.b16 %v294
        %v1531 = vunpack.c.l.b16 %v295
        %v1532 = vunpack.c.h.b16 %v295
        %v1533 = vunpack.c.l.b16 %v296
        %v1534 = vunpack.c.h.b16 %v296
        %v1535 = vunpack.c.l.b16 %v297
        %v1536 = vunpack.c.h.b16 %v297
        %v1537 = vunpack.c.l.b16 %v298
        %v1538 = vunpack.c.h.b16 %v298
        %v1539 = vunpack.c.l.b16 %v299
        %v1540 = vunpack.c.h.b16 %v299
        %v1541 = vunpack.c.l.b16 %v300
        %v1542 = vunpack.c.h.b16 %v300
        %v1543 = vunpack.c.l.b16 %v301
        %v1544 = vunpack.c.h.b16 %v301
        %v1545 = vunpack.c.l.b16 %v302
        %v1546 = vunpack.c.h.b16 %v302
        %v1547 = vunpack.c.l.b16 %v303
        %v1548 = vunpack.c.h.b16 %v303
        %v1549 = vunpack.c.l.b16 %v304
        %v1550 = vunpack.c.h.b16 %v304
        %v1551 = vunpack.c.l.b16 %v305
        %v1552 = vunpack.c.h.b16 %v305
        %v1553 = vunpack.c.l.b16 %v306
        %v1554 = vunpack.c.h.b16 %v306
        %v1555 = vunpack.c.l.b16 %v307
        %v1556 = vunpack.c.h.b16 %v307
        %v1557 = vunpack.c.l.b16 %v308
        %v1558 = vunpack.c.h.b16 %v308
        %v1559 = vunpack.c.l.b16 %v309
        %v1560 = vunpack.c.h.b16 %v309
        %v1561 = vunpack.c.l.b16 %v310
        %v1562 = vunpack.c.h.b16 %v310
        %v1563 = vunpack.c.l.b16 %v311
        %v1564 = vunpack.c.h.b16 %v311
        %v1565 = vunpack.c.l.b16 %v312
        %v1566 = vunpack.c.h.b16 %v312
        %v1567 = vunpack.c.l.b16 %v313
        %v1568 = vunpack.c.h.b16 %v313
        %v1569 = vunpack.c.l.b16 %v314
        %v1570 = vunpack.c.h.b16 %v314
        %v1571 = vunpack.c.l.b16 %v315
        %v1572 = vunpack.c.h.b16 %v315
        %v1573 = vunpack.c.l.b16 %v316
        %v1574 = vunpack.c.h.b16 %v316
        %v1575 = vunpack.c.l.b16 %v317
        %v1576 = vunpack.c.h.b16 %v317
        %v1577 = vunpack.c.l.b16 %v318
        %v1578 = vunpack.c.h.b16 %v318
        %v1579 = vunpack.c.l.b16 %v319
        %v1580 = vunpack.c.h.b16 %v319
        %v1581 = vunpack.c.l.b16 %v320
        %v1582 = vunpack.c.h.b16 %v320
        %v1583 = vunpack.c.l.b16 %v321
        %v1584 = vunpack.c.h.b16 %v321
        %v1585 = vunpack.c.l.b16 %v322
        %v1586 = vunpack.c.h.b16 %v322
        %v1587 = vunpack.c.l.b16 %v323
        %v1588 = vunpack.c.h.b16 %v323
        %v1589 = vunpack.c.l.b16 %v324
        %v1590 = vunpack.c.h.b16 %v324
        %v1591 = vunpack.c.l.b16 %v325
        %v1592 = vunpack.c.h.b16 %v325
        %v1593 = vunpack.c.l.b16 %v326
        %v1594 = vunpack.c.h.b16 %v326
        %v1595 = vunpack.c.l.b16 %v327
        %v1596 = vunpack.c.h.b16 %v327
        %v1597 = vunpack.c.l.b16 %v328
        %v1598 = vunpack.c.h.b16 %v328
        %v1599 = vunpack.c.l.b16 %v329
        %v1600 = vunpack.c.h.b16 %v329
        %v1601 = vunpack.c.l.b16 %v330
        %v1602 = vunpack.c.h.b16 %v330
        %v1603 = vunpack.c.l.b16 %v331
        %v1604 = vunpack.c.h.b16 %v331
        %v1605 = vunpack.c.l.b16 %v332
        %v1606 = vunpack.c.h.b16 %v332
        %v1607 = vunpack.c.l.b16 %v333
        %v1608 = vunpack.c.h.b16 %v333
        %v1609 = vunpack.c.l.b16 %v334
        %v1610 = vunpack.c.h.b16 %v334
        %v1611 = vunpack.c.l.b16 %v335
        %v1612 = vunpack.c.h.b16 %v335
        %v1613 = vunpack.c.l.b16 %v336
        %v1614 = vunpack.c.h.b16 %v336
        %v1615 = vunpack.c.l.b16 %v337
        %v1616 = vunpack.c.h.b16 %v337
        %v1617 = vunpack.c.l.b16 %v338
        %v1618 = vunpack.c.h.b16 %v338
        %v1619 = vunpack.c.l.b16 %v339
        %v1620 = vunpack.c.h.b16 %v339
        %v1621 = vunpack.c.l.b16 %v340
        %v1622 = vunpack.c.h.b16 %v340
        %v1623 = vunpack.c.l.b16 %v341
        %v1624 = vunpack.c.h.b16 %v341
        %v1625 = vunpack.c.l.b16 %v342
        %v1626 = vunpack.c.h.b16 %v342
        %v1627 = vunpack.c.l.b16 %v343
        %v1628 = vunpack.c.h.b16 %v343
        %v1629 = vunpack.c.l.b16 %v344
        %v1630 = vunpack.c.h.b16 %v344
        %v1631 = vunpack.c.l.b16 %v345
        %v1632 = vunpack.c.h.b16 %v345
        %v1633 = vunpack.c.l.b16 %v346
        %v1634 = vunpack.c.h.b16 %v346
        %v1635 = vunpack.c.l.b16 %v347
        %v1636 = vunpack.c.h.b16 %v347
        %v1637 = vunpack.c.l.b16 %v348
        %v1638 = vunpack.c.h.b16 %v348
        %v1639 = vunpack.c.l.b16 %v349
        %v1640 = vunpack.c.h.b16 %v349
        %v1641 = vunpack.c.l.b16 %v350
        %v1642 = vunpack.c.h.b16 %v350
        %v1643 = vunpack.c.l.b16 %v351
        %v1644 = vunpack.c.h.b16 %v351
        %v1645 = vunpack.c.l.b16 %v352
        %v1646 = vunpack.c.h.b16 %v352
        %v1647 = vunpack.c.l.b16 %v353
        %v1648 = vunpack.c.h.b16 %v353
        %v1649 = vunpack.c.l.b16 %v354
        %v1650 = vunpack.c.h.b16 %v354
        %v1651 = vunpack.c.l.b16 %v355
        %v1652 = vunpack.c.h.b16 %v355
        %v1653 = vunpack.c.l.b16 %v356
        %v1654 = vunpack.c.h.b16 %v356
        %v1655 = vunpack.c.l.b16 %v357
        %v1656 = vunpack.c.h.b16 %v357
        %v1657 = vunpack.c.l.b16 %v358
        %v1658 = vunpack.c.h.b16 %v358
        %v1659 = vunpack.c.l.b16 %v359
        %v1660 = vunpack.c.h.b16 %v359
        %v1661 = vunpack.c.l.b16 %v360
        %v1662 = vunpack.c.h.b16 %v360
        %v1663 = vunpack.c.l.b16 %v361
        %v1664 = vunpack.c.h.b16 %v361
        %v1665 = vunpack.c.l.b16 %v362
        %v1666 = vunpack.c.h.b16 %v362
        %v1667 = vunpack.c.l.b16 %v363
        %v1668 = vunpack.c.h.b16 %v363
        %v1669 = vunpack.c.l.b16 %v364
        %v1670 = vunpack.c.h.b16 %v364
        %v1671 = vunpack.c.l.b16 %v365
        %v1672 = vunpack.c.h.b16 %v365
        %v1673 = vunpack.c.l.b16 %v366
        %v1674 = vunpack.c.h.b16 %v366
        %v1675 = vunpack.c.l.b16 %v367
        %v1676 = vunpack.c.h.b16 %v367
        %v1677 = vunpack.c.l.b16 %v368
        %v1678 = vunpack.c.h.b16 %v368
        %v1679 = vunpack.c.l.b16 %v369
        %v1680 = vunpack.c.h.b16 %v369
        %v1681 = vunpack.c.l.b16 %v370
        %v1682 = vunpack.c.h.b16 %v370
        %v1683 = vunpack.c.l.b16 %v371
        %v1684 = vunpack.c.h.b16 %v371
        %v1685 = vunpack.c.l.b16 %v372
        %v1686 = vunpack.c.h.b16 %v372
        %v1687 = vunpack.c.l.b16 %v373
        %v1688 = vunpack.c.h.b16 %v373
        %v1689 = vunpack.c.l.b16 %v374
        %v1690 = vunpack.c.h.b16 %v374
        %v1691 = vunpack.c.l.b16 %v375
        %v1692 = vunpack.c.h.b16 %v375
        %v1693 = vunpack.c.l.b16 %v376
        %v1694 = vunpack.c.h.b16 %v376
        %v1695 = vunpack.c.l.b16 %v377
        %v1696 = vunpack.c.h.b16 %v377
        %v1697 = vunpack.c.l.b16 %v378
        %v1698 = vunpack.c.h.b16 %v378
        %v1699 = vunpack.c.l.b16 %v379
        %v1700 = vunpack.c.h.b16 %v379
        %v1701 = vunpack.c.l.b16 %v380
        %v1702 = vunpack.c.h.b16 %v380
        %v1703 = vunpack.c.l.b16 %v381
        %v1704 = vunpack.c.h.b16 %v381
        %v1705 = vunpack.c.l.b16 %v382
        %v1706 = vunpack.c.h.b16 %v382
        %v1707 = vunpack.c.l.b16 %v383
        %v1708 = vunpack.c.h.b16 %v383
        %v1709 = vunpack.c.l.b16 %v384
        %v1710 = vunpack.c.h.b16 %v384
        %v1711 = vunpack.c.l.b16 %v385
        %v1712 = vunpack.c.h.b16 %v385
        %v1713 = vunpack.c.l.b16 %v386
        %v1714 = vunpack.c.h.b16 %v386
        %v1715 = vunpack.c.l.b16 %v387
        %v1716 = vunpack.c.h.b16 %v387
        %v1717 = vunpack.c.l.b16 %v388
        %v1718 = vunpack.c.h.b16 %v388
        %v1719 = vunpack.c.l.b16 %v389
        %v1720 = vunpack.c.h.b16 %v389
        %v1721 = vunpack.c.l.b16 %v390
        %v1722 = vunpack.c.h.b16 %v390
        %v1723 = vunpack.c.l.b16 %v391
        %v1724 = vunpack.c.h.b16 %v391
        %v1725 = vunpack.c.l.b16 %v392
        %v1726 = vunpack.c.h.b16 %v392
        %v1727 = vunpack.c.l.b16 %v393
        %v1728 = vunpack.c.h.b16 %v393
        %v1729 = vunpack.c.l.b16 %v394
        %v1730 = vunpack.c.h.b16 %v394
        %v1731 = vunpack.c.l.b16 %v395
        %v1732 = vunpack.c.h.b16 %v395
        %v1733 = vunpack.c.l.b16 %v396
        %v1734 = vunpack.c.h.b16 %v396
        %v1735 = vunpack.c.l.b16 %v397
        %v1736 = vunpack.c.h.b16 %v397
        %v1737 = vunpack.c.l.b16 %v398
        %v1738 = vunpack.c.h.b16 %v398
        %v1739 = vunpack.c.l.b16 %v399
        %v1740 = vunpack.c.h.b16 %v399
        %v1741 = vunpack.c.l.b16 %v400
        %v1742 = vunpack.c.h.b16 %v400
        %v1743 = vunpack.c.l.b16 %v401
        %v1744 = vunpack.c.h.b16 %v401
        %v1745 = vunpack.c.l.b16 %v402
        %v1746 = vunpack.c.h.b16 %v402
        %v1747 = vunpack.c.l.b16 %v403
        %v1748 = vunpack.c.h.b16 %v403
        %v1749 = vunpack.c.l.b16 %v404
        %v1750 = vunpack.c.h.b16 %v404
        %v1751 = vunpack.c.l.b16 %v405
        %v1752 = vunpack.c.h.b16 %v405
        %v1753 = vunpack.c.l.b16 %v406
        %v1754 = vunpack.c.h.b16 %v406
        %v1755 = vunpack.c.l.b16 %v407
        %v1756 = vunpack.c.h.b16 %v407
        %v1757 = vunpack.c.l.b16 %v408
        %v1758 = vunpack.c.h.b16 %v408
        %v1759 = vunpack.c.l.b16 %v409
        %v1760 = vunpack.c.h.b16 %v409
        %v1761 = vunpack.c.l.b16 %v410
        %v1762 = vunpack.c.h.b16 %v410
        %v1763 = vunpack.c.l.b16 %v411
        %v1764 = vunpack.c.h.b16 %v411
        %v1765 = vunpack.c.l.b16 %v412
        %v1766 = vunpack.c.h.b16 %v412
        %v1767 = vunpack.c.l.b16 %v413
        %v1768 = vunpack.c.h.b16 %v413
        %v1769 = vunpack.c.l.b16 %v414
        %v1770 = vunpack.c.h.b16 %v414
        %v1771 = vunpack.c.l.b16 %v415
        %v1772 = vunpack.c.h.b16 %v415
        %v1773 = vunpack.c.l.b16 %v416
        %v1774 = vunpack.c.h.b16 %v416
        %v1775 = vunpack.c.l.b16 %v417
        %v1776 = vunpack.c.h.b16 %v417
        %v1777 = vunpack.c.l.b16 %v418
        %v1778 = vunpack.c.h.b16 %v418
        %v1779 = vunpack.c.l.b16 %v419
        %v1780 = vunpack.c.h.b16 %v419
        %v1781 = vunpack.c.l.b16 %v420
        %v1782 = vunpack.c.h.b16 %v420
        %v1783 = vunpack.c.l.b16 %v421
        %v1784 = vunpack.c.h.b16 %v421
        %v1785 = vunpack.c.l.b16 %v422
        %v1786 = vunpack.c.h.b16 %v422
        %v1787 = vunpack.c.l.b16 %v423
        %v1788 = vunpack.c.h.b16 %v423
        %v1789 = vunpack.c.l.b16 %v424
        %v1790 = vunpack.c.h.b16 %v424
        %v1791 = vunpack.c.l.b16 %v425
        %v1792 = vunpack.c.h.b16 %v425
        %v1793 = vunpack.c.l.b16 %v426
        %v1794 = vunpack.c.h.b16 %v426
        %v1795 = vunpack.c.l.b16 %v427
        %v1796 = vunpack.c.h.b16 %v427
        %v1797 = vunpack.c.l.b16 %v428
        %v1798 = vunpack.c.h.b16 %v428
        %v1799 = vunpack.c.l.b16 %v429
        %v1800 = vunpack.c.h.b16 %v429
        %v1801 = vunpack.c.l.b16 %v430
        %v1802 = vunpack.c.h.b16 %v430
        %v1803 = vunpack.c.l.b16 %v431
        %v1804 = vunpack.c.h.b16 %v431
        %v1805 = vunpack.c.l.b16 %v432
        %v1806 = vunpack.c.h.b16 %v432
        %v1807 = vunpack.c.l.b16 %v433
        %v1808 = vunpack.c.h.b16 %v433
        %v1809 = vunpack.c.l.b16 %v434
        %v1810 = vunpack.c.h.b16 %v434
        %v1811 = vunpack.c.l.b16 %v435
        %v1812 = vunpack.c.h.b16 %v435
        %v1813 = vunpack.c.l.b16 %v436
        %v1814 = vunpack.c.h.b16 %v436
        %v1815 = vunpack.c.l.b16 %v437
        %v1816 = vunpack.c.h.b16 %v437
        %v1817 = vunpack.c.l.b16 %v438
        %v1818 = vunpack.c.h.b16 %v438
        %v1819 = vunpack.c.l.b16 %v439
        %v1820 = vunpack.c.h.b16 %v439
        %v1821 = vunpack.c.l.b16 %v440
        %v1822 = vunpack.c.h.b16 %v440
        %v1823 = vunpack.c.l.b16 %v441
        %v1824 = vunpack.c.h.b16 %v441
        %v1825 = vunpack.c.l.b16 %v442
        %v1826 = vunpack.c.h.b16 %v442
        %v1827 = vunpack.c.l.b16 %v443
        %v1828 = vunpack.c.h.b16 %v443
        %v1829 = vunpack.c.l.b16 %v444
        %v1830 = vunpack.c.h.b16 %v444
        %v1831 = vunpack.c.l.b16 %v445
        %v1832 = vunpack.c.h.b16 %v445
        %v1833 = vunpack.c.l.b16 %v446
        %v1834 = vunpack.c.h.b16 %v446
        %v1835 = vunpack.c.l.b16 %v447
        %v1836 = vunpack.c.h.b16 %v447
        %v1837 = vunpack.c.l.b16 %v448
        %v1838 = vunpack.c.h.b16 %v448
        %v1839 = vunpack.c.l.b16 %v449
        %v1840 = vunpack.c.h.b16 %v449
        %v1841 = vunpack.c.l.b16 %v450
        %v1842 = vunpack.c.h.b16 %v450
        %v1843 = vunpack.c.l.b16 %v451
        %v1844 = vunpack.c.h.b16 %v451
        %v1845 = vunpack.c.l.b16 %v452
        %v1846 = vunpack.c.h.b16 %v452
        %v1847 = vunpack.c.l.b16 %v453
        %v1848 = vunpack.c.h.b16 %v453
        %v1849 = vunpack.c.l.b16 %v454
        %v1850 = vunpack.c.h.b16 %v454
        %v1851 = vunpack.c.l.b16 %v455
        %v1852 = vunpack.c.h.b16 %v455
        %v1853 = vunpack.c.l.b16 %v456
        %v1854 = vunpack.c.h.b16 %v456
        %v1855 = vunpack.c.l.b16 %v457
        %v1856 = vunpack.c.h.b16 %v457
        %v1857 = vunpack.c.l.b16 %v458
        %v1858 = vunpack.c.h.b16 %v458
        %v1859 = vunpack.c.l.b16 %v459
        %v1860 = vunpack.c.h.b16 %v459
        %v1861 = vunpack.c.l.b16 %v460
        %v1862 = vunpack.c.h.b16 %v460
        %v1863 = vunpack.c.l.b16 %v461
        %v1864 = vunpack.c.h.b16 %v461
        %v1865 = vunpack.c.l.b16 %v462
        %v1866 = vunpack.c.h.b16 %v462
        %v1867 = vunpack.c.l.b16 %v463
        %v1868 = vunpack.c.h.b16 %v463
        %v1869 = vunpack.c.l.b16 %v464
        %v1870 = vunpack.c.h.b16 %v464
        %v1871 = vunpack.c.l.b16 %v465
        %v1872 = vunpack.c.h.b16 %v465
        %v1873 = vunpack.c.l.b16 %v466
        %v1874 = vunpack.c.h.b16 %v466
        %v1875 = vunpack.c.l.b16 %v467
        %v1876 = vunpack.c.h.b16 %v467
        %v1877 = vunpack.c.l.b16 %v468
        %v1878 = vunpack.c.h.b16 %v468
        %v1879 = vunpack.c.l.b16 %v469
        %v1880 = vunpack.c.h.b16 %v469
        %v1881 = vunpack.c.l.b16 %v470
        %v1882 = vunpack.c.h.b16 %v470
        %v1883 = vunpack.c.l.b16 %v471
        %v1884 = vunpack.c.h.b16 %v471
        %v1885 = vunpack.c.l.b16 %v472
        %v1886 = vunpack.c.h.b16 %v472
        %v1887 = vunpack.c.l.b16 %v473
        %v1888 = vunpack.c.h.b16 %v473
        %v1889 = vunpack.c.l.b16 %v474
        %v1890 = vunpack.c.h.b16 %v474
        %v1891 = vunpack.c.l.b16 %v475
        %v1892 = vunpack.c.h.b16 %v475
        %v1893 = vunpack.c.l.b16 %v476
        %v1894 = vunpack.c.h.b16 %v476
        %v1895 = vunpack.c.l.b16 %v477
        %v1896 = vunpack.c.h.b16 %v477
        %v1897 = vunpack.c.l.b16 %v478
        %v1898 = vunpack.c.h.b16 %v478
        %v1899 = vunpack.c.l.b16 %v479
        %v1900 = vunpack.c.h.b16 %v479
        %v1901 = vunpack.c.l.b16 %v480
        %v1902 = vunpack.c.h.b16 %v480
        %v1903 = vunpack.c.l.b16 %v481
        %v1904 = vunpack.c.h.b16 %v481
        %v1905 = vunpack.c.l.b16 %v482
        %v1906 = vunpack.c.h.b16 %v482
        %v1907 = vunpack.c.l.b16 %v483
        %v1908 = vunpack.c.h.b16 %v483
        %v1909 = vunpack.c.l.b16 %v484
        %v1910 = vunpack.c.h.b16 %v484
        %v1911 = vunpack.c.l.b16 %v485
        %v1912 = vunpack.c.h.b16 %v485
        %v1913 = vunpack.c.l.b16 %v486
        %v1914 = vunpack.c.h.b16 %v486
        %v1915 = vunpack.c.l.b16 %v487
        %v1916 = vunpack.c.h.b16 %v487
        %v1917 = vunpack.c.l.b16 %v488
        %v1918 = vunpack.c.h.b16 %v488
        %v1919 = vunpack.c.l.b16 %v489
        %v1920 = vunpack.c.h.b16 %v489
        %v1921 = vunpack.c.l.b16 %v490
        %v1922 = vunpack.c.h.b16 %v490
        %v1923 = vunpack.c.l.b16 %v491
        %v1924 = vunpack.c.h.b16 %v491
        %v1925 = vunpack.c.l.b16 %v492
        %v1926 = vunpack.c.h.b16 %v492
        %v1927 = vunpack.c.l.b16 %v493
        %v1928 = vunpack.c.h.b16 %v493
        %v1929 = vunpack.c.l.b16 %v494
        %v1930 = vunpack.c.h.b16 %v494
        %v1931 = vunpack.c.l.b16 %v495
        %v1932 = vunpack.c.h.b16 %v495
        %v1933 = vunpack.c.l.b16 %v496
        %v1934 = vunpack.c.h.b16 %v496
        %v1935 = vunpack.c.l.b16 %v497
        %v1936 = vunpack.c.h.b16 %v497
        %v1937 = vunpack.c.l.b16 %v498
        %v1938 = vunpack.c.h.b16 %v498
        %v1939 = vpack.c.b16 %v1555, %v1427
        %v1940 = vpack.c.b16 %v1556, %v1428
        %v1941 = vpack.c.b16 %v1557, %v1429
        %v1942 = vpack.c.b16 %v1558, %v1430
        %v1943 = vpack.c.b16 %v1559, %v1431
        %v1944 = vpack.c.b16 %v1560, %v1432
        %v1945 = vpack.c.b16 %v1561, %v1433
        %v1946 = vpack.c.b16 %v1562, %v1434
        %v1947 = vpack.c.b16 %v1563, %v1435
        %v1948 = vpack.c.b16 %v1564, %v1436
        %v1949 = vpack.c.b16 %v1565, %v1437
        %v1950 = vpack.c.b16 %v1566, %v1438
        %v1951 = vpack.c.b16 %v1567, %v1439
        %v1952 = vpack.c.b16 %v1568, %v1440
        %v1953 = vpack.c.b16 %v1569, %v1441
        %v1954 = vpack.c.b16 %v1570, %v1442
        %v1955 = vpack.c.b16 %v1571, %v1443
        %v1956 = vpack.c.b16 %v1572, %v1444
        %v1957 = vpack.c.b16 %v1573, %v1445
        %v1958 = vpack.c.b16 %v1574, %v1446
        %v1959 = vpack.c.b16 %v1575, %v1447
        %v1960 = vpack.c.b16 %v1576, %v1448
        %v1961 = vpack.c.b16 %v1577, %v1449
        %v1962 = vpack.c.b16 %v1578, %v1450
        %v1963 = vpack.c.b16 %v1579, %v1451
        %v1964 = vpack.c.b16 %v1580, %v1452
        %v1965 = vpack.c.b16 %v1581, %v1453
        %v1966 = vpack.c.b16 %v1582, %v1454
        %v1967 = vpack.c.b16 %v1583, %v1455
        %v1968 = vpack.c.b16 %v1584, %v1456
        %v1969 = vpack.c.b16 %v1585, %v1457
        %v1970 = vpack.c.b16 %v1586, %v1458
        %v1971 = vpack.c.b16 %v1587, %v1459
        %v1972 = vpack.c.b16 %v1588, %v1460
        %v1973 = vpack.c.b16 %v1589, %v1461
        %v1974 = vpack.c.b16 %v1590, %v1462
        %v1975 = vpack.c.b16 %v1591, %v1463
        %v1976 = vpack.c.b16 %v1592, %v1464
        %v1977 = vpack.c.b16 %v1593, %v1465
        %v1978 = vpack.c.b16 %v1594, %v1466
        %v1979 = vpack.c.b16 %v1595, %v1467
        %v1980 = vpack.c.b16 %v1596, %v1468
        %v1981 = vpack.c.b16 %v1597, %v1469
        %v1982 = vpack.c.b16 %v1598, %v1470
        %v1983 = vpack.c.b16 %v1599, %v1471
        %v1984 = vpack.c.b16 %v1600, %v1472
        %v1985 = vpack.c.b16 %v1601, %v1473
        %v1986 = vpack.c.b16 %v1602, %v1474
        %v1987 = vpack.c.b16 %v1603, %v1475
        %v1988 = vpack.c.b16 %v1604, %v1476
        %v1989 = vpack.c.b16 %v1605, %v1477
        %v1990 = vpack.c.b16 %v1606, %v1478
        %v1991 = vpack.c.b16 %v1607, %v1479
        %v1992 = vpack.c.b16 %v1608, %v1480
        %v1993 = vpack.c.b16 %v1609, %v1481
        %v1994 = vpack.c.b16 %v1610, %v1482
        %v1995 = vpack.c.b16 %v1611, %v1483
        %v1996 = vpack.c.b16 %v1612, %v1484
        %v1997 = vpack.c.b16 %v1613, %v1485
        %v1998 = vpack.c.b16 %v1614, %v1486
        %v1999 = vpack.c.b16 %v1615, %v1487
        %v2000 = vpack.c.b16 %v1616, %v1488
        %v2001 = vpack.c.b16 %v1617, %v1489
        %v2002 = vpack.c.b16 %v1618, %v1490
        %v2003 = vpack.c.b16 %v1619, %v1491
        %v2004 = vpack.c.b16 %v1620, %v1492
        %v2005 = vpack.c.b16 %v1621, %v1493
        %v2006 = vpack.c.b16 %v1622, %v1494
        %v2007 = vpack.c.b16 %v1623, %v1495
        %v2008 = vpack.c.b16 %v1624, %v1496
        %v2009 = vpack.c.b16 %v1625, %v1497
        %v2010 = vpack.c.b16 %v1626, %v1498
        %v2011 = vpack.c.b16 %v1627, %v1499
        %v2012 = vpack.c.b16 %v1628, %v1500
        %v2013 = vpack.c.b16 %v1629, %v1501
        %v2014 = vpack.c.b16 %v1630, %v1502
        %v2015 = vpack.c.b16 %v1631, %v1503
        %v2016 = vpack.c.b16 %v1632, %v1504
        %v2017 = vpack.c.b16 %v1633, %v1505
        %v2018 = vpack.c.b16 %v1634, %v1506
        %v2019 = vpack.c.b16 %v1635, %v1507
        %v2020 = vpack.c.b16 %v1636, %v1508
        %v2021 = vpack.c.b16 %v1637, %v1509
        %v2022 = vpack.c.b16 %v1638, %v1510
        %v2023 = vpack.c.b16 %v1639, %v1511
        %v2024 = vpack.c.b16 %v1640, %v1512
        %v2025 = vpack.c.b16 %v1641, %v1513
        %v2026 = vpack.c.b16 %v1642, %v1514
        %v2027 = vpack.c.b16 %v1643, %v1515
        %v2028 = vpack.c.b16 %v1644, %v1516
        %v2029 = vpack.c.b16 %v1645, %v1517
        %v2030 = vpack.c.b16 %v1646, %v1518
        %v2031 = vpack.c.b16 %v1647, %v1519
        %v2032 = vpack.c.b16 %v1648, %v1520
        %v2033 = vpack.c.b16 %v1649, %v1521
        %v2034 = vpack.c.b16 %v1650, %v1522
        %v2035 = vpack.c.b16 %v1651, %v1523
        %v2036 = vpack.c.b16 %v1652, %v1524
        %v2037 = vpack.c.b16 %v1653, %v1525
        %v2038 = vpack.c.b16 %v1654, %v1526
        %v2039 = vpack.c.b16 %v1655, %v1527
        %v2040 = vpack.c.b16 %v1656, %v1528
        %v2041 = vpack.c.b16 %v1657, %v1529
        %v2042 = vpack.c.b16 %v1658, %v1530
        %v2043 = vpack.c.b16 %v1659, %v1531
        %v2044 = vpack.c.b16 %v1660, %v1532
        %v2045 = vpack.c.b16 %v1661, %v1533
        %v2046 = vpack.c.b16 %v1662, %v1534
        %v2047 = vpack.c.b16 %v1663, %v1535
        %v2048 = vpack.c.b16 %v1664, %v1536
        %v2049 = vpack.c.b16 %v1665, %v1537
        %v2050 = vpack.c.b16 %v1666, %v1538
        %v2051 = vpack.c.b16 %v1667, %v1539
        %v2052 = vpack.c.b16 %v1668, %v1540
        %v2053 = vpack.c.b16 %v1669, %v1541
        %v2054 = vpack.c.b16 %v1670, %v1542
        %v2055 = vpack.c.b16 %v1671, %v1543
        %v2056 = vpack.c.b16 %v1672, %v1544
        %v2057 = vpack.c.b16 %v1673, %v1545
        %v2058 = vpack.c.b16 %v1674, %v1546
        %v2059 = vpack.c.b16 %v1675, %v1547
        %v2060 = vpack.c.b16 %v1676, %v1548
        %v2061 = vpack.c.b16 %v1677, %v1549
        %v2062 = vpack.c.b16 %v1678, %v1550
        %v2063 = vpack.c.b16 %v1679, %v1551
        %v2064 = vpack.c.b16 %v1680, %v1552
        %v2065 = vpack.c.b16 %v1681, %v1553
        %v2066 = vpack.c.b16 %v1682, %v1554
        %v2067 = vpack.c.b16 %v1811, %v1683
        %v2068 = vpack.c.b16 %v1812, %v1684
        %v2069 = vpack.c.b16 %v1813, %v1685
        %v2070 = vpack.c.b16 %v1814, %v1686
        %v2071 = vpack.c.b16 %v1815, %v1687
        %v2072 = vpack.c.b16 %v1816, %v1688
        %v2073 = vpack.c.b16 %v1817, %v1689
        %v2074 = vpack.c.b16 %v1818, %v1690
        %v2075 = vpack.c.b16 %v1819, %v1691
        %v2076 = vpack.c.b16 %v1820, %v1692
        %v2077 = vpack.c.b16 %v1821, %v1693
        %v2078 = vpack.c.b16 %v1822, %v1694
        %v2079 = vpack.c.b16 %v1823, %v1695
        %v2080 = vpack.c.b16 %v1824, %v1696
        %v2081 = vpack.c.b16 %v1825, %v1697
        %v2082 = vpack.c.b16 %v1826, %v1698
        %v2083 = vpack.c.b16 %v1827, %v1699
        %v2084 = vpack.c.b16 %v1828, %v1700
        %v2085 = vpack.c.b16 %v1829, %v1701
        %v2086 = vpack.c.b16 %v1830, %v1702
        %v2087 = vpack.c.b16 %v1831, %v1703
        %v2088 = vpack.c.b16 %v1832, %v1704
        %v2089 = vpack.c.b16 %v1833, %v1705
        %v2090 = vpack.c.b16 %v1834, %v1706
        %v2091 = vpack.c.b16 %v1835, %v1707
        %v2092 = vpack.c.b16 %v1836, %v1708
        %v2093 = vpack.c.b16 %v1837, %v1709
        %v2094 = vpack.c.b16 %v1838, %v1710
        %v2095 = vpack.c.b16 %v1839, %v1711
        %v2096 = vpack.c.b16 %v1840, %v1712
        %v2097 = vpack.c.b16 %v1841, %v1713
        %v2098 = vpack.c.b16 %v1842, %v1714
        %v2099 = vpack.c.b16 %v1843, %v1715
        %v2100 = vpack.c.b16 %v1844, %v1716
        %v2101 = vpack.c.b16 %v1845, %v1717
        %v2102 = vpack.c.b16 %v1846, %v1718
        %v2103 = vpack.c.b16 %v1847, %v1719
        %v2104 = vpack.c.b16 %v1848, %v1720
        %v2105 = vpack.c.b16 %v1849, %v1721
        %v2106 = vpack.c.b16 %v1850, %v1722
        %v2107 = vpack.c.b16 %v1851, %v1723
        %v2108 = vpack.c.b16 %v1852, %v1724
        %v2109 = vpack.c.b16 %v1853, %v1725
        %v2110 = vpack.c.b16 %v1854, %v1726
        %v2111 = vpack.c.b16 %v1855, %v1727
        %v2112 = vpack.c.b16 %v1856, %v1728
        %v2113 = vpack.c.b16 %v1857, %v1729
        %v2114 = vpack.c.b16 %v1858, %v1730
        %v2115 = vpack.c.b16 %v1859, %v1731
        %v2116 = vpack.c.b16 %v1860, %v1732
        %v2117 = vpack.c.b16 %v1861, %v1733
        %v2118 = vpack.c.b16 %v1862, %v1734
        %v2119 = vpack.c.b16 %v1863, %v1735
        %v2120 = vpack.c.b16 %v1864, %v1736
        %v2121 = vpack.c.b16 %v1865, %v1737
        %v2122 = vpack.c.b16 %v1866, %v1738
        %v2123 = vpack.c.b16 %v1867, %v1739
        %v2124 = vpack.c.b16 %v1868, %v1740
        %v2125 = vpack.c.b16 %v1869, %v1741
        %v2126 = vpack.c.b16 %v1870, %v1742
        %v2127 = vpack.c.b16 %v1871, %v1743
        %v2128 = vpack.c.b16 %v1872, %v1744
        %v2129 = vpack.c.b16 %v1873, %v1745
        %v2130 = vpack.c.b16 %v1874, %v1746
        %v2131 = vpack.c.b16 %v1875, %v1747
        %v2132 = vpack.c.b16 %v1876, %v1748
        %v2133 = vpack.c.b16 %v1877, %v1749
        %v2134 = vpack.c.b16 %v1878, %v1750
        %v2135 = vpack.c.b16 %v1879, %v1751
        %v2136 = vpack.c.b16 %v1880, %v1752
        %v2137 = vpack.c.b16 %v1881, %v1753
        %v2138 = vpack.c.b16 %v1882, %v1754
        %v2139 = vpack.c.b16 %v1883, %v1755
        %v2140 = vpack.c.b16 %v1884, %v1756
        %v2141 = vpack.c.b16 %v1885, %v1757
        %v2142 = vpack.c.b16 %v1886, %v1758
        %v2143 = vpack.c.b16 %v1887, %v1759
        %v2144 = vpack.c.b16 %v1888, %v1760
        %v2145 = vpack.c.b16 %v1889, %v1761
        %v2146 = vpack.c.b16 %v1890, %v1762
        %v2147 = vpack.c.b16 %v1891, %v1763
        %v2148 = vpack.c.b16 %v1892, %v1764
        %v2149 = vpack.c.b16 %v1893, %v1765
        %v2150 = vpack.c.b16 %v1894, %v1766
        %v2151 = vpack.c.b16 %v1895, %v1767
        %v2152 = vpack.c.b16 %v1896, %v1768
        %v2153 = vpack.c.b16 %v1897, %v1769
        %v2154 = vpack.c.b16 %v1898, %v1770
        %v2155 = vpack.c.b16 %v1899, %v1771
        %v2156 = vpack.c.b16 %v1900, %v1772
        %v2157 = vpack.c.b16 %v1901, %v1773
        %v2158 = vpack.c.b16 %v1902, %v1774
        %v2159 = vpack.c.b16 %v1903, %v1775
        %v2160 = vpack.c.b16 %v1904, %v1776
        %v2161 = vpack.c.b16 %v1905, %v1777
        %v2162 = vpack.c.b16 %v1906, %v1778
        %v2163 = vpack.c.b16 %v1907, %v1779
        %v2164 = vpack.c.b16 %v1908, %v1780
        %v2165 = vpack.c.b16 %v1909, %v1781
        %v2166 = vpack.c.b16 %v1910, %v1782
        %v2167 = vpack.c.b16 %v1911, %v1783
        %v2168 = vpack.c.b16 %v1912, %v1784
        %v2169 = vpack.c.b16 %v1913, %v1785
        %v2170 = vpack.c.b16 %v1914, %v1786
        %v2171 = vpack.c.b16 %v1915, %v1787
        %v2172 = vpack.c.b16 %v1916, %v1788
        %v2173 = vpack.c.b16 %v1917, %v1789
        %v2174 = vpack.c.b16 %v1918, %v1790
        %v2175 = vpack.c.b16 %v1919, %v1791
        %v2176 = vpack.c.b16 %v1920, %v1792
        %v2177 = vpack.c.b16 %v1921, %v1793
        %v2178 = vpack.c.b16 %v1922, %v1794
        %v2179 = vpack.c.b16 %v1923, %v1795
        %v2180 = vpack.c.b16 %v1924, %v1796
        %v2181 = vpack.c.b16 %v1925, %v1797
        %v2182 = vpack.c.b16 %v1926, %v1798
        %v2183 = vpack.c.b16 %v1927, %v1799
        %v2184 = vpack.c.b16 %v1928, %v1800
        %v2185 = vpack.c.b16 %v1929, %v1801
        %v2186 = vpack.c.b16 %v1930, %v1802
        %v2187 = vpack.c.b16 %v1931, %v1803
        %v2188 = vpack.c.b16 %v1932, %v1804
        %v2189 = vpack.c.b16 %v1933, %v1805
        %v2190 = vpack.c.b16 %v1934, %v1806
        %v2191 = vpack.c.b16 %v1935, %v1807
        %v2192 = vpack.c.b16 %v1936, %v1808
        %v2193 = vpack.c.b16 %v1937, %v1809
        %v2194 = vpack.c.b16 %v1938, %v1810
        %vm2451 = vcmask 261120
        %v2453 = vsel %vm2451, %v242, 0
        %2455 = vmatprep.subr.bf16.mxu0 %v1940
        %2456 = vmatpush1.bf16.msra.mxu0 %v1939
        %2457 = vmatprep.subr.bf16.mxu0 %v2068
        %2458 = vmatpush1.bf16.msra.mxu0 %v2067
        %2459 = vmatprep.subr.bf16.mxu0 0
        %2460 = vmatpush1.bf16.msra.mxu0 0
        %2461 = vmatprep.subr.bf16.mxu0 0
        %2462 = vmatpush1.bf16.msra.mxu0 0
        %2463 = vmatprep.subr.bf16.mxu0 0
        %2464 = vmatpush1.bf16.msra.mxu0 0
        %2465 = vmatprep.subr.bf16.mxu0 0
        %2466 = vmatpush1.bf16.msra.mxu0 0
        %2467 = vmatprep.subr.bf16.mxu0 0
        %2468 = vmatpush1.bf16.msra.mxu0 0
        %2469 = vmatprep.subr.bf16.mxu0 0
        %2470 = vmatpush1.bf16.msra.mxu0 0
        %2471 = vmatprep.subr.bf16.mxu0 0
        %2472 = vmatpush1.bf16.msra.mxu0 0
        %2473 = vmatprep.subr.bf16.mxu0 0
        %2474 = vmatpush1.bf16.msra.mxu0 0
        %2475 = vmatprep.subr.bf16.mxu0 0
        %2476 = vmatpush1.bf16.msra.mxu0 0
        %2477 = vmatprep.subr.bf16.mxu0 0
        %2478 = vmatpush1.bf16.msra.mxu0 0
        %2479 = vmatprep.subr.bf16.mxu0 0
        %2480 = vmatpush1.bf16.msra.mxu0 0
        %2481 = vmatprep.subr.bf16.mxu0 0
        %2482 = vmatpush1.bf16.msra.mxu0 0
        %2483 = vmatprep.subr.bf16.mxu0 0
        %2484 = vmatpush1.bf16.msra.mxu0 0
        %2485 = vmatprep.subr.bf16.mxu0 0
        %2486 = vmatpush1.bf16.msra.mxu0 0
        %2487 = vmatprep.mubr.bf16.mxu0 0
        %2488 = vmatmul.mubr.bf16.gmra.mrb[0].mxu0 %v2453
        %v2489 = vpop.f32.mrb[0].mxu0
        %v2490 = vadd.f32 %v534, %v2489
        %v2491 = vpop.f32.mrb[0].mxu0
        %v2492 = vadd.f32 %v538, %v2491
        %v2493 = vpop.f32.mrb[0].mxu0
        %v2494 = vpop.f32.mrb[0].mxu0
        %2495 = vdwg.mxu0
        %2496 = vmatprep.subr.bf16.mxu0 %v1942
        %2497 = vmatpush1.bf16.msra.mxu0 %v1941
        %2498 = vmatprep.subr.bf16.mxu0 %v2070
        %2499 = vmatpush1.bf16.msra.mxu0 %v2069
        %2500 = vmatprep.subr.bf16.mxu0 0
        %2501 = vmatpush1.bf16.msra.mxu0 0
        %2502 = vmatprep.subr.bf16.mxu0 0
        %2503 = vmatpush1.bf16.msra.mxu0 0
        %2504 = vmatprep.subr.bf16.mxu0 0
        %2505 = vmatpush1.bf16.msra.mxu0 0
        %2506 = vmatprep.subr.bf16.mxu0 0
        %2507 = vmatpush1.bf16.msra.mxu0 0
        %2508 = vmatprep.subr.bf16.mxu0 0
        %2509 = vmatpush1.bf16.msra.mxu0 0
        %2510 = vmatprep.subr.bf16.mxu0 0
        %2511 = vmatpush1.bf16.msra.mxu0 0
        %2512 = vmatprep.subr.bf16.mxu0 0
        %2513 = vmatpush1.bf16.msra.mxu0 0
        %2514 = vmatprep.subr.bf16.mxu0 0
        %2515 = vmatpush1.bf16.msra.mxu0 0
        %2516 = vmatprep.subr.bf16.mxu0 0
        %2517 = vmatpush1.bf16.msra.mxu0 0
        %2518 = vmatprep.subr.bf16.mxu0 0
        %2519 = vmatpush1.bf16.msra.mxu0 0
        %2520 = vmatprep.subr.bf16.mxu0 0
        %2521 = vmatpush1.bf16.msra.mxu0 0
        %2522 = vmatprep.subr.bf16.mxu0 0
        %2523 = vmatpush1.bf16.msra.mxu0 0
        %2524 = vmatprep.subr.bf16.mxu0 0
        %2525 = vmatpush1.bf16.msra.mxu0 0
        %2526 = vmatprep.subr.bf16.mxu0 0
        %2527 = vmatpush1.bf16.msra.mxu0 0
        %2528 = vmatprep.mubr.bf16.mxu0 0
        %2529 = vmatmul.mubr.bf16.gmra.mrb[0].mxu0 %v2453
        %v2530 = vpop.f32.mrb[0].mxu0
        %v2531 = vadd.f32 %v542, %v2530
        %v2532 = vpop.f32.mrb[0].mxu0
        %v2533 = vadd.f32 %v546, %v2532
        %v2534 = vpop.f32.mrb[0].mxu0
        %v2535 = vpop.f32.mrb[0].mxu0
        %2536 = vdwg.mxu0
        %2537 = vmatprep.subr.bf16.mxu0 %v1944
        %2538 = vmatpush1.bf16.msra.mxu0 %v1943
        %2539 = vmatprep.subr.bf16.mxu0 %v2072
        %2540 = vmatpush1.bf16.msra.mxu0 %v2071
        %2541 = vmatprep.subr.bf16.mxu0 0
        %2542 = vmatpush1.bf16.msra.mxu0 0
        %2543 = vmatprep.subr.bf16.mxu0 0
        %2544 = vmatpush1.bf16.msra.mxu0 0
        %2545 = vmatprep.subr.bf16.mxu0 0
        %2546 = vmatpush1.bf16.msra.mxu0 0
        %2547 = vmatprep.subr.bf16.mxu0 0
        %2548 = vmatpush1.bf16.msra.mxu0 0
        %2549 = vmatprep.subr.bf16.mxu0 0
        %2550 = vmatpush1.bf16.msra.mxu0 0
        %2551 = vmatprep.subr.bf16.mxu0 0
        %2552 = vmatpush1.bf16.msra.mxu0 0
        %2553 = vmatprep.subr.bf16.mxu0 0
        %2554 = vmatpush1.bf16.msra.mxu0 0
        %2555 = vmatprep.subr.bf16.mxu0 0
        %2556 = vmatpush1.bf16.msra.mxu0 0
        %2557 = vmatprep.subr.bf16.mxu0 0
        %2558 = vmatpush1.bf16.msra.mxu0 0
        %2559 = vmatprep.subr.bf16.mxu0 0
        %2560 = vmatpush1.bf16.msra.mxu0 0
        %2561 = vmatprep.subr.bf16.mxu0 0
        %2562 = vmatpush1.bf16.msra.mxu0 0
        %2563 = vmatprep.subr.bf16.mxu0 0
        %2564 = vmatpush1.bf16.msra.mxu0 0
        %2565 = vmatprep.subr.bf16.mxu0 0
        %2566 = vmatpush1.bf16.msra.mxu0 0
        %2567 = vmatprep.subr.bf16.mxu0 0
        %2568 = vmatpush1.bf16.msra.mxu0 0
        %2569 = vmatprep.mubr.bf16.mxu0 0
        %2570 = vmatmul.mubr.bf16.gmra.mrb[0].mxu0 %v2453
        %v2571 = vpop.f32.mrb[0].mxu0
        %v2572 = vadd.f32 %v550, %v2571
        %v2573 = vpop.f32.mrb[0].mxu0
        %v2574 = vadd.f32 %v554, %v2573
        %v2575 = vpop.f32.mrb[0].mxu0
        %v2576 = vpop.f32.mrb[0].mxu0
        %2577 = vdwg.mxu0
        %2578 = vmatprep.subr.bf16.mxu0 %v1946
        %2579 = vmatpush1.bf16.msra.mxu0 %v1945
        %2580 = vmatprep.subr.bf16.mxu0 %v2074
        %2581 = vmatpush1.bf16.msra.mxu0 %v2073
        %2582 = vmatprep.subr.bf16.mxu0 0
        %2583 = vmatpush1.bf16.msra.mxu0 0
        %2584 = vmatprep.subr.bf16.mxu0 0
        %2585 = vmatpush1.bf16.msra.mxu0 0
        %2586 = vmatprep.subr.bf16.mxu0 0
        %2587 = vmatpush1.bf16.msra.mxu0 0
        %2588 = vmatprep.subr.bf16.mxu0 0
        %2589 = vmatpush1.bf16.msra.mxu0 0
        %2590 = vmatprep.subr.bf16.mxu0 0
        %2591 = vmatpush1.bf16.msra.mxu0 0
        %2592 = vmatprep.subr.bf16.mxu0 0
        %2593 = vmatpush1.bf16.msra.mxu0 0
        %2594 = vmatprep.subr.bf16.mxu0 0
        %2595 = vmatpush1.bf16.msra.mxu0 0
        %2596 = vmatprep.subr.bf16.mxu0 0
        %2597 = vmatpush1.bf16.msra.mxu0 0
        %2598 = vmatprep.subr.bf16.mxu0 0
        %2599 = vmatpush1.bf16.msra.mxu0 0
        %2600 = vmatprep.subr.bf16.mxu0 0
        %2601 = vmatpush1.bf16.msra.mxu0 0
        %2602 = vmatprep.subr.bf16.mxu0 0
        %2603 = vmatpush1.bf16.msra.mxu0 0
        %2604 = vmatprep.subr.bf16.mxu0 0
        %2605 = vmatpush1.bf16.msra.mxu0 0
        %2606 = vmatprep.subr.bf16.mxu0 0
        %2607 = vmatpush1.bf16.msra.mxu0 0
        %2608 = vmatprep.subr.bf16.mxu0 0
        %2609 = vmatpush1.bf16.msra.mxu0 0
        %2610 = vmatprep.mubr.bf16.mxu0 0
        %2611 = vmatmul.mubr.bf16.gmra.mrb[0].mxu0 %v2453
        %v2612 = vpop.f32.mrb[0].mxu0
        %v2613 = vadd.f32 %v558, %v2612
        %v2614 = vpop.f32.mrb[0].mxu0
        %v2615 = vadd.f32 %v562, %v2614
        %v2616 = vpop.f32.mrb[0].mxu0
        %v2617 = vpop.f32.mrb[0].mxu0
        %2618 = vdwg.mxu0
        %2619 = vmatprep.subr.bf16.mxu0 %v1948
        %2620 = vmatpush1.bf16.msra.mxu0 %v1947
        %2621 = vmatprep.subr.bf16.mxu0 %v2076
        %2622 = vmatpush1.bf16.msra.mxu0 %v2075
        %2623 = vmatprep.subr.bf16.mxu0 0
        %2624 = vmatpush1.bf16.msra.mxu0 0
        %2625 = vmatprep.subr.bf16.mxu0 0
        %2626 = vmatpush1.bf16.msra.mxu0 0
        %2627 = vmatprep.subr.bf16.mxu0 0
        %2628 = vmatpush1.bf16.msra.mxu0 0
        %2629 = vmatprep.subr.bf16.mxu0 0
        %2630 = vmatpush1.bf16.msra.mxu0 0
        %2631 = vmatprep.subr.bf16.mxu0 0
        %2632 = vmatpush1.bf16.msra.mxu0 0
        %2633 = vmatprep.subr.bf16.mxu0 0
        %2634 = vmatpush1.bf16.msra.mxu0 0
        %2635 = vmatprep.subr.bf16.mxu0 0
        %2636 = vmatpush1.bf16.msra.mxu0 0
        %2637 = vmatprep.subr.bf16.mxu0 0
        %2638 = vmatpush1.bf16.msra.mxu0 0
        %2639 = vmatprep.subr.bf16.mxu0 0
        %2640 = vmatpush1.bf16.msra.mxu0 0
        %2641 = vmatprep.subr.bf16.mxu0 0
        %2642 = vmatpush1.bf16.msra.mxu0 0
        %2643 = vmatprep.subr.bf16.mxu0 0
        %2644 = vmatpush1.bf16.msra.mxu0 0
        %2645 = vmatprep.subr.bf16.mxu0 0
        %2646 = vmatpush1.bf16.msra.mxu0 0
        %2647 = vmatprep.subr.bf16.mxu0 0
        %2648 = vmatpush1.bf16.msra.mxu0 0
        %2649 = vmatprep.subr.bf16.mxu0 0
        %2650 = vmatpush1.bf16.msra.mxu0 0
        %2651 = vmatprep.mubr.bf16.mxu0 0
        %2652 = vmatmul.mubr.bf16.gmra.mrb[0].mxu0 %v2453
        %v2653 = vpop.f32.mrb[0].mxu0
        %v2654 = vadd.f32 %v566, %v2653
        %v2655 = vpop.f32.mrb[0].mxu0
        %v2656 = vadd.f32 %v570, %v2655
        %v2657 = vpop.f32.mrb[0].mxu0
        %v2658 = vpop.f32.mrb[0].mxu0
        %2659 = vdwg.mxu0
        %2660 = vmatprep.subr.bf16.mxu0 %v1950
        %2661 = vmatpush1.bf16.msra.mxu0 %v1949
        %2662 = vmatprep.subr.bf16.mxu0 %v2078
        %2663 = vmatpush1.bf16.msra.mxu0 %v2077
        %2664 = vmatprep.subr.bf16.mxu0 0
        %2665 = vmatpush1.bf16.msra.mxu0 0
        %2666 = vmatprep.subr.bf16.mxu0 0
        %2667 = vmatpush1.bf16.msra.mxu0 0
        %2668 = vmatprep.subr.bf16.mxu0 0
        %2669 = vmatpush1.bf16.msra.mxu0 0
        %2670 = vmatprep.subr.bf16.mxu0 0
        %2671 = vmatpush1.bf16.msra.mxu0 0
        %2672 = vmatprep.subr.bf16.mxu0 0
        %2673 = vmatpush1.bf16.msra.mxu0 0
        %2674 = vmatprep.subr.bf16.mxu0 0
        %2675 = vmatpush1.bf16.msra.mxu0 0
        %2676 = vmatprep.subr.bf16.mxu0 0
        %2677 = vmatpush1.bf16.msra.mxu0 0
        %2678 = vmatprep.subr.bf16.mxu0 0
        %2679 = vmatpush1.bf16.msra.mxu0 0
        %2680 = vmatprep.subr.bf16.mxu0 0
        %2681 = vmatpush1.bf16.msra.mxu0 0
        %2682 = vmatprep.subr.bf16.mxu0 0
        %2683 = vmatpush1.bf16.msra.mxu0 0
        %2684 = vmatprep.subr.bf16.mxu0 0
        %2685 = vmatpush1.bf16.msra.mxu0 0
        %2686 = vmatprep.subr.bf16.mxu0 0
        %2687 = vmatpush1.bf16.msra.mxu0 0
        %2688 = vmatprep.subr.bf16.mxu0 0
        %2689 = vmatpush1.bf16.msra.mxu0 0
        %2690 = vmatprep.subr.bf16.mxu0 0
        %2691 = vmatpush1.bf16.msra.mxu0 0
        %2692 = vmatprep.mubr.bf16.mxu0 0
        %2693 = vmatmul.mubr.bf16.gmra.mrb[0].mxu0 %v2453
        %v2694 = vpop.f32.mrb[0].mxu0
        %v2695 = vadd.f32 %v574, %v2694
        %v2696 = vpop.f32.mrb[0].mxu0
        %v2697 = vadd.f32 %v578, %v2696
        %v2698 = vpop.f32.mrb[0].mxu0
        %v2699 = vpop.f32.mrb[0].mxu0
        %2700 = vdwg.mxu0
        %2701 = vmatprep.subr.bf16.mxu0 %v1952
        %2702 = vmatpush1.bf16.msra.mxu0 %v1951
        %2703 = vmatprep.subr.bf16.mxu0 %v2080
        %2704 = vmatpush1.bf16.msra.mxu0 %v2079
        %2705 = vmatprep.subr.bf16.mxu0 0
        %2706 = vmatpush1.bf16.msra.mxu0 0
        %2707 = vmatprep.subr.bf16.mxu0 0
        %2708 = vmatpush1.bf16.msra.mxu0 0
        %2709 = vmatprep.subr.bf16.mxu0 0
        %2710 = vmatpush1.bf16.msra.mxu0 0
        %2711 = vmatprep.subr.bf16.mxu0 0
        %2712 = vmatpush1.bf16.msra.mxu0 0
        %2713 = vmatprep.subr.bf16.mxu0 0
        %2714 = vmatpush1.bf16.msra.mxu0 0
        %2715 = vmatprep.subr.bf16.mxu0 0
        %2716 = vmatpush1.bf16.msra.mxu0 0
        %2717 = vmatprep.subr.bf16.mxu0 0
        %2718 = vmatpush1.bf16.msra.mxu0 0
        %2719 = vmatprep.subr.bf16.mxu0 0
        %2720 = vmatpush1.bf16.msra.mxu0 0
        %2721 = vmatprep.subr.bf16.mxu0 0
        %2722 = vmatpush1.bf16.msra.mxu0 0
        %2723 = vmatprep.subr.bf16.mxu0 0
        %2724 = vmatpush1.bf16.msra.mxu0 0
        %2725 = vmatprep.subr.bf16.mxu0 0
        %2726 = vmatpush1.bf16.msra.mxu0 0
        %2727 = vmatprep.subr.bf16.mxu0 0
        %2728 = vmatpush1.bf16.msra.mxu0 0
        %2729 = vmatprep.subr.bf16.mxu0 0
        %2730 = vmatpush1.bf16.msra.mxu0 0
        %2731 = vmatprep.subr.bf16.mxu0 0
        %2732 = vmatpush1.bf16.msra.mxu0 0
        %2733 = vmatprep.mubr.bf16.mxu0 0
        %2734 = vmatmul.mubr.bf16.gmra.mrb[0].mxu0 %v2453
        %v2735 = vpop.f32.mrb[0].mxu0
        %v2736 = vadd.f32 %v582, %v2735
        %v2737 = vpop.f32.mrb[0].mxu0
        %v2738 = vadd.f32 %v586, %v2737
        %v2739 = vpop.f32.mrb[0].mxu0
        %v2740 = vpop.f32.mrb[0].mxu0
        %2741 = vdwg.mxu0
        %2742 = vmatprep.subr.bf16.mxu0 %v1954
        %2743 = vmatpush1.bf16.msra.mxu0 %v1953
        %2744 = vmatprep.subr.bf16.mxu0 %v2082
        %2745 = vmatpush1.bf16.msra.mxu0 %v2081
        %2746 = vmatprep.subr.bf16.mxu0 0
        %2747 = vmatpush1.bf16.msra.mxu0 0
        %2748 = vmatprep.subr.bf16.mxu0 0
        %2749 = vmatpush1.bf16.msra.mxu0 0
        %2750 = vmatprep.subr.bf16.mxu0 0
        %2751 = vmatpush1.bf16.msra.mxu0 0
        %2752 = vmatprep.subr.bf16.mxu0 0
        %2753 = vmatpush1.bf16.msra.mxu0 0
        %2754 = vmatprep.subr.bf16.mxu0 0
        %2755 = vmatpush1.bf16.msra.mxu0 0
        %2756 = vmatprep.subr.bf16.mxu0 0
        %2757 = vmatpush1.bf16.msra.mxu0 0
        %2758 = vmatprep.subr.bf16.mxu0 0
        %2759 = vmatpush1.bf16.msra.mxu0 0
        %2760 = vmatprep.subr.bf16.mxu0 0
        %2761 = vmatpush1.bf16.msra.mxu0 0
        %2762 = vmatprep.subr.bf16.mxu0 0
        %2763 = vmatpush1.bf16.msra.mxu0 0
        %2764 = vmatprep.subr.bf16.mxu0 0
        %2765 = vmatpush1.bf16.msra.mxu0 0
        %2766 = vmatprep.subr.bf16.mxu0 0
        %2767 = vmatpush1.bf16.msra.mxu0 0
        %2768 = vmatprep.subr.bf16.mxu0 0
        %2769 = vmatpush1.bf16.msra.mxu0 0
        %2770 = vmatprep.subr.bf16.mxu0 0
        %2771 = vmatpush1.bf16.msra.mxu0 0
        %2772 = vmatprep.subr.bf16.mxu0 0
        %2773 = vmatpush1.bf16.msra.mxu0 0
        %2774 = vmatprep.mubr.bf16.mxu0 0
        %2775 = vmatmul.mubr.bf16.gmra.mrb[0].mxu0 %v2453
        %v2776 = vpop.f32.mrb[0].mxu0
        %v2777 = vadd.f32 %v590, %v2776
        %v2778 = vpop.f32.mrb[0].mxu0
        %v2779 = vadd.f32 %v594, %v2778
        %v2780 = vpop.f32.mrb[0].mxu0
        %v2781 = vpop.f32.mrb[0].mxu0
        %2782 = vdwg.mxu0
        %2783 = vmatprep.subr.bf16.mxu0 %v1956
        %2784 = vmatpush1.bf16.msra.mxu0 %v1955
        %2785 = vmatprep.subr.bf16.mxu0 %v2084
        %2786 = vmatpush1.bf16.msra.mxu0 %v2083
        %2787 = vmatprep.subr.bf16.mxu0 0
        %2788 = vmatpush1.bf16.msra.mxu0 0
        %2789 = vmatprep.subr.bf16.mxu0 0
        %2790 = vmatpush1.bf16.msra.mxu0 0
        %2791 = vmatprep.subr.bf16.mxu0 0
        %2792 = vmatpush1.bf16.msra.mxu0 0
        %2793 = vmatprep.subr.bf16.mxu0 0
        %2794 = vmatpush1.bf16.msra.mxu0 0
        %2795 = vmatprep.subr.bf16.mxu0 0
        %2796 = vmatpush1.bf16.msra.mxu0 0
        %2797 = vmatprep.subr.bf16.mxu0 0
        %2798 = vmatpush1.bf16.msra.mxu0 0
        %2799 = vmatprep.subr.bf16.mxu0 0
        %2800 = vmatpush1.bf16.msra.mxu0 0
        %2801 = vmatprep.subr.bf16.mxu0 0
        %2802 = vmatpush1.bf16.msra.mxu0 0
        %2803 = vmatprep.subr.bf16.mxu0 0
        %2804 = vmatpush1.bf16.msra.mxu0 0
        %2805 = vmatprep.subr.bf16.mxu0 0
        %2806 = vmatpush1.bf16.msra.mxu0 0
        %2807 = vmatprep.subr.bf16.mxu0 0
        %2808 = vmatpush1.bf16.msra.mxu0 0
        %2809 = vmatprep.subr.bf16.mxu0 0
        %2810 = vmatpush1.bf16.msra.mxu0 0
        %2811 = vmatprep.subr.bf16.mxu0 0
        %2812 = vmatpush1.bf16.msra.mxu0 0
        %2813 = vmatprep.subr.bf16.mxu0 0
        %2814 = vmatpush1.bf16.msra.mxu0 0
        %2815 = vmatprep.mubr.bf16.mxu0 0
        %2816 = vmatmul.mubr.bf16.gmra.mrb[0].mxu0 %v2453
        %v2817 = vpop.f32.mrb[0].mxu0
        %v2818 = vadd.f32 %v598, %v2817
        %v2819 = vpop.f32.mrb[0].mxu0
        %v2820 = vadd.f32 %v602, %v2819
        %v2821 = vpop.f32.mrb[0].mxu0
        %v2822 = vpop.f32.mrb[0].mxu0
        %2823 = vdwg.mxu0
        %2824 = vmatprep.subr.bf16.mxu0 %v1958
        %2825 = vmatpush1.bf16.msra.mxu0 %v1957
        %2826 = vmatprep.subr.bf16.mxu0 %v2086
        %2827 = vmatpush1.bf16.msra.mxu0 %v2085
        %2828 = vmatprep.subr.bf16.mxu0 0
        %2829 = vmatpush1.bf16.msra.mxu0 0
        %2830 = vmatprep.subr.bf16.mxu0 0
        %2831 = vmatpush1.bf16.msra.mxu0 0
        %2832 = vmatprep.subr.bf16.mxu0 0
        %2833 = vmatpush1.bf16.msra.mxu0 0
        %2834 = vmatprep.subr.bf16.mxu0 0
        %2835 = vmatpush1.bf16.msra.mxu0 0
        %2836 = vmatprep.subr.bf16.mxu0 0
        %2837 = vmatpush1.bf16.msra.mxu0 0
        %2838 = vmatprep.subr.bf16.mxu0 0
        %2839 = vmatpush1.bf16.msra.mxu0 0
        %2840 = vmatprep.subr.bf16.mxu0 0
        %2841 = vmatpush1.bf16.msra.mxu0 0
        %2842 = vmatprep.subr.bf16.mxu0 0
        %2843 = vmatpush1.bf16.msra.mxu0 0
        %2844 = vmatprep.subr.bf16.mxu0 0
        %2845 = vmatpush1.bf16.msra.mxu0 0
        %2846 = vmatprep.subr.bf16.mxu0 0
        %2847 = vmatpush1.bf16.msra.mxu0 0
        %2848 = vmatprep.subr.bf16.mxu0 0
        %2849 = vmatpush1.bf16.msra.mxu0 0
        %2850 = vmatprep.subr.bf16.mxu0 0
        %2851 = vmatpush1.bf16.msra.mxu0 0
        %2852 = vmatprep.subr.bf16.mxu0 0
        %2853 = vmatpush1.bf16.msra.mxu0 0
        %2854 = vmatprep.subr.bf16.mxu0 0
        %2855 = vmatpush1.bf16.msra.mxu0 0
        %2856 = vmatprep.mubr.bf16.mxu0 0
        %2857 = vmatmul.mubr.bf16.gmra.mrb[0].mxu0 %v2453
        %v2858 = vpop.f32.mrb[0].mxu0
        %v2859 = vadd.f32 %v606, %v2858
        %v2860 = vpop.f32.mrb[0].mxu0
        %v2861 = vadd.f32 %v610, %v2860
        %v2862 = vpop.f32.mrb[0].mxu0
        %v2863 = vpop.f32.mrb[0].mxu0
        %2864 = vdwg.mxu0
        %2865 = vmatprep.subr.bf16.mxu0 %v1960
        %2866 = vmatpush1.bf16.msra.mxu0 %v1959
        %2867 = vmatprep.subr.bf16.mxu0 %v2088
        %2868 = vmatpush1.bf16.msra.mxu0 %v2087
        %2869 = vmatprep.subr.bf16.mxu0 0
        %2870 = vmatpush1.bf16.msra.mxu0 0
        %2871 = vmatprep.subr.bf16.mxu0 0
        %2872 = vmatpush1.bf16.msra.mxu0 0
        %2873 = vmatprep.subr.bf16.mxu0 0
        %2874 = vmatpush1.bf16.msra.mxu0 0
        %2875 = vmatprep.subr.bf16.mxu0 0
        %2876 = vmatpush1.bf16.msra.mxu0 0
        %2877 = vmatprep.subr.bf16.mxu0 0
        %2878 = vmatpush1.bf16.msra.mxu0 0
        %2879 = vmatprep.subr.bf16.mxu0 0
        %2880 = vmatpush1.bf16.msra.mxu0 0
        %2881 = vmatprep.subr.bf16.mxu0 0
        %2882 = vmatpush1.bf16.msra.mxu0 0
        %2883 = vmatprep.subr.bf16.mxu0 0
        %2884 = vmatpush1.bf16.msra.mxu0 0
        %2885 = vmatprep.subr.bf16.mxu0 0
        %2886 = vmatpush1.bf16.msra.mxu0 0
        %2887 = vmatprep.subr.bf16.mxu0 0
        %2888 = vmatpush1.bf16.msra.mxu0 0
        %2889 = vmatprep.subr.bf16.mxu0 0
        %2890 = vmatpush1.bf16.msra.mxu0 0
        %2891 = vmatprep.subr.bf16.mxu0 0
        %2892 = vmatpush1.bf16.msra.mxu0 0
        %2893 = vmatprep.subr.bf16.mxu0 0
        %2894 = vmatpush1.bf16.msra.mxu0 0
        %2895 = vmatprep.subr.bf16.mxu0 0
        %2896 = vmatpush1.bf16.msra.mxu0 0
        %2897 = vmatprep.mubr.bf16.mxu0 0
        %2898 = vmatmul.mubr.bf16.gmra.mrb[0].mxu0 %v2453
        %v2899 = vpop.f32.mrb[0].mxu0
        %v2900 = vadd.f32 %v614, %v2899
        %v2901 = vpop.f32.mrb[0].mxu0
        %v2902 = vadd.f32 %v618, %v2901
        %v2903 = vpop.f32.mrb[0].mxu0
        %v2904 = vpop.f32.mrb[0].mxu0
        %2905 = vdwg.mxu0
        %2906 = vmatprep.subr.bf16.mxu0 %v1962
        %2907 = vmatpush1.bf16.msra.mxu0 %v1961
        %2908 = vmatprep.subr.bf16.mxu0 %v2090
        %2909 = vmatpush1.bf16.msra.mxu0 %v2089
        %2910 = vmatprep.subr.bf16.mxu0 0
        %2911 = vmatpush1.bf16.msra.mxu0 0
        %2912 = vmatprep.subr.bf16.mxu0 0
        %2913 = vmatpush1.bf16.msra.mxu0 0
        %2914 = vmatprep.subr.bf16.mxu0 0
        %2915 = vmatpush1.bf16.msra.mxu0 0
        %2916 = vmatprep.subr.bf16.mxu0 0
        %2917 = vmatpush1.bf16.msra.mxu0 0
        %2918 = vmatprep.subr.bf16.mxu0 0
        %2919 = vmatpush1.bf16.msra.mxu0 0
        %2920 = vmatprep.subr.bf16.mxu0 0
        %2921 = vmatpush1.bf16.msra.mxu0 0
        %2922 = vmatprep.subr.bf16.mxu0 0
        %2923 = vmatpush1.bf16.msra.mxu0 0
        %2924 = vmatprep.subr.bf16.mxu0 0
        %2925 = vmatpush1.bf16.msra.mxu0 0
        %2926 = vmatprep.subr.bf16.mxu0 0
        %2927 = vmatpush1.bf16.msra.mxu0 0
        %2928 = vmatprep.subr.bf16.mxu0 0
        %2929 = vmatpush1.bf16.msra.mxu0 0
        %2930 = vmatprep.subr.bf16.mxu0 0
        %2931 = vmatpush1.bf16.msra.mxu0 0
        %2932 = vmatprep.subr.bf16.mxu0 0
        %2933 = vmatpush1.bf16.msra.mxu0 0
        %2934 = vmatprep.subr.bf16.mxu0 0
        %2935 = vmatpush1.bf16.msra.mxu0 0
        %2936 = vmatprep.subr.bf16.mxu0 0
        %2937 = vmatpush1.bf16.msra.mxu0 0
        %2938 = vmatprep.mubr.bf16.mxu0 0
        %2939 = vmatmul.mubr.bf16.gmra.mrb[0].mxu0 %v2453
        %v2940 = vpop.f32.mrb[0].mxu0
        %v2941 = vadd.f32 %v622, %v2940
        %v2942 = vpop.f32.mrb[0].mxu0
        %v2943 = vadd.f32 %v626, %v2942
        %v2944 = vpop.f32.mrb[0].mxu0
        %v2945 = vpop.f32.mrb[0].mxu0
        %2946 = vdwg.mxu0
        %2947 = vmatprep.subr.bf16.mxu0 %v1964
        %2948 = vmatpush1.bf16.msra.mxu0 %v1963
        %2949 = vmatprep.subr.bf16.mxu0 %v2092
        %2950 = vmatpush1.bf16.msra.mxu0 %v2091
        %2951 = vmatprep.subr.bf16.mxu0 0
        %2952 = vmatpush1.bf16.msra.mxu0 0
        %2953 = vmatprep.subr.bf16.mxu0 0
        %2954 = vmatpush1.bf16.msra.mxu0 0
        %2955 = vmatprep.subr.bf16.mxu0 0
        %2956 = vmatpush1.bf16.msra.mxu0 0
        %2957 = vmatprep.subr.bf16.mxu0 0
        %2958 = vmatpush1.bf16.msra.mxu0 0
        %2959 = vmatprep.subr.bf16.mxu0 0
        %2960 = vmatpush1.bf16.msra.mxu0 0
        %2961 = vmatprep.subr.bf16.mxu0 0
        %2962 = vmatpush1.bf16.msra.mxu0 0
        %2963 = vmatprep.subr.bf16.mxu0 0
        %2964 = vmatpush1.bf16.msra.mxu0 0
        %2965 = vmatprep.subr.bf16.mxu0 0
        %2966 = vmatpush1.bf16.msra.mxu0 0
        %2967 = vmatprep.subr.bf16.mxu0 0
        %2968 = vmatpush1.bf16.msra.mxu0 0
        %2969 = vmatprep.subr.bf16.mxu0 0
        %2970 = vmatpush1.bf16.msra.mxu0 0
        %2971 = vmatprep.subr.bf16.mxu0 0
        %2972 = vmatpush1.bf16.msra.mxu0 0
        %2973 = vmatprep.subr.bf16.mxu0 0
        %2974 = vmatpush1.bf16.msra.mxu0 0
        %2975 = vmatprep.subr.bf16.mxu0 0
        %2976 = vmatpush1.bf16.msra.mxu0 0
        %2977 = vmatprep.subr.bf16.mxu0 0
        %2978 = vmatpush1.bf16.msra.mxu0 0
        %2979 = vmatprep.mubr.bf16.mxu0 0
        %2980 = vmatmul.mubr.bf16.gmra.mrb[0].mxu0 %v2453
        %v2981 = vpop.f32.mrb[0].mxu0
        %v2982 = vadd.f32 %v630, %v2981
        %v2983 = vpop.f32.mrb[0].mxu0
        %v2984 = vadd.f32 %v634, %v2983
        %v2985 = vpop.f32.mrb[0].mxu0
        %v2986 = vpop.f32.mrb[0].mxu0
        %2987 = vdwg.mxu0
        %2988 = vmatprep.subr.bf16.mxu0 %v1966
        %2989 = vmatpush1.bf16.msra.mxu0 %v1965
        %2990 = vmatprep.subr.bf16.mxu0 %v2094
        %2991 = vmatpush1.bf16.msra.mxu0 %v2093
        %2992 = vmatprep.subr.bf16.mxu0 0
        %2993 = vmatpush1.bf16.msra.mxu0 0
        %2994 = vmatprep.subr.bf16.mxu0 0
        %2995 = vmatpush1.bf16.msra.mxu0 0
        %2996 = vmatprep.subr.bf16.mxu0 0
        %2997 = vmatpush1.bf16.msra.mxu0 0
        %2998 = vmatprep.subr.bf16.mxu0 0
        %2999 = vmatpush1.bf16.msra.mxu0 0
        %3000 = vmatprep.subr.bf16.mxu0 0
        %3001 = vmatpush1.bf16.msra.mxu0 0
        %3002 = vmatprep.subr.bf16.mxu0 0
        %3003 = vmatpush1.bf16.msra.mxu0 0
        %3004 = vmatprep.subr.bf16.mxu0 0
        %3005 = vmatpush1.bf16.msra.mxu0 0
        %3006 = vmatprep.subr.bf16.mxu0 0
        %3007 = vmatpush1.bf16.msra.mxu0 0
        %3008 = vmatprep.subr.bf16.mxu0 0
        %3009 = vmatpush1.bf16.msra.mxu0 0
        %3010 = vmatprep.subr.bf16.mxu0 0
        %3011 = vmatpush1.bf16.msra.mxu0 0
        %3012 = vmatprep.subr.bf16.mxu0 0
        %3013 = vmatpush1.bf16.msra.mxu0 0
        %3014 = vmatprep.subr.bf16.mxu0 0
        %3015 = vmatpush1.bf16.msra.mxu0 0
        %3016 = vmatprep.subr.bf16.mxu0 0
        %3017 = vmatpush1.bf16.msra.mxu0 0
        %3018 = vmatprep.subr.bf16.mxu0 0
        %3019 = vmatpush1.bf16.msra.mxu0 0
        %3020 = vmatprep.mubr.bf16.mxu0 0
        %3021 = vmatmul.mubr.bf16.gmra.mrb[0].mxu0 %v2453
        %v3022 = vpop.f32.mrb[0].mxu0
        %v3023 = vadd.f32 %v638, %v3022
        %v3024 = vpop.f32.mrb[0].mxu0
        %v3025 = vadd.f32 %v642, %v3024
        %v3026 = vpop.f32.mrb[0].mxu0
        %v3027 = vpop.f32.mrb[0].mxu0
        %3028 = vdwg.mxu0
        %3029 = vmatprep.subr.bf16.mxu0 %v1968
        %3030 = vmatpush1.bf16.msra.mxu0 %v1967
        %3031 = vmatprep.subr.bf16.mxu0 %v2096
        %3032 = vmatpush1.bf16.msra.mxu0 %v2095
        %3033 = vmatprep.subr.bf16.mxu0 0
        %3034 = vmatpush1.bf16.msra.mxu0 0
        %3035 = vmatprep.subr.bf16.mxu0 0
        %3036 = vmatpush1.bf16.msra.mxu0 0
        %3037 = vmatprep.subr.bf16.mxu0 0
        %3038 = vmatpush1.bf16.msra.mxu0 0
        %3039 = vmatprep.subr.bf16.mxu0 0
        %3040 = vmatpush1.bf16.msra.mxu0 0
        %3041 = vmatprep.subr.bf16.mxu0 0
        %3042 = vmatpush1.bf16.msra.mxu0 0
        %3043 = vmatprep.subr.bf16.mxu0 0
        %3044 = vmatpush1.bf16.msra.mxu0 0
        %3045 = vmatprep.subr.bf16.mxu0 0
        %3046 = vmatpush1.bf16.msra.mxu0 0
        %3047 = vmatprep.subr.bf16.mxu0 0
        %3048 = vmatpush1.bf16.msra.mxu0 0
        %3049 = vmatprep.subr.bf16.mxu0 0
        %3050 = vmatpush1.bf16.msra.mxu0 0
        %3051 = vmatprep.subr.bf16.mxu0 0
        %3052 = vmatpush1.bf16.msra.mxu0 0
        %3053 = vmatprep.subr.bf16.mxu0 0
        %3054 = vmatpush1.bf16.msra.mxu0 0
        %3055 = vmatprep.subr.bf16.mxu0 0
        %3056 = vmatpush1.bf16.msra.mxu0 0
        %3057 = vmatprep.subr.bf16.mxu0 0
        %3058 = vmatpush1.bf16.msra.mxu0 0
        %3059 = vmatprep.subr.bf16.mxu0 0
        %3060 = vmatpush1.bf16.msra.mxu0 0
        %3061 = vmatprep.mubr.bf16.mxu0 0
        %3062 = vmatmul.mubr.bf16.gmra.mrb[0].mxu0 %v2453
        %v3063 = vpop.f32.mrb[0].mxu0
        %v3064 = vadd.f32 %v646, %v3063
        %v3065 = vpop.f32.mrb[0].mxu0
        %v3066 = vadd.f32 %v650, %v3065
        %v3067 = vpop.f32.mrb[0].mxu0
        %v3068 = vpop.f32.mrb[0].mxu0
        %3069 = vdwg.mxu0
        %3070 = vmatprep.subr.bf16.mxu0 %v1970
        %3071 = vmatpush1.bf16.msra.mxu0 %v1969
        %3072 = vmatprep.subr.bf16.mxu0 %v2098
        %3073 = vmatpush1.bf16.msra.mxu0 %v2097
        %3074 = vmatprep.subr.bf16.mxu0 0
        %3075 = vmatpush1.bf16.msra.mxu0 0
        %3076 = vmatprep.subr.bf16.mxu0 0
        %3077 = vmatpush1.bf16.msra.mxu0 0
        %3078 = vmatprep.subr.bf16.mxu0 0
        %3079 = vmatpush1.bf16.msra.mxu0 0
        %3080 = vmatprep.subr.bf16.mxu0 0
        %3081 = vmatpush1.bf16.msra.mxu0 0
        %3082 = vmatprep.subr.bf16.mxu0 0
        %3083 = vmatpush1.bf16.msra.mxu0 0
        %3084 = vmatprep.subr.bf16.mxu0 0
        %3085 = vmatpush1.bf16.msra.mxu0 0
        %3086 = vmatprep.subr.bf16.mxu0 0
        %3087 = vmatpush1.bf16.msra.mxu0 0
        %3088 = vmatprep.subr.bf16.mxu0 0
        %3089 = vmatpush1.bf16.msra.mxu0 0
        %3090 = vmatprep.subr.bf16.mxu0 0
        %3091 = vmatpush1.bf16.msra.mxu0 0
        %3092 = vmatprep.subr.bf16.mxu0 0
        %3093 = vmatpush1.bf16.msra.mxu0 0
        %3094 = vmatprep.subr.bf16.mxu0 0
        %3095 = vmatpush1.bf16.msra.mxu0 0
        %3096 = vmatprep.subr.bf16.mxu0 0
        %3097 = vmatpush1.bf16.msra.mxu0 0
        %3098 = vmatprep.subr.bf16.mxu0 0
        %3099 = vmatpush1.bf16.msra.mxu0 0
        %3100 = vmatprep.subr.bf16.mxu0 0
        %3101 = vmatpush1.bf16.msra.mxu0 0
        %3102 = vmatprep.mubr.bf16.mxu0 0
        %3103 = vmatmul.mubr.bf16.gmra.mrb[0].mxu0 %v2453
        %v3104 = vpop.f32.mrb[0].mxu0
        %v3105 = vadd.f32 %v654, %v3104
        %v3106 = vpop.f32.mrb[0].mxu0
        %v3107 = vadd.f32 %v658, %v3106
        %v3108 = vpop.f32.mrb[0].mxu0
        %v3109 = vpop.f32.mrb[0].mxu0
        %3110 = vdwg.mxu0
        %3111 = vmatprep.subr.bf16.mxu0 %v1972
        %3112 = vmatpush1.bf16.msra.mxu0 %v1971
        %3113 = vmatprep.subr.bf16.mxu0 %v2100
        %3114 = vmatpush1.bf16.msra.mxu0 %v2099
        %3115 = vmatprep.subr.bf16.mxu0 0
        %3116 = vmatpush1.bf16.msra.mxu0 0
        %3117 = vmatprep.subr.bf16.mxu0 0
        %3118 = vmatpush1.bf16.msra.mxu0 0
        %3119 = vmatprep.subr.bf16.mxu0 0
        %3120 = vmatpush1.bf16.msra.mxu0 0
        %3121 = vmatprep.subr.bf16.mxu0 0
        %3122 = vmatpush1.bf16.msra.mxu0 0
        %3123 = vmatprep.subr.bf16.mxu0 0
        %3124 = vmatpush1.bf16.msra.mxu0 0
        %3125 = vmatprep.subr.bf16.mxu0 0
        %3126 = vmatpush1.bf16.msra.mxu0 0
        %3127 = vmatprep.subr.bf16.mxu0 0
        %3128 = vmatpush1.bf16.msra.mxu0 0
        %3129 = vmatprep.subr.bf16.mxu0 0
        %3130 = vmatpush1.bf16.msra.mxu0 0
        %3131 = vmatprep.subr.bf16.mxu0 0
        %3132 = vmatpush1.bf16.msra.mxu0 0
        %3133 = vmatprep.subr.bf16.mxu0 0
        %3134 = vmatpush1.bf16.msra.mxu0 0
        %3135 = vmatprep.subr.bf16.mxu0 0
        %3136 = vmatpush1.bf16.msra.mxu0 0
        %3137 = vmatprep.subr.bf16.mxu0 0
        %3138 = vmatpush1.bf16.msra.mxu0 0
        %3139 = vmatprep.subr.bf16.mxu0 0
        %3140 = vmatpush1.bf16.msra.mxu0 0
        %3141 = vmatprep.subr.bf16.mxu0 0
        %3142 = vmatpush1.bf16.msra.mxu0 0
        %3143 = vmatprep.mubr.bf16.mxu0 0
        %3144 = vmatmul.mubr.bf16.gmra.mrb[0].mxu0 %v2453
        %v3145 = vpop.f32.mrb[0].mxu0
        %v3146 = vadd.f32 %v662, %v3145
        %v3147 = vpop.f32.mrb[0].mxu0
        %v3148 = vadd.f32 %v666, %v3147
        %v3149 = vpop.f32.mrb[0].mxu0
        %v3150 = vpop.f32.mrb[0].mxu0
        %3151 = vdwg.mxu0
        %3152 = vmatprep.subr.bf16.mxu0 %v1974
        %3153 = vmatpush1.bf16.msra.mxu0 %v1973
        %3154 = vmatprep.subr.bf16.mxu0 %v2102
        %3155 = vmatpush1.bf16.msra.mxu0 %v2101
        %3156 = vmatprep.subr.bf16.mxu0 0
        %3157 = vmatpush1.bf16.msra.mxu0 0
        %3158 = vmatprep.subr.bf16.mxu0 0
        %3159 = vmatpush1.bf16.msra.mxu0 0
        %3160 = vmatprep.subr.bf16.mxu0 0
        %3161 = vmatpush1.bf16.msra.mxu0 0
        %3162 = vmatprep.subr.bf16.mxu0 0
        %3163 = vmatpush1.bf16.msra.mxu0 0
        %3164 = vmatprep.subr.bf16.mxu0 0
        %3165 = vmatpush1.bf16.msra.mxu0 0
        %3166 = vmatprep.subr.bf16.mxu0 0
        %3167 = vmatpush1.bf16.msra.mxu0 0
        %3168 = vmatprep.subr.bf16.mxu0 0
        %3169 = vmatpush1.bf16.msra.mxu0 0
        %3170 = vmatprep.subr.bf16.mxu0 0
        %3171 = vmatpush1.bf16.msra.mxu0 0
        %3172 = vmatprep.subr.bf16.mxu0 0
        %3173 = vmatpush1.bf16.msra.mxu0 0
        %3174 = vmatprep.subr.bf16.mxu0 0
        %3175 = vmatpush1.bf16.msra.mxu0 0
        %3176 = vmatprep.subr.bf16.mxu0 0
        %3177 = vmatpush1.bf16.msra.mxu0 0
        %3178 = vmatprep.subr.bf16.mxu0 0
        %3179 = vmatpush1.bf16.msra.mxu0 0
        %3180 = vmatprep.subr.bf16.mxu0 0
        %3181 = vmatpush1.bf16.msra.mxu0 0
        %3182 = vmatprep.subr.bf16.mxu0 0
        %3183 = vmatpush1.bf16.msra.mxu0 0
        %3184 = vmatprep.mubr.bf16.mxu0 0
        %3185 = vmatmul.mubr.bf16.gmra.mrb[0].mxu0 %v2453
        %v3186 = vpop.f32.mrb[0].mxu0
        %v3187 = vadd.f32 %v670, %v3186
        %v3188 = vpop.f32.mrb[0].mxu0
        %v3189 = vadd.f32 %v674, %v3188
        %v3190 = vpop.f32.mrb[0].mxu0
        %v3191 = vpop.f32.mrb[0].mxu0
        %3192 = vdwg.mxu0
        %3193 = vmatprep.subr.bf16.mxu0 %v1976
        %3194 = vmatpush1.bf16.msra.mxu0 %v1975
        %3195 = vmatprep.subr.bf16.mxu0 %v2104
        %3196 = vmatpush1.bf16.msra.mxu0 %v2103
        %3197 = vmatprep.subr.bf16.mxu0 0
        %3198 = vmatpush1.bf16.msra.mxu0 0
        %3199 = vmatprep.subr.bf16.mxu0 0
        %3200 = vmatpush1.bf16.msra.mxu0 0
        %3201 = vmatprep.subr.bf16.mxu0 0
        %3202 = vmatpush1.bf16.msra.mxu0 0
        %3203 = vmatprep.subr.bf16.mxu0 0
        %3204 = vmatpush1.bf16.msra.mxu0 0
        %3205 = vmatprep.subr.bf16.mxu0 0
        %3206 = vmatpush1.bf16.msra.mxu0 0
        %3207 = vmatprep.subr.bf16.mxu0 0
        %3208 = vmatpush1.bf16.msra.mxu0 0
        %3209 = vmatprep.subr.bf16.mxu0 0
        %3210 = vmatpush1.bf16.msra.mxu0 0
        %3211 = vmatprep.subr.bf16.mxu0 0
        %3212 = vmatpush1.bf16.msra.mxu0 0
        %3213 = vmatprep.subr.bf16.mxu0 0
        %3214 = vmatpush1.bf16.msra.mxu0 0
        %3215 = vmatprep.subr.bf16.mxu0 0
        %3216 = vmatpush1.bf16.msra.mxu0 0
        %3217 = vmatprep.subr.bf16.mxu0 0
        %3218 = vmatpush1.bf16.msra.mxu0 0
        %3219 = vmatprep.subr.bf16.mxu0 0
        %3220 = vmatpush1.bf16.msra.mxu0 0
        %3221 = vmatprep.subr.bf16.mxu0 0
        %3222 = vmatpush1.bf16.msra.mxu0 0
        %3223 = vmatprep.subr.bf16.mxu0 0
        %3224 = vmatpush1.bf16.msra.mxu0 0
        %3225 = vmatprep.mubr.bf16.mxu0 0
        %3226 = vmatmul.mubr.bf16.gmra.mrb[0].mxu0 %v2453
        %v3227 = vpop.f32.mrb[0].mxu0
        %v3228 = vadd.f32 %v678, %v3227
        %v3229 = vpop.f32.mrb[0].mxu0
        %v3230 = vadd.f32 %v682, %v3229
        %v3231 = vpop.f32.mrb[0].mxu0
        %v3232 = vpop.f32.mrb[0].mxu0
        %3233 = vdwg.mxu0
        %3234 = vmatprep.subr.bf16.mxu0 %v1978
        %3235 = vmatpush1.bf16.msra.mxu0 %v1977
        %3236 = vmatprep.subr.bf16.mxu0 %v2106
        %3237 = vmatpush1.bf16.msra.mxu0 %v2105
        %3238 = vmatprep.subr.bf16.mxu0 0
        %3239 = vmatpush1.bf16.msra.mxu0 0
        %3240 = vmatprep.subr.bf16.mxu0 0
        %3241 = vmatpush1.bf16.msra.mxu0 0
        %3242 = vmatprep.subr.bf16.mxu0 0
        %3243 = vmatpush1.bf16.msra.mxu0 0
        %3244 = vmatprep.subr.bf16.mxu0 0
        %3245 = vmatpush1.bf16.msra.mxu0 0
        %3246 = vmatprep.subr.bf16.mxu0 0
        %3247 = vmatpush1.bf16.msra.mxu0 0
        %3248 = vmatprep.subr.bf16.mxu0 0
        %3249 = vmatpush1.bf16.msra.mxu0 0
        %3250 = vmatprep.subr.bf16.mxu0 0
        %3251 = vmatpush1.bf16.msra.mxu0 0
        %3252 = vmatprep.subr.bf16.mxu0 0
        %3253 = vmatpush1.bf16.msra.mxu0 0
        %3254 = vmatprep.subr.bf16.mxu0 0
        %3255 = vmatpush1.bf16.msra.mxu0 0
        %3256 = vmatprep.subr.bf16.mxu0 0
        %3257 = vmatpush1.bf16.msra.mxu0 0
        %3258 = vmatprep.subr.bf16.mxu0 0
        %3259 = vmatpush1.bf16.msra.mxu0 0
        %3260 = vmatprep.subr.bf16.mxu0 0
        %3261 = vmatpush1.bf16.msra.mxu0 0
        %3262 = vmatprep.subr.bf16.mxu0 0
        %3263 = vmatpush1.bf16.msra.mxu0 0
        %3264 = vmatprep.subr.bf16.mxu0 0
        %3265 = vmatpush1.bf16.msra.mxu0 0
        %3266 = vmatprep.mubr.bf16.mxu0 0
        %3267 = vmatmul.mubr.bf16.gmra.mrb[0].mxu0 %v2453
        %v3268 = vpop.f32.mrb[0].mxu0
        %v3269 = vadd.f32 %v686, %v3268
        %v3270 = vpop.f32.mrb[0].mxu0
        %v3271 = vadd.f32 %v690, %v3270
        %v3272 = vpop.f32.mrb[0].mxu0
        %v3273 = vpop.f32.mrb[0].mxu0
        %3274 = vdwg.mxu0
        %3275 = vmatprep.subr.bf16.mxu0 %v1980
        %3276 = vmatpush1.bf16.msra.mxu0 %v1979
        %3277 = vmatprep.subr.bf16.mxu0 %v2108
        %3278 = vmatpush1.bf16.msra.mxu0 %v2107
        %3279 = vmatprep.subr.bf16.mxu0 0
        %3280 = vmatpush1.bf16.msra.mxu0 0
        %3281 = vmatprep.subr.bf16.mxu0 0
        %3282 = vmatpush1.bf16.msra.mxu0 0
        %3283 = vmatprep.subr.bf16.mxu0 0
        %3284 = vmatpush1.bf16.msra.mxu0 0
        %3285 = vmatprep.subr.bf16.mxu0 0
        %3286 = vmatpush1.bf16.msra.mxu0 0
        %3287 = vmatprep.subr.bf16.mxu0 0
        %3288 = vmatpush1.bf16.msra.mxu0 0
        %3289 = vmatprep.subr.bf16.mxu0 0
        %3290 = vmatpush1.bf16.msra.mxu0 0
        %3291 = vmatprep.subr.bf16.mxu0 0
        %3292 = vmatpush1.bf16.msra.mxu0 0
        %3293 = vmatprep.subr.bf16.mxu0 0
        %3294 = vmatpush1.bf16.msra.mxu0 0
        %3295 = vmatprep.subr.bf16.mxu0 0
        %3296 = vmatpush1.bf16.msra.mxu0 0
        %3297 = vmatprep.subr.bf16.mxu0 0
        %3298 = vmatpush1.bf16.msra.mxu0 0
        %3299 = vmatprep.subr.bf16.mxu0 0
        %3300 = vmatpush1.bf16.msra.mxu0 0
        %3301 = vmatprep.subr.bf16.mxu0 0
        %3302 = vmatpush1.bf16.msra.mxu0 0
        %3303 = vmatprep.subr.bf16.mxu0 0
        %3304 = vmatpush1.bf16.msra.mxu0 0
        %3305 = vmatprep.subr.bf16.mxu0 0
        %3306 = vmatpush1.bf16.msra.mxu0 0
        %3307 = vmatprep.mubr.bf16.mxu0 0
        %3308 = vmatmul.mubr.bf16.gmra.mrb[0].mxu0 %v2453
        %v3309 = vpop.f32.mrb[0].mxu0
        %v3310 = vadd.f32 %v694, %v3309
        %v3311 = vpop.f32.mrb[0].mxu0
        %v3312 = vadd.f32 %v698, %v3311
        %v3313 = vpop.f32.mrb[0].mxu0
        %v3314 = vpop.f32.mrb[0].mxu0
        %3315 = vdwg.mxu0
        %3316 = vmatprep.subr.bf16.mxu0 %v1982
        %3317 = vmatpush1.bf16.msra.mxu0 %v1981
        %3318 = vmatprep.subr.bf16.mxu0 %v2110
        %3319 = vmatpush1.bf16.msra.mxu0 %v2109
        %3320 = vmatprep.subr.bf16.mxu0 0
        %3321 = vmatpush1.bf16.msra.mxu0 0
        %3322 = vmatprep.subr.bf16.mxu0 0
        %3323 = vmatpush1.bf16.msra.mxu0 0
        %3324 = vmatprep.subr.bf16.mxu0 0
        %3325 = vmatpush1.bf16.msra.mxu0 0
        %3326 = vmatprep.subr.bf16.mxu0 0
        %3327 = vmatpush1.bf16.msra.mxu0 0
        %3328 = vmatprep.subr.bf16.mxu0 0
        %3329 = vmatpush1.bf16.msra.mxu0 0
        %3330 = vmatprep.subr.bf16.mxu0 0
        %3331 = vmatpush1.bf16.msra.mxu0 0
        %3332 = vmatprep.subr.bf16.mxu0 0
        %3333 = vmatpush1.bf16.msra.mxu0 0
        %3334 = vmatprep.subr.bf16.mxu0 0
        %3335 = vmatpush1.bf16.msra.mxu0 0
        %3336 = vmatprep.subr.bf16.mxu0 0
        %3337 = vmatpush1.bf16.msra.mxu0 0
        %3338 = vmatprep.subr.bf16.mxu0 0
        %3339 = vmatpush1.bf16.msra.mxu0 0
        %3340 = vmatprep.subr.bf16.mxu0 0
        %3341 = vmatpush1.bf16.msra.mxu0 0
        %3342 = vmatprep.subr.bf16.mxu0 0
        %3343 = vmatpush1.bf16.msra.mxu0 0
        %3344 = vmatprep.subr.bf16.mxu0 0
        %3345 = vmatpush1.bf16.msra.mxu0 0
        %3346 = vmatprep.subr.bf16.mxu0 0
        %3347 = vmatpush1.bf16.msra.mxu0 0
        %3348 = vmatprep.mubr.bf16.mxu0 0
        %3349 = vmatmul.mubr.bf16.gmra.mrb[0].mxu0 %v2453
        %v3350 = vpop.f32.mrb[0].mxu0
        %v3351 = vadd.f32 %v702, %v3350
        %v3352 = vpop.f32.mrb[0].mxu0
        %v3353 = vadd.f32 %v706, %v3352
        %v3354 = vpop.f32.mrb[0].mxu0
        %v3355 = vpop.f32.mrb[0].mxu0
        %3356 = vdwg.mxu0
        %3357 = vmatprep.subr.bf16.mxu0 %v1984
        %3358 = vmatpush1.bf16.msra.mxu0 %v1983
        %3359 = vmatprep.subr.bf16.mxu0 %v2112
        %3360 = vmatpush1.bf16.msra.mxu0 %v2111
        %3361 = vmatprep.subr.bf16.mxu0 0
        %3362 = vmatpush1.bf16.msra.mxu0 0
        %3363 = vmatprep.subr.bf16.mxu0 0
        %3364 = vmatpush1.bf16.msra.mxu0 0
        %3365 = vmatprep.subr.bf16.mxu0 0
        %3366 = vmatpush1.bf16.msra.mxu0 0
        %3367 = vmatprep.subr.bf16.mxu0 0
        %3368 = vmatpush1.bf16.msra.mxu0 0
        %3369 = vmatprep.subr.bf16.mxu0 0
        %3370 = vmatpush1.bf16.msra.mxu0 0
        %3371 = vmatprep.subr.bf16.mxu0 0
        %3372 = vmatpush1.bf16.msra.mxu0 0
        %3373 = vmatprep.subr.bf16.mxu0 0
        %3374 = vmatpush1.bf16.msra.mxu0 0
        %3375 = vmatprep.subr.bf16.mxu0 0
        %3376 = vmatpush1.bf16.msra.mxu0 0
        %3377 = vmatprep.subr.bf16.mxu0 0
        %3378 = vmatpush1.bf16.msra.mxu0 0
        %3379 = vmatprep.subr.bf16.mxu0 0
        %3380 = vmatpush1.bf16.msra.mxu0 0
        %3381 = vmatprep.subr.bf16.mxu0 0
        %3382 = vmatpush1.bf16.msra.mxu0 0
        %3383 = vmatprep.subr.bf16.mxu0 0
        %3384 = vmatpush1.bf16.msra.mxu0 0
        %3385 = vmatprep.subr.bf16.mxu0 0
        %3386 = vmatpush1.bf16.msra.mxu0 0
        %3387 = vmatprep.subr.bf16.mxu0 0
        %3388 = vmatpush1.bf16.msra.mxu0 0
        %3389 = vmatprep.mubr.bf16.mxu0 0
        %3390 = vmatmul.mubr.bf16.gmra.mrb[0].mxu0 %v2453
        %v3391 = vpop.f32.mrb[0].mxu0
        %v3392 = vadd.f32 %v710, %v3391
        %v3393 = vpop.f32.mrb[0].mxu0
        %v3394 = vadd.f32 %v714, %v3393
        %v3395 = vpop.f32.mrb[0].mxu0
        %v3396 = vpop.f32.mrb[0].mxu0
        %3397 = vdwg.mxu0
        %3398 = vmatprep.subr.bf16.mxu0 %v1986
        %3399 = vmatpush1.bf16.msra.mxu0 %v1985
        %3400 = vmatprep.subr.bf16.mxu0 %v2114
        %3401 = vmatpush1.bf16.msra.mxu0 %v2113
        %3402 = vmatprep.subr.bf16.mxu0 0
        %3403 = vmatpush1.bf16.msra.mxu0 0
        %3404 = vmatprep.subr.bf16.mxu0 0
        %3405 = vmatpush1.bf16.msra.mxu0 0
        %3406 = vmatprep.subr.bf16.mxu0 0
        %3407 = vmatpush1.bf16.msra.mxu0 0
        %3408 = vmatprep.subr.bf16.mxu0 0
        %3409 = vmatpush1.bf16.msra.mxu0 0
        %3410 = vmatprep.subr.bf16.mxu0 0
        %3411 = vmatpush1.bf16.msra.mxu0 0
        %3412 = vmatprep.subr.bf16.mxu0 0
        %3413 = vmatpush1.bf16.msra.mxu0 0
        %3414 = vmatprep.subr.bf16.mxu0 0
        %3415 = vmatpush1.bf16.msra.mxu0 0
        %3416 = vmatprep.subr.bf16.mxu0 0
        %3417 = vmatpush1.bf16.msra.mxu0 0
        %3418 = vmatprep.subr.bf16.mxu0 0
        %3419 = vmatpush1.bf16.msra.mxu0 0
        %3420 = vmatprep.subr.bf16.mxu0 0
        %3421 = vmatpush1.bf16.msra.mxu0 0
        %3422 = vmatprep.subr.bf16.mxu0 0
        %3423 = vmatpush1.bf16.msra.mxu0 0
        %3424 = vmatprep.subr.bf16.mxu0 0
        %3425 = vmatpush1.bf16.msra.mxu0 0
        %3426 = vmatprep.subr.bf16.mxu0 0
        %3427 = vmatpush1.bf16.msra.mxu0 0
        %3428 = vmatprep.subr.bf16.mxu0 0
        %3429 = vmatpush1.bf16.msra.mxu0 0
        %3430 = vmatprep.mubr.bf16.mxu0 0
        %3431 = vmatmul.mubr.bf16.gmra.mrb[0].mxu0 %v2453
        %v3432 = vpop.f32.mrb[0].mxu0
        %v3433 = vadd.f32 %v718, %v3432
        %v3434 = vpop.f32.mrb[0].mxu0
        %v3435 = vadd.f32 %v722, %v3434
        %v3436 = vpop.f32.mrb[0].mxu0
        %v3437 = vpop.f32.mrb[0].mxu0
        %3438 = vdwg.mxu0
        %3439 = vmatprep.subr.bf16.mxu0 %v1988
        %3440 = vmatpush1.bf16.msra.mxu0 %v1987
        %3441 = vmatprep.subr.bf16.mxu0 %v2116
        %3442 = vmatpush1.bf16.msra.mxu0 %v2115
        %3443 = vmatprep.subr.bf16.mxu0 0
        %3444 = vmatpush1.bf16.msra.mxu0 0
        %3445 = vmatprep.subr.bf16.mxu0 0
        %3446 = vmatpush1.bf16.msra.mxu0 0
        %3447 = vmatprep.subr.bf16.mxu0 0
        %3448 = vmatpush1.bf16.msra.mxu0 0
        %3449 = vmatprep.subr.bf16.mxu0 0
        %3450 = vmatpush1.bf16.msra.mxu0 0
        %3451 = vmatprep.subr.bf16.mxu0 0
        %3452 = vmatpush1.bf16.msra.mxu0 0
        %3453 = vmatprep.subr.bf16.mxu0 0
        %3454 = vmatpush1.bf16.msra.mxu0 0
        %3455 = vmatprep.subr.bf16.mxu0 0
        %3456 = vmatpush1.bf16.msra.mxu0 0
        %3457 = vmatprep.subr.bf16.mxu0 0
        %3458 = vmatpush1.bf16.msra.mxu0 0
        %3459 = vmatprep.subr.bf16.mxu0 0
        %3460 = vmatpush1.bf16.msra.mxu0 0
        %3461 = vmatprep.subr.bf16.mxu0 0
        %3462 = vmatpush1.bf16.msra.mxu0 0
        %3463 = vmatprep.subr.bf16.mxu0 0
        %3464 = vmatpush1.bf16.msra.mxu0 0
        %3465 = vmatprep.subr.bf16.mxu0 0
        %3466 = vmatpush1.bf16.msra.mxu0 0
        %3467 = vmatprep.subr.bf16.mxu0 0
        %3468 = vmatpush1.bf16.msra.mxu0 0
        %3469 = vmatprep.subr.bf16.mxu0 0
        %3470 = vmatpush1.bf16.msra.mxu0 0
        %3471 = vmatprep.mubr.bf16.mxu0 0
        %3472 = vmatmul.mubr.bf16.gmra.mrb[0].mxu0 %v2453
        %v3473 = vpop.f32.mrb[0].mxu0
        %v3474 = vadd.f32 %v726, %v3473
        %v3475 = vpop.f32.mrb[0].mxu0
        %v3476 = vadd.f32 %v730, %v3475
        %v3477 = vpop.f32.mrb[0].mxu0
        %v3478 = vpop.f32.mrb[0].mxu0
        %3479 = vdwg.mxu0
        %3480 = vmatprep.subr.bf16.mxu0 %v1990
        %3481 = vmatpush1.bf16.msra.mxu0 %v1989
        %3482 = vmatprep.subr.bf16.mxu0 %v2118
        %3483 = vmatpush1.bf16.msra.mxu0 %v2117
        %3484 = vmatprep.subr.bf16.mxu0 0
        %3485 = vmatpush1.bf16.msra.mxu0 0
        %3486 = vmatprep.subr.bf16.mxu0 0
        %3487 = vmatpush1.bf16.msra.mxu0 0
        %3488 = vmatprep.subr.bf16.mxu0 0
        %3489 = vmatpush1.bf16.msra.mxu0 0
        %3490 = vmatprep.subr.bf16.mxu0 0
        %3491 = vmatpush1.bf16.msra.mxu0 0
        %3492 = vmatprep.subr.bf16.mxu0 0
        %3493 = vmatpush1.bf16.msra.mxu0 0
        %3494 = vmatprep.subr.bf16.mxu0 0
        %3495 = vmatpush1.bf16.msra.mxu0 0
        %3496 = vmatprep.subr.bf16.mxu0 0
        %3497 = vmatpush1.bf16.msra.mxu0 0
        %3498 = vmatprep.subr.bf16.mxu0 0
        %3499 = vmatpush1.bf16.msra.mxu0 0
        %3500 = vmatprep.subr.bf16.mxu0 0
        %3501 = vmatpush1.bf16.msra.mxu0 0
        %3502 = vmatprep.subr.bf16.mxu0 0
        %3503 = vmatpush1.bf16.msra.mxu0 0
        %3504 = vmatprep.subr.bf16.mxu0 0
        %3505 = vmatpush1.bf16.msra.mxu0 0
        %3506 = vmatprep.subr.bf16.mxu0 0
        %3507 = vmatpush1.bf16.msra.mxu0 0
        %3508 = vmatprep.subr.bf16.mxu0 0
        %3509 = vmatpush1.bf16.msra.mxu0 0
        %3510 = vmatprep.subr.bf16.mxu0 0
        %3511 = vmatpush1.bf16.msra.mxu0 0
        %3512 = vmatprep.mubr.bf16.mxu0 0
        %3513 = vmatmul.mubr.bf16.gmra.mrb[0].mxu0 %v2453
        %v3514 = vpop.f32.mrb[0].mxu0
        %v3515 = vadd.f32 %v734, %v3514
        %v3516 = vpop.f32.mrb[0].mxu0
        %v3517 = vadd.f32 %v738, %v3516
        %v3518 = vpop.f32.mrb[0].mxu0
        %v3519 = vpop.f32.mrb[0].mxu0
        %3520 = vdwg.mxu0
        %3521 = vmatprep.subr.bf16.mxu0 %v1992
        %3522 = vmatpush1.bf16.msra.mxu0 %v1991
        %3523 = vmatprep.subr.bf16.mxu0 %v2120
        %3524 = vmatpush1.bf16.msra.mxu0 %v2119
        %3525 = vmatprep.subr.bf16.mxu0 0
        %3526 = vmatpush1.bf16.msra.mxu0 0
        %3527 = vmatprep.subr.bf16.mxu0 0
        %3528 = vmatpush1.bf16.msra.mxu0 0
        %3529 = vmatprep.subr.bf16.mxu0 0
        %3530 = vmatpush1.bf16.msra.mxu0 0
        %3531 = vmatprep.subr.bf16.mxu0 0
        %3532 = vmatpush1.bf16.msra.mxu0 0
        %3533 = vmatprep.subr.bf16.mxu0 0
        %3534 = vmatpush1.bf16.msra.mxu0 0
        %3535 = vmatprep.subr.bf16.mxu0 0
        %3536 = vmatpush1.bf16.msra.mxu0 0
        %3537 = vmatprep.subr.bf16.mxu0 0
        %3538 = vmatpush1.bf16.msra.mxu0 0
        %3539 = vmatprep.subr.bf16.mxu0 0
        %3540 = vmatpush1.bf16.msra.mxu0 0
        %3541 = vmatprep.subr.bf16.mxu0 0
        %3542 = vmatpush1.bf16.msra.mxu0 0
        %3543 = vmatprep.subr.bf16.mxu0 0
        %3544 = vmatpush1.bf16.msra.mxu0 0
        %3545 = vmatprep.subr.bf16.mxu0 0
        %3546 = vmatpush1.bf16.msra.mxu0 0
        %3547 = vmatprep.subr.bf16.mxu0 0
        %3548 = vmatpush1.bf16.msra.mxu0 0
        %3549 = vmatprep.subr.bf16.mxu0 0
        %3550 = vmatpush1.bf16.msra.mxu0 0
        %3551 = vmatprep.subr.bf16.mxu0 0
        %3552 = vmatpush1.bf16.msra.mxu0 0
        %3553 = vmatprep.mubr.bf16.mxu0 0
        %3554 = vmatmul.mubr.bf16.gmra.mrb[0].mxu0 %v2453
        %v3555 = vpop.f32.mrb[0].mxu0
        %v3556 = vadd.f32 %v742, %v3555
        %v3557 = vpop.f32.mrb[0].mxu0
        %v3558 = vadd.f32 %v746, %v3557
        %v3559 = vpop.f32.mrb[0].mxu0
        %v3560 = vpop.f32.mrb[0].mxu0
        %3561 = vdwg.mxu0
        %3562 = vmatprep.subr.bf16.mxu0 %v1994
        %3563 = vmatpush1.bf16.msra.mxu0 %v1993
        %3564 = vmatprep.subr.bf16.mxu0 %v2122
        %3565 = vmatpush1.bf16.msra.mxu0 %v2121
        %3566 = vmatprep.subr.bf16.mxu0 0
        %3567 = vmatpush1.bf16.msra.mxu0 0
        %3568 = vmatprep.subr.bf16.mxu0 0
        %3569 = vmatpush1.bf16.msra.mxu0 0
        %3570 = vmatprep.subr.bf16.mxu0 0
        %3571 = vmatpush1.bf16.msra.mxu0 0
        %3572 = vmatprep.subr.bf16.mxu0 0
        %3573 = vmatpush1.bf16.msra.mxu0 0
        %3574 = vmatprep.subr.bf16.mxu0 0
        %3575 = vmatpush1.bf16.msra.mxu0 0
        %3576 = vmatprep.subr.bf16.mxu0 0
        %3577 = vmatpush1.bf16.msra.mxu0 0
        %3578 = vmatprep.subr.bf16.mxu0 0
        %3579 = vmatpush1.bf16.msra.mxu0 0
        %3580 = vmatprep.subr.bf16.mxu0 0
        %3581 = vmatpush1.bf16.msra.mxu0 0
        %3582 = vmatprep.subr.bf16.mxu0 0
        %3583 = vmatpush1.bf16.msra.mxu0 0
        %3584 = vmatprep.subr.bf16.mxu0 0
        %3585 = vmatpush1.bf16.msra.mxu0 0
        %3586 = vmatprep.subr.bf16.mxu0 0
        %3587 = vmatpush1.bf16.msra.mxu0 0
        %3588 = vmatprep.subr.bf16.mxu0 0
        %3589 = vmatpush1.bf16.msra.mxu0 0
        %3590 = vmatprep.subr.bf16.mxu0 0
        %3591 = vmatpush1.bf16.msra.mxu0 0
        %3592 = vmatprep.subr.bf16.mxu0 0
        %3593 = vmatpush1.bf16.msra.mxu0 0
        %3594 = vmatprep.mubr.bf16.mxu0 0
        %3595 = vmatmul.mubr.bf16.gmra.mrb[0].mxu0 %v2453
        %v3596 = vpop.f32.mrb[0].mxu0
        %v3597 = vadd.f32 %v750, %v3596
        %v3598 = vpop.f32.mrb[0].mxu0
        %v3599 = vadd.f32 %v754, %v3598
        %v3600 = vpop.f32.mrb[0].mxu0
        %v3601 = vpop.f32.mrb[0].mxu0
        %3602 = vdwg.mxu0
        %3603 = vmatprep.subr.bf16.mxu0 %v1996
        %3604 = vmatpush1.bf16.msra.mxu0 %v1995
        %3605 = vmatprep.subr.bf16.mxu0 %v2124
        %3606 = vmatpush1.bf16.msra.mxu0 %v2123
        %3607 = vmatprep.subr.bf16.mxu0 0
        %3608 = vmatpush1.bf16.msra.mxu0 0
        %3609 = vmatprep.subr.bf16.mxu0 0
        %3610 = vmatpush1.bf16.msra.mxu0 0
        %3611 = vmatprep.subr.bf16.mxu0 0
        %3612 = vmatpush1.bf16.msra.mxu0 0
        %3613 = vmatprep.subr.bf16.mxu0 0
        %3614 = vmatpush1.bf16.msra.mxu0 0
        %3615 = vmatprep.subr.bf16.mxu0 0
        %3616 = vmatpush1.bf16.msra.mxu0 0
        %3617 = vmatprep.subr.bf16.mxu0 0
        %3618 = vmatpush1.bf16.msra.mxu0 0
        %3619 = vmatprep.subr.bf16.mxu0 0
        %3620 = vmatpush1.bf16.msra.mxu0 0
        %3621 = vmatprep.subr.bf16.mxu0 0
        %3622 = vmatpush1.bf16.msra.mxu0 0
        %3623 = vmatprep.subr.bf16.mxu0 0
        %3624 = vmatpush1.bf16.msra.mxu0 0
        %3625 = vmatprep.subr.bf16.mxu0 0
        %3626 = vmatpush1.bf16.msra.mxu0 0
        %3627 = vmatprep.subr.bf16.mxu0 0
        %3628 = vmatpush1.bf16.msra.mxu0 0
        %3629 = vmatprep.subr.bf16.mxu0 0
        %3630 = vmatpush1.bf16.msra.mxu0 0
        %3631 = vmatprep.subr.bf16.mxu0 0
        %3632 = vmatpush1.bf16.msra.mxu0 0
        %3633 = vmatprep.subr.bf16.mxu0 0
        %3634 = vmatpush1.bf16.msra.mxu0 0
        %3635 = vmatprep.mubr.bf16.mxu0 0
        %3636 = vmatmul.mubr.bf16.gmra.mrb[0].mxu0 %v2453
        %v3637 = vpop.f32.mrb[0].mxu0
        %v3638 = vadd.f32 %v758, %v3637
        %v3639 = vpop.f32.mrb[0].mxu0
        %v3640 = vadd.f32 %v762, %v3639
        %v3641 = vpop.f32.mrb[0].mxu0
        %v3642 = vpop.f32.mrb[0].mxu0
        %3643 = vdwg.mxu0
        %3644 = vmatprep.subr.bf16.mxu0 %v1998
        %3645 = vmatpush1.bf16.msra.mxu0 %v1997
        %3646 = vmatprep.subr.bf16.mxu0 %v2126
        %3647 = vmatpush1.bf16.msra.mxu0 %v2125
        %3648 = vmatprep.subr.bf16.mxu0 0
        %3649 = vmatpush1.bf16.msra.mxu0 0
        %3650 = vmatprep.subr.bf16.mxu0 0
        %3651 = vmatpush1.bf16.msra.mxu0 0
        %3652 = vmatprep.subr.bf16.mxu0 0
        %3653 = vmatpush1.bf16.msra.mxu0 0
        %3654 = vmatprep.subr.bf16.mxu0 0
        %3655 = vmatpush1.bf16.msra.mxu0 0
        %3656 = vmatprep.subr.bf16.mxu0 0
        %3657 = vmatpush1.bf16.msra.mxu0 0
        %3658 = vmatprep.subr.bf16.mxu0 0
        %3659 = vmatpush1.bf16.msra.mxu0 0
        %3660 = vmatprep.subr.bf16.mxu0 0
        %3661 = vmatpush1.bf16.msra.mxu0 0
        %3662 = vmatprep.subr.bf16.mxu0 0
        %3663 = vmatpush1.bf16.msra.mxu0 0
        %3664 = vmatprep.subr.bf16.mxu0 0
        %3665 = vmatpush1.bf16.msra.mxu0 0
        %3666 = vmatprep.subr.bf16.mxu0 0
        %3667 = vmatpush1.bf16.msra.mxu0 0
        %3668 = vmatprep.subr.bf16.mxu0 0
        %3669 = vmatpush1.bf16.msra.mxu0 0
        %3670 = vmatprep.subr.bf16.mxu0 0
        %3671 = vmatpush1.bf16.msra.mxu0 0
        %3672 = vmatprep.subr.bf16.mxu0 0
        %3673 = vmatpush1.bf16.msra.mxu0 0
        %3674 = vmatprep.subr.bf16.mxu0 0
        %3675 = vmatpush1.bf16.msra.mxu0 0
        %3676 = vmatprep.mubr.bf16.mxu0 0
        %3677 = vmatmul.mubr.bf16.gmra.mrb[0].mxu0 %v2453
        %v3678 = vpop.f32.mrb[0].mxu0
        %v3679 = vadd.f32 %v766, %v3678
        %v3680 = vpop.f32.mrb[0].mxu0
        %v3681 = vadd.f32 %v770, %v3680
        %v3682 = vpop.f32.mrb[0].mxu0
        %v3683 = vpop.f32.mrb[0].mxu0
        %3684 = vdwg.mxu0
        %3685 = vmatprep.subr.bf16.mxu0 %v2000
        %3686 = vmatpush1.bf16.msra.mxu0 %v1999
        %3687 = vmatprep.subr.bf16.mxu0 %v2128
        %3688 = vmatpush1.bf16.msra.mxu0 %v2127
        %3689 = vmatprep.subr.bf16.mxu0 0
        %3690 = vmatpush1.bf16.msra.mxu0 0
        %3691 = vmatprep.subr.bf16.mxu0 0
        %3692 = vmatpush1.bf16.msra.mxu0 0
        %3693 = vmatprep.subr.bf16.mxu0 0
        %3694 = vmatpush1.bf16.msra.mxu0 0
        %3695 = vmatprep.subr.bf16.mxu0 0
        %3696 = vmatpush1.bf16.msra.mxu0 0
        %3697 = vmatprep.subr.bf16.mxu0 0
        %3698 = vmatpush1.bf16.msra.mxu0 0
        %3699 = vmatprep.subr.bf16.mxu0 0
        %3700 = vmatpush1.bf16.msra.mxu0 0
        %3701 = vmatprep.subr.bf16.mxu0 0
        %3702 = vmatpush1.bf16.msra.mxu0 0
        %3703 = vmatprep.subr.bf16.mxu0 0
        %3704 = vmatpush1.bf16.msra.mxu0 0
        %3705 = vmatprep.subr.bf16.mxu0 0
        %3706 = vmatpush1.bf16.msra.mxu0 0
        %3707 = vmatprep.subr.bf16.mxu0 0
        %3708 = vmatpush1.bf16.msra.mxu0 0
        %3709 = vmatprep.subr.bf16.mxu0 0
        %3710 = vmatpush1.bf16.msra.mxu0 0
        %3711 = vmatprep.subr.bf16.mxu0 0
        %3712 = vmatpush1.bf16.msra.mxu0 0
        %3713 = vmatprep.subr.bf16.mxu0 0
        %3714 = vmatpush1.bf16.msra.mxu0 0
        %3715 = vmatprep.subr.bf16.mxu0 0
        %3716 = vmatpush1.bf16.msra.mxu0 0
        %3717 = vmatprep.mubr.bf16.mxu0 0
        %3718 = vmatmul.mubr.bf16.gmra.mrb[0].mxu0 %v2453
        %v3719 = vpop.f32.mrb[0].mxu0
        %v3720 = vadd.f32 %v774, %v3719
        %v3721 = vpop.f32.mrb[0].mxu0
        %v3722 = vadd.f32 %v778, %v3721
        %v3723 = vpop.f32.mrb[0].mxu0
        %v3724 = vpop.f32.mrb[0].mxu0
        %3725 = vdwg.mxu0
        %3726 = vmatprep.subr.bf16.mxu0 %v2002
        %3727 = vmatpush1.bf16.msra.mxu0 %v2001
        %3728 = vmatprep.subr.bf16.mxu0 %v2130
        %3729 = vmatpush1.bf16.msra.mxu0 %v2129
        %3730 = vmatprep.subr.bf16.mxu0 0
        %3731 = vmatpush1.bf16.msra.mxu0 0
        %3732 = vmatprep.subr.bf16.mxu0 0
        %3733 = vmatpush1.bf16.msra.mxu0 0
        %3734 = vmatprep.subr.bf16.mxu0 0
        %3735 = vmatpush1.bf16.msra.mxu0 0
        %3736 = vmatprep.subr.bf16.mxu0 0
        %3737 = vmatpush1.bf16.msra.mxu0 0
        %3738 = vmatprep.subr.bf16.mxu0 0
        %3739 = vmatpush1.bf16.msra.mxu0 0
        %3740 = vmatprep.subr.bf16.mxu0 0
        %3741 = vmatpush1.bf16.msra.mxu0 0
        %3742 = vmatprep.subr.bf16.mxu0 0
        %3743 = vmatpush1.bf16.msra.mxu0 0
        %3744 = vmatprep.subr.bf16.mxu0 0
        %3745 = vmatpush1.bf16.msra.mxu0 0
        %3746 = vmatprep.subr.bf16.mxu0 0
        %3747 = vmatpush1.bf16.msra.mxu0 0
        %3748 = vmatprep.subr.bf16.mxu0 0
        %3749 = vmatpush1.bf16.msra.mxu0 0
        %3750 = vmatprep.subr.bf16.mxu0 0
        %3751 = vmatpush1.bf16.msra.mxu0 0
        %3752 = vmatprep.subr.bf16.mxu0 0
        %3753 = vmatpush1.bf16.msra.mxu0 0
        %3754 = vmatprep.subr.bf16.mxu0 0
        %3755 = vmatpush1.bf16.msra.mxu0 0
        %3756 = vmatprep.subr.bf16.mxu0 0
        %3757 = vmatpush1.bf16.msra.mxu0 0
        %3758 = vmatprep.mubr.bf16.mxu0 0
        %3759 = vmatmul.mubr.bf16.gmra.mrb[0].mxu0 %v2453
        %v3760 = vpop.f32.mrb[0].mxu0
        %v3761 = vadd.f32 %v782, %v3760
        %v3762 = vpop.f32.mrb[0].mxu0
        %v3763 = vadd.f32 %v786, %v3762
        %v3764 = vpop.f32.mrb[0].mxu0
        %v3765 = vpop.f32.mrb[0].mxu0
        %3766 = vdwg.mxu0
        %3767 = vmatprep.subr.bf16.mxu0 %v2004
        %3768 = vmatpush1.bf16.msra.mxu0 %v2003
        %3769 = vmatprep.subr.bf16.mxu0 %v2132
        %3770 = vmatpush1.bf16.msra.mxu0 %v2131
        %3771 = vmatprep.subr.bf16.mxu0 0
        %3772 = vmatpush1.bf16.msra.mxu0 0
        %3773 = vmatprep.subr.bf16.mxu0 0
        %3774 = vmatpush1.bf16.msra.mxu0 0
        %3775 = vmatprep.subr.bf16.mxu0 0
        %3776 = vmatpush1.bf16.msra.mxu0 0
        %3777 = vmatprep.subr.bf16.mxu0 0
        %3778 = vmatpush1.bf16.msra.mxu0 0
        %3779 = vmatprep.subr.bf16.mxu0 0
        %3780 = vmatpush1.bf16.msra.mxu0 0
        %3781 = vmatprep.subr.bf16.mxu0 0
        %3782 = vmatpush1.bf16.msra.mxu0 0
        %3783 = vmatprep.subr.bf16.mxu0 0
        %3784 = vmatpush1.bf16.msra.mxu0 0
        %3785 = vmatprep.subr.bf16.mxu0 0
        %3786 = vmatpush1.bf16.msra.mxu0 0
        %3787 = vmatprep.subr.bf16.mxu0 0
        %3788 = vmatpush1.bf16.msra.mxu0 0
        %3789 = vmatprep.subr.bf16.mxu0 0
        %3790 = vmatpush1.bf16.msra.mxu0 0
        %3791 = vmatprep.subr.bf16.mxu0 0
        %3792 = vmatpush1.bf16.msra.mxu0 0
        %3793 = vmatprep.subr.bf16.mxu0 0
        %3794 = vmatpush1.bf16.msra.mxu0 0
        %3795 = vmatprep.subr.bf16.mxu0 0
        %3796 = vmatpush1.bf16.msra.mxu0 0
        %3797 = vmatprep.subr.bf16.mxu0 0
        %3798 = vmatpush1.bf16.msra.mxu0 0
        %3799 = vmatprep.mubr.bf16.mxu0 0
        %3800 = vmatmul.mubr.bf16.gmra.mrb[0].mxu0 %v2453
        %v3801 = vpop.f32.mrb[0].mxu0
        %v3802 = vadd.f32 %v790, %v3801
        %v3803 = vpop.f32.mrb[0].mxu0
        %v3804 = vadd.f32 %v794, %v3803
        %v3805 = vpop.f32.mrb[0].mxu0
        %v3806 = vpop.f32.mrb[0].mxu0
        %3807 = vdwg.mxu0
        %3808 = vmatprep.subr.bf16.mxu0 %v2006
        %3809 = vmatpush1.bf16.msra.mxu0 %v2005
        %3810 = vmatprep.subr.bf16.mxu0 %v2134
        %3811 = vmatpush1.bf16.msra.mxu0 %v2133
        %3812 = vmatprep.subr.bf16.mxu0 0
        %3813 = vmatpush1.bf16.msra.mxu0 0
        %3814 = vmatprep.subr.bf16.mxu0 0
        %3815 = vmatpush1.bf16.msra.mxu0 0
        %3816 = vmatprep.subr.bf16.mxu0 0
        %3817 = vmatpush1.bf16.msra.mxu0 0
        %3818 = vmatprep.subr.bf16.mxu0 0
        %3819 = vmatpush1.bf16.msra.mxu0 0
        %3820 = vmatprep.subr.bf16.mxu0 0
        %3821 = vmatpush1.bf16.msra.mxu0 0
        %3822 = vmatprep.subr.bf16.mxu0 0
        %3823 = vmatpush1.bf16.msra.mxu0 0
        %3824 = vmatprep.subr.bf16.mxu0 0
        %3825 = vmatpush1.bf16.msra.mxu0 0
        %3826 = vmatprep.subr.bf16.mxu0 0
        %3827 = vmatpush1.bf16.msra.mxu0 0
        %3828 = vmatprep.subr.bf16.mxu0 0
        %3829 = vmatpush1.bf16.msra.mxu0 0
        %3830 = vmatprep.subr.bf16.mxu0 0
        %3831 = vmatpush1.bf16.msra.mxu0 0
        %3832 = vmatprep.subr.bf16.mxu0 0
        %3833 = vmatpush1.bf16.msra.mxu0 0
        %3834 = vmatprep.subr.bf16.mxu0 0
        %3835 = vmatpush1.bf16.msra.mxu0 0
        %3836 = vmatprep.subr.bf16.mxu0 0
        %3837 = vmatpush1.bf16.msra.mxu0 0
        %3838 = vmatprep.subr.bf16.mxu0 0
        %3839 = vmatpush1.bf16.msra.mxu0 0
        %3840 = vmatprep.mubr.bf16.mxu0 0
        %3841 = vmatmul.mubr.bf16.gmra.mrb[0].mxu0 %v2453
        %v3842 = vpop.f32.mrb[0].mxu0
        %v3843 = vadd.f32 %v798, %v3842
        %v3844 = vpop.f32.mrb[0].mxu0
        %v3845 = vadd.f32 %v802, %v3844
        %v3846 = vpop.f32.mrb[0].mxu0
        %v3847 = vpop.f32.mrb[0].mxu0
        %3848 = vdwg.mxu0
        %3849 = vmatprep.subr.bf16.mxu0 %v2008
        %3850 = vmatpush1.bf16.msra.mxu0 %v2007
        %3851 = vmatprep.subr.bf16.mxu0 %v2136
        %3852 = vmatpush1.bf16.msra.mxu0 %v2135
        %3853 = vmatprep.subr.bf16.mxu0 0
        %3854 = vmatpush1.bf16.msra.mxu0 0
        %3855 = vmatprep.subr.bf16.mxu0 0
        %3856 = vmatpush1.bf16.msra.mxu0 0
        %3857 = vmatprep.subr.bf16.mxu0 0
        %3858 = vmatpush1.bf16.msra.mxu0 0
        %3859 = vmatprep.subr.bf16.mxu0 0
        %3860 = vmatpush1.bf16.msra.mxu0 0
        %3861 = vmatprep.subr.bf16.mxu0 0
        %3862 = vmatpush1.bf16.msra.mxu0 0
        %3863 = vmatprep.subr.bf16.mxu0 0
        %3864 = vmatpush1.bf16.msra.mxu0 0
        %3865 = vmatprep.subr.bf16.mxu0 0
        %3866 = vmatpush1.bf16.msra.mxu0 0
        %3867 = vmatprep.subr.bf16.mxu0 0
        %3868 = vmatpush1.bf16.msra.mxu0 0
        %3869 = vmatprep.subr.bf16.mxu0 0
        %3870 = vmatpush1.bf16.msra.mxu0 0
        %3871 = vmatprep.subr.bf16.mxu0 0
        %3872 = vmatpush1.bf16.msra.mxu0 0
        %3873 = vmatprep.subr.bf16.mxu0 0
        %3874 = vmatpush1.bf16.msra.mxu0 0
        %3875 = vmatprep.subr.bf16.mxu0 0
        %3876 = vmatpush1.bf16.msra.mxu0 0
        %3877 = vmatprep.subr.bf16.mxu0 0
        %3878 = vmatpush1.bf16.msra.mxu0 0
        %3879 = vmatprep.subr.bf16.mxu0 0
        %3880 = vmatpush1.bf16.msra.mxu0 0
        %3881 = vmatprep.mubr.bf16.mxu0 0
        %3882 = vmatmul.mubr.bf16.gmra.mrb[0].mxu0 %v2453
        %v3883 = vpop.f32.mrb[0].mxu0
        %v3884 = vadd.f32 %v806, %v3883
        %v3885 = vpop.f32.mrb[0].mxu0
        %v3886 = vadd.f32 %v810, %v3885
        %v3887 = vpop.f32.mrb[0].mxu0
        %v3888 = vpop.f32.mrb[0].mxu0
        %3889 = vdwg.mxu0
        %3890 = vmatprep.subr.bf16.mxu0 %v2010
        %3891 = vmatpush1.bf16.msra.mxu0 %v2009
        %3892 = vmatprep.subr.bf16.mxu0 %v2138
        %3893 = vmatpush1.bf16.msra.mxu0 %v2137
        %3894 = vmatprep.subr.bf16.mxu0 0
        %3895 = vmatpush1.bf16.msra.mxu0 0
        %3896 = vmatprep.subr.bf16.mxu0 0
        %3897 = vmatpush1.bf16.msra.mxu0 0
        %3898 = vmatprep.subr.bf16.mxu0 0
        %3899 = vmatpush1.bf16.msra.mxu0 0
        %3900 = vmatprep.subr.bf16.mxu0 0
        %3901 = vmatpush1.bf16.msra.mxu0 0
        %3902 = vmatprep.subr.bf16.mxu0 0
        %3903 = vmatpush1.bf16.msra.mxu0 0
        %3904 = vmatprep.subr.bf16.mxu0 0
        %3905 = vmatpush1.bf16.msra.mxu0 0
        %3906 = vmatprep.subr.bf16.mxu0 0
        %3907 = vmatpush1.bf16.msra.mxu0 0
        %3908 = vmatprep.subr.bf16.mxu0 0
        %3909 = vmatpush1.bf16.msra.mxu0 0
        %3910 = vmatprep.subr.bf16.mxu0 0
        %3911 = vmatpush1.bf16.msra.mxu0 0
        %3912 = vmatprep.subr.bf16.mxu0 0
        %3913 = vmatpush1.bf16.msra.mxu0 0
        %3914 = vmatprep.subr.bf16.mxu0 0
        %3915 = vmatpush1.bf16.msra.mxu0 0
        %3916 = vmatprep.subr.bf16.mxu0 0
        %3917 = vmatpush1.bf16.msra.mxu0 0
        %3918 = vmatprep.subr.bf16.mxu0 0
        %3919 = vmatpush1.bf16.msra.mxu0 0
        %3920 = vmatprep.subr.bf16.mxu0 0
        %3921 = vmatpush1.bf16.msra.mxu0 0
        %3922 = vmatprep.mubr.bf16.mxu0 0
        %3923 = vmatmul.mubr.bf16.gmra.mrb[0].mxu0 %v2453
        %v3924 = vpop.f32.mrb[0].mxu0
        %v3925 = vadd.f32 %v814, %v3924
        %v3926 = vpop.f32.mrb[0].mxu0
        %v3927 = vadd.f32 %v818, %v3926
        %v3928 = vpop.f32.mrb[0].mxu0
        %v3929 = vpop.f32.mrb[0].mxu0
        %3930 = vdwg.mxu0
        %3931 = vmatprep.subr.bf16.mxu0 %v2012
        %3932 = vmatpush1.bf16.msra.mxu0 %v2011
        %3933 = vmatprep.subr.bf16.mxu0 %v2140
        %3934 = vmatpush1.bf16.msra.mxu0 %v2139
        %3935 = vmatprep.subr.bf16.mxu0 0
        %3936 = vmatpush1.bf16.msra.mxu0 0
        %3937 = vmatprep.subr.bf16.mxu0 0
        %3938 = vmatpush1.bf16.msra.mxu0 0
        %3939 = vmatprep.subr.bf16.mxu0 0
        %3940 = vmatpush1.bf16.msra.mxu0 0
        %3941 = vmatprep.subr.bf16.mxu0 0
        %3942 = vmatpush1.bf16.msra.mxu0 0
        %3943 = vmatprep.subr.bf16.mxu0 0
        %3944 = vmatpush1.bf16.msra.mxu0 0
        %3945 = vmatprep.subr.bf16.mxu0 0
        %3946 = vmatpush1.bf16.msra.mxu0 0
        %3947 = vmatprep.subr.bf16.mxu0 0
        %3948 = vmatpush1.bf16.msra.mxu0 0
        %3949 = vmatprep.subr.bf16.mxu0 0
        %3950 = vmatpush1.bf16.msra.mxu0 0
        %3951 = vmatprep.subr.bf16.mxu0 0
        %3952 = vmatpush1.bf16.msra.mxu0 0
        %3953 = vmatprep.subr.bf16.mxu0 0
        %3954 = vmatpush1.bf16.msra.mxu0 0
        %3955 = vmatprep.subr.bf16.mxu0 0
        %3956 = vmatpush1.bf16.msra.mxu0 0
        %3957 = vmatprep.subr.bf16.mxu0 0
        %3958 = vmatpush1.bf16.msra.mxu0 0
        %3959 = vmatprep.subr.bf16.mxu0 0
        %3960 = vmatpush1.bf16.msra.mxu0 0
        %3961 = vmatprep.subr.bf16.mxu0 0
        %3962 = vmatpush1.bf16.msra.mxu0 0
        %3963 = vmatprep.mubr.bf16.mxu0 0
        %3964 = vmatmul.mubr.bf16.gmra.mrb[0].mxu0 %v2453
        %v3965 = vpop.f32.mrb[0].mxu0
        %v3966 = vadd.f32 %v822, %v3965
        %v3967 = vpop.f32.mrb[0].mxu0
        %v3968 = vadd.f32 %v826, %v3967
        %v3969 = vpop.f32.mrb[0].mxu0
        %v3970 = vpop.f32.mrb[0].mxu0
        %3971 = vdwg.mxu0
        %3972 = vmatprep.subr.bf16.mxu0 %v2014
        %3973 = vmatpush1.bf16.msra.mxu0 %v2013
        %3974 = vmatprep.subr.bf16.mxu0 %v2142
        %3975 = vmatpush1.bf16.msra.mxu0 %v2141
        %3976 = vmatprep.subr.bf16.mxu0 0
        %3977 = vmatpush1.bf16.msra.mxu0 0
        %3978 = vmatprep.subr.bf16.mxu0 0
        %3979 = vmatpush1.bf16.msra.mxu0 0
        %3980 = vmatprep.subr.bf16.mxu0 0
        %3981 = vmatpush1.bf16.msra.mxu0 0
        %3982 = vmatprep.subr.bf16.mxu0 0
        %3983 = vmatpush1.bf16.msra.mxu0 0
        %3984 = vmatprep.subr.bf16.mxu0 0
        %3985 = vmatpush1.bf16.msra.mxu0 0
        %3986 = vmatprep.subr.bf16.mxu0 0
        %3987 = vmatpush1.bf16.msra.mxu0 0
        %3988 = vmatprep.subr.bf16.mxu0 0
        %3989 = vmatpush1.bf16.msra.mxu0 0
        %3990 = vmatprep.subr.bf16.mxu0 0
        %3991 = vmatpush1.bf16.msra.mxu0 0
        %3992 = vmatprep.subr.bf16.mxu0 0
        %3993 = vmatpush1.bf16.msra.mxu0 0
        %3994 = vmatprep.subr.bf16.mxu0 0
        %3995 = vmatpush1.bf16.msra.mxu0 0
        %3996 = vmatprep.subr.bf16.mxu0 0
        %3997 = vmatpush1.bf16.msra.mxu0 0
        %3998 = vmatprep.subr.bf16.mxu0 0
        %3999 = vmatpush1.bf16.msra.mxu0 0
        %4000 = vmatprep.subr.bf16.mxu0 0
        %4001 = vmatpush1.bf16.msra.mxu0 0
        %4002 = vmatprep.subr.bf16.mxu0 0
        %4003 = vmatpush1.bf16.msra.mxu0 0
        %4004 = vmatprep.mubr.bf16.mxu0 0
        %4005 = vmatmul.mubr.bf16.gmra.mrb[0].mxu0 %v2453
        %v4006 = vpop.f32.mrb[0].mxu0
        %v4007 = vadd.f32 %v830, %v4006
        %v4008 = vpop.f32.mrb[0].mxu0
        %v4009 = vadd.f32 %v834, %v4008
        %v4010 = vpop.f32.mrb[0].mxu0
        %v4011 = vpop.f32.mrb[0].mxu0
        %4012 = vdwg.mxu0
        %4013 = vmatprep.subr.bf16.mxu0 %v2016
        %4014 = vmatpush1.bf16.msra.mxu0 %v2015
        %4015 = vmatprep.subr.bf16.mxu0 %v2144
        %4016 = vmatpush1.bf16.msra.mxu0 %v2143
        %4017 = vmatprep.subr.bf16.mxu0 0
        %4018 = vmatpush1.bf16.msra.mxu0 0
        %4019 = vmatprep.subr.bf16.mxu0 0
        %4020 = vmatpush1.bf16.msra.mxu0 0
        %4021 = vmatprep.subr.bf16.mxu0 0
        %4022 = vmatpush1.bf16.msra.mxu0 0
        %4023 = vmatprep.subr.bf16.mxu0 0
        %4024 = vmatpush1.bf16.msra.mxu0 0
        %4025 = vmatprep.subr.bf16.mxu0 0
        %4026 = vmatpush1.bf16.msra.mxu0 0
        %4027 = vmatprep.subr.bf16.mxu0 0
        %4028 = vmatpush1.bf16.msra.mxu0 0
        %4029 = vmatprep.subr.bf16.mxu0 0
        %4030 = vmatpush1.bf16.msra.mxu0 0
        %4031 = vmatprep.subr.bf16.mxu0 0
        %4032 = vmatpush1.bf16.msra.mxu0 0
        %4033 = vmatprep.subr.bf16.mxu0 0
        %4034 = vmatpush1.bf16.msra.mxu0 0
        %4035 = vmatprep.subr.bf16.mxu0 0
        %4036 = vmatpush1.bf16.msra.mxu0 0
        %4037 = vmatprep.subr.bf16.mxu0 0
        %4038 = vmatpush1.bf16.msra.mxu0 0
        %4039 = vmatprep.subr.bf16.mxu0 0
        %4040 = vmatpush1.bf16.msra.mxu0 0
        %4041 = vmatprep.subr.bf16.mxu0 0
        %4042 = vmatpush1.bf16.msra.mxu0 0
        %4043 = vmatprep.subr.bf16.mxu0 0
        %4044 = vmatpush1.bf16.msra.mxu0 0
        %4045 = vmatprep.mubr.bf16.mxu0 0
        %4046 = vmatmul.mubr.bf16.gmra.mrb[0].mxu0 %v2453
        %v4047 = vpop.f32.mrb[0].mxu0
        %v4048 = vadd.f32 %v838, %v4047
        %v4049 = vpop.f32.mrb[0].mxu0
        %v4050 = vadd.f32 %v842, %v4049
        %v4051 = vpop.f32.mrb[0].mxu0
        %v4052 = vpop.f32.mrb[0].mxu0
        %4053 = vdwg.mxu0
        %4054 = vmatprep.subr.bf16.mxu0 %v2018
        %4055 = vmatpush1.bf16.msra.mxu0 %v2017
        %4056 = vmatprep.subr.bf16.mxu0 %v2146
        %4057 = vmatpush1.bf16.msra.mxu0 %v2145
        %4058 = vmatprep.subr.bf16.mxu0 0
        %4059 = vmatpush1.bf16.msra.mxu0 0
        %4060 = vmatprep.subr.bf16.mxu0 0
        %4061 = vmatpush1.bf16.msra.mxu0 0
        %4062 = vmatprep.subr.bf16.mxu0 0
        %4063 = vmatpush1.bf16.msra.mxu0 0
        %4064 = vmatprep.subr.bf16.mxu0 0
        %4065 = vmatpush1.bf16.msra.mxu0 0
        %4066 = vmatprep.subr.bf16.mxu0 0
        %4067 = vmatpush1.bf16.msra.mxu0 0
        %4068 = vmatprep.subr.bf16.mxu0 0
        %4069 = vmatpush1.bf16.msra.mxu0 0
        %4070 = vmatprep.subr.bf16.mxu0 0
        %4071 = vmatpush1.bf16.msra.mxu0 0
        %4072 = vmatprep.subr.bf16.mxu0 0
        %4073 = vmatpush1.bf16.msra.mxu0 0
        %4074 = vmatprep.subr.bf16.mxu0 0
        %4075 = vmatpush1.bf16.msra.mxu0 0
        %4076 = vmatprep.subr.bf16.mxu0 0
        %4077 = vmatpush1.bf16.msra.mxu0 0
        %4078 = vmatprep.subr.bf16.mxu0 0
        %4079 = vmatpush1.bf16.msra.mxu0 0
        %4080 = vmatprep.subr.bf16.mxu0 0
        %4081 = vmatpush1.bf16.msra.mxu0 0
        %4082 = vmatprep.subr.bf16.mxu0 0
        %4083 = vmatpush1.bf16.msra.mxu0 0
        %4084 = vmatprep.subr.bf16.mxu0 0
        %4085 = vmatpush1.bf16.msra.mxu0 0
        %4086 = vmatprep.mubr.bf16.mxu0 0
        %4087 = vmatmul.mubr.bf16.gmra.mrb[0].mxu0 %v2453
        %v4088 = vpop.f32.mrb[0].mxu0
        %v4089 = vadd.f32 %v846, %v4088
        %v4090 = vpop.f32.mrb[0].mxu0
        %v4091 = vadd.f32 %v850, %v4090
        %v4092 = vpop.f32.mrb[0].mxu0
        %v4093 = vpop.f32.mrb[0].mxu0
        %4094 = vdwg.mxu0
        %4095 = vmatprep.subr.bf16.mxu0 %v2020
        %4096 = vmatpush1.bf16.msra.mxu0 %v2019
        %4097 = vmatprep.subr.bf16.mxu0 %v2148
        %4098 = vmatpush1.bf16.msra.mxu0 %v2147
        %4099 = vmatprep.subr.bf16.mxu0 0
        %4100 = vmatpush1.bf16.msra.mxu0 0
        %4101 = vmatprep.subr.bf16.mxu0 0
        %4102 = vmatpush1.bf16.msra.mxu0 0
        %4103 = vmatprep.subr.bf16.mxu0 0
        %4104 = vmatpush1.bf16.msra.mxu0 0
        %4105 = vmatprep.subr.bf16.mxu0 0
        %4106 = vmatpush1.bf16.msra.mxu0 0
        %4107 = vmatprep.subr.bf16.mxu0 0
        %4108 = vmatpush1.bf16.msra.mxu0 0
        %4109 = vmatprep.subr.bf16.mxu0 0
        %4110 = vmatpush1.bf16.msra.mxu0 0
        %4111 = vmatprep.subr.bf16.mxu0 0
        %4112 = vmatpush1.bf16.msra.mxu0 0
        %4113 = vmatprep.subr.bf16.mxu0 0
        %4114 = vmatpush1.bf16.msra.mxu0 0
        %4115 = vmatprep.subr.bf16.mxu0 0
        %4116 = vmatpush1.bf16.msra.mxu0 0
        %4117 = vmatprep.subr.bf16.mxu0 0
        %4118 = vmatpush1.bf16.msra.mxu0 0
        %4119 = vmatprep.subr.bf16.mxu0 0
        %4120 = vmatpush1.bf16.msra.mxu0 0
        %4121 = vmatprep.subr.bf16.mxu0 0
        %4122 = vmatpush1.bf16.msra.mxu0 0
        %4123 = vmatprep.subr.bf16.mxu0 0
        %4124 = vmatpush1.bf16.msra.mxu0 0
        %4125 = vmatprep.subr.bf16.mxu0 0
        %4126 = vmatpush1.bf16.msra.mxu0 0
        %4127 = vmatprep.mubr.bf16.mxu0 0
        %4128 = vmatmul.mubr.bf16.gmra.mrb[0].mxu0 %v2453
        %v4129 = vpop.f32.mrb[0].mxu0
        %v4130 = vadd.f32 %v854, %v4129
        %v4131 = vpop.f32.mrb[0].mxu0
        %v4132 = vadd.f32 %v858, %v4131
        %v4133 = vpop.f32.mrb[0].mxu0
        %v4134 = vpop.f32.mrb[0].mxu0
        %4135 = vdwg.mxu0
        %4136 = vmatprep.subr.bf16.mxu0 %v2022
        %4137 = vmatpush1.bf16.msra.mxu0 %v2021
        %4138 = vmatprep.subr.bf16.mxu0 %v2150
        %4139 = vmatpush1.bf16.msra.mxu0 %v2149
        %4140 = vmatprep.subr.bf16.mxu0 0
        %4141 = vmatpush1.bf16.msra.mxu0 0
        %4142 = vmatprep.subr.bf16.mxu0 0
        %4143 = vmatpush1.bf16.msra.mxu0 0
        %4144 = vmatprep.subr.bf16.mxu0 0
        %4145 = vmatpush1.bf16.msra.mxu0 0
        %4146 = vmatprep.subr.bf16.mxu0 0
        %4147 = vmatpush1.bf16.msra.mxu0 0
        %4148 = vmatprep.subr.bf16.mxu0 0
        %4149 = vmatpush1.bf16.msra.mxu0 0
        %4150 = vmatprep.subr.bf16.mxu0 0
        %4151 = vmatpush1.bf16.msra.mxu0 0
        %4152 = vmatprep.subr.bf16.mxu0 0
        %4153 = vmatpush1.bf16.msra.mxu0 0
        %4154 = vmatprep.subr.bf16.mxu0 0
        %4155 = vmatpush1.bf16.msra.mxu0 0
        %4156 = vmatprep.subr.bf16.mxu0 0
        %4157 = vmatpush1.bf16.msra.mxu0 0
        %4158 = vmatprep.subr.bf16.mxu0 0
        %4159 = vmatpush1.bf16.msra.mxu0 0
        %4160 = vmatprep.subr.bf16.mxu0 0
        %4161 = vmatpush1.bf16.msra.mxu0 0
        %4162 = vmatprep.subr.bf16.mxu0 0
        %4163 = vmatpush1.bf16.msra.mxu0 0
        %4164 = vmatprep.subr.bf16.mxu0 0
        %4165 = vmatpush1.bf16.msra.mxu0 0
        %4166 = vmatprep.subr.bf16.mxu0 0
        %4167 = vmatpush1.bf16.msra.mxu0 0
        %4168 = vmatprep.mubr.bf16.mxu0 0
        %4169 = vmatmul.mubr.bf16.gmra.mrb[0].mxu0 %v2453
        %v4170 = vpop.f32.mrb[0].mxu0
        %v4171 = vadd.f32 %v862, %v4170
        %v4172 = vpop.f32.mrb[0].mxu0
        %v4173 = vadd.f32 %v866, %v4172
        %v4174 = vpop.f32.mrb[0].mxu0
        %v4175 = vpop.f32.mrb[0].mxu0
        %4176 = vdwg.mxu0
        %4177 = vmatprep.subr.bf16.mxu0 %v2024
        %4178 = vmatpush1.bf16.msra.mxu0 %v2023
        %4179 = vmatprep.subr.bf16.mxu0 %v2152
        %4180 = vmatpush1.bf16.msra.mxu0 %v2151
        %4181 = vmatprep.subr.bf16.mxu0 0
        %4182 = vmatpush1.bf16.msra.mxu0 0
        %4183 = vmatprep.subr.bf16.mxu0 0
        %4184 = vmatpush1.bf16.msra.mxu0 0
        %4185 = vmatprep.subr.bf16.mxu0 0
        %4186 = vmatpush1.bf16.msra.mxu0 0
        %4187 = vmatprep.subr.bf16.mxu0 0
        %4188 = vmatpush1.bf16.msra.mxu0 0
        %4189 = vmatprep.subr.bf16.mxu0 0
        %4190 = vmatpush1.bf16.msra.mxu0 0
        %4191 = vmatprep.subr.bf16.mxu0 0
        %4192 = vmatpush1.bf16.msra.mxu0 0
        %4193 = vmatprep.subr.bf16.mxu0 0
        %4194 = vmatpush1.bf16.msra.mxu0 0
        %4195 = vmatprep.subr.bf16.mxu0 0
        %4196 = vmatpush1.bf16.msra.mxu0 0
        %4197 = vmatprep.subr.bf16.mxu0 0
        %4198 = vmatpush1.bf16.msra.mxu0 0
        %4199 = vmatprep.subr.bf16.mxu0 0
        %4200 = vmatpush1.bf16.msra.mxu0 0
        %4201 = vmatprep.subr.bf16.mxu0 0
        %4202 = vmatpush1.bf16.msra.mxu0 0
        %4203 = vmatprep.subr.bf16.mxu0 0
        %4204 = vmatpush1.bf16.msra.mxu0 0
        %4205 = vmatprep.subr.bf16.mxu0 0
        %4206 = vmatpush1.bf16.msra.mxu0 0
        %4207 = vmatprep.subr.bf16.mxu0 0
        %4208 = vmatpush1.bf16.msra.mxu0 0
        %4209 = vmatprep.mubr.bf16.mxu0 0
        %4210 = vmatmul.mubr.bf16.gmra.mrb[0].mxu0 %v2453
        %v4211 = vpop.f32.mrb[0].mxu0
        %v4212 = vadd.f32 %v870, %v4211
        %v4213 = vpop.f32.mrb[0].mxu0
        %v4214 = vadd.f32 %v874, %v4213
        %v4215 = vpop.f32.mrb[0].mxu0
        %v4216 = vpop.f32.mrb[0].mxu0
        %4217 = vdwg.mxu0
        %4218 = vmatprep.subr.bf16.mxu0 %v2026
        %4219 = vmatpush1.bf16.msra.mxu0 %v2025
        %4220 = vmatprep.subr.bf16.mxu0 %v2154
        %4221 = vmatpush1.bf16.msra.mxu0 %v2153
        %4222 = vmatprep.subr.bf16.mxu0 0
        %4223 = vmatpush1.bf16.msra.mxu0 0
        %4224 = vmatprep.subr.bf16.mxu0 0
        %4225 = vmatpush1.bf16.msra.mxu0 0
        %4226 = vmatprep.subr.bf16.mxu0 0
        %4227 = vmatpush1.bf16.msra.mxu0 0
        %4228 = vmatprep.subr.bf16.mxu0 0
        %4229 = vmatpush1.bf16.msra.mxu0 0
        %4230 = vmatprep.subr.bf16.mxu0 0
        %4231 = vmatpush1.bf16.msra.mxu0 0
        %4232 = vmatprep.subr.bf16.mxu0 0
        %4233 = vmatpush1.bf16.msra.mxu0 0
        %4234 = vmatprep.subr.bf16.mxu0 0
        %4235 = vmatpush1.bf16.msra.mxu0 0
        %4236 = vmatprep.subr.bf16.mxu0 0
        %4237 = vmatpush1.bf16.msra.mxu0 0
        %4238 = vmatprep.subr.bf16.mxu0 0
        %4239 = vmatpush1.bf16.msra.mxu0 0
        %4240 = vmatprep.subr.bf16.mxu0 0
        %4241 = vmatpush1.bf16.msra.mxu0 0
        %4242 = vmatprep.subr.bf16.mxu0 0
        %4243 = vmatpush1.bf16.msra.mxu0 0
        %4244 = vmatprep.subr.bf16.mxu0 0
        %4245 = vmatpush1.bf16.msra.mxu0 0
        %4246 = vmatprep.subr.bf16.mxu0 0
        %4247 = vmatpush1.bf16.msra.mxu0 0
        %4248 = vmatprep.subr.bf16.mxu0 0
        %4249 = vmatpush1.bf16.msra.mxu0 0
        %4250 = vmatprep.mubr.bf16.mxu0 0
        %4251 = vmatmul.mubr.bf16.gmra.mrb[0].mxu0 %v2453
        %v4252 = vpop.f32.mrb[0].mxu0
        %v4253 = vadd.f32 %v878, %v4252
        %v4254 = vpop.f32.mrb[0].mxu0
        %v4255 = vadd.f32 %v882, %v4254
        %v4256 = vpop.f32.mrb[0].mxu0
        %v4257 = vpop.f32.mrb[0].mxu0
        %4258 = vdwg.mxu0
        %4259 = vmatprep.subr.bf16.mxu0 %v2028
        %4260 = vmatpush1.bf16.msra.mxu0 %v2027
        %4261 = vmatprep.subr.bf16.mxu0 %v2156
        %4262 = vmatpush1.bf16.msra.mxu0 %v2155
        %4263 = vmatprep.subr.bf16.mxu0 0
        %4264 = vmatpush1.bf16.msra.mxu0 0
        %4265 = vmatprep.subr.bf16.mxu0 0
        %4266 = vmatpush1.bf16.msra.mxu0 0
        %4267 = vmatprep.subr.bf16.mxu0 0
        %4268 = vmatpush1.bf16.msra.mxu0 0
        %4269 = vmatprep.subr.bf16.mxu0 0
        %4270 = vmatpush1.bf16.msra.mxu0 0
        %4271 = vmatprep.subr.bf16.mxu0 0
        %4272 = vmatpush1.bf16.msra.mxu0 0
        %4273 = vmatprep.subr.bf16.mxu0 0
        %4274 = vmatpush1.bf16.msra.mxu0 0
        %4275 = vmatprep.subr.bf16.mxu0 0
        %4276 = vmatpush1.bf16.msra.mxu0 0
        %4277 = vmatprep.subr.bf16.mxu0 0
        %4278 = vmatpush1.bf16.msra.mxu0 0
        %4279 = vmatprep.subr.bf16.mxu0 0
        %4280 = vmatpush1.bf16.msra.mxu0 0
        %4281 = vmatprep.subr.bf16.mxu0 0
        %4282 = vmatpush1.bf16.msra.mxu0 0
        %4283 = vmatprep.subr.bf16.mxu0 0
        %4284 = vmatpush1.bf16.msra.mxu0 0
        %4285 = vmatprep.subr.bf16.mxu0 0
        %4286 = vmatpush1.bf16.msra.mxu0 0
        %4287 = vmatprep.subr.bf16.mxu0 0
        %4288 = vmatpush1.bf16.msra.mxu0 0
        %4289 = vmatprep.subr.bf16.mxu0 0
        %4290 = vmatpush1.bf16.msra.mxu0 0
        %4291 = vmatprep.mubr.bf16.mxu0 0
        %4292 = vmatmul.mubr.bf16.gmra.mrb[0].mxu0 %v2453
        %v4293 = vpop.f32.mrb[0].mxu0
        %v4294 = vadd.f32 %v886, %v4293
        %v4295 = vpop.f32.mrb[0].mxu0
        %v4296 = vadd.f32 %v890, %v4295
        %v4297 = vpop.f32.mrb[0].mxu0
        %v4298 = vpop.f32.mrb[0].mxu0
        %4299 = vdwg.mxu0
        %4300 = vmatprep.subr.bf16.mxu0 %v2030
        %4301 = vmatpush1.bf16.msra.mxu0 %v2029
        %4302 = vmatprep.subr.bf16.mxu0 %v2158
        %4303 = vmatpush1.bf16.msra.mxu0 %v2157
        %4304 = vmatprep.subr.bf16.mxu0 0
        %4305 = vmatpush1.bf16.msra.mxu0 0
        %4306 = vmatprep.subr.bf16.mxu0 0
        %4307 = vmatpush1.bf16.msra.mxu0 0
        %4308 = vmatprep.subr.bf16.mxu0 0
        %4309 = vmatpush1.bf16.msra.mxu0 0
        %4310 = vmatprep.subr.bf16.mxu0 0
        %4311 = vmatpush1.bf16.msra.mxu0 0
        %4312 = vmatprep.subr.bf16.mxu0 0
        %4313 = vmatpush1.bf16.msra.mxu0 0
        %4314 = vmatprep.subr.bf16.mxu0 0
        %4315 = vmatpush1.bf16.msra.mxu0 0
        %4316 = vmatprep.subr.bf16.mxu0 0
        %4317 = vmatpush1.bf16.msra.mxu0 0
        %4318 = vmatprep.subr.bf16.mxu0 0
        %4319 = vmatpush1.bf16.msra.mxu0 0
        %4320 = vmatprep.subr.bf16.mxu0 0
        %4321 = vmatpush1.bf16.msra.mxu0 0
        %4322 = vmatprep.subr.bf16.mxu0 0
        %4323 = vmatpush1.bf16.msra.mxu0 0
        %4324 = vmatprep.subr.bf16.mxu0 0
        %4325 = vmatpush1.bf16.msra.mxu0 0
        %4326 = vmatprep.subr.bf16.mxu0 0
        %4327 = vmatpush1.bf16.msra.mxu0 0
        %4328 = vmatprep.subr.bf16.mxu0 0
        %4329 = vmatpush1.bf16.msra.mxu0 0
        %4330 = vmatprep.subr.bf16.mxu0 0
        %4331 = vmatpush1.bf16.msra.mxu0 0
        %4332 = vmatprep.mubr.bf16.mxu0 0
        %4333 = vmatmul.mubr.bf16.gmra.mrb[0].mxu0 %v2453
        %v4334 = vpop.f32.mrb[0].mxu0
        %v4335 = vadd.f32 %v894, %v4334
        %v4336 = vpop.f32.mrb[0].mxu0
        %v4337 = vadd.f32 %v898, %v4336
        %v4338 = vpop.f32.mrb[0].mxu0
        %v4339 = vpop.f32.mrb[0].mxu0
        %4340 = vdwg.mxu0
        %4341 = vmatprep.subr.bf16.mxu0 %v2032
        %4342 = vmatpush1.bf16.msra.mxu0 %v2031
        %4343 = vmatprep.subr.bf16.mxu0 %v2160
        %4344 = vmatpush1.bf16.msra.mxu0 %v2159
        %4345 = vmatprep.subr.bf16.mxu0 0
        %4346 = vmatpush1.bf16.msra.mxu0 0
        %4347 = vmatprep.subr.bf16.mxu0 0
        %4348 = vmatpush1.bf16.msra.mxu0 0
        %4349 = vmatprep.subr.bf16.mxu0 0
        %4350 = vmatpush1.bf16.msra.mxu0 0
        %4351 = vmatprep.subr.bf16.mxu0 0
        %4352 = vmatpush1.bf16.msra.mxu0 0
        %4353 = vmatprep.subr.bf16.mxu0 0
        %4354 = vmatpush1.bf16.msra.mxu0 0
        %4355 = vmatprep.subr.bf16.mxu0 0
        %4356 = vmatpush1.bf16.msra.mxu0 0
        %4357 = vmatprep.subr.bf16.mxu0 0
        %4358 = vmatpush1.bf16.msra.mxu0 0
        %4359 = vmatprep.subr.bf16.mxu0 0
        %4360 = vmatpush1.bf16.msra.mxu0 0
        %4361 = vmatprep.subr.bf16.mxu0 0
        %4362 = vmatpush1.bf16.msra.mxu0 0
        %4363 = vmatprep.subr.bf16.mxu0 0
        %4364 = vmatpush1.bf16.msra.mxu0 0
        %4365 = vmatprep.subr.bf16.mxu0 0
        %4366 = vmatpush1.bf16.msra.mxu0 0
        %4367 = vmatprep.subr.bf16.mxu0 0
        %4368 = vmatpush1.bf16.msra.mxu0 0
        %4369 = vmatprep.subr.bf16.mxu0 0
        %4370 = vmatpush1.bf16.msra.mxu0 0
        %4371 = vmatprep.subr.bf16.mxu0 0
        %4372 = vmatpush1.bf16.msra.mxu0 0
        %4373 = vmatprep.mubr.bf16.mxu0 0
        %4374 = vmatmul.mubr.bf16.gmra.mrb[0].mxu0 %v2453
        %v4375 = vpop.f32.mrb[0].mxu0
        %v4376 = vadd.f32 %v902, %v4375
        %v4377 = vpop.f32.mrb[0].mxu0
        %v4378 = vadd.f32 %v906, %v4377
        %v4379 = vpop.f32.mrb[0].mxu0
        %v4380 = vpop.f32.mrb[0].mxu0
        %4381 = vdwg.mxu0
        %4382 = vmatprep.subr.bf16.mxu0 %v2034
        %4383 = vmatpush1.bf16.msra.mxu0 %v2033
        %4384 = vmatprep.subr.bf16.mxu0 %v2162
        %4385 = vmatpush1.bf16.msra.mxu0 %v2161
        %4386 = vmatprep.subr.bf16.mxu0 0
        %4387 = vmatpush1.bf16.msra.mxu0 0
        %4388 = vmatprep.subr.bf16.mxu0 0
        %4389 = vmatpush1.bf16.msra.mxu0 0
        %4390 = vmatprep.subr.bf16.mxu0 0
        %4391 = vmatpush1.bf16.msra.mxu0 0
        %4392 = vmatprep.subr.bf16.mxu0 0
        %4393 = vmatpush1.bf16.msra.mxu0 0
        %4394 = vmatprep.subr.bf16.mxu0 0
        %4395 = vmatpush1.bf16.msra.mxu0 0
        %4396 = vmatprep.subr.bf16.mxu0 0
        %4397 = vmatpush1.bf16.msra.mxu0 0
        %4398 = vmatprep.subr.bf16.mxu0 0
        %4399 = vmatpush1.bf16.msra.mxu0 0
        %4400 = vmatprep.subr.bf16.mxu0 0
        %4401 = vmatpush1.bf16.msra.mxu0 0
        %4402 = vmatprep.subr.bf16.mxu0 0
        %4403 = vmatpush1.bf16.msra.mxu0 0
        %4404 = vmatprep.subr.bf16.mxu0 0
        %4405 = vmatpush1.bf16.msra.mxu0 0
        %4406 = vmatprep.subr.bf16.mxu0 0
        %4407 = vmatpush1.bf16.msra.mxu0 0
        %4408 = vmatprep.subr.bf16.mxu0 0
        %4409 = vmatpush1.bf16.msra.mxu0 0
        %4410 = vmatprep.subr.bf16.mxu0 0
        %4411 = vmatpush1.bf16.msra.mxu0 0
        %4412 = vmatprep.subr.bf16.mxu0 0
        %4413 = vmatpush1.bf16.msra.mxu0 0
        %4414 = vmatprep.mubr.bf16.mxu0 0
        %4415 = vmatmul.mubr.bf16.gmra.mrb[0].mxu0 %v2453
        %v4416 = vpop.f32.mrb[0].mxu0
        %v4417 = vadd.f32 %v910, %v4416
        %v4418 = vpop.f32.mrb[0].mxu0
        %v4419 = vadd.f32 %v914, %v4418
        %v4420 = vpop.f32.mrb[0].mxu0
        %v4421 = vpop.f32.mrb[0].mxu0
        %4422 = vdwg.mxu0
        %4423 = vmatprep.subr.bf16.mxu0 %v2036
        %4424 = vmatpush1.bf16.msra.mxu0 %v2035
        %4425 = vmatprep.subr.bf16.mxu0 %v2164
        %4426 = vmatpush1.bf16.msra.mxu0 %v2163
        %4427 = vmatprep.subr.bf16.mxu0 0
        %4428 = vmatpush1.bf16.msra.mxu0 0
        %4429 = vmatprep.subr.bf16.mxu0 0
        %4430 = vmatpush1.bf16.msra.mxu0 0
        %4431 = vmatprep.subr.bf16.mxu0 0
        %4432 = vmatpush1.bf16.msra.mxu0 0
        %4433 = vmatprep.subr.bf16.mxu0 0
        %4434 = vmatpush1.bf16.msra.mxu0 0
        %4435 = vmatprep.subr.bf16.mxu0 0
        %4436 = vmatpush1.bf16.msra.mxu0 0
        %4437 = vmatprep.subr.bf16.mxu0 0
        %4438 = vmatpush1.bf16.msra.mxu0 0
        %4439 = vmatprep.subr.bf16.mxu0 0
        %4440 = vmatpush1.bf16.msra.mxu0 0
        %4441 = vmatprep.subr.bf16.mxu0 0
        %4442 = vmatpush1.bf16.msra.mxu0 0
        %4443 = vmatprep.subr.bf16.mxu0 0
        %4444 = vmatpush1.bf16.msra.mxu0 0
        %4445 = vmatprep.subr.bf16.mxu0 0
        %4446 = vmatpush1.bf16.msra.mxu0 0
        %4447 = vmatprep.subr.bf16.mxu0 0
        %4448 = vmatpush1.bf16.msra.mxu0 0
        %4449 = vmatprep.subr.bf16.mxu0 0
        %4450 = vmatpush1.bf16.msra.mxu0 0
        %4451 = vmatprep.subr.bf16.mxu0 0
        %4452 = vmatpush1.bf16.msra.mxu0 0
        %4453 = vmatprep.subr.bf16.mxu0 0
        %4454 = vmatpush1.bf16.msra.mxu0 0
        %4455 = vmatprep.mubr.bf16.mxu0 0
        %4456 = vmatmul.mubr.bf16.gmra.mrb[0].mxu0 %v2453
        %v4457 = vpop.f32.mrb[0].mxu0
        %v4458 = vadd.f32 %v918, %v4457
        %v4459 = vpop.f32.mrb[0].mxu0
        %v4460 = vadd.f32 %v922, %v4459
        %v4461 = vpop.f32.mrb[0].mxu0
        %v4462 = vpop.f32.mrb[0].mxu0
        %4463 = vdwg.mxu0
        %4464 = vmatprep.subr.bf16.mxu0 %v2038
        %4465 = vmatpush1.bf16.msra.mxu0 %v2037
        %4466 = vmatprep.subr.bf16.mxu0 %v2166
        %4467 = vmatpush1.bf16.msra.mxu0 %v2165
        %4468 = vmatprep.subr.bf16.mxu0 0
        %4469 = vmatpush1.bf16.msra.mxu0 0
        %4470 = vmatprep.subr.bf16.mxu0 0
        %4471 = vmatpush1.bf16.msra.mxu0 0
        %4472 = vmatprep.subr.bf16.mxu0 0
        %4473 = vmatpush1.bf16.msra.mxu0 0
        %4474 = vmatprep.subr.bf16.mxu0 0
        %4475 = vmatpush1.bf16.msra.mxu0 0
        %4476 = vmatprep.subr.bf16.mxu0 0
        %4477 = vmatpush1.bf16.msra.mxu0 0
        %4478 = vmatprep.subr.bf16.mxu0 0
        %4479 = vmatpush1.bf16.msra.mxu0 0
        %4480 = vmatprep.subr.bf16.mxu0 0
        %4481 = vmatpush1.bf16.msra.mxu0 0
        %4482 = vmatprep.subr.bf16.mxu0 0
        %4483 = vmatpush1.bf16.msra.mxu0 0
        %4484 = vmatprep.subr.bf16.mxu0 0
        %4485 = vmatpush1.bf16.msra.mxu0 0
        %4486 = vmatprep.subr.bf16.mxu0 0
        %4487 = vmatpush1.bf16.msra.mxu0 0
        %4488 = vmatprep.subr.bf16.mxu0 0
        %4489 = vmatpush1.bf16.msra.mxu0 0
        %4490 = vmatprep.subr.bf16.mxu0 0
        %4491 = vmatpush1.bf16.msra.mxu0 0
        %4492 = vmatprep.subr.bf16.mxu0 0
        %4493 = vmatpush1.bf16.msra.mxu0 0
        %4494 = vmatprep.subr.bf16.mxu0 0
        %4495 = vmatpush1.bf16.msra.mxu0 0
        %4496 = vmatprep.mubr.bf16.mxu0 0
        %4497 = vmatmul.mubr.bf16.gmra.mrb[0].mxu0 %v2453
        %v4498 = vpop.f32.mrb[0].mxu0
        %v4499 = vadd.f32 %v926, %v4498
        %v4500 = vpop.f32.mrb[0].mxu0
        %v4501 = vadd.f32 %v930, %v4500
        %v4502 = vpop.f32.mrb[0].mxu0
        %v4503 = vpop.f32.mrb[0].mxu0
        %4504 = vdwg.mxu0
        %4505 = vmatprep.subr.bf16.mxu0 %v2040
        %4506 = vmatpush1.bf16.msra.mxu0 %v2039
        %4507 = vmatprep.subr.bf16.mxu0 %v2168
        %4508 = vmatpush1.bf16.msra.mxu0 %v2167
        %4509 = vmatprep.subr.bf16.mxu0 0
        %4510 = vmatpush1.bf16.msra.mxu0 0
        %4511 = vmatprep.subr.bf16.mxu0 0
        %4512 = vmatpush1.bf16.msra.mxu0 0
        %4513 = vmatprep.subr.bf16.mxu0 0
        %4514 = vmatpush1.bf16.msra.mxu0 0
        %4515 = vmatprep.subr.bf16.mxu0 0
        %4516 = vmatpush1.bf16.msra.mxu0 0
        %4517 = vmatprep.subr.bf16.mxu0 0
        %4518 = vmatpush1.bf16.msra.mxu0 0
        %4519 = vmatprep.subr.bf16.mxu0 0
        %4520 = vmatpush1.bf16.msra.mxu0 0
        %4521 = vmatprep.subr.bf16.mxu0 0
        %4522 = vmatpush1.bf16.msra.mxu0 0
        %4523 = vmatprep.subr.bf16.mxu0 0
        %4524 = vmatpush1.bf16.msra.mxu0 0
        %4525 = vmatprep.subr.bf16.mxu0 0
        %4526 = vmatpush1.bf16.msra.mxu0 0
        %4527 = vmatprep.subr.bf16.mxu0 0
        %4528 = vmatpush1.bf16.msra.mxu0 0
        %4529 = vmatprep.subr.bf16.mxu0 0
        %4530 = vmatpush1.bf16.msra.mxu0 0
        %4531 = vmatprep.subr.bf16.mxu0 0
        %4532 = vmatpush1.bf16.msra.mxu0 0
        %4533 = vmatprep.subr.bf16.mxu0 0
        %4534 = vmatpush1.bf16.msra.mxu0 0
        %4535 = vmatprep.subr.bf16.mxu0 0
        %4536 = vmatpush1.bf16.msra.mxu0 0
        %4537 = vmatprep.mubr.bf16.mxu0 0
        %4538 = vmatmul.mubr.bf16.gmra.mrb[0].mxu0 %v2453
        %v4539 = vpop.f32.mrb[0].mxu0
        %v4540 = vadd.f32 %v934, %v4539
        %v4541 = vpop.f32.mrb[0].mxu0
        %v4542 = vadd.f32 %v938, %v4541
        %v4543 = vpop.f32.mrb[0].mxu0
        %v4544 = vpop.f32.mrb[0].mxu0
        %4545 = vdwg.mxu0
        %4546 = vmatprep.subr.bf16.mxu0 %v2042
        %4547 = vmatpush1.bf16.msra.mxu0 %v2041
        %4548 = vmatprep.subr.bf16.mxu0 %v2170
        %4549 = vmatpush1.bf16.msra.mxu0 %v2169
        %4550 = vmatprep.subr.bf16.mxu0 0
        %4551 = vmatpush1.bf16.msra.mxu0 0
        %4552 = vmatprep.subr.bf16.mxu0 0
        %4553 = vmatpush1.bf16.msra.mxu0 0
        %4554 = vmatprep.subr.bf16.mxu0 0
        %4555 = vmatpush1.bf16.msra.mxu0 0
        %4556 = vmatprep.subr.bf16.mxu0 0
        %4557 = vmatpush1.bf16.msra.mxu0 0
        %4558 = vmatprep.subr.bf16.mxu0 0
        %4559 = vmatpush1.bf16.msra.mxu0 0
        %4560 = vmatprep.subr.bf16.mxu0 0
        %4561 = vmatpush1.bf16.msra.mxu0 0
        %4562 = vmatprep.subr.bf16.mxu0 0
        %4563 = vmatpush1.bf16.msra.mxu0 0
        %4564 = vmatprep.subr.bf16.mxu0 0
        %4565 = vmatpush1.bf16.msra.mxu0 0
        %4566 = vmatprep.subr.bf16.mxu0 0
        %4567 = vmatpush1.bf16.msra.mxu0 0
        %4568 = vmatprep.subr.bf16.mxu0 0
        %4569 = vmatpush1.bf16.msra.mxu0 0
        %4570 = vmatprep.subr.bf16.mxu0 0
        %4571 = vmatpush1.bf16.msra.mxu0 0
        %4572 = vmatprep.subr.bf16.mxu0 0
        %4573 = vmatpush1.bf16.msra.mxu0 0
        %4574 = vmatprep.subr.bf16.mxu0 0
        %4575 = vmatpush1.bf16.msra.mxu0 0
        %4576 = vmatprep.subr.bf16.mxu0 0
        %4577 = vmatpush1.bf16.msra.mxu0 0
        %4578 = vmatprep.mubr.bf16.mxu0 0
        %4579 = vmatmul.mubr.bf16.gmra.mrb[0].mxu0 %v2453
        %v4580 = vpop.f32.mrb[0].mxu0
        %v4581 = vadd.f32 %v942, %v4580
        %v4582 = vpop.f32.mrb[0].mxu0
        %v4583 = vadd.f32 %v946, %v4582
        %v4584 = vpop.f32.mrb[0].mxu0
        %v4585 = vpop.f32.mrb[0].mxu0
        %4586 = vdwg.mxu0
        %4587 = vmatprep.subr.bf16.mxu0 %v2044
        %4588 = vmatpush1.bf16.msra.mxu0 %v2043
        %4589 = vmatprep.subr.bf16.mxu0 %v2172
        %4590 = vmatpush1.bf16.msra.mxu0 %v2171
        %4591 = vmatprep.subr.bf16.mxu0 0
        %4592 = vmatpush1.bf16.msra.mxu0 0
        %4593 = vmatprep.subr.bf16.mxu0 0
        %4594 = vmatpush1.bf16.msra.mxu0 0
        %4595 = vmatprep.subr.bf16.mxu0 0
        %4596 = vmatpush1.bf16.msra.mxu0 0
        %4597 = vmatprep.subr.bf16.mxu0 0
        %4598 = vmatpush1.bf16.msra.mxu0 0
        %4599 = vmatprep.subr.bf16.mxu0 0
        %4600 = vmatpush1.bf16.msra.mxu0 0
        %4601 = vmatprep.subr.bf16.mxu0 0
        %4602 = vmatpush1.bf16.msra.mxu0 0
        %4603 = vmatprep.subr.bf16.mxu0 0
        %4604 = vmatpush1.bf16.msra.mxu0 0
        %4605 = vmatprep.subr.bf16.mxu0 0
        %4606 = vmatpush1.bf16.msra.mxu0 0
        %4607 = vmatprep.subr.bf16.mxu0 0
        %4608 = vmatpush1.bf16.msra.mxu0 0
        %4609 = vmatprep.subr.bf16.mxu0 0
        %4610 = vmatpush1.bf16.msra.mxu0 0
        %4611 = vmatprep.subr.bf16.mxu0 0
        %4612 = vmatpush1.bf16.msra.mxu0 0
        %4613 = vmatprep.subr.bf16.mxu0 0
        %4614 = vmatpush1.bf16.msra.mxu0 0
        %4615 = vmatprep.subr.bf16.mxu0 0
        %4616 = vmatpush1.bf16.msra.mxu0 0
        %4617 = vmatprep.subr.bf16.mxu0 0
        %4618 = vmatpush1.bf16.msra.mxu0 0
        %4619 = vmatprep.mubr.bf16.mxu0 0
        %4620 = vmatmul.mubr.bf16.gmra.mrb[0].mxu0 %v2453
        %v4621 = vpop.f32.mrb[0].mxu0
        %v4622 = vadd.f32 %v950, %v4621
        %v4623 = vpop.f32.mrb[0].mxu0
        %v4624 = vadd.f32 %v954, %v4623
        %v4625 = vpop.f32.mrb[0].mxu0
        %v4626 = vpop.f32.mrb[0].mxu0
        %4627 = vdwg.mxu0
        %4628 = vmatprep.subr.bf16.mxu0 %v2046
        %4629 = vmatpush1.bf16.msra.mxu0 %v2045
        %4630 = vmatprep.subr.bf16.mxu0 %v2174
        %4631 = vmatpush1.bf16.msra.mxu0 %v2173
        %4632 = vmatprep.subr.bf16.mxu0 0
        %4633 = vmatpush1.bf16.msra.mxu0 0
        %4634 = vmatprep.subr.bf16.mxu0 0
        %4635 = vmatpush1.bf16.msra.mxu0 0
        %4636 = vmatprep.subr.bf16.mxu0 0
        %4637 = vmatpush1.bf16.msra.mxu0 0
        %4638 = vmatprep.subr.bf16.mxu0 0
        %4639 = vmatpush1.bf16.msra.mxu0 0
        %4640 = vmatprep.subr.bf16.mxu0 0
        %4641 = vmatpush1.bf16.msra.mxu0 0
        %4642 = vmatprep.subr.bf16.mxu0 0
        %4643 = vmatpush1.bf16.msra.mxu0 0
        %4644 = vmatprep.subr.bf16.mxu0 0
        %4645 = vmatpush1.bf16.msra.mxu0 0
        %4646 = vmatprep.subr.bf16.mxu0 0
        %4647 = vmatpush1.bf16.msra.mxu0 0
        %4648 = vmatprep.subr.bf16.mxu0 0
        %4649 = vmatpush1.bf16.msra.mxu0 0
        %4650 = vmatprep.subr.bf16.mxu0 0
        %4651 = vmatpush1.bf16.msra.mxu0 0
        %4652 = vmatprep.subr.bf16.mxu0 0
        %4653 = vmatpush1.bf16.msra.mxu0 0
        %4654 = vmatprep.subr.bf16.mxu0 0
        %4655 = vmatpush1.bf16.msra.mxu0 0
        %4656 = vmatprep.subr.bf16.mxu0 0
        %4657 = vmatpush1.bf16.msra.mxu0 0
        %4658 = vmatprep.subr.bf16.mxu0 0
        %4659 = vmatpush1.bf16.msra.mxu0 0
        %4660 = vmatprep.mubr.bf16.mxu0 0
        %4661 = vmatmul.mubr.bf16.gmra.mrb[0].mxu0 %v2453
        %v4662 = vpop.f32.mrb[0].mxu0
        %v4663 = vadd.f32 %v958, %v4662
        %v4664 = vpop.f32.mrb[0].mxu0
        %v4665 = vadd.f32 %v962, %v4664
        %v4666 = vpop.f32.mrb[0].mxu0
        %v4667 = vpop.f32.mrb[0].mxu0
        %4668 = vdwg.mxu0
        %4669 = vmatprep.subr.bf16.mxu0 %v2048
        %4670 = vmatpush1.bf16.msra.mxu0 %v2047
        %4671 = vmatprep.subr.bf16.mxu0 %v2176
        %4672 = vmatpush1.bf16.msra.mxu0 %v2175
        %4673 = vmatprep.subr.bf16.mxu0 0
        %4674 = vmatpush1.bf16.msra.mxu0 0
        %4675 = vmatprep.subr.bf16.mxu0 0
        %4676 = vmatpush1.bf16.msra.mxu0 0
        %4677 = vmatprep.subr.bf16.mxu0 0
        %4678 = vmatpush1.bf16.msra.mxu0 0
        %4679 = vmatprep.subr.bf16.mxu0 0
        %4680 = vmatpush1.bf16.msra.mxu0 0
        %4681 = vmatprep.subr.bf16.mxu0 0
        %4682 = vmatpush1.bf16.msra.mxu0 0
        %4683 = vmatprep.subr.bf16.mxu0 0
        %4684 = vmatpush1.bf16.msra.mxu0 0
        %4685 = vmatprep.subr.bf16.mxu0 0
        %4686 = vmatpush1.bf16.msra.mxu0 0
        %4687 = vmatprep.subr.bf16.mxu0 0
        %4688 = vmatpush1.bf16.msra.mxu0 0
        %4689 = vmatprep.subr.bf16.mxu0 0
        %4690 = vmatpush1.bf16.msra.mxu0 0
        %4691 = vmatprep.subr.bf16.mxu0 0
        %4692 = vmatpush1.bf16.msra.mxu0 0
        %4693 = vmatprep.subr.bf16.mxu0 0
        %4694 = vmatpush1.bf16.msra.mxu0 0
        %4695 = vmatprep.subr.bf16.mxu0 0
        %4696 = vmatpush1.bf16.msra.mxu0 0
        %4697 = vmatprep.subr.bf16.mxu0 0
        %4698 = vmatpush1.bf16.msra.mxu0 0
        %4699 = vmatprep.subr.bf16.mxu0 0
        %4700 = vmatpush1.bf16.msra.mxu0 0
        %4701 = vmatprep.mubr.bf16.mxu0 0
        %4702 = vmatmul.mubr.bf16.gmra.mrb[0].mxu0 %v2453
        %v4703 = vpop.f32.mrb[0].mxu0
        %v4704 = vadd.f32 %v966, %v4703
        %v4705 = vpop.f32.mrb[0].mxu0
        %v4706 = vadd.f32 %v970, %v4705
        %v4707 = vpop.f32.mrb[0].mxu0
        %v4708 = vpop.f32.mrb[0].mxu0
        %4709 = vdwg.mxu0
        %4710 = vmatprep.subr.bf16.mxu0 %v2050
        %4711 = vmatpush1.bf16.msra.mxu0 %v2049
        %4712 = vmatprep.subr.bf16.mxu0 %v2178
        %4713 = vmatpush1.bf16.msra.mxu0 %v2177
        %4714 = vmatprep.subr.bf16.mxu0 0
        %4715 = vmatpush1.bf16.msra.mxu0 0
        %4716 = vmatprep.subr.bf16.mxu0 0
        %4717 = vmatpush1.bf16.msra.mxu0 0
        %4718 = vmatprep.subr.bf16.mxu0 0
        %4719 = vmatpush1.bf16.msra.mxu0 0
        %4720 = vmatprep.subr.bf16.mxu0 0
        %4721 = vmatpush1.bf16.msra.mxu0 0
        %4722 = vmatprep.subr.bf16.mxu0 0
        %4723 = vmatpush1.bf16.msra.mxu0 0
        %4724 = vmatprep.subr.bf16.mxu0 0
        %4725 = vmatpush1.bf16.msra.mxu0 0
        %4726 = vmatprep.subr.bf16.mxu0 0
        %4727 = vmatpush1.bf16.msra.mxu0 0
        %4728 = vmatprep.subr.bf16.mxu0 0
        %4729 = vmatpush1.bf16.msra.mxu0 0
        %4730 = vmatprep.subr.bf16.mxu0 0
        %4731 = vmatpush1.bf16.msra.mxu0 0
        %4732 = vmatprep.subr.bf16.mxu0 0
        %4733 = vmatpush1.bf16.msra.mxu0 0
        %4734 = vmatprep.subr.bf16.mxu0 0
        %4735 = vmatpush1.bf16.msra.mxu0 0
        %4736 = vmatprep.subr.bf16.mxu0 0
        %4737 = vmatpush1.bf16.msra.mxu0 0
        %4738 = vmatprep.subr.bf16.mxu0 0
        %4739 = vmatpush1.bf16.msra.mxu0 0
        %4740 = vmatprep.subr.bf16.mxu0 0
        %4741 = vmatpush1.bf16.msra.mxu0 0
        %4742 = vmatprep.mubr.bf16.mxu0 0
        %4743 = vmatmul.mubr.bf16.gmra.mrb[0].mxu0 %v2453
        %v4744 = vpop.f32.mrb[0].mxu0
        %v4745 = vadd.f32 %v974, %v4744
        %v4746 = vpop.f32.mrb[0].mxu0
        %v4747 = vadd.f32 %v978, %v4746
        %v4748 = vpop.f32.mrb[0].mxu0
        %v4749 = vpop.f32.mrb[0].mxu0
        %4750 = vdwg.mxu0
        %4751 = vmatprep.subr.bf16.mxu0 %v2052
        %4752 = vmatpush1.bf16.msra.mxu0 %v2051
        %4753 = vmatprep.subr.bf16.mxu0 %v2180
        %4754 = vmatpush1.bf16.msra.mxu0 %v2179
        %4755 = vmatprep.subr.bf16.mxu0 0
        %4756 = vmatpush1.bf16.msra.mxu0 0
        %4757 = vmatprep.subr.bf16.mxu0 0
        %4758 = vmatpush1.bf16.msra.mxu0 0
        %4759 = vmatprep.subr.bf16.mxu0 0
        %4760 = vmatpush1.bf16.msra.mxu0 0
        %4761 = vmatprep.subr.bf16.mxu0 0
        %4762 = vmatpush1.bf16.msra.mxu0 0
        %4763 = vmatprep.subr.bf16.mxu0 0
        %4764 = vmatpush1.bf16.msra.mxu0 0
        %4765 = vmatprep.subr.bf16.mxu0 0
        %4766 = vmatpush1.bf16.msra.mxu0 0
        %4767 = vmatprep.subr.bf16.mxu0 0
        %4768 = vmatpush1.bf16.msra.mxu0 0
        %4769 = vmatprep.subr.bf16.mxu0 0
        %4770 = vmatpush1.bf16.msra.mxu0 0
        %4771 = vmatprep.subr.bf16.mxu0 0
        %4772 = vmatpush1.bf16.msra.mxu0 0
        %4773 = vmatprep.subr.bf16.mxu0 0
        %4774 = vmatpush1.bf16.msra.mxu0 0
        %4775 = vmatprep.subr.bf16.mxu0 0
        %4776 = vmatpush1.bf16.msra.mxu0 0
        %4777 = vmatprep.subr.bf16.mxu0 0
        %4778 = vmatpush1.bf16.msra.mxu0 0
        %4779 = vmatprep.subr.bf16.mxu0 0
        %4780 = vmatpush1.bf16.msra.mxu0 0
        %4781 = vmatprep.subr.bf16.mxu0 0
        %4782 = vmatpush1.bf16.msra.mxu0 0
        %4783 = vmatprep.mubr.bf16.mxu0 0
        %4784 = vmatmul.mubr.bf16.gmra.mrb[0].mxu0 %v2453
        %v4785 = vpop.f32.mrb[0].mxu0
        %v4786 = vadd.f32 %v982, %v4785
        %v4787 = vpop.f32.mrb[0].mxu0
        %v4788 = vadd.f32 %v986, %v4787
        %v4789 = vpop.f32.mrb[0].mxu0
        %v4790 = vpop.f32.mrb[0].mxu0
        %4791 = vdwg.mxu0
        %4792 = vmatprep.subr.bf16.mxu0 %v2054
        %4793 = vmatpush1.bf16.msra.mxu0 %v2053
        %4794 = vmatprep.subr.bf16.mxu0 %v2182
        %4795 = vmatpush1.bf16.msra.mxu0 %v2181
        %4796 = vmatprep.subr.bf16.mxu0 0
        %4797 = vmatpush1.bf16.msra.mxu0 0
        %4798 = vmatprep.subr.bf16.mxu0 0
        %4799 = vmatpush1.bf16.msra.mxu0 0
        %4800 = vmatprep.subr.bf16.mxu0 0
        %4801 = vmatpush1.bf16.msra.mxu0 0
        %4802 = vmatprep.subr.bf16.mxu0 0
        %4803 = vmatpush1.bf16.msra.mxu0 0
        %4804 = vmatprep.subr.bf16.mxu0 0
        %4805 = vmatpush1.bf16.msra.mxu0 0
        %4806 = vmatprep.subr.bf16.mxu0 0
        %4807 = vmatpush1.bf16.msra.mxu0 0
        %4808 = vmatprep.subr.bf16.mxu0 0
        %4809 = vmatpush1.bf16.msra.mxu0 0
        %4810 = vmatprep.subr.bf16.mxu0 0
        %4811 = vmatpush1.bf16.msra.mxu0 0
        %4812 = vmatprep.subr.bf16.mxu0 0
        %4813 = vmatpush1.bf16.msra.mxu0 0
        %4814 = vmatprep.subr.bf16.mxu0 0
        %4815 = vmatpush1.bf16.msra.mxu0 0
        %4816 = vmatprep.subr.bf16.mxu0 0
        %4817 = vmatpush1.bf16.msra.mxu0 0
        %4818 = vmatprep.subr.bf16.mxu0 0
        %4819 = vmatpush1.bf16.msra.mxu0 0
        %4820 = vmatprep.subr.bf16.mxu0 0
        %4821 = vmatpush1.bf16.msra.mxu0 0
        %4822 = vmatprep.subr.bf16.mxu0 0
        %4823 = vmatpush1.bf16.msra.mxu0 0
        %4824 = vmatprep.mubr.bf16.mxu0 0
        %4825 = vmatmul.mubr.bf16.gmra.mrb[0].mxu0 %v2453
        %v4826 = vpop.f32.mrb[0].mxu0
        %v4827 = vadd.f32 %v990, %v4826
        %v4828 = vpop.f32.mrb[0].mxu0
        %v4829 = vadd.f32 %v994, %v4828
        %v4830 = vpop.f32.mrb[0].mxu0
        %v4831 = vpop.f32.mrb[0].mxu0
        %4832 = vdwg.mxu0
        %4833 = vmatprep.subr.bf16.mxu0 %v2056
        %4834 = vmatpush1.bf16.msra.mxu0 %v2055
        %4835 = vmatprep.subr.bf16.mxu0 %v2184
        %4836 = vmatpush1.bf16.msra.mxu0 %v2183
        %4837 = vmatprep.subr.bf16.mxu0 0
        %4838 = vmatpush1.bf16.msra.mxu0 0
        %4839 = vmatprep.subr.bf16.mxu0 0
        %4840 = vmatpush1.bf16.msra.mxu0 0
        %4841 = vmatprep.subr.bf16.mxu0 0
        %4842 = vmatpush1.bf16.msra.mxu0 0
        %4843 = vmatprep.subr.bf16.mxu0 0
        %4844 = vmatpush1.bf16.msra.mxu0 0
        %4845 = vmatprep.subr.bf16.mxu0 0
        %4846 = vmatpush1.bf16.msra.mxu0 0
        %4847 = vmatprep.subr.bf16.mxu0 0
        %4848 = vmatpush1.bf16.msra.mxu0 0
        %4849 = vmatprep.subr.bf16.mxu0 0
        %4850 = vmatpush1.bf16.msra.mxu0 0
        %4851 = vmatprep.subr.bf16.mxu0 0
        %4852 = vmatpush1.bf16.msra.mxu0 0
        %4853 = vmatprep.subr.bf16.mxu0 0
        %4854 = vmatpush1.bf16.msra.mxu0 0
        %4855 = vmatprep.subr.bf16.mxu0 0
        %4856 = vmatpush1.bf16.msra.mxu0 0
        %4857 = vmatprep.subr.bf16.mxu0 0
        %4858 = vmatpush1.bf16.msra.mxu0 0
        %4859 = vmatprep.subr.bf16.mxu0 0
        %4860 = vmatpush1.bf16.msra.mxu0 0
        %4861 = vmatprep.subr.bf16.mxu0 0
        %4862 = vmatpush1.bf16.msra.mxu0 0
        %4863 = vmatprep.subr.bf16.mxu0 0
        %4864 = vmatpush1.bf16.msra.mxu0 0
        %4865 = vmatprep.mubr.bf16.mxu0 0
        %4866 = vmatmul.mubr.bf16.gmra.mrb[0].mxu0 %v2453
        %v4867 = vpop.f32.mrb[0].mxu0
        %v4868 = vadd.f32 %v998, %v4867
        %v4869 = vpop.f32.mrb[0].mxu0
        %v4870 = vadd.f32 %v1002, %v4869
        %v4871 = vpop.f32.mrb[0].mxu0
        %v4872 = vpop.f32.mrb[0].mxu0
        %4873 = vdwg.mxu0
        %4874 = vmatprep.subr.bf16.mxu0 %v2058
        %4875 = vmatpush1.bf16.msra.mxu0 %v2057
        %4876 = vmatprep.subr.bf16.mxu0 %v2186
        %4877 = vmatpush1.bf16.msra.mxu0 %v2185
        %4878 = vmatprep.subr.bf16.mxu0 0
        %4879 = vmatpush1.bf16.msra.mxu0 0
        %4880 = vmatprep.subr.bf16.mxu0 0
        %4881 = vmatpush1.bf16.msra.mxu0 0
        %4882 = vmatprep.subr.bf16.mxu0 0
        %4883 = vmatpush1.bf16.msra.mxu0 0
        %4884 = vmatprep.subr.bf16.mxu0 0
        %4885 = vmatpush1.bf16.msra.mxu0 0
        %4886 = vmatprep.subr.bf16.mxu0 0
        %4887 = vmatpush1.bf16.msra.mxu0 0
        %4888 = vmatprep.subr.bf16.mxu0 0
        %4889 = vmatpush1.bf16.msra.mxu0 0
        %4890 = vmatprep.subr.bf16.mxu0 0
        %4891 = vmatpush1.bf16.msra.mxu0 0
        %4892 = vmatprep.subr.bf16.mxu0 0
        %4893 = vmatpush1.bf16.msra.mxu0 0
        %4894 = vmatprep.subr.bf16.mxu0 0
        %4895 = vmatpush1.bf16.msra.mxu0 0
        %4896 = vmatprep.subr.bf16.mxu0 0
        %4897 = vmatpush1.bf16.msra.mxu0 0
        %4898 = vmatprep.subr.bf16.mxu0 0
        %4899 = vmatpush1.bf16.msra.mxu0 0
        %4900 = vmatprep.subr.bf16.mxu0 0
        %4901 = vmatpush1.bf16.msra.mxu0 0
        %4902 = vmatprep.subr.bf16.mxu0 0
        %4903 = vmatpush1.bf16.msra.mxu0 0
        %4904 = vmatprep.subr.bf16.mxu0 0
        %4905 = vmatpush1.bf16.msra.mxu0 0
        %4906 = vmatprep.mubr.bf16.mxu0 0
        %4907 = vmatmul.mubr.bf16.gmra.mrb[0].mxu0 %v2453
        %v4908 = vpop.f32.mrb[0].mxu0
        %v4909 = vadd.f32 %v1006, %v4908
        %v4910 = vpop.f32.mrb[0].mxu0
        %v4911 = vadd.f32 %v1010, %v4910
        %v4912 = vpop.f32.mrb[0].mxu0
        %v4913 = vpop.f32.mrb[0].mxu0
        %4914 = vdwg.mxu0
        %4915 = vmatprep.subr.bf16.mxu0 %v2060
        %4916 = vmatpush1.bf16.msra.mxu0 %v2059
        %4917 = vmatprep.subr.bf16.mxu0 %v2188
        %4918 = vmatpush1.bf16.msra.mxu0 %v2187
        %4919 = vmatprep.subr.bf16.mxu0 0
        %4920 = vmatpush1.bf16.msra.mxu0 0
        %4921 = vmatprep.subr.bf16.mxu0 0
        %4922 = vmatpush1.bf16.msra.mxu0 0
        %4923 = vmatprep.subr.bf16.mxu0 0
        %4924 = vmatpush1.bf16.msra.mxu0 0
        %4925 = vmatprep.subr.bf16.mxu0 0
        %4926 = vmatpush1.bf16.msra.mxu0 0
        %4927 = vmatprep.subr.bf16.mxu0 0
        %4928 = vmatpush1.bf16.msra.mxu0 0
        %4929 = vmatprep.subr.bf16.mxu0 0
        %4930 = vmatpush1.bf16.msra.mxu0 0
        %4931 = vmatprep.subr.bf16.mxu0 0
        %4932 = vmatpush1.bf16.msra.mxu0 0
        %4933 = vmatprep.subr.bf16.mxu0 0
        %4934 = vmatpush1.bf16.msra.mxu0 0
        %4935 = vmatprep.subr.bf16.mxu0 0
        %4936 = vmatpush1.bf16.msra.mxu0 0
        %4937 = vmatprep.subr.bf16.mxu0 0
        %4938 = vmatpush1.bf16.msra.mxu0 0
        %4939 = vmatprep.subr.bf16.mxu0 0
        %4940 = vmatpush1.bf16.msra.mxu0 0
        %4941 = vmatprep.subr.bf16.mxu0 0
        %4942 = vmatpush1.bf16.msra.mxu0 0
        %4943 = vmatprep.subr.bf16.mxu0 0
        %4944 = vmatpush1.bf16.msra.mxu0 0
        %4945 = vmatprep.subr.bf16.mxu0 0
        %4946 = vmatpush1.bf16.msra.mxu0 0
        %4947 = vmatprep.mubr.bf16.mxu0 0
        %4948 = vmatmul.mubr.bf16.gmra.mrb[0].mxu0 %v2453
        %v4949 = vpop.f32.mrb[0].mxu0
        %v4950 = vadd.f32 %v1014, %v4949
        %v4951 = vpop.f32.mrb[0].mxu0
        %v4952 = vadd.f32 %v1018, %v4951
        %v4953 = vpop.f32.mrb[0].mxu0
        %v4954 = vpop.f32.mrb[0].mxu0
        %4955 = vdwg.mxu0
        %4956 = vmatprep.subr.bf16.mxu0 %v2062
        %4957 = vmatpush1.bf16.msra.mxu0 %v2061
        %4958 = vmatprep.subr.bf16.mxu0 %v2190
        %4959 = vmatpush1.bf16.msra.mxu0 %v2189
        %4960 = vmatprep.subr.bf16.mxu0 0
        %4961 = vmatpush1.bf16.msra.mxu0 0
        %4962 = vmatprep.subr.bf16.mxu0 0
        %4963 = vmatpush1.bf16.msra.mxu0 0
        %4964 = vmatprep.subr.bf16.mxu0 0
        %4965 = vmatpush1.bf16.msra.mxu0 0
        %4966 = vmatprep.subr.bf16.mxu0 0
        %4967 = vmatpush1.bf16.msra.mxu0 0
        %4968 = vmatprep.subr.bf16.mxu0 0
        %4969 = vmatpush1.bf16.msra.mxu0 0
        %4970 = vmatprep.subr.bf16.mxu0 0
        %4971 = vmatpush1.bf16.msra.mxu0 0
        %4972 = vmatprep.subr.bf16.mxu0 0
        %4973 = vmatpush1.bf16.msra.mxu0 0
        %4974 = vmatprep.subr.bf16.mxu0 0
        %4975 = vmatpush1.bf16.msra.mxu0 0
        %4976 = vmatprep.subr.bf16.mxu0 0
        %4977 = vmatpush1.bf16.msra.mxu0 0
        %4978 = vmatprep.subr.bf16.mxu0 0
        %4979 = vmatpush1.bf16.msra.mxu0 0
        %4980 = vmatprep.subr.bf16.mxu0 0
        %4981 = vmatpush1.bf16.msra.mxu0 0
        %4982 = vmatprep.subr.bf16.mxu0 0
        %4983 = vmatpush1.bf16.msra.mxu0 0
        %4984 = vmatprep.subr.bf16.mxu0 0
        %4985 = vmatpush1.bf16.msra.mxu0 0
        %4986 = vmatprep.subr.bf16.mxu0 0
        %4987 = vmatpush1.bf16.msra.mxu0 0
        %4988 = vmatprep.mubr.bf16.mxu0 0
        %4989 = vmatmul.mubr.bf16.gmra.mrb[0].mxu0 %v2453
        %v4990 = vpop.f32.mrb[0].mxu0
        %v4991 = vadd.f32 %v1022, %v4990
        %v4992 = vpop.f32.mrb[0].mxu0
        %v4993 = vadd.f32 %v1026, %v4992
        %v4994 = vpop.f32.mrb[0].mxu0
        %v4995 = vpop.f32.mrb[0].mxu0
        %4996 = vdwg.mxu0
        %4997 = vmatprep.subr.bf16.mxu0 %v2064
        %4998 = vmatpush1.bf16.msra.mxu0 %v2063
        %4999 = vmatprep.subr.bf16.mxu0 %v2192
        %5000 = vmatpush1.bf16.msra.mxu0 %v2191
        %5001 = vmatprep.subr.bf16.mxu0 0
        %5002 = vmatpush1.bf16.msra.mxu0 0
        %5003 = vmatprep.subr.bf16.mxu0 0
        %5004 = vmatpush1.bf16.msra.mxu0 0
        %5005 = vmatprep.subr.bf16.mxu0 0
        %5006 = vmatpush1.bf16.msra.mxu0 0
        %5007 = vmatprep.subr.bf16.mxu0 0
        %5008 = vmatpush1.bf16.msra.mxu0 0
        %5009 = vmatprep.subr.bf16.mxu0 0
        %5010 = vmatpush1.bf16.msra.mxu0 0
        %5011 = vmatprep.subr.bf16.mxu0 0
        %5012 = vmatpush1.bf16.msra.mxu0 0
        %5013 = vmatprep.subr.bf16.mxu0 0
        %5014 = vmatpush1.bf16.msra.mxu0 0
        %5015 = vmatprep.subr.bf16.mxu0 0
        %5016 = vmatpush1.bf16.msra.mxu0 0
        %5017 = vmatprep.subr.bf16.mxu0 0
        %5018 = vmatpush1.bf16.msra.mxu0 0
        %5019 = vmatprep.subr.bf16.mxu0 0
        %5020 = vmatpush1.bf16.msra.mxu0 0
        %5021 = vmatprep.subr.bf16.mxu0 0
        %5022 = vmatpush1.bf16.msra.mxu0 0
        %5023 = vmatprep.subr.bf16.mxu0 0
        %5024 = vmatpush1.bf16.msra.mxu0 0
        %5025 = vmatprep.subr.bf16.mxu0 0
        %5026 = vmatpush1.bf16.msra.mxu0 0
        %5027 = vmatprep.subr.bf16.mxu0 0
        %5028 = vmatpush1.bf16.msra.mxu0 0
        %5029 = vmatprep.mubr.bf16.mxu0 0
        %5030 = vmatmul.mubr.bf16.gmra.mrb[0].mxu0 %v2453
        %v5031 = vpop.f32.mrb[0].mxu0
        %v5032 = vadd.f32 %v1030, %v5031
        %v5033 = vpop.f32.mrb[0].mxu0
        %v5034 = vadd.f32 %v1034, %v5033
        %v5035 = vpop.f32.mrb[0].mxu0
        %v5036 = vpop.f32.mrb[0].mxu0
        %5037 = vdwg.mxu0
        %5038 = vmatprep.subr.bf16.mxu0 %v2066
        %5039 = vmatpush1.bf16.msra.mxu0 %v2065
        %5040 = vmatprep.subr.bf16.mxu0 %v2194
        %5041 = vmatpush1.bf16.msra.mxu0 %v2193
        %5042 = vmatprep.subr.bf16.mxu0 0
        %5043 = vmatpush1.bf16.msra.mxu0 0
        %5044 = vmatprep.subr.bf16.mxu0 0
        %5045 = vmatpush1.bf16.msra.mxu0 0
        %5046 = vmatprep.subr.bf16.mxu0 0
        %5047 = vmatpush1.bf16.msra.mxu0 0
        %5048 = vmatprep.subr.bf16.mxu0 0
        %5049 = vmatpush1.bf16.msra.mxu0 0
        %5050 = vmatprep.subr.bf16.mxu0 0
        %5051 = vmatpush1.bf16.msra.mxu0 0
        %5052 = vmatprep.subr.bf16.mxu0 0
        %5053 = vmatpush1.bf16.msra.mxu0 0
        %5054 = vmatprep.subr.bf16.mxu0 0
        %5055 = vmatpush1.bf16.msra.mxu0 0
        %5056 = vmatprep.subr.bf16.mxu0 0
        %5057 = vmatpush1.bf16.msra.mxu0 0
        %5058 = vmatprep.subr.bf16.mxu0 0
        %5059 = vmatpush1.bf16.msra.mxu0 0
        %5060 = vmatprep.subr.bf16.mxu0 0
        %5061 = vmatpush1.bf16.msra.mxu0 0
        %5062 = vmatprep.subr.bf16.mxu0 0
        %5063 = vmatpush1.bf16.msra.mxu0 0
        %5064 = vmatprep.subr.bf16.mxu0 0
        %5065 = vmatpush1.bf16.msra.mxu0 0
        %5066 = vmatprep.subr.bf16.mxu0 0
        %5067 = vmatpush1.bf16.msra.mxu0 0
        %5068 = vmatprep.subr.bf16.mxu0 0
        %5069 = vmatpush1.bf16.msra.mxu0 0
        %5070 = vmatprep.mubr.bf16.mxu0 0
        %5071 = vmatmul.mubr.bf16.gmra.mrb[0].mxu0 %v2453
        %v5072 = vpop.f32.mrb[0].mxu0
        %v5073 = vadd.f32 %v1038, %v5072
        %v5074 = vpop.f32.mrb[0].mxu0
        %v5075 = vadd.f32 %v1042, %v5074
        %v5076 = vpop.f32.mrb[0].mxu0
        %v5077 = vpop.f32.mrb[0].mxu0
        %5078 = vdwg.mxu0
        %v5079 = vpack.c.bf16 %v2490, %v2490
        %v5080 = vpack.c.bf16 %v2492, %v2492
        %v5081 = vpack.c.bf16 %v2531, %v2531
        %v5082 = vpack.c.bf16 %v2533, %v2533
        %v5083 = vpack.c.bf16 %v2572, %v2572
        %v5084 = vpack.c.bf16 %v2574, %v2574
        %v5085 = vpack.c.bf16 %v2613, %v2613
        %v5086 = vpack.c.bf16 %v2615, %v2615
        %v5087 = vpack.c.bf16 %v2654, %v2654
        %v5088 = vpack.c.bf16 %v2656, %v2656
        %v5089 = vpack.c.bf16 %v2695, %v2695
        %v5090 = vpack.c.bf16 %v2697, %v2697
        %v5091 = vpack.c.bf16 %v2736, %v2736
        %v5092 = vpack.c.bf16 %v2738, %v2738
        %v5093 = vpack.c.bf16 %v2777, %v2777
        %v5094 = vpack.c.bf16 %v2779, %v2779
        %v5095 = vpack.c.bf16 %v2818, %v2818
        %v5096 = vpack.c.bf16 %v2820, %v2820
        %v5097 = vpack.c.bf16 %v2859, %v2859
        %v5098 = vpack.c.bf16 %v2861, %v2861
        %v5099 = vpack.c.bf16 %v2900, %v2900
        %v5100 = vpack.c.bf16 %v2902, %v2902
        %v5101 = vpack.c.bf16 %v2941, %v2941
        %v5102 = vpack.c.bf16 %v2943, %v2943
        %v5103 = vpack.c.bf16 %v2982, %v2982
        %v5104 = vpack.c.bf16 %v2984, %v2984
        %v5105 = vpack.c.bf16 %v3023, %v3023
        %v5106 = vpack.c.bf16 %v3025, %v3025
        %v5107 = vpack.c.bf16 %v3064, %v3064
        %v5108 = vpack.c.bf16 %v3066, %v3066
        %v5109 = vpack.c.bf16 %v3105, %v3105
        %v5110 = vpack.c.bf16 %v3107, %v3107
        %v5111 = vpack.c.bf16 %v3146, %v3146
        %v5112 = vpack.c.bf16 %v3148, %v3148
        %v5113 = vpack.c.bf16 %v3187, %v3187
        %v5114 = vpack.c.bf16 %v3189, %v3189
        %v5115 = vpack.c.bf16 %v3228, %v3228
        %v5116 = vpack.c.bf16 %v3230, %v3230
        %v5117 = vpack.c.bf16 %v3269, %v3269
        %v5118 = vpack.c.bf16 %v3271, %v3271
        %v5119 = vpack.c.bf16 %v3310, %v3310
        %v5120 = vpack.c.bf16 %v3312, %v3312
        %v5121 = vpack.c.bf16 %v3351, %v3351
        %v5122 = vpack.c.bf16 %v3353, %v3353
        %v5123 = vpack.c.bf16 %v3392, %v3392
        %v5124 = vpack.c.bf16 %v3394, %v3394
        %v5125 = vpack.c.bf16 %v3433, %v3433
        %v5126 = vpack.c.bf16 %v3435, %v3435
        %v5127 = vpack.c.bf16 %v3474, %v3474
        %v5128 = vpack.c.bf16 %v3476, %v3476
        %v5129 = vpack.c.bf16 %v3515, %v3515
        %v5130 = vpack.c.bf16 %v3517, %v3517
        %v5131 = vpack.c.bf16 %v3556, %v3556
        %v5132 = vpack.c.bf16 %v3558, %v3558
        %v5133 = vpack.c.bf16 %v3597, %v3597
        %v5134 = vpack.c.bf16 %v3599, %v3599
        %v5135 = vpack.c.bf16 %v3638, %v3638
        %v5136 = vpack.c.bf16 %v3640, %v3640
        %v5137 = vpack.c.bf16 %v3679, %v3679
        %v5138 = vpack.c.bf16 %v3681, %v3681
        %v5139 = vpack.c.bf16 %v3720, %v3720
        %v5140 = vpack.c.bf16 %v3722, %v3722
        %v5141 = vpack.c.bf16 %v3761, %v3761
        %v5142 = vpack.c.bf16 %v3763, %v3763
        %v5143 = vpack.c.bf16 %v3802, %v3802
        %v5144 = vpack.c.bf16 %v3804, %v3804
        %v5145 = vpack.c.bf16 %v3843, %v3843
        %v5146 = vpack.c.bf16 %v3845, %v3845
        %v5147 = vpack.c.bf16 %v3884, %v3884
        %v5148 = vpack.c.bf16 %v3886, %v3886
        %v5149 = vpack.c.bf16 %v3925, %v3925
        %v5150 = vpack.c.bf16 %v3927, %v3927
        %v5151 = vpack.c.bf16 %v3966, %v3966
        %v5152 = vpack.c.bf16 %v3968, %v3968
        %v5153 = vpack.c.bf16 %v4007, %v4007
        %v5154 = vpack.c.bf16 %v4009, %v4009
        %v5155 = vpack.c.bf16 %v4048, %v4048
        %v5156 = vpack.c.bf16 %v4050, %v4050
        %v5157 = vpack.c.bf16 %v4089, %v4089
        %v5158 = vpack.c.bf16 %v4091, %v4091
        %v5159 = vpack.c.bf16 %v4130, %v4130
        %v5160 = vpack.c.bf16 %v4132, %v4132
        %v5161 = vpack.c.bf16 %v4171, %v4171
        %v5162 = vpack.c.bf16 %v4173, %v4173
        %v5163 = vpack.c.bf16 %v4212, %v4212
        %v5164 = vpack.c.bf16 %v4214, %v4214
        %v5165 = vpack.c.bf16 %v4253, %v4253
        %v5166 = vpack.c.bf16 %v4255, %v4255
        %v5167 = vpack.c.bf16 %v4294, %v4294
        %v5168 = vpack.c.bf16 %v4296, %v4296
        %v5169 = vpack.c.bf16 %v4335, %v4335
        %v5170 = vpack.c.bf16 %v4337, %v4337
        %v5171 = vpack.c.bf16 %v4376, %v4376
        %v5172 = vpack.c.bf16 %v4378, %v4378
        %v5173 = vpack.c.bf16 %v4417, %v4417
        %v5174 = vpack.c.bf16 %v4419, %v4419
        %v5175 = vpack.c.bf16 %v4458, %v4458
        %v5176 = vpack.c.bf16 %v4460, %v4460
        %v5177 = vpack.c.bf16 %v4499, %v4499
        %v5178 = vpack.c.bf16 %v4501, %v4501
        %v5179 = vpack.c.bf16 %v4540, %v4540
        %v5180 = vpack.c.bf16 %v4542, %v4542
        %v5181 = vpack.c.bf16 %v4581, %v4581
        %v5182 = vpack.c.bf16 %v4583, %v4583
        %v5183 = vpack.c.bf16 %v4622, %v4622
        %v5184 = vpack.c.bf16 %v4624, %v4624
        %v5185 = vpack.c.bf16 %v4663, %v4663
        %v5186 = vpack.c.bf16 %v4665, %v4665
        %v5187 = vpack.c.bf16 %v4704, %v4704
        %v5188 = vpack.c.bf16 %v4706, %v4706
        %v5189 = vpack.c.bf16 %v4745, %v4745
        %v5190 = vpack.c.bf16 %v4747, %v4747
        %v5191 = vpack.c.bf16 %v4786, %v4786
        %v5192 = vpack.c.bf16 %v4788, %v4788
        %v5193 = vpack.c.bf16 %v4827, %v4827
        %v5194 = vpack.c.bf16 %v4829, %v4829
        %v5195 = vpack.c.bf16 %v4868, %v4868
        %v5196 = vpack.c.bf16 %v4870, %v4870
        %v5197 = vpack.c.bf16 %v4909, %v4909
        %v5198 = vpack.c.bf16 %v4911, %v4911
        %v5199 = vpack.c.bf16 %v4950, %v4950
        %v5200 = vpack.c.bf16 %v4952, %v4952
        %v5201 = vpack.c.bf16 %v4991, %v4991
        %v5202 = vpack.c.bf16 %v4993, %v4993
        %v5203 = vpack.c.bf16 %v5032, %v5032
        %v5204 = vpack.c.bf16 %v5034, %v5034
        %v5205 = vpack.c.bf16 %v5073, %v5073
        %v5206 = vpack.c.bf16 %v5075, %v5075
        %v5335 = vcombine.low %v5079, %v5080
        %v5336 = vcombine.low %v5081, %v5082
        %v5337 = vcombine.low %v5083, %v5084
        %v5338 = vcombine.low %v5085, %v5086
        %v5340 = vunpack.c.l.s4 1966171168
        %v5341 = vunpack.c.0.s8 %v5340
        %v5342 = vlaneseq
        %v5343 = vshrl.u32 %v5342, 7
        %v5344 = vsub.s32 %v5341, %v5343
        %v5345 = vrot.slane %v5335, %v5344
        %v5347 = vunpack.c.l.s4 1966171168
        %v5348 = vunpack.c.0.s8 %v5347
        %v5349 = vlaneseq
        %v5350 = vshrl.u32 %v5349, 7
        %v5351 = vsub.s32 %v5348, %v5350
        %v5352 = vrot.slane %v5336, %v5351
        %v5354 = vunpack.c.l.s4 1966171168
        %v5355 = vunpack.c.0.s8 %v5354
        %v5356 = vlaneseq
        %v5357 = vshrl.u32 %v5356, 7
        %v5358 = vsub.s32 %v5355, %v5357
        %v5359 = vrot.slane %v5337, %v5358
        %v5361 = vunpack.c.l.s4 1966171168
        %v5362 = vunpack.c.0.s8 %v5361
        %v5363 = vlaneseq
        %v5364 = vshrl.u32 %v5363, 7
        %v5365 = vsub.s32 %v5362, %v5364
        %v5366 = vrot.slane %v5338, %v5365
        %v5367 = vcombine.low %v5345, %v5352
        %v5368 = vcombine.low %v5359, %v5366
        %v5370 = vunpack.c.l.s4 1966171168
        %v5371 = vunpack.c.0.s8 %v5370
        %v5372 = vlaneseq
        %v5373 = vshrl.u32 %v5372, 7
        %v5374 = vsub.s32 %v5371, %v5373
        %v5375 = vrot.slane %v5367, %v5374
        %v5377 = vunpack.c.l.s4 1966171168
        %v5378 = vunpack.c.0.s8 %v5377
        %v5379 = vlaneseq
        %v5380 = vshrl.u32 %v5379, 7
        %v5381 = vsub.s32 %v5378, %v5380
        %v5382 = vrot.slane %v5368, %v5381
        %v5383 = vcombine.low %v5375, %v5382
        %v5384 = vcombine.low %v5087, %v5088
        %v5385 = vcombine.low %v5089, %v5090
        %v5386 = vcombine.low %v5091, %v5092
        %v5387 = vcombine.low %v5093, %v5094
        %v5389 = vunpack.c.l.s4 1966171168
        %v5390 = vunpack.c.0.s8 %v5389
        %v5391 = vlaneseq
        %v5392 = vshrl.u32 %v5391, 7
        %v5393 = vsub.s32 %v5390, %v5392
        %v5394 = vrot.slane %v5384, %v5393
        %v5396 = vunpack.c.l.s4 1966171168
        %v5397 = vunpack.c.0.s8 %v5396
        %v5398 = vlaneseq
        %v5399 = vshrl.u32 %v5398, 7
        %v5400 = vsub.s32 %v5397, %v5399
        %v5401 = vrot.slane %v5385, %v5400
        %v5403 = vunpack.c.l.s4 1966171168
        %v5404 = vunpack.c.0.s8 %v5403
        %v5405 = vlaneseq
        %v5406 = vshrl.u32 %v5405, 7
        %v5407 = vsub.s32 %v5404, %v5406
        %v5408 = vrot.slane %v5386, %v5407
        %v5410 = vunpack.c.l.s4 1966171168
        %v5411 = vunpack.c.0.s8 %v5410
        %v5412 = vlaneseq
        %v5413 = vshrl.u32 %v5412, 7
        %v5414 = vsub.s32 %v5411, %v5413
        %v5415 = vrot.slane %v5387, %v5414
        %v5416 = vcombine.low %v5394, %v5401
        %v5417 = vcombine.low %v5408, %v5415
        %v5419 = vunpack.c.l.s4 1966171168
        %v5420 = vunpack.c.0.s8 %v5419
        %v5421 = vlaneseq
        %v5422 = vshrl.u32 %v5421, 7
        %v5423 = vsub.s32 %v5420, %v5422
        %v5424 = vrot.slane %v5416, %v5423
        %v5426 = vunpack.c.l.s4 1966171168
        %v5427 = vunpack.c.0.s8 %v5426
        %v5428 = vlaneseq
        %v5429 = vshrl.u32 %v5428, 7
        %v5430 = vsub.s32 %v5427, %v5429
        %v5431 = vrot.slane %v5417, %v5430
        %v5432 = vcombine.low %v5424, %v5431
        %v5433 = vcombine.low %v5095, %v5096
        %v5434 = vcombine.low %v5097, %v5098
        %v5435 = vcombine.low %v5099, %v5100
        %v5436 = vcombine.low %v5101, %v5102
        %v5438 = vunpack.c.l.s4 1966171168
        %v5439 = vunpack.c.0.s8 %v5438
        %v5440 = vlaneseq
        %v5441 = vshrl.u32 %v5440, 7
        %v5442 = vsub.s32 %v5439, %v5441
        %v5443 = vrot.slane %v5433, %v5442
        %v5445 = vunpack.c.l.s4 1966171168
        %v5446 = vunpack.c.0.s8 %v5445
        %v5447 = vlaneseq
        %v5448 = vshrl.u32 %v5447, 7
        %v5449 = vsub.s32 %v5446, %v5448
        %v5450 = vrot.slane %v5434, %v5449
        %v5452 = vunpack.c.l.s4 1966171168
        %v5453 = vunpack.c.0.s8 %v5452
        %v5454 = vlaneseq
        %v5455 = vshrl.u32 %v5454, 7
        %v5456 = vsub.s32 %v5453, %v5455
        %v5457 = vrot.slane %v5435, %v5456
        %v5459 = vunpack.c.l.s4 1966171168
        %v5460 = vunpack.c.0.s8 %v5459
        %v5461 = vlaneseq
        %v5462 = vshrl.u32 %v5461, 7
        %v5463 = vsub.s32 %v5460, %v5462
        %v5464 = vrot.slane %v5436, %v5463
        %v5465 = vcombine.low %v5443, %v5450
        %v5466 = vcombine.low %v5457, %v5464
        %v5468 = vunpack.c.l.s4 1966171168
        %v5469 = vunpack.c.0.s8 %v5468
        %v5470 = vlaneseq
        %v5471 = vshrl.u32 %v5470, 7
        %v5472 = vsub.s32 %v5469, %v5471
        %v5473 = vrot.slane %v5465, %v5472
        %v5475 = vunpack.c.l.s4 1966171168
        %v5476 = vunpack.c.0.s8 %v5475
        %v5477 = vlaneseq
        %v5478 = vshrl.u32 %v5477, 7
        %v5479 = vsub.s32 %v5476, %v5478
        %v5480 = vrot.slane %v5466, %v5479
        %v5481 = vcombine.low %v5473, %v5480
        %v5482 = vcombine.low %v5103, %v5104
        %v5483 = vcombine.low %v5105, %v5106
        %v5484 = vcombine.low %v5107, %v5108
        %v5485 = vcombine.low %v5109, %v5110
        %v5487 = vunpack.c.l.s4 1966171168
        %v5488 = vunpack.c.0.s8 %v5487
        %v5489 = vlaneseq
        %v5490 = vshrl.u32 %v5489, 7
        %v5491 = vsub.s32 %v5488, %v5490
        %v5492 = vrot.slane %v5482, %v5491
        %v5494 = vunpack.c.l.s4 1966171168
        %v5495 = vunpack.c.0.s8 %v5494
        %v5496 = vlaneseq
        %v5497 = vshrl.u32 %v5496, 7
        %v5498 = vsub.s32 %v5495, %v5497
        %v5499 = vrot.slane %v5483, %v5498
        %v5501 = vunpack.c.l.s4 1966171168
        %v5502 = vunpack.c.0.s8 %v5501
        %v5503 = vlaneseq
        %v5504 = vshrl.u32 %v5503, 7
        %v5505 = vsub.s32 %v5502, %v5504
        %v5506 = vrot.slane %v5484, %v5505
        %v5508 = vunpack.c.l.s4 1966171168
        %v5509 = vunpack.c.0.s8 %v5508
        %v5510 = vlaneseq
        %v5511 = vshrl.u32 %v5510, 7
        %v5512 = vsub.s32 %v5509, %v5511
        %v5513 = vrot.slane %v5485, %v5512
        %v5514 = vcombine.low %v5492, %v5499
        %v5515 = vcombine.low %v5506, %v5513
        %v5517 = vunpack.c.l.s4 1966171168
        %v5518 = vunpack.c.0.s8 %v5517
        %v5519 = vlaneseq
        %v5520 = vshrl.u32 %v5519, 7
        %v5521 = vsub.s32 %v5518, %v5520
        %v5522 = vrot.slane %v5514, %v5521
        %v5524 = vunpack.c.l.s4 1966171168
        %v5525 = vunpack.c.0.s8 %v5524
        %v5526 = vlaneseq
        %v5527 = vshrl.u32 %v5526, 7
        %v5528 = vsub.s32 %v5525, %v5527
        %v5529 = vrot.slane %v5515, %v5528
        %v5530 = vcombine.low %v5522, %v5529
        %v5531 = vcombine.low %v5111, %v5112
        %v5532 = vcombine.low %v5113, %v5114
        %v5533 = vcombine.low %v5115, %v5116
        %v5534 = vcombine.low %v5117, %v5118
        %v5536 = vunpack.c.l.s4 1966171168
        %v5537 = vunpack.c.0.s8 %v5536
        %v5538 = vlaneseq
        %v5539 = vshrl.u32 %v5538, 7
        %v5540 = vsub.s32 %v5537, %v5539
        %v5541 = vrot.slane %v5531, %v5540
        %v5543 = vunpack.c.l.s4 1966171168
        %v5544 = vunpack.c.0.s8 %v5543
        %v5545 = vlaneseq
        %v5546 = vshrl.u32 %v5545, 7
        %v5547 = vsub.s32 %v5544, %v5546
        %v5548 = vrot.slane %v5532, %v5547
        %v5550 = vunpack.c.l.s4 1966171168
        %v5551 = vunpack.c.0.s8 %v5550
        %v5552 = vlaneseq
        %v5553 = vshrl.u32 %v5552, 7
        %v5554 = vsub.s32 %v5551, %v5553
        %v5555 = vrot.slane %v5533, %v5554
        %v5557 = vunpack.c.l.s4 1966171168
        %v5558 = vunpack.c.0.s8 %v5557
        %v5559 = vlaneseq
        %v5560 = vshrl.u32 %v5559, 7
        %v5561 = vsub.s32 %v5558, %v5560
        %v5562 = vrot.slane %v5534, %v5561
        %v5563 = vcombine.low %v5541, %v5548
        %v5564 = vcombine.low %v5555, %v5562
        %v5566 = vunpack.c.l.s4 1966171168
        %v5567 = vunpack.c.0.s8 %v5566
        %v5568 = vlaneseq
        %v5569 = vshrl.u32 %v5568, 7
        %v5570 = vsub.s32 %v5567, %v5569
        %v5571 = vrot.slane %v5563, %v5570
        %v5573 = vunpack.c.l.s4 1966171168
        %v5574 = vunpack.c.0.s8 %v5573
        %v5575 = vlaneseq
        %v5576 = vshrl.u32 %v5575, 7
        %v5577 = vsub.s32 %v5574, %v5576
        %v5578 = vrot.slane %v5564, %v5577
        %v5579 = vcombine.low %v5571, %v5578
        %v5580 = vcombine.low %v5119, %v5120
        %v5581 = vcombine.low %v5121, %v5122
        %v5582 = vcombine.low %v5123, %v5124
        %v5583 = vcombine.low %v5125, %v5126
        %v5585 = vunpack.c.l.s4 1966171168
        %v5586 = vunpack.c.0.s8 %v5585
        %v5587 = vlaneseq
        %v5588 = vshrl.u32 %v5587, 7
        %v5589 = vsub.s32 %v5586, %v5588
        %v5590 = vrot.slane %v5580, %v5589
        %v5592 = vunpack.c.l.s4 1966171168
        %v5593 = vunpack.c.0.s8 %v5592
        %v5594 = vlaneseq
        %v5595 = vshrl.u32 %v5594, 7
        %v5596 = vsub.s32 %v5593, %v5595
        %v5597 = vrot.slane %v5581, %v5596
        %v5599 = vunpack.c.l.s4 1966171168
        %v5600 = vunpack.c.0.s8 %v5599
        %v5601 = vlaneseq
        %v5602 = vshrl.u32 %v5601, 7
        %v5603 = vsub.s32 %v5600, %v5602
        %v5604 = vrot.slane %v5582, %v5603
        %v5606 = vunpack.c.l.s4 1966171168
        %v5607 = vunpack.c.0.s8 %v5606
        %v5608 = vlaneseq
        %v5609 = vshrl.u32 %v5608, 7
        %v5610 = vsub.s32 %v5607, %v5609
        %v5611 = vrot.slane %v5583, %v5610
        %v5612 = vcombine.low %v5590, %v5597
        %v5613 = vcombine.low %v5604, %v5611
        %v5615 = vunpack.c.l.s4 1966171168
        %v5616 = vunpack.c.0.s8 %v5615
        %v5617 = vlaneseq
        %v5618 = vshrl.u32 %v5617, 7
        %v5619 = vsub.s32 %v5616, %v5618
        %v5620 = vrot.slane %v5612, %v5619
        %v5622 = vunpack.c.l.s4 1966171168
        %v5623 = vunpack.c.0.s8 %v5622
        %v5624 = vlaneseq
        %v5625 = vshrl.u32 %v5624, 7
        %v5626 = vsub.s32 %v5623, %v5625
        %v5627 = vrot.slane %v5613, %v5626
        %v5628 = vcombine.low %v5620, %v5627
        %v5629 = vcombine.low %v5127, %v5128
        %v5630 = vcombine.low %v5129, %v5130
        %v5631 = vcombine.low %v5131, %v5132
        %v5632 = vcombine.low %v5133, %v5134
        %v5634 = vunpack.c.l.s4 1966171168
        %v5635 = vunpack.c.0.s8 %v5634
        %v5636 = vlaneseq
        %v5637 = vshrl.u32 %v5636, 7
        %v5638 = vsub.s32 %v5635, %v5637
        %v5639 = vrot.slane %v5629, %v5638
        %v5641 = vunpack.c.l.s4 1966171168
        %v5642 = vunpack.c.0.s8 %v5641
        %v5643 = vlaneseq
        %v5644 = vshrl.u32 %v5643, 7
        %v5645 = vsub.s32 %v5642, %v5644
        %v5646 = vrot.slane %v5630, %v5645
        %v5648 = vunpack.c.l.s4 1966171168
        %v5649 = vunpack.c.0.s8 %v5648
        %v5650 = vlaneseq
        %v5651 = vshrl.u32 %v5650, 7
        %v5652 = vsub.s32 %v5649, %v5651
        %v5653 = vrot.slane %v5631, %v5652
        %v5655 = vunpack.c.l.s4 1966171168
        %v5656 = vunpack.c.0.s8 %v5655
        %v5657 = vlaneseq
        %v5658 = vshrl.u32 %v5657, 7
        %v5659 = vsub.s32 %v5656, %v5658
        %v5660 = vrot.slane %v5632, %v5659
        %v5661 = vcombine.low %v5639, %v5646
        %v5662 = vcombine.low %v5653, %v5660
        %v5664 = vunpack.c.l.s4 1966171168
        %v5665 = vunpack.c.0.s8 %v5664
        %v5666 = vlaneseq
        %v5667 = vshrl.u32 %v5666, 7
        %v5668 = vsub.s32 %v5665, %v5667
        %v5669 = vrot.slane %v5661, %v5668
        %v5671 = vunpack.c.l.s4 1966171168
        %v5672 = vunpack.c.0.s8 %v5671
        %v5673 = vlaneseq
        %v5674 = vshrl.u32 %v5673, 7
        %v5675 = vsub.s32 %v5672, %v5674
        %v5676 = vrot.slane %v5662, %v5675
        %v5677 = vcombine.low %v5669, %v5676
        %v5678 = vcombine.low %v5135, %v5136
        %v5679 = vcombine.low %v5137, %v5138
        %v5680 = vcombine.low %v5139, %v5140
        %v5681 = vcombine.low %v5141, %v5142
        %v5683 = vunpack.c.l.s4 1966171168
        %v5684 = vunpack.c.0.s8 %v5683
        %v5685 = vlaneseq
        %v5686 = vshrl.u32 %v5685, 7
        %v5687 = vsub.s32 %v5684, %v5686
        %v5688 = vrot.slane %v5678, %v5687
        %v5690 = vunpack.c.l.s4 1966171168
        %v5691 = vunpack.c.0.s8 %v5690
        %v5692 = vlaneseq
        %v5693 = vshrl.u32 %v5692, 7
        %v5694 = vsub.s32 %v5691, %v5693
        %v5695 = vrot.slane %v5679, %v5694
        %v5697 = vunpack.c.l.s4 1966171168
        %v5698 = vunpack.c.0.s8 %v5697
        %v5699 = vlaneseq
        %v5700 = vshrl.u32 %v5699, 7
        %v5701 = vsub.s32 %v5698, %v5700
        %v5702 = vrot.slane %v5680, %v5701
        %v5704 = vunpack.c.l.s4 1966171168
        %v5705 = vunpack.c.0.s8 %v5704
        %v5706 = vlaneseq
        %v5707 = vshrl.u32 %v5706, 7
        %v5708 = vsub.s32 %v5705, %v5707
        %v5709 = vrot.slane %v5681, %v5708
        %v5710 = vcombine.low %v5688, %v5695
        %v5711 = vcombine.low %v5702, %v5709
        %v5713 = vunpack.c.l.s4 1966171168
        %v5714 = vunpack.c.0.s8 %v5713
        %v5715 = vlaneseq
        %v5716 = vshrl.u32 %v5715, 7
        %v5717 = vsub.s32 %v5714, %v5716
        %v5718 = vrot.slane %v5710, %v5717
        %v5720 = vunpack.c.l.s4 1966171168
        %v5721 = vunpack.c.0.s8 %v5720
        %v5722 = vlaneseq
        %v5723 = vshrl.u32 %v5722, 7
        %v5724 = vsub.s32 %v5721, %v5723
        %v5725 = vrot.slane %v5711, %v5724
        %v5726 = vcombine.low %v5718, %v5725
        %v5727 = vcombine.low %v5143, %v5144
        %v5728 = vcombine.low %v5145, %v5146
        %v5729 = vcombine.low %v5147, %v5148
        %v5730 = vcombine.low %v5149, %v5150
        %v5732 = vunpack.c.l.s4 1966171168
        %v5733 = vunpack.c.0.s8 %v5732
        %v5734 = vlaneseq
        %v5735 = vshrl.u32 %v5734, 7
        %v5736 = vsub.s32 %v5733, %v5735
        %v5737 = vrot.slane %v5727, %v5736
        %v5739 = vunpack.c.l.s4 1966171168
        %v5740 = vunpack.c.0.s8 %v5739
        %v5741 = vlaneseq
        %v5742 = vshrl.u32 %v5741, 7
        %v5743 = vsub.s32 %v5740, %v5742
        %v5744 = vrot.slane %v5728, %v5743
        %v5746 = vunpack.c.l.s4 1966171168
        %v5747 = vunpack.c.0.s8 %v5746
        %v5748 = vlaneseq
        %v5749 = vshrl.u32 %v5748, 7
        %v5750 = vsub.s32 %v5747, %v5749
        %v5751 = vrot.slane %v5729, %v5750
        %v5753 = vunpack.c.l.s4 1966171168
        %v5754 = vunpack.c.0.s8 %v5753
        %v5755 = vlaneseq
        %v5756 = vshrl.u32 %v5755, 7
        %v5757 = vsub.s32 %v5754, %v5756
        %v5758 = vrot.slane %v5730, %v5757
        %v5759 = vcombine.low %v5737, %v5744
        %v5760 = vcombine.low %v5751, %v5758
        %v5762 = vunpack.c.l.s4 1966171168
        %v5763 = vunpack.c.0.s8 %v5762
        %v5764 = vlaneseq
        %v5765 = vshrl.u32 %v5764, 7
        %v5766 = vsub.s32 %v5763, %v5765
        %v5767 = vrot.slane %v5759, %v5766
        %v5769 = vunpack.c.l.s4 1966171168
        %v5770 = vunpack.c.0.s8 %v5769
        %v5771 = vlaneseq
        %v5772 = vshrl.u32 %v5771, 7
        %v5773 = vsub.s32 %v5770, %v5772
        %v5774 = vrot.slane %v5760, %v5773
        %v5775 = vcombine.low %v5767, %v5774
        %v5776 = vcombine.low %v5151, %v5152
        %v5777 = vcombine.low %v5153, %v5154
        %v5778 = vcombine.low %v5155, %v5156
        %v5779 = vcombine.low %v5157, %v5158
        %v5781 = vunpack.c.l.s4 1966171168
        %v5782 = vunpack.c.0.s8 %v5781
        %v5783 = vlaneseq
        %v5784 = vshrl.u32 %v5783, 7
        %v5785 = vsub.s32 %v5782, %v5784
        %v5786 = vrot.slane %v5776, %v5785
        %v5788 = vunpack.c.l.s4 1966171168
        %v5789 = vunpack.c.0.s8 %v5788
        %v5790 = vlaneseq
        %v5791 = vshrl.u32 %v5790, 7
        %v5792 = vsub.s32 %v5789, %v5791
        %v5793 = vrot.slane %v5777, %v5792
        %v5795 = vunpack.c.l.s4 1966171168
        %v5796 = vunpack.c.0.s8 %v5795
        %v5797 = vlaneseq
        %v5798 = vshrl.u32 %v5797, 7
        %v5799 = vsub.s32 %v5796, %v5798
        %v5800 = vrot.slane %v5778, %v5799
        %v5802 = vunpack.c.l.s4 1966171168
        %v5803 = vunpack.c.0.s8 %v5802
        %v5804 = vlaneseq
        %v5805 = vshrl.u32 %v5804, 7
        %v5806 = vsub.s32 %v5803, %v5805
        %v5807 = vrot.slane %v5779, %v5806
        %v5808 = vcombine.low %v5786, %v5793
        %v5809 = vcombine.low %v5800, %v5807
        %v5811 = vunpack.c.l.s4 1966171168
        %v5812 = vunpack.c.0.s8 %v5811
        %v5813 = vlaneseq
        %v5814 = vshrl.u32 %v5813, 7
        %v5815 = vsub.s32 %v5812, %v5814
        %v5816 = vrot.slane %v5808, %v5815
        %v5818 = vunpack.c.l.s4 1966171168
        %v5819 = vunpack.c.0.s8 %v5818
        %v5820 = vlaneseq
        %v5821 = vshrl.u32 %v5820, 7
        %v5822 = vsub.s32 %v5819, %v5821
        %v5823 = vrot.slane %v5809, %v5822
        %v5824 = vcombine.low %v5816, %v5823
        %v5825 = vcombine.low %v5159, %v5160
        %v5826 = vcombine.low %v5161, %v5162
        %v5827 = vcombine.low %v5163, %v5164
        %v5828 = vcombine.low %v5165, %v5166
        %v5830 = vunpack.c.l.s4 1966171168
        %v5831 = vunpack.c.0.s8 %v5830
        %v5832 = vlaneseq
        %v5833 = vshrl.u32 %v5832, 7
        %v5834 = vsub.s32 %v5831, %v5833
        %v5835 = vrot.slane %v5825, %v5834
        %v5837 = vunpack.c.l.s4 1966171168
        %v5838 = vunpack.c.0.s8 %v5837
        %v5839 = vlaneseq
        %v5840 = vshrl.u32 %v5839, 7
        %v5841 = vsub.s32 %v5838, %v5840
        %v5842 = vrot.slane %v5826, %v5841
        %v5844 = vunpack.c.l.s4 1966171168
        %v5845 = vunpack.c.0.s8 %v5844
        %v5846 = vlaneseq
        %v5847 = vshrl.u32 %v5846, 7
        %v5848 = vsub.s32 %v5845, %v5847
        %v5849 = vrot.slane %v5827, %v5848
        %v5851 = vunpack.c.l.s4 1966171168
        %v5852 = vunpack.c.0.s8 %v5851
        %v5853 = vlaneseq
        %v5854 = vshrl.u32 %v5853, 7
        %v5855 = vsub.s32 %v5852, %v5854
        %v5856 = vrot.slane %v5828, %v5855
        %v5857 = vcombine.low %v5835, %v5842
        %v5858 = vcombine.low %v5849, %v5856
        %v5860 = vunpack.c.l.s4 1966171168
        %v5861 = vunpack.c.0.s8 %v5860
        %v5862 = vlaneseq
        %v5863 = vshrl.u32 %v5862, 7
        %v5864 = vsub.s32 %v5861, %v5863
        %v5865 = vrot.slane %v5857, %v5864
        %v5867 = vunpack.c.l.s4 1966171168
        %v5868 = vunpack.c.0.s8 %v5867
        %v5869 = vlaneseq
        %v5870 = vshrl.u32 %v5869, 7
        %v5871 = vsub.s32 %v5868, %v5870
        %v5872 = vrot.slane %v5858, %v5871
        %v5873 = vcombine.low %v5865, %v5872
        %v5874 = vcombine.low %v5167, %v5168
        %v5875 = vcombine.low %v5169, %v5170
        %v5876 = vcombine.low %v5171, %v5172
        %v5877 = vcombine.low %v5173, %v5174
        %v5879 = vunpack.c.l.s4 1966171168
        %v5880 = vunpack.c.0.s8 %v5879
        %v5881 = vlaneseq
        %v5882 = vshrl.u32 %v5881, 7
        %v5883 = vsub.s32 %v5880, %v5882
        %v5884 = vrot.slane %v5874, %v5883
        %v5886 = vunpack.c.l.s4 1966171168
        %v5887 = vunpack.c.0.s8 %v5886
        %v5888 = vlaneseq
        %v5889 = vshrl.u32 %v5888, 7
        %v5890 = vsub.s32 %v5887, %v5889
        %v5891 = vrot.slane %v5875, %v5890
        %v5893 = vunpack.c.l.s4 1966171168
        %v5894 = vunpack.c.0.s8 %v5893
        %v5895 = vlaneseq
        %v5896 = vshrl.u32 %v5895, 7
        %v5897 = vsub.s32 %v5894, %v5896
        %v5898 = vrot.slane %v5876, %v5897
        %v5900 = vunpack.c.l.s4 1966171168
        %v5901 = vunpack.c.0.s8 %v5900
        %v5902 = vlaneseq
        %v5903 = vshrl.u32 %v5902, 7
        %v5904 = vsub.s32 %v5901, %v5903
        %v5905 = vrot.slane %v5877, %v5904
        %v5906 = vcombine.low %v5884, %v5891
        %v5907 = vcombine.low %v5898, %v5905
        %v5909 = vunpack.c.l.s4 1966171168
        %v5910 = vunpack.c.0.s8 %v5909
        %v5911 = vlaneseq
        %v5912 = vshrl.u32 %v5911, 7
        %v5913 = vsub.s32 %v5910, %v5912
        %v5914 = vrot.slane %v5906, %v5913
        %v5916 = vunpack.c.l.s4 1966171168
        %v5917 = vunpack.c.0.s8 %v5916
        %v5918 = vlaneseq
        %v5919 = vshrl.u32 %v5918, 7
        %v5920 = vsub.s32 %v5917, %v5919
        %v5921 = vrot.slane %v5907, %v5920
        %v5922 = vcombine.low %v5914, %v5921
        %v5923 = vcombine.low %v5175, %v5176
        %v5924 = vcombine.low %v5177, %v5178
        %v5925 = vcombine.low %v5179, %v5180
        %v5926 = vcombine.low %v5181, %v5182
        %v5928 = vunpack.c.l.s4 1966171168
        %v5929 = vunpack.c.0.s8 %v5928
        %v5930 = vlaneseq
        %v5931 = vshrl.u32 %v5930, 7
        %v5932 = vsub.s32 %v5929, %v5931
        %v5933 = vrot.slane %v5923, %v5932
        %v5935 = vunpack.c.l.s4 1966171168
        %v5936 = vunpack.c.0.s8 %v5935
        %v5937 = vlaneseq
        %v5938 = vshrl.u32 %v5937, 7
        %v5939 = vsub.s32 %v5936, %v5938
        %v5940 = vrot.slane %v5924, %v5939
        %v5942 = vunpack.c.l.s4 1966171168
        %v5943 = vunpack.c.0.s8 %v5942
        %v5944 = vlaneseq
        %v5945 = vshrl.u32 %v5944, 7
        %v5946 = vsub.s32 %v5943, %v5945
        %v5947 = vrot.slane %v5925, %v5946
        %v5949 = vunpack.c.l.s4 1966171168
        %v5950 = vunpack.c.0.s8 %v5949
        %v5951 = vlaneseq
        %v5952 = vshrl.u32 %v5951, 7
        %v5953 = vsub.s32 %v5950, %v5952
        %v5954 = vrot.slane %v5926, %v5953
        %v5955 = vcombine.low %v5933, %v5940
        %v5956 = vcombine.low %v5947, %v5954
        %v5958 = vunpack.c.l.s4 1966171168
        %v5959 = vunpack.c.0.s8 %v5958
        %v5960 = vlaneseq
        %v5961 = vshrl.u32 %v5960, 7
        %v5962 = vsub.s32 %v5959, %v5961
        %v5963 = vrot.slane %v5955, %v5962
        %v5965 = vunpack.c.l.s4 1966171168
        %v5966 = vunpack.c.0.s8 %v5965
        %v5967 = vlaneseq
        %v5968 = vshrl.u32 %v5967, 7
        %v5969 = vsub.s32 %v5966, %v5968
        %v5970 = vrot.slane %v5956, %v5969
        %v5971 = vcombine.low %v5963, %v5970
        %v5972 = vcombine.low %v5183, %v5184
        %v5973 = vcombine.low %v5185, %v5186
        %v5974 = vcombine.low %v5187, %v5188
        %v5975 = vcombine.low %v5189, %v5190
        %v5977 = vunpack.c.l.s4 1966171168
        %v5978 = vunpack.c.0.s8 %v5977
        %v5979 = vlaneseq
        %v5980 = vshrl.u32 %v5979, 7
        %v5981 = vsub.s32 %v5978, %v5980
        %v5982 = vrot.slane %v5972, %v5981
        %v5984 = vunpack.c.l.s4 1966171168
        %v5985 = vunpack.c.0.s8 %v5984
        %v5986 = vlaneseq
        %v5987 = vshrl.u32 %v5986, 7
        %v5988 = vsub.s32 %v5985, %v5987
        %v5989 = vrot.slane %v5973, %v5988
        %v5991 = vunpack.c.l.s4 1966171168
        %v5992 = vunpack.c.0.s8 %v5991
        %v5993 = vlaneseq
        %v5994 = vshrl.u32 %v5993, 7
        %v5995 = vsub.s32 %v5992, %v5994
        %v5996 = vrot.slane %v5974, %v5995
        %v5998 = vunpack.c.l.s4 1966171168
        %v5999 = vunpack.c.0.s8 %v5998
        %v6000 = vlaneseq
        %v6001 = vshrl.u32 %v6000, 7
        %v6002 = vsub.s32 %v5999, %v6001
        %v6003 = vrot.slane %v5975, %v6002
        %v6004 = vcombine.low %v5982, %v5989
        %v6005 = vcombine.low %v5996, %v6003
        %v6007 = vunpack.c.l.s4 1966171168
        %v6008 = vunpack.c.0.s8 %v6007
        %v6009 = vlaneseq
        %v6010 = vshrl.u32 %v6009, 7
        %v6011 = vsub.s32 %v6008, %v6010
        %v6012 = vrot.slane %v6004, %v6011
        %v6014 = vunpack.c.l.s4 1966171168
        %v6015 = vunpack.c.0.s8 %v6014
        %v6016 = vlaneseq
        %v6017 = vshrl.u32 %v6016, 7
        %v6018 = vsub.s32 %v6015, %v6017
        %v6019 = vrot.slane %v6005, %v6018
        %v6020 = vcombine.low %v6012, %v6019
        %v6021 = vcombine.low %v5191, %v5192
        %v6022 = vcombine.low %v5193, %v5194
        %v6023 = vcombine.low %v5195, %v5196
        %v6024 = vcombine.low %v5197, %v5198
        %v6026 = vunpack.c.l.s4 1966171168
        %v6027 = vunpack.c.0.s8 %v6026
        %v6028 = vlaneseq
        %v6029 = vshrl.u32 %v6028, 7
        %v6030 = vsub.s32 %v6027, %v6029
        %v6031 = vrot.slane %v6021, %v6030
        %v6033 = vunpack.c.l.s4 1966171168
        %v6034 = vunpack.c.0.s8 %v6033
        %v6035 = vlaneseq
        %v6036 = vshrl.u32 %v6035, 7
        %v6037 = vsub.s32 %v6034, %v6036
        %v6038 = vrot.slane %v6022, %v6037
        %v6040 = vunpack.c.l.s4 1966171168
        %v6041 = vunpack.c.0.s8 %v6040
        %v6042 = vlaneseq
        %v6043 = vshrl.u32 %v6042, 7
        %v6044 = vsub.s32 %v6041, %v6043
        %v6045 = vrot.slane %v6023, %v6044
        %v6047 = vunpack.c.l.s4 1966171168
        %v6048 = vunpack.c.0.s8 %v6047
        %v6049 = vlaneseq
        %v6050 = vshrl.u32 %v6049, 7
        %v6051 = vsub.s32 %v6048, %v6050
        %v6052 = vrot.slane %v6024, %v6051
        %v6053 = vcombine.low %v6031, %v6038
        %v6054 = vcombine.low %v6045, %v6052
        %v6056 = vunpack.c.l.s4 1966171168
        %v6057 = vunpack.c.0.s8 %v6056
        %v6058 = vlaneseq
        %v6059 = vshrl.u32 %v6058, 7
        %v6060 = vsub.s32 %v6057, %v6059
        %v6061 = vrot.slane %v6053, %v6060
        %v6063 = vunpack.c.l.s4 1966171168
        %v6064 = vunpack.c.0.s8 %v6063
        %v6065 = vlaneseq
        %v6066 = vshrl.u32 %v6065, 7
        %v6067 = vsub.s32 %v6064, %v6066
        %v6068 = vrot.slane %v6054, %v6067
        %v6069 = vcombine.low %v6061, %v6068
        %v6070 = vcombine.low %v5199, %v5200
        %v6071 = vcombine.low %v5201, %v5202
        %v6072 = vcombine.low %v5203, %v5204
        %v6073 = vcombine.low %v5205, %v5206
        %v6075 = vunpack.c.l.s4 1966171168
        %v6076 = vunpack.c.0.s8 %v6075
        %v6077 = vlaneseq
        %v6078 = vshrl.u32 %v6077, 7
        %v6079 = vsub.s32 %v6076, %v6078
        %v6080 = vrot.slane %v6070, %v6079
        %v6082 = vunpack.c.l.s4 1966171168
        %v6083 = vunpack.c.0.s8 %v6082
        %v6084 = vlaneseq
        %v6085 = vshrl.u32 %v6084, 7
        %v6086 = vsub.s32 %v6083, %v6085
        %v6087 = vrot.slane %v6071, %v6086
        %v6089 = vunpack.c.l.s4 1966171168
        %v6090 = vunpack.c.0.s8 %v6089
        %v6091 = vlaneseq
        %v6092 = vshrl.u32 %v6091, 7
        %v6093 = vsub.s32 %v6090, %v6092
        %v6094 = vrot.slane %v6072, %v6093
        %v6096 = vunpack.c.l.s4 1966171168
        %v6097 = vunpack.c.0.s8 %v6096
        %v6098 = vlaneseq
        %v6099 = vshrl.u32 %v6098, 7
        %v6100 = vsub.s32 %v6097, %v6099
        %v6101 = vrot.slane %v6073, %v6100
        %v6102 = vcombine.low %v6080, %v6087
        %v6103 = vcombine.low %v6094, %v6101
        %v6105 = vunpack.c.l.s4 1966171168
        %v6106 = vunpack.c.0.s8 %v6105
        %v6107 = vlaneseq
        %v6108 = vshrl.u32 %v6107, 7
        %v6109 = vsub.s32 %v6106, %v6108
        %v6110 = vrot.slane %v6102, %v6109
        %v6112 = vunpack.c.l.s4 1966171168
        %v6113 = vunpack.c.0.s8 %v6112
        %v6114 = vlaneseq
        %v6115 = vshrl.u32 %v6114, 7
        %v6116 = vsub.s32 %v6113, %v6115
        %v6117 = vrot.slane %v6103, %v6116
        %v6118 = vcombine.low %v6110, %v6117
        %6135 = vst [vmem:[%s238] sm:$0xff] %v5383
        %6136 = vst [vmem:[%s238 + $0x8] sm:$0xff] %v5432
        %6137 = vst [vmem:[%s238 + $0x10] sm:$0xff] %v5481
        %6138 = vst [vmem:[%s238 + $0x18] sm:$0xff] %v5530
        %6139 = vst [vmem:[%s238 + $0x20] sm:$0xff] %v5579
        %6140 = vst [vmem:[%s238 + $0x28] sm:$0xff] %v5628
        %6141 = vst [vmem:[%s238 + $0x30] sm:$0xff] %v5677
        %6142 = vst [vmem:[%s238 + $0x38] sm:$0xff] %v5726
        %6143 = vst [vmem:[%s238 + $0x40] sm:$0xff] %v5775
        %6144 = vst [vmem:[%s238 + $0x48] sm:$0xff] %v5824
        %6145 = vst [vmem:[%s238 + $0x50] sm:$0xff] %v5873
        %6146 = vst [vmem:[%s238 + $0x58] sm:$0xff] %v5922
        %6147 = vst [vmem:[%s238 + $0x60] sm:$0xff] %v5971
        %6148 = vst [vmem:[%s238 + $0x68] sm:$0xff] %v6020
        %6149 = vst [vmem:[%s238 + $0x70] sm:$0xff] %v6069
        %6150 = vst [vmem:[%s238 + $0x78] sm:$0xff] %v6118
        %s6151 = smul.u32 128, %s18
        %p6152 = scmp.lt.s32.totalorder %s6151, 255
        %s6153 = scalar_select %p6152, %s6151, 255
        %s6154 = scalar_lea.vmem %s3, %s6153
        // Predicated region
        $region45: #{decoder_forward.2} parent=31 // pred_check
          %p6155 = pneg %p109
        $region46: #{decoder_forward.2} parent=31 // pred_check_branch
          %6157 = sbr.rel (%p6155) target = $region48
        $region47: #{decoder_forward.2} parent=31 // pred_region
          %s6158 = smul.u32 128, %s18
        $region48: #{decoder_forward.2} parent=31 // pred_fallthru
          _
      $region32: #{decoder_forward.2} parent=5 // pred_fallthru
        _
      %p6159 = scmp.le.s32.totalorder 2, %s13
      // Predicated region
      $region49: #{decoder_forward.2} parent=5 // pred_check
        %p6160 = pneg %p6159
      $region50: #{decoder_forward.2} parent=5 // pred_check_branch
        %6162 = sbr.rel (%p6160) target = $region52
      $region51: #{decoder_forward.2} parent=5 // pred_region
        %s6163 = ssub.s32 %s13, 2
        // Predicated region
        $region53: #{decoder_forward.2} parent=51 // pred_check
          %p6164 = pneg %p115
        $region54: #{decoder_forward.2} parent=51 // pred_check_branch
          %6166 = sbr.rel (%p6164) target = $region56
        $region55: #{decoder_forward.2} parent=51 // pred_region
          %s6167 = smul.u32 128, %s19
          %p6168 = scmp.lt.s32.totalorder %s6167, 255
          %s6169 = scalar_select %p6168, %s6167, 255
          %s6170 = scalar_lea.vmem %s3, %s6169
        $region56: #{decoder_forward.2} parent=51 // pred_fallthru
          _
      $region52: #{decoder_forward.2} parent=5 // pred_fallthru
        _
    $region6: #{decoder_forward.2} parent=1 // loop_footer
      %s17 = sadd.s32 1, %s13
    $region7: #{decoder_forward.2} parent=1 // loop_footer_branch
      %12 = sbr.rel target = $region3
    $region8: #{decoder_forward.2} parent=1 // loop_exit
      _
    %6171 = vsyncpa [#allocation3], 1
    %s6172 = scalar_lea.sflag [#allocation3], 1
    %6173 = vsyncpa %s6172, 1
    %6174 = vsyncpa [#allocation5], 1
    %s6175 = scalar_lea.sflag [#allocation5], 1
    %6176 = vsyncpa %s6175, 1

</llo_original>
